<compile_context>
chip_gen: v5e
topology: v5e:2x2
jax: 0.10.0
libtpu: 0.0.40
codegen_flags: <defaults>
</compile_context>

<pallas_src>
import functools

import jax
import jax.numpy as jnp
from jax.experimental import pallas as pl
from jax.experimental.pallas import tpu as pltpu

FEAT = 1280             # mobilenet_v2 num_feature_channels()
FC1, FC1P = 1000, 1024  # padded to lane multiple
FC2, FC2P = 500, 512    # padded to lane multiple
CPAD = 8                # input channels (3) padded to a sublane multiple only


# ---------------------------------------------------------------------------
# Fused E_Net forward kernel.  grid = (2,) over the two eye streams
# ("parallel": streams are independent, sharded across TCs on v7x).
# ---------------------------------------------------------------------------
def _enet_kernel(n, hw, x_ref, eye_w_ref, eye_b_ref,
                 w1q_ref, s1_ref, b1_ref,
                 w2q_ref, s2_ref, b2_ref,
                 wf_ref, part_ref):
    # --- backbone stand-in: 1x1 conv -> ReLU6 -> global average pool -------
    # x_ref: (1, n*hw, CPAD) bf16, eye_w_ref: (CPAD, FEAT) bf16
    x = x_ref[0]                                                   # (n*hw, CPAD)
    h = jnp.dot(x, eye_w_ref[...], preferred_element_type=jnp.float32)
    h = jnp.clip(h + eye_b_ref[...], 0.0, 6.0)                     # ReLU6
    # global average pool: sublane mean over the HW rows of each batch item
    f = jnp.mean(h.reshape(n, hw, FEAT), axis=1)                   # (n, FEAT) f32

    # --- stream FC head: Linear+ReLU -> Linear+ReLU (dropout == identity) --
    # int8 weights -> exact bf16 cast for the MXU; per-output-column scale and
    # bias applied in f32 on the f32 accumulator.
    w1 = w1q_ref[0].astype(jnp.bfloat16)                           # (FEAT, FC1P)
    h1 = jnp.dot(f.astype(jnp.bfloat16), w1,
                 preferred_element_type=jnp.float32)
    h1 = jnp.maximum(h1 * s1_ref[0] + b1_ref[0], 0.0)              # (n, FC1P)

    w2 = w2q_ref[0].astype(jnp.bfloat16)                           # (FC1P, FC2P)
    h2 = jnp.dot(h1.astype(jnp.bfloat16), w2,
                 preferred_element_type=jnp.float32)
    h2 = jnp.maximum(h2 * s2_ref[0] + b2_ref[0], 0.0)              # (n, FC2P)

    # --- this stream's partial of the fc_1_2 logit --------------------------
    # cat((s1, s2), 1) @ W == s1 @ W[:500] + s2 @ W[500:]
    part_ref[0] = jnp.sum(h2 * wf_ref[0], axis=-1, keepdims=True)  # (n, 1)


# ---------------------------------------------------------------------------
# Wrapper: layout plumbing (NCHW -> lane-dense, channel pad, stream stack)
# and the tiny final combine (add halves + bias + sigmoid).
# ---------------------------------------------------------------------------
def e_net_forward(params, left_eye_image, right_eye_image):
    n, c, hh, ww = left_eye_image.shape
    hw = hh * ww

    def prep(img):
        xi = jnp.transpose(img, (0, 2, 3, 1)).reshape(n * hw, c)
        xi = jnp.pad(xi, ((0, 0), (0, CPAD - c)))
        return xi.astype(jnp.bfloat16)

    # streams stacked on a leading axis: 0 = left eye, 1 = right eye
    x = jnp.stack([prep(left_eye_image), prep(right_eye_image)], axis=0)

    part = pl.pallas_call(
        functools.partial(_enet_kernel, n, hw),
        out_shape=jax.ShapeDtypeStruct((2, n, 1), jnp.float32),
        grid=(2,),
        in_specs=[
            pl.BlockSpec((1, n * hw, CPAD), lambda s: (s, 0, 0)),   # x
            pl.BlockSpec((CPAD, FEAT), lambda s: (0, 0)),           # eye_w (shared)
            pl.BlockSpec((1, FEAT), lambda s: (0, 0)),              # eye_b (shared)
            pl.BlockSpec((1, FEAT, FC1P), lambda s: (s, 0, 0)),     # w1 int8 (per stream)
            pl.BlockSpec((1, 1, FC1P), lambda s: (s, 0, 0)),        # w1 scales
            pl.BlockSpec((1, 1, FC1P), lambda s: (s, 0, 0)),        # b1
            pl.BlockSpec((1, FC1P, FC2P), lambda s: (s, 0, 0)),     # w2 int8
            pl.BlockSpec((1, 1, FC2P), lambda s: (s, 0, 0)),        # w2 scales
            pl.BlockSpec((1, 1, FC2P), lambda s: (s, 0, 0)),        # b2
            pl.BlockSpec((1, 1, FC2P), lambda s: (s, 0, 0)),        # wf (fc_1_2 split)
        ],
        out_specs=pl.BlockSpec((1, n, 1), lambda s: (s, 0, 0)),     # per-stream partial
        compiler_params=pltpu.CompilerParams(
            dimension_semantics=("parallel",),      # streams independent -> 2 TCs on v7x
            vmem_limit_bytes=32 * 1024 * 1024),
    )(x, params["eye_w"], params["eye_b"],
      params["w1q"], params["s1"], params["b1"],
      params["w2q"], params["s2"], params["b2"],
      params["wf"])

    raw = part[0] + part[1] + params["bf"]          # (n, 1)
    sig = jax.nn.sigmoid(raw)
    return {"p-r": 1.0 - sig, "p-l": sig, "p-raw": raw}


# ---------------------------------------------------------------------------
# Parameter init (PyTorch-Linear-style uniform(-1/sqrt(fan_in))), pre-padded
# to lane-dense shapes; big FC weights quantized to int8 per output column.
# ---------------------------------------------------------------------------
def init_params(key, c_in=3):
    ks = jax.random.split(key, 12)

    def lin(kw, kb, fin, fout, fin_p, fout_p):
        s = (1.0 / fin) ** 0.5
        w = jax.random.uniform(kw, (fin, fout), jnp.float32, -s, s)
        b = jax.random.uniform(kb, (1, fout), jnp.float32, -s, s)
        w = jnp.pad(w, ((0, fin_p - fin), (0, fout_p - fout)))
        b = jnp.pad(b, ((0, 0), (0, fout_p - fout)))
        return w, b

    def quant_cols(w):
        # symmetric per-output-column int8 quantization
        absmax = jnp.max(jnp.abs(w), axis=0, keepdims=True)
        scale = jnp.maximum(absmax, 1e-12) / 127.0
        wq = jnp.round(w / scale).astype(jnp.int8)
        return wq, scale.astype(jnp.float32)

    eye_w, eye_b = lin(ks[0], ks[1], c_in, FEAT, CPAD, FEAT)
    s1_w1, s1_b1 = lin(ks[2], ks[3], FEAT, FC1, FEAT, FC1P)
    s1_w2, s1_b2 = lin(ks[4], ks[5], FC1, FC2, FC1P, FC2P)
    s2_w1, s2_b1 = lin(ks[6], ks[7], FEAT, FC1, FEAT, FC1P)
    s2_w2, s2_b2 = lin(ks[8], ks[9], FC1, FC2, FC1P, FC2P)

    s1_w1q, s1_sc1 = quant_cols(s1_w1)
    s2_w1q, s2_sc1 = quant_cols(s2_w1)
    s1_w2q, s1_sc2 = quant_cols(s1_w2)
    s2_w2q, s2_sc2 = quant_cols(s2_w2)

    # fc_1_2: Linear(1000, 1); split its weight into the two stream halves,
    # stored as lane-dense row vectors.
    sf = (1.0 / (2 * FC2)) ** 0.5
    fw = jax.random.uniform(ks[10], (2 * FC2, 1), jnp.float32, -sf, sf)
    fb = jax.random.uniform(ks[11], (1, 1), jnp.float32, -sf, sf)
    wfa = jnp.pad(fw[:FC2, 0][None, :], ((0, 0), (0, FC2P - FC2)))
    wfb = jnp.pad(fw[FC2:, 0][None, :], ((0, 0), (0, FC2P - FC2)))

    return dict(
        eye_w=eye_w.astype(jnp.bfloat16),               # (CPAD, FEAT)    bf16
        eye_b=eye_b,                                    # (1, FEAT)       f32
        w1q=jnp.stack([s1_w1q, s2_w1q], axis=0),        # (2, FEAT, FC1P) int8
        s1=jnp.stack([s1_sc1, s2_sc1], axis=0),         # (2, 1, FC1P)    f32
        b1=jnp.stack([s1_b1, s2_b1], axis=0),           # (2, 1, FC1P)    f32
        w2q=jnp.stack([s1_w2q, s2_w2q], axis=0),        # (2, FC1P, FC2P) int8
        s2=jnp.stack([s1_sc2, s2_sc2], axis=0),         # (2, 1, FC2P)    f32
        b2=jnp.stack([s1_b2, s2_b2], axis=0),           # (2, 1, FC2P)    f32
        wf=jnp.stack([wfa, wfb], axis=0),               # (2, 1, FC2P)    f32
        bf=fb,                                          # (1, 1)          f32
    )


# ---------------------------------------------------------------------------
if __name__ == "__main__":
    key = jax.random.PRNGKey(0)
    k_params, k_left, k_right = jax.random.split(key, 3)

    N, C, H, W = 2, 3, 16, 16                      # small NCHW eye images
    left = jax.random.normal(k_left, (N, C, H, W), jnp.float32)
    right = jax.random.normal(k_right, (N, C, H, W), jnp.float32)

    params = init_params(k_params, c_in=C)

    fwd = jax.jit(e_net_forward)
    prob = fwd(params, left, right)
    jax.block_until_ready(prob)

    assert prob["p-raw"].shape == (N, 1)
    assert prob["p-l"].shape == (N, 1)
    assert prob["p-r"].shape == (N, 1)
    print("KERNEL_OK")
</pallas_src>

<mosaic_0001>
module attributes {stable_mosaic.version = 11 : i64} {
  func.func @_enet_kernel(%arg0: i32, %arg1: memref<1x512x8xbf16, #tpu.memory_space<vmem>>, %arg2: memref<8x1280xbf16, #tpu.memory_space<vmem>>, %arg3: memref<1x1280xf32, #tpu.memory_space<vmem>>, %arg4: memref<1x1280x1024xi8, #tpu.memory_space<vmem>>, %arg5: memref<1x1x1024xf32, #tpu.memory_space<vmem>>, %arg6: memref<1x1x1024xf32, #tpu.memory_space<vmem>>, %arg7: memref<1x1024x512xi8, #tpu.memory_space<vmem>>, %arg8: memref<1x1x512xf32, #tpu.memory_space<vmem>>, %arg9: memref<1x1x512xf32, #tpu.memory_space<vmem>>, %arg10: memref<1x1x512xf32, #tpu.memory_space<vmem>>, %arg11: memref<1x2x1xf32, #tpu.memory_space<vmem>>) attributes {dimension_semantics = [#tpu.dimension_semantics<parallel>], iteration_bounds = array<i64: 2>, scalar_prefetch = 0 : i64, scratch_operands = 0 : i64, tpu.core_type = #tpu.core_type<tc>, window_params = [{transform_indices = @transform_0, window_bounds = array<i64: 1, 512, 8>}, {pipeline_mode = #tpu.pipeline_mode<synchronous>, transform_indices = @transform_1, window_bounds = array<i64: 8, 1280>}, {pipeline_mode = #tpu.pipeline_mode<synchronous>, transform_indices = @transform_2, window_bounds = array<i64: 1, 1280>}, {transform_indices = @transform_3, window_bounds = array<i64: 1, 1280, 1024>}, {transform_indices = @transform_4, window_bounds = array<i64: 1, 1, 1024>}, {transform_indices = @transform_5, window_bounds = array<i64: 1, 1, 1024>}, {transform_indices = @transform_6, window_bounds = array<i64: 1, 1024, 512>}, {transform_indices = @transform_7, window_bounds = array<i64: 1, 1, 512>}, {transform_indices = @transform_8, window_bounds = array<i64: 1, 1, 512>}, {transform_indices = @transform_9, window_bounds = array<i64: 1, 1, 512>}, {transform_indices = @transform_10, window_bounds = array<i64: 1, 2, 1>}]} {
    %c0 = arith.constant 0 : index
    %c0_0 = arith.constant 0 : index
    %c0_1 = arith.constant 0 : index
    %0 = vector.load %arg1[%c0, %c0_0, %c0_1] : memref<1x512x8xbf16, #tpu.memory_space<vmem>>, vector<1x512x8xbf16>
    %1 = vector.shape_cast %0 : vector<1x512x8xbf16> to vector<512x8xbf16>
    %c0_2 = arith.constant 0 : index
    %c0_3 = arith.constant 0 : index
    %2 = vector.load %arg2[%c0_2, %c0_3] : memref<8x1280xbf16, #tpu.memory_space<vmem>>, vector<8x1280xbf16>
    %cst = arith.constant dense<0.000000e+00> : vector<512x1280xf32>
    %3 = tpu.matmul %1, %2, %cst {dimension_numbers = #tpu.dot_dimension_numbers<[1], [0], [0], [1], [0, 0, 1, 1], [], []>} : vector<512x8xbf16>, vector<8x1280xbf16>, vector<512x1280xf32> -> vector<512x1280xf32>
    %c0_4 = arith.constant 0 : index
    %c0_5 = arith.constant 0 : index
    %4 = vector.load %arg3[%c0_4, %c0_5] : memref<1x1280xf32, #tpu.memory_space<vmem>>, vector<1x1280xf32>
    %5 = vector.broadcast %4 : vector<1x1280xf32> to vector<512x1280xf32>
    %6 = arith.addf %3, %5 : vector<512x1280xf32>
    %cst_6 = arith.constant 0.000000e+00 : f32
    %cst_7 = arith.constant 6.000000e+00 : f32
    %7 = vector.broadcast %cst_6 : f32 to vector<512x1280xf32>
    %8 = arith.maximumf %7, %6 : vector<512x1280xf32>
    %9 = vector.broadcast %cst_7 : f32 to vector<512x1280xf32>
    %10 = arith.minimumf %9, %8 : vector<512x1280xf32>
    %11 = vector.shape_cast %10 : vector<512x1280xf32> to vector<2x256x1280xf32>
    %cst_8 = arith.constant dense<0.000000e+00> : vector<2x1280xf32>
    %12 = vector.multi_reduction <add>, %11, %cst_8 [1] : vector<2x256x1280xf32> to vector<2x1280xf32>
    %cst_9 = arith.constant 2.560000e+02 : f32
    %13 = vector.broadcast %cst_9 : f32 to vector<2x1280xf32>
    %14 = arith.divf %12, %13 : vector<2x1280xf32>
    %c0_10 = arith.constant 0 : index
    %c0_11 = arith.constant 0 : index
    %c0_12 = arith.constant 0 : index
    %15 = vector.load %arg4[%c0_10, %c0_11, %c0_12] : memref<1x1280x1024xi8, #tpu.memory_space<vmem>>, vector<1x1280x1024xi8>
    %16 = vector.shape_cast %15 : vector<1x1280x1024xi8> to vector<1280x1024xi8>
    %17 = arith.sitofp %16 : vector<1280x1024xi8> to vector<1280x1024xbf16>
    %18 = arith.truncf %14 : vector<2x1280xf32> to vector<2x1280xbf16>
    %cst_13 = arith.constant dense<0.000000e+00> : vector<2x1024xf32>
    %19 = tpu.matmul %18, %17, %cst_13 {dimension_numbers = #tpu.dot_dimension_numbers<[1], [0], [0], [1], [0, 0, 1, 1], [], []>} : vector<2x1280xbf16>, vector<1280x1024xbf16>, vector<2x1024xf32> -> vector<2x1024xf32>
    %c0_14 = arith.constant 0 : index
    %c0_15 = arith.constant 0 : index
    %c0_16 = arith.constant 0 : index
    %20 = vector.load %arg5[%c0_14, %c0_15, %c0_16] : memref<1x1x1024xf32, #tpu.memory_space<vmem>>, vector<1x1x1024xf32>
    %21 = vector.shape_cast %20 : vector<1x1x1024xf32> to vector<1x1024xf32>
    %22 = vector.broadcast %21 : vector<1x1024xf32> to vector<2x1024xf32>
    %23 = arith.mulf %19, %22 : vector<2x1024xf32>
    %c0_17 = arith.constant 0 : index
    %c0_18 = arith.constant 0 : index
    %c0_19 = arith.constant 0 : index
    %24 = vector.load %arg6[%c0_17, %c0_18, %c0_19] : memref<1x1x1024xf32, #tpu.memory_space<vmem>>, vector<1x1x1024xf32>
    %25 = vector.shape_cast %24 : vector<1x1x1024xf32> to vector<1x1024xf32>
    %26 = vector.broadcast %25 : vector<1x1024xf32> to vector<2x1024xf32>
    %27 = arith.addf %23, %26 : vector<2x1024xf32>
    %cst_20 = arith.constant 0.000000e+00 : f32
    %28 = vector.broadcast %cst_20 : f32 to vector<2x1024xf32>
    %29 = arith.maximumf %27, %28 : vector<2x1024xf32>
    %c0_21 = arith.constant 0 : index
    %c0_22 = arith.constant 0 : index
    %c0_23 = arith.constant 0 : index
    %30 = vector.load %arg7[%c0_21, %c0_22, %c0_23] : memref<1x1024x512xi8, #tpu.memory_space<vmem>>, vector<1x1024x512xi8>
    %31 = vector.shape_cast %30 : vector<1x1024x512xi8> to vector<1024x512xi8>
    %32 = arith.sitofp %31 : vector<1024x512xi8> to vector<1024x512xbf16>
    %33 = arith.truncf %29 : vector<2x1024xf32> to vector<2x1024xbf16>
    %cst_24 = arith.constant dense<0.000000e+00> : vector<2x512xf32>
    %34 = tpu.matmul %33, %32, %cst_24 {dimension_numbers = #tpu.dot_dimension_numbers<[1], [0], [0], [1], [0, 0, 1, 1], [], []>} : vector<2x1024xbf16>, vector<1024x512xbf16>, vector<2x512xf32> -> vector<2x512xf32>
    %c0_25 = arith.constant 0 : index
    %c0_26 = arith.constant 0 : index
    %c0_27 = arith.constant 0 : index
    %35 = vector.load %arg8[%c0_25, %c0_26, %c0_27] : memref<1x1x512xf32, #tpu.memory_space<vmem>>, vector<1x1x512xf32>
    %36 = vector.shape_cast %35 : vector<1x1x512xf32> to vector<1x512xf32>
    %37 = vector.broadcast %36 : vector<1x512xf32> to vector<2x512xf32>
    %38 = arith.mulf %34, %37 : vector<2x512xf32>
    %c0_28 = arith.constant 0 : index
    %c0_29 = arith.constant 0 : index
    %c0_30 = arith.constant 0 : index
    %39 = vector.load %arg9[%c0_28, %c0_29, %c0_30] : memref<1x1x512xf32, #tpu.memory_space<vmem>>, vector<1x1x512xf32>
    %40 = vector.shape_cast %39 : vector<1x1x512xf32> to vector<1x512xf32>
    %41 = vector.broadcast %40 : vector<1x512xf32> to vector<2x512xf32>
    %42 = arith.addf %38, %41 : vector<2x512xf32>
    %cst_31 = arith.constant 0.000000e+00 : f32
    %43 = vector.broadcast %cst_31 : f32 to vector<2x512xf32>
    %44 = arith.maximumf %42, %43 : vector<2x512xf32>
    %c0_32 = arith.constant 0 : index
    %c0_33 = arith.constant 0 : index
    %c0_34 = arith.constant 0 : index
    %45 = vector.load %arg10[%c0_32, %c0_33, %c0_34] : memref<1x1x512xf32, #tpu.memory_space<vmem>>, vector<1x1x512xf32>
    %46 = vector.shape_cast %45 : vector<1x1x512xf32> to vector<1x512xf32>
    %47 = vector.broadcast %46 : vector<1x512xf32> to vector<2x512xf32>
    %48 = arith.mulf %44, %47 : vector<2x512xf32>
    %cst_35 = arith.constant dense<0.000000e+00> : vector<2xf32>
    %49 = vector.multi_reduction <add>, %48, %cst_35 [1] : vector<2x512xf32> to vector<2xf32>
    %50 = vector.shape_cast %49 : vector<2xf32> to vector<2x1xf32>
    %c0_36 = arith.constant 0 : index
    %c0_37 = arith.constant 0 : index
    %c0_38 = arith.constant 0 : index
    %51 = vector.load %arg11[%c0_36, %c0_37, %c0_38] : memref<1x2x1xf32, #tpu.memory_space<vmem>>, vector<1x2x1xf32>
    %52 = vector.shape_cast %51 : vector<1x2x1xf32> to vector<2x1xf32>
    %53 = vector.shape_cast %50 : vector<2x1xf32> to vector<1x2x1xf32>
    tpu.vector_store %arg11[%c0_36, %c0_37, %c0_38], %53 {strides = array<i32>} : memref<1x2x1xf32, #tpu.memory_space<vmem>>, vector<1x2x1xf32>,
    return
  }
  func.func @transform_0(%arg0: i32) -> (i32, i32, i32) {
    %c0_i32 = arith.constant 0 : i32
    %c0_i32_0 = arith.constant 0 : i32
    %c0_i32_1 = arith.constant 0 : i32
    return %arg0, %c0_i32, %c0_i32_0 : i32, i32, i32
  }
  func.func @transform_1(%arg0: i32) -> (i32, i32) {
    %c0_i32 = arith.constant 0 : i32
    %c0_i32_0 = arith.constant 0 : i32
    %c0_i32_1 = arith.constant 0 : i32
    return %c0_i32, %c0_i32_0 : i32, i32
  }
  func.func @transform_2(%arg0: i32) -> (i32, i32) {
    %c0_i32 = arith.constant 0 : i32
    %c0_i32_0 = arith.constant 0 : i32
    %c0_i32_1 = arith.constant 0 : i32
    return %c0_i32, %c0_i32_0 : i32, i32
  }
  func.func @transform_3(%arg0: i32) -> (i32, i32, i32) {
    %c0_i32 = arith.constant 0 : i32
    %c0_i32_0 = arith.constant 0 : i32
    %c0_i32_1 = arith.constant 0 : i32
    return %arg0, %c0_i32, %c0_i32_0 : i32, i32, i32
  }
  func.func @transform_4(%arg0: i32) -> (i32, i32, i32) {
    %c0_i32 = arith.constant 0 : i32
    %c0_i32_0 = arith.constant 0 : i32
    %c0_i32_1 = arith.constant 0 : i32
    return %arg0, %c0_i32, %c0_i32_0 : i32, i32, i32
  }
  func.func @transform_5(%arg0: i32) -> (i32, i32, i32) {
    %c0_i32 = arith.constant 0 : i32
    %c0_i32_0 = arith.constant 0 : i32
    %c0_i32_1 = arith.constant 0 : i32
    return %arg0, %c0_i32, %c0_i32_0 : i32, i32, i32
  }
  func.func @transform_6(%arg0: i32) -> (i32, i32, i32) {
    %c0_i32 = arith.constant 0 : i32
    %c0_i32_0 = arith.constant 0 : i32
    %c0_i32_1 = arith.constant 0 : i32
    return %arg0, %c0_i32, %c0_i32_0 : i32, i32, i32
  }
  func.func @transform_7(%arg0: i32) -> (i32, i32, i32) {
    %c0_i32 = arith.constant 0 : i32
    %c0_i32_0 = arith.constant 0 : i32
    %c0_i32_1 = arith.constant 0 : i32
    return %arg0, %c0_i32, %c0_i32_0 : i32, i32, i32
  }
  func.func @transform_8(%arg0: i32) -> (i32, i32, i32) {
    %c0_i32 = arith.constant 0 : i32
    %c0_i32_0 = arith.constant 0 : i32
    %c0_i32_1 = arith.constant 0 : i32
    return %arg0, %c0_i32, %c0_i32_0 : i32, i32, i32
  }
  func.func @transform_9(%arg0: i32) -> (i32, i32, i32) {
    %c0_i32 = arith.constant 0 : i32
    %c0_i32_0 = arith.constant 0 : i32
    %c0_i32_1 = arith.constant 0 : i32
    return %arg0, %c0_i32, %c0_i32_0 : i32, i32, i32
  }
  func.func @transform_10(%arg0: i32) -> (i32, i32, i32) {
    %c0_i32 = arith.constant 0 : i32
    %c0_i32_0 = arith.constant 0 : i32
    %c0_i32_1 = arith.constant 0 : i32
    return %arg0, %c0_i32, %c0_i32_0 : i32, i32, i32
  }
}

</mosaic_0001>

<llo_original>
// kernel: e_net_forward.1
$region0: #{e_net_forward.1}
  #allocation0 [shape = 'u32[]', space=smem, size = 0x4, offset = 0x4, fixed_abs, tag = 'smem constant byte address 0x4 - core index']
  #allocation1 [shape = 'u32[72,128]{1,0:T(1,128)}', space=vmem, size = 0x9000, scoped, tag = 'internal scratch']
  %s0 = inlined_call_operand.vmem [shape: bf16[2,512,8], index: 0, kind: input, shape index: {}]
  %s1 = inlined_call_operand.hbm [shape: bf16[8,1280], index: 1, kind: input, shape index: {}]
  %s2 = inlined_call_operand.hbm [shape: f32[1,1280], index: 2, kind: input, shape index: {}]
  %s3 = inlined_call_operand.hbm [shape: s8[2,1280,1024], index: 3, kind: input, shape index: {}]
  %s4 = inlined_call_operand.hbm [shape: f32[2,1,1024], index: 4, kind: input, shape index: {}]
  %s5 = inlined_call_operand.hbm [shape: f32[2,1,1024], index: 5, kind: input, shape index: {}]
  %s6 = inlined_call_operand.hbm [shape: s8[2,1024,512], index: 6, kind: input, shape index: {}]
  %s7 = inlined_call_operand.hbm [shape: f32[2,1,512], index: 7, kind: input, shape index: {}]
  %s8 = inlined_call_operand.hbm [shape: f32[2,1,512], index: 8, kind: input, shape index: {}]
  %s9 = inlined_call_operand.hbm [shape: f32[2,1,512], index: 9, kind: input, shape index: {}]
  %s10 = inlined_call_operand.vmem [shape: f32[2,2,1], index: 10, kind: output, shape index: {}]
  %s11 = sld [smem:[#allocation0]]
  $region109: #{e_net_forward.1} parent=0
    _
  %s13 = ssub.s32 1, %s11
  %s14 = scalar_select 0, %s13, %s11
  $region1: #{e_net_forward.1} parent=0
    #allocation2 [shape = 'u8[20480]{0}', space=vmem, size = 0x5000, scoped, tag = 'input window, operand 1, single buffered']
    #allocation3 [shape = 's32[2]{0}', space=sflag, size = 0x8, scoped, tag = 'scoped memory for e_net_forward.1']
    #allocation4 [shape = 'u8[5120]{0}', space=vmem, size = 0x1400, scoped, tag = 'input window, operand 2, single buffered']
    #allocation5 [shape = 's32[1]{0}', space=sflag, size = 0x4, scoped, tag = 'scoped memory for e_net_forward.1']
    #allocation6 [shape = 'u8[2621440]{0}', space=vmem, size = 0x280000, scoped, tag = 'input window, operand 3']
    #allocation7 [shape = 'u8[8192]{0}', space=vmem, size = 0x2000, scoped, tag = 'input window, operand 4']
    #allocation8 [shape = 'u8[8192]{0}', space=vmem, size = 0x2000, scoped, tag = 'input window, operand 5']
    #allocation9 [shape = 'u8[1048576]{0}', space=vmem, size = 0x100000, scoped, tag = 'input window, operand 6']
    #allocation10 [shape = 'u8[4096]{0}', space=vmem, size = 0x1000, scoped, tag = 'input window, operand 7']
    #allocation11 [shape = 'u8[4096]{0}', space=vmem, size = 0x1000, scoped, tag = 'input window, operand 8']
    #allocation12 [shape = 'u8[4096]{0}', space=vmem, size = 0x1000, scoped, tag = 'input window, operand 9']
    %15 = vsyncpa [#allocation3], 0
    %16 = vsyncpa [#allocation5], 0
    loop: start=0, step=1, limit=4
    $region2: #{e_net_forward.1} parent=1 // loop_pre_header
      _
    $region3: #{e_net_forward.1} parent=1 // loop_header
      %s18 = sphi 0, %s22
      %p19 = scmp.ge.s32.totalorder %s18, 4
      %s28 = sphi 0, %s30
      %s31 = sphi 0, %s28
      %s32 = sphi 0, %s31
      %s48 = sphi 0, %s32
      %s52 = sphi 0, %s52
      %s54 = sphi 0, %s52
      %s55 = sphi 0, %s54
      %s69 = sphi 0, %s55
      %s73 = sphi 0, %s73
      %s75 = sphi 0, %s73
      %s76 = sphi 0, %s75
      %s90 = sphi 0, %s76
      %s96 = sphi 0, %s98
      %s99 = sphi 0, %s96
      %s100 = sphi 0, %s99
      %s116 = sphi 0, %s100
      %s122 = sphi 0, %s124
      %s125 = sphi 0, %s122
      %s126 = sphi 0, %s125
      %s142 = sphi 0, %s126
      %s148 = sphi 0, %s150
      %s151 = sphi 0, %s148
      %s152 = sphi 0, %s151
      %s168 = sphi 0, %s152
      %s174 = sphi 0, %s176
      %s177 = sphi 0, %s174
      %s178 = sphi 0, %s177
      %s194 = sphi 0, %s178
      %s200 = sphi 0, %s202
      %s203 = sphi 0, %s200
      %s204 = sphi 0, %s203
      %s220 = sphi 0, %s204
      %s226 = sphi 0, %s228
      %s229 = sphi 0, %s226
      %s230 = sphi 0, %s229
      %s246 = sphi 0, %s230
      %s252 = sphi 0, %s254
      %s255 = sphi 0, %s252
      %s256 = sphi 0, %s255
      %s272 = sphi 0, %s256
      %s278 = sphi 0, %s280
      %s281 = sphi 0, %s278
      %s282 = sphi 0, %s281
      %s298 = sphi 0, %s282
    $region4: #{e_net_forward.1} parent=1 // loop_header_branch
      %21 = sbr.rel (%p19) target = $region8
    $region5: #{e_net_forward.1} parent=1 // loop_body
      %s23 = ssub.s32 %s18, 1
      %s24 = ssub.s32 %s18, 2
      %s25 = sadd.s32 %s18, 1
      %s26 = ssub.s32 %s18, %s25
      %p27 = scmp.eq.s32.totalorder %s26, 0
      %s29 = sadd.s32 %s28, 1
      %s30 = scalar_select %p27, %s28, %s29
      %p33 = pneg %p27
      %p34 = scmp.eq.s32.totalorder %s18, 1
      %p35 = por %p33, %p34
      %p36 = scmp.ne.s32.totalorder %s28, %s31
      %p37 = scmp.eq.s32.totalorder %s18, 0
      %p38 = por %p36, %p37
      %p39 = scmp.ne.s32.totalorder %s28, %s31
      %p40 = scmp.eq.s32.totalorder %s23, 1
      %p41 = por %p39, %p40
      %p42 = scmp.ne.s32.totalorder %s31, %s32
      %p43 = scmp.eq.s32.totalorder %s23, 0
      %p44 = por %p42, %p43
      %p45 = scmp.ne.s32.totalorder %s31, %s32
      %p46 = scmp.eq.s32.totalorder %s24, 1
      %p47 = por %p45, %p46
      %p49 = scmp.ne.s32.totalorder %s32, %s48
      %p50 = scmp.eq.s32.totalorder %s24, 0
      %p51 = por %p49, %p50
      %s53 = sadd.s32 %s52, 1
      %p56 = scmp.eq.s32.totalorder %s18, 1
      %p57 = scmp.ne.s32.totalorder %s52, %s54
      %p58 = scmp.eq.s32.totalorder %s18, 0
      %p59 = por %p57, %p58
      %p60 = scmp.ne.s32.totalorder %s52, %s54
      %p61 = scmp.eq.s32.totalorder %s23, 1
      %p62 = por %p60, %p61
      %p63 = scmp.ne.s32.totalorder %s54, %s55
      %p64 = scmp.eq.s32.totalorder %s23, 0
      %p65 = por %p63, %p64
      %p66 = scmp.ne.s32.totalorder %s54, %s55
      %p67 = scmp.eq.s32.totalorder %s24, 1
      %p68 = por %p66, %p67
      %p70 = scmp.ne.s32.totalorder %s55, %s69
      %p71 = scmp.eq.s32.totalorder %s24, 0
      %p72 = por %p70, %p71
      %s74 = sadd.s32 %s73, 1
      %p77 = scmp.eq.s32.totalorder %s18, 1
      %p78 = scmp.ne.s32.totalorder %s73, %s75
      %p79 = scmp.eq.s32.totalorder %s18, 0
      %p80 = por %p78, %p79
      %p81 = scmp.ne.s32.totalorder %s73, %s75
      %p82 = scmp.eq.s32.totalorder %s23, 1
      %p83 = por %p81, %p82
      %p84 = scmp.ne.s32.totalorder %s75, %s76
      %p85 = scmp.eq.s32.totalorder %s23, 0
      %p86 = por %p84, %p85
      %p87 = scmp.ne.s32.totalorder %s75, %s76
      %p88 = scmp.eq.s32.totalorder %s24, 1
      %p89 = por %p87, %p88
      %p91 = scmp.ne.s32.totalorder %s76, %s90
      %p92 = scmp.eq.s32.totalorder %s24, 0
      %p93 = por %p91, %p92
      %s94 = ssub.s32 %s18, %s25
      %p95 = scmp.eq.s32.totalorder %s94, 0
      %s97 = sadd.s32 %s96, 1
      %s98 = scalar_select %p95, %s96, %s97
      %p101 = pneg %p95
      %p102 = scmp.eq.s32.totalorder %s18, 1
      %p103 = por %p101, %p102
      %p104 = scmp.ne.s32.totalorder %s96, %s99
      %p105 = scmp.eq.s32.totalorder %s18, 0
      %p106 = por %p104, %p105
      %p107 = scmp.ne.s32.totalorder %s96, %s99
      %p108 = scmp.eq.s32.totalorder %s23, 1
      %p109 = por %p107, %p108
      %p110 = scmp.ne.s32.totalorder %s99, %s100
      %p111 = scmp.eq.s32.totalorder %s23, 0
      %p112 = por %p110, %p111
      %p113 = scmp.ne.s32.totalorder %s99, %s100
      %p114 = scmp.eq.s32.totalorder %s24, 1
      %p115 = por %p113, %p114
      %p117 = scmp.ne.s32.totalorder %s100, %s116
      %p118 = scmp.eq.s32.totalorder %s24, 0
      %p119 = por %p117, %p118
      %s120 = ssub.s32 %s18, %s25
      %p121 = scmp.eq.s32.totalorder %s120, 0
      %s123 = sadd.s32 %s122, 1
      %s124 = scalar_select %p121, %s122, %s123
      %p127 = pneg %p121
      %p128 = scmp.eq.s32.totalorder %s18, 1
      %p129 = por %p127, %p128
      %p130 = scmp.ne.s32.totalorder %s122, %s125
      %p131 = scmp.eq.s32.totalorder %s18, 0
      %p132 = por %p130, %p131
      %p133 = scmp.ne.s32.totalorder %s122, %s125
      %p134 = scmp.eq.s32.totalorder %s23, 1
      %p135 = por %p133, %p134
      %p136 = scmp.ne.s32.totalorder %s125, %s126
      %p137 = scmp.eq.s32.totalorder %s23, 0
      %p138 = por %p136, %p137
      %p139 = scmp.ne.s32.totalorder %s125, %s126
      %p140 = scmp.eq.s32.totalorder %s24, 1
      %p141 = por %p139, %p140
      %p143 = scmp.ne.s32.totalorder %s126, %s142
      %p144 = scmp.eq.s32.totalorder %s24, 0
      %p145 = por %p143, %p144
      %s146 = ssub.s32 %s18, %s25
      %p147 = scmp.eq.s32.totalorder %s146, 0
      %s149 = sadd.s32 %s148, 1
      %s150 = scalar_select %p147, %s148, %s149
      %p153 = pneg %p147
      %p154 = scmp.eq.s32.totalorder %s18, 1
      %p155 = por %p153, %p154
      %p156 = scmp.ne.s32.totalorder %s148, %s151
      %p157 = scmp.eq.s32.totalorder %s18, 0
      %p158 = por %p156, %p157
      %p159 = scmp.ne.s32.totalorder %s148, %s151
      %p160 = scmp.eq.s32.totalorder %s23, 1
      %p161 = por %p159, %p160
      %p162 = scmp.ne.s32.totalorder %s151, %s152
      %p163 = scmp.eq.s32.totalorder %s23, 0
      %p164 = por %p162, %p163
      %p165 = scmp.ne.s32.totalorder %s151, %s152
      %p166 = scmp.eq.s32.totalorder %s24, 1
      %p167 = por %p165, %p166
      %p169 = scmp.ne.s32.totalorder %s152, %s168
      %p170 = scmp.eq.s32.totalorder %s24, 0
      %p171 = por %p169, %p170
      %s172 = ssub.s32 %s18, %s25
      %p173 = scmp.eq.s32.totalorder %s172, 0
      %s175 = sadd.s32 %s174, 1
      %s176 = scalar_select %p173, %s174, %s175
      %p179 = pneg %p173
      %p180 = scmp.eq.s32.totalorder %s18, 1
      %p181 = por %p179, %p180
      %p182 = scmp.ne.s32.totalorder %s174, %s177
      %p183 = scmp.eq.s32.totalorder %s18, 0
      %p184 = por %p182, %p183
      %p185 = scmp.ne.s32.totalorder %s174, %s177
      %p186 = scmp.eq.s32.totalorder %s23, 1
      %p187 = por %p185, %p186
      %p188 = scmp.ne.s32.totalorder %s177, %s178
      %p189 = scmp.eq.s32.totalorder %s23, 0
      %p190 = por %p188, %p189
      %p191 = scmp.ne.s32.totalorder %s177, %s178
      %p192 = scmp.eq.s32.totalorder %s24, 1
      %p193 = por %p191, %p192
      %p195 = scmp.ne.s32.totalorder %s178, %s194
      %p196 = scmp.eq.s32.totalorder %s24, 0
      %p197 = por %p195, %p196
      %s198 = ssub.s32 %s18, %s25
      %p199 = scmp.eq.s32.totalorder %s198, 0
      %s201 = sadd.s32 %s200, 1
      %s202 = scalar_select %p199, %s200, %s201
      %p205 = pneg %p199
      %p206 = scmp.eq.s32.totalorder %s18, 1
      %p207 = por %p205, %p206
      %p208 = scmp.ne.s32.totalorder %s200, %s203
      %p209 = scmp.eq.s32.totalorder %s18, 0
      %p210 = por %p208, %p209
      %p211 = scmp.ne.s32.totalorder %s200, %s203
      %p212 = scmp.eq.s32.totalorder %s23, 1
      %p213 = por %p211, %p212
      %p214 = scmp.ne.s32.totalorder %s203, %s204
      %p215 = scmp.eq.s32.totalorder %s23, 0
      %p216 = por %p214, %p215
      %p217 = scmp.ne.s32.totalorder %s203, %s204
      %p218 = scmp.eq.s32.totalorder %s24, 1
      %p219 = por %p217, %p218
      %p221 = scmp.ne.s32.totalorder %s204, %s220
      %p222 = scmp.eq.s32.totalorder %s24, 0
      %p223 = por %p221, %p222
      %s224 = ssub.s32 %s18, %s25
      %p225 = scmp.eq.s32.totalorder %s224, 0
      %s227 = sadd.s32 %s226, 1
      %s228 = scalar_select %p225, %s226, %s227
      %p231 = pneg %p225
      %p232 = scmp.eq.s32.totalorder %s18, 1
      %p233 = por %p231, %p232
      %p234 = scmp.ne.s32.totalorder %s226, %s229
      %p235 = scmp.eq.s32.totalorder %s18, 0
      %p236 = por %p234, %p235
      %p237 = scmp.ne.s32.totalorder %s226, %s229
      %p238 = scmp.eq.s32.totalorder %s23, 1
      %p239 = por %p237, %p238
      %p240 = scmp.ne.s32.totalorder %s229, %s230
      %p241 = scmp.eq.s32.totalorder %s23, 0
      %p242 = por %p240, %p241
      %p243 = scmp.ne.s32.totalorder %s229, %s230
      %p244 = scmp.eq.s32.totalorder %s24, 1
      %p245 = por %p243, %p244
      %p247 = scmp.ne.s32.totalorder %s230, %s246
      %p248 = scmp.eq.s32.totalorder %s24, 0
      %p249 = por %p247, %p248
      %s250 = ssub.s32 %s18, %s25
      %p251 = scmp.eq.s32.totalorder %s250, 0
      %s253 = sadd.s32 %s252, 1
      %s254 = scalar_select %p251, %s252, %s253
      %p257 = pneg %p251
      %p258 = scmp.eq.s32.totalorder %s18, 1
      %p259 = por %p257, %p258
      %p260 = scmp.ne.s32.totalorder %s252, %s255
      %p261 = scmp.eq.s32.totalorder %s18, 0
      %p262 = por %p260, %p261
      %p263 = scmp.ne.s32.totalorder %s252, %s255
      %p264 = scmp.eq.s32.totalorder %s23, 1
      %p265 = por %p263, %p264
      %p266 = scmp.ne.s32.totalorder %s255, %s256
      %p267 = scmp.eq.s32.totalorder %s23, 0
      %p268 = por %p266, %p267
      %p269 = scmp.ne.s32.totalorder %s255, %s256
      %p270 = scmp.eq.s32.totalorder %s24, 1
      %p271 = por %p269, %p270
      %p273 = scmp.ne.s32.totalorder %s256, %s272
      %p274 = scmp.eq.s32.totalorder %s24, 0
      %p275 = por %p273, %p274
      %s276 = ssub.s32 %s18, %s25
      %p277 = scmp.eq.s32.totalorder %s276, 0
      %s279 = sadd.s32 %s278, 1
      %s280 = scalar_select %p277, %s278, %s279
      %p283 = pneg %p277
      %p284 = scmp.eq.s32.totalorder %s18, 1
      %p285 = por %p283, %p284
      %p286 = scmp.ne.s32.totalorder %s278, %s281
      %p287 = scmp.eq.s32.totalorder %s18, 0
      %p288 = por %p286, %p287
      %p289 = scmp.ne.s32.totalorder %s278, %s281
      %p290 = scmp.eq.s32.totalorder %s23, 1
      %p291 = por %p289, %p290
      %p292 = scmp.ne.s32.totalorder %s281, %s282
      %p293 = scmp.eq.s32.totalorder %s23, 0
      %p294 = por %p292, %p293
      %p295 = scmp.ne.s32.totalorder %s281, %s282
      %p296 = scmp.eq.s32.totalorder %s24, 1
      %p297 = por %p295, %p296
      %p299 = scmp.ne.s32.totalorder %s282, %s298
      %p300 = scmp.eq.s32.totalorder %s24, 0
      %p301 = por %p299, %p300
      %p302 = scmp.le.s32.totalorder 1, %s18
      %p303 = scmp.lt.s32.totalorder %s18, 3
      %p304 = pnand %p302, %p303
      %p305 = pneg %p304
      // Predicated region
      $region9: #{e_net_forward.1} parent=5 // pred_check
        _
      $region10: #{e_net_forward.1} parent=5 // pred_check_branch
        %307 = sbr.rel (%p304) target = $region12
      $region11: #{e_net_forward.1} parent=5 // pred_region
        %s308 = ssub.s32 %s18, 1
        // Predicated region
        $region13: #{e_net_forward.1} parent=11 // pred_check
          %p309 = pneg %p65
        $region14: #{e_net_forward.1} parent=11 // pred_check_branch
          %311 = sbr.rel (%p309) target = $region16
        $region15: #{e_net_forward.1} parent=11 // pred_region
          %313 = vsyncadd [#allocation3], 0
          %s315 = sshll.u32 %s1, 4
          %s316 = int_to_ptr.hbm [resolvable:$true] %s315
          %s317 = sshll.u32 [#allocation2], 4
          %s318 = int_to_ptr.vmem [resolvable:$true] %s317
          %320 = dma.hbm_to_vmem [thread:$0]  %s316, 640, %s318, [#allocation3]
        $region16: #{e_net_forward.1} parent=11 // pred_fallthru
          _
        // Predicated region
        $region17: #{e_net_forward.1} parent=11 // pred_check
          %p321 = pneg %p86
        $region18: #{e_net_forward.1} parent=11 // pred_check_branch
          %323 = sbr.rel (%p321) target = $region20
        $region19: #{e_net_forward.1} parent=11 // pred_region
          %325 = vsyncadd [#allocation5], 0
          %s327 = sshll.u32 %s2, 4
          %s328 = int_to_ptr.hbm [resolvable:$true] %s327
          %s329 = sshll.u32 [#allocation4], 4
          %s330 = int_to_ptr.vmem [resolvable:$true] %s329
          %332 = dma.hbm_to_vmem [thread:$0]  %s328, 160, %s330, [#allocation5]
        $region20: #{e_net_forward.1} parent=11 // pred_fallthru
          _
      $region12: #{e_net_forward.1} parent=5 // pred_fallthru
        _
      %p333 = scmp.lt.s32.totalorder %s18, 2
      // Predicated region
      $region21: #{e_net_forward.1} parent=5 // pred_check
        %p334 = pneg %p333
      $region22: #{e_net_forward.1} parent=5 // pred_check_branch
        %336 = sbr.rel (%p334) target = $region24
      $region23: #{e_net_forward.1} parent=5 // pred_region
        // Predicated region
        $region25: #{e_net_forward.1} parent=23 // pred_check
          %p337 = pneg %p38
        $region26: #{e_net_forward.1} parent=23 // pred_check_branch
          %339 = sbr.rel (%p337) target = $region28
        $region27: #{e_net_forward.1} parent=23 // pred_region
          %p340 = scmp.lt.s32.totalorder %s18, 1
          %s341 = scalar_select %p340, %s18, 1
          %s342 = smul.addr %s341, 64
          %s343 = smul.addr %s342, 4
          %s344 = scalar_lea.vmem %s0, %s343
        $region28: #{e_net_forward.1} parent=23 // pred_fallthru
          _
        // Predicated region
        $region29: #{e_net_forward.1} parent=23 // pred_check
          %p345 = pneg %p106
        $region30: #{e_net_forward.1} parent=23 // pred_check_branch
          %347 = sbr.rel (%p345) target = $region32
        $region31: #{e_net_forward.1} parent=23 // pred_region
          %s348 = sand.u32 %s18, 1
          %s349 = scalar_lea.sflag [#allocation3], %s348
          %s350 = sand.u32 %s96, 1
          %s351 = smul.addr %s350, 2560
          %s352 = scalar_lea.vmem [#allocation6], %s351
          %354 = vsyncadd %s349, 0
          %s355 = smul.addr %s18, 320
          %s356 = smul.addr %s355, 8
          %s357 = scalar_lea.hbm %s3, %s356
          %s358 = sshll.u32 %s357, 4
          %s359 = int_to_ptr.hbm [resolvable:$true] %s358
          %s360 = sshll.u32 %s352, 4
          %s361 = int_to_ptr.vmem [resolvable:$true] %s360
          %366 = dma.hbm_to_vmem [thread:$0]  %s359, 40960, %s361, %s349, 1024, 1024, 64
        $region32: #{e_net_forward.1} parent=23 // pred_fallthru
          _
        // Predicated region
        $region33: #{e_net_forward.1} parent=23 // pred_check
          %p367 = pneg %p132
        $region34: #{e_net_forward.1} parent=23 // pred_check_branch
          %369 = sbr.rel (%p367) target = $region36
        $region35: #{e_net_forward.1} parent=23 // pred_region
          %s370 = sand.u32 %s18, 1
          %s371 = scalar_lea.sflag [#allocation3], %s370
          %s372 = sand.u32 %s122, 1
          %s373 = smul.addr %s372, 8
          %s374 = scalar_lea.vmem [#allocation7], %s373
          %376 = vsyncadd %s371, 0
          %s377 = smul.addr %s18, 8
          %s378 = scalar_lea.hbm %s4, %s377
          %s380 = sshll.u32 %s378, 4
          %s381 = int_to_ptr.hbm [resolvable:$true] %s380
          %s382 = sshll.u32 %s374, 4
          %s383 = int_to_ptr.vmem [resolvable:$true] %s382
          %385 = dma.hbm_to_vmem [thread:$0]  %s381, 128, %s383, %s371
        $region36: #{e_net_forward.1} parent=23 // pred_fallthru
          _
        // Predicated region
        $region37: #{e_net_forward.1} parent=23 // pred_check
          %p386 = pneg %p158
        $region38: #{e_net_forward.1} parent=23 // pred_check_branch
          %388 = sbr.rel (%p386) target = $region40
        $region39: #{e_net_forward.1} parent=23 // pred_region
          %s389 = sand.u32 %s18, 1
          %s390 = scalar_lea.sflag [#allocation3], %s389
          %s391 = sand.u32 %s148, 1
          %s392 = smul.addr %s391, 8
          %s393 = scalar_lea.vmem [#allocation8], %s392
          %395 = vsyncadd %s390, 0
          %s396 = smul.addr %s18, 8
          %s397 = scalar_lea.hbm %s5, %s396
          %s399 = sshll.u32 %s397, 4
          %s400 = int_to_ptr.hbm [resolvable:$true] %s399
          %s401 = sshll.u32 %s393, 4
          %s402 = int_to_ptr.vmem [resolvable:$true] %s401
          %404 = dma.hbm_to_vmem [thread:$0]  %s400, 128, %s402, %s390
        $region40: #{e_net_forward.1} parent=23 // pred_fallthru
          _
        // Predicated region
        $region41: #{e_net_forward.1} parent=23 // pred_check
          %p405 = pneg %p184
        $region42: #{e_net_forward.1} parent=23 // pred_check_branch
          %407 = sbr.rel (%p405) target = $region44
        $region43: #{e_net_forward.1} parent=23 // pred_region
          %s408 = sand.u32 %s18, 1
          %s409 = scalar_lea.sflag [#allocation3], %s408
          %s410 = sand.u32 %s174, 1
          %s411 = smul.addr %s410, 1024
          %s412 = scalar_lea.vmem [#allocation9], %s411
          %414 = vsyncadd %s409, 0
          %s415 = smul.addr %s18, 128
          %s416 = smul.addr %s415, 8
          %s417 = scalar_lea.hbm %s6, %s416
          %s418 = sshll.u32 %s417, 4
          %s419 = int_to_ptr.hbm [resolvable:$true] %s418
          %s420 = sshll.u32 %s412, 4
          %s421 = int_to_ptr.vmem [resolvable:$true] %s420
          %426 = dma.hbm_to_vmem [thread:$0]  %s419, 16384, %s421, %s409, 512, 512, 32
        $region44: #{e_net_forward.1} parent=23 // pred_fallthru
          _
        // Predicated region
        $region45: #{e_net_forward.1} parent=23 // pred_check
          %p427 = pneg %p210
        $region46: #{e_net_forward.1} parent=23 // pred_check_branch
          %429 = sbr.rel (%p427) target = $region48
        $region47: #{e_net_forward.1} parent=23 // pred_region
          %s430 = sand.u32 %s18, 1
          %s431 = scalar_lea.sflag [#allocation3], %s430
          %s432 = sand.u32 %s200, 1
          %s433 = smul.addr %s432, 4
          %s434 = scalar_lea.vmem [#allocation10], %s433
          %436 = vsyncadd %s431, 0
          %s437 = smul.addr %s18, 4
          %s438 = scalar_lea.hbm %s7, %s437
          %s440 = sshll.u32 %s438, 4
          %s441 = int_to_ptr.hbm [resolvable:$true] %s440
          %s442 = sshll.u32 %s434, 4
          %s443 = int_to_ptr.vmem [resolvable:$true] %s442
          %445 = dma.hbm_to_vmem [thread:$0]  %s441, 64, %s443, %s431
        $region48: #{e_net_forward.1} parent=23 // pred_fallthru
          _
        // Predicated region
        $region49: #{e_net_forward.1} parent=23 // pred_check
          %p446 = pneg %p236
        $region50: #{e_net_forward.1} parent=23 // pred_check_branch
          %448 = sbr.rel (%p446) target = $region52
        $region51: #{e_net_forward.1} parent=23 // pred_region
          %s449 = sand.u32 %s18, 1
          %s450 = scalar_lea.sflag [#allocation3], %s449
          %s451 = sand.u32 %s226, 1
          %s452 = smul.addr %s451, 4
          %s453 = scalar_lea.vmem [#allocation11], %s452
          %455 = vsyncadd %s450, 0
          %s456 = smul.addr %s18, 4
          %s457 = scalar_lea.hbm %s8, %s456
          %s459 = sshll.u32 %s457, 4
          %s460 = int_to_ptr.hbm [resolvable:$true] %s459
          %s461 = sshll.u32 %s453, 4
          %s462 = int_to_ptr.vmem [resolvable:$true] %s461
          %464 = dma.hbm_to_vmem [thread:$0]  %s460, 64, %s462, %s450
        $region52: #{e_net_forward.1} parent=23 // pred_fallthru
          _
        // Predicated region
        $region53: #{e_net_forward.1} parent=23 // pred_check
          %p465 = pneg %p262
        $region54: #{e_net_forward.1} parent=23 // pred_check_branch
          %467 = sbr.rel (%p465) target = $region56
        $region55: #{e_net_forward.1} parent=23 // pred_region
          %s468 = sand.u32 %s18, 1
          %s469 = scalar_lea.sflag [#allocation3], %s468
          %s470 = sand.u32 %s252, 1
          %s471 = smul.addr %s470, 4
          %s472 = scalar_lea.vmem [#allocation12], %s471
          %474 = vsyncadd %s469, 0
          %s475 = smul.addr %s18, 4
          %s476 = scalar_lea.hbm %s9, %s475
          %s478 = sshll.u32 %s476, 4
          %s479 = int_to_ptr.hbm [resolvable:$true] %s478
          %s480 = sshll.u32 %s472, 4
          %s481 = int_to_ptr.vmem [resolvable:$true] %s480
          %483 = dma.hbm_to_vmem [thread:$0]  %s479, 64, %s481, %s469
        $region56: #{e_net_forward.1} parent=23 // pred_fallthru
          _
      $region24: #{e_net_forward.1} parent=5 // pred_fallthru
        _
      %p484 = scmp.le.s32.totalorder 1, %s18
      %p485 = scmp.lt.s32.totalorder %s18, 3
      %p486 = pnand %p484, %p485
      %p487 = pneg %p486
      // Predicated region
      $region57: #{e_net_forward.1} parent=5 // pred_check
        _
      $region58: #{e_net_forward.1} parent=5 // pred_check_branch
        %489 = sbr.rel (%p486) target = $region60
      $region59: #{e_net_forward.1} parent=5 // pred_region
        %s490 = ssub.s32 %s18, 1
        // Predicated region
        $region61: #{e_net_forward.1} parent=59 // pred_check
          %p491 = pneg %p65
        $region62: #{e_net_forward.1} parent=59 // pred_check_branch
          %493 = sbr.rel (%p491) target = $region64
        $region63: #{e_net_forward.1} parent=59 // pred_region
          %495 = dma.done [#allocation3], 640
        $region64: #{e_net_forward.1} parent=59 // pred_fallthru
          _
        // Predicated region
        $region65: #{e_net_forward.1} parent=59 // pred_check
          %p496 = pneg %p86
        $region66: #{e_net_forward.1} parent=59 // pred_check_branch
          %498 = sbr.rel (%p496) target = $region68
        $region67: #{e_net_forward.1} parent=59 // pred_region
          %500 = dma.done [#allocation5], 160
        $region68: #{e_net_forward.1} parent=59 // pred_fallthru
          _
        %s501 = sand.u32 %s23, 1
        %s502 = scalar_lea.sflag [#allocation3], %s501
        %s503 = sand.u32 %s99, 1
        %s504 = smul.addr %s503, 2560
        %s505 = scalar_lea.vmem [#allocation6], %s504
        // Predicated region
        $region69: #{e_net_forward.1} parent=59 // pred_check
          %p506 = pneg %p112
        $region70: #{e_net_forward.1} parent=59 // pred_check_branch
          %508 = sbr.rel (%p506) target = $region72
        $region71: #{e_net_forward.1} parent=59 // pred_region
          %510 = dma.done %s502, 40960
        $region72: #{e_net_forward.1} parent=59 // pred_fallthru
          _
        %s511 = sand.u32 %s23, 1
        %s512 = scalar_lea.sflag [#allocation3], %s511
        %s513 = sand.u32 %s125, 1
        %s514 = smul.addr %s513, 8
        %s515 = scalar_lea.vmem [#allocation7], %s514
        // Predicated region
        $region73: #{e_net_forward.1} parent=59 // pred_check
          %p516 = pneg %p138
        $region74: #{e_net_forward.1} parent=59 // pred_check_branch
          %518 = sbr.rel (%p516) target = $region76
        $region75: #{e_net_forward.1} parent=59 // pred_region
          %520 = dma.done %s512, 128
        $region76: #{e_net_forward.1} parent=59 // pred_fallthru
          _
        %s521 = sand.u32 %s23, 1
        %s522 = scalar_lea.sflag [#allocation3], %s521
        %s523 = sand.u32 %s151, 1
        %s524 = smul.addr %s523, 8
        %s525 = scalar_lea.vmem [#allocation8], %s524
        // Predicated region
        $region77: #{e_net_forward.1} parent=59 // pred_check
          %p526 = pneg %p164
        $region78: #{e_net_forward.1} parent=59 // pred_check_branch
          %528 = sbr.rel (%p526) target = $region80
        $region79: #{e_net_forward.1} parent=59 // pred_region
          %530 = dma.done %s522, 128
        $region80: #{e_net_forward.1} parent=59 // pred_fallthru
          _
        %s531 = sand.u32 %s23, 1
        %s532 = scalar_lea.sflag [#allocation3], %s531
        %s533 = sand.u32 %s177, 1
        %s534 = smul.addr %s533, 1024
        %s535 = scalar_lea.vmem [#allocation9], %s534
        // Predicated region
        $region81: #{e_net_forward.1} parent=59 // pred_check
          %p536 = pneg %p190
        $region82: #{e_net_forward.1} parent=59 // pred_check_branch
          %538 = sbr.rel (%p536) target = $region84
        $region83: #{e_net_forward.1} parent=59 // pred_region
          %540 = dma.done %s532, 16384
        $region84: #{e_net_forward.1} parent=59 // pred_fallthru
          _
        %s541 = sand.u32 %s23, 1
        %s542 = scalar_lea.sflag [#allocation3], %s541
        %s543 = sand.u32 %s203, 1
        %s544 = smul.addr %s543, 4
        %s545 = scalar_lea.vmem [#allocation10], %s544
        // Predicated region
        $region85: #{e_net_forward.1} parent=59 // pred_check
          %p546 = pneg %p216
        $region86: #{e_net_forward.1} parent=59 // pred_check_branch
          %548 = sbr.rel (%p546) target = $region88
        $region87: #{e_net_forward.1} parent=59 // pred_region
          %550 = dma.done %s542, 64
        $region88: #{e_net_forward.1} parent=59 // pred_fallthru
          _
        %s551 = sand.u32 %s23, 1
        %s552 = scalar_lea.sflag [#allocation3], %s551
        %s553 = sand.u32 %s229, 1
        %s554 = smul.addr %s553, 4
        %s555 = scalar_lea.vmem [#allocation11], %s554
        // Predicated region
        $region89: #{e_net_forward.1} parent=59 // pred_check
          %p556 = pneg %p242
        $region90: #{e_net_forward.1} parent=59 // pred_check_branch
          %558 = sbr.rel (%p556) target = $region92
        $region91: #{e_net_forward.1} parent=59 // pred_region
          %560 = dma.done %s552, 64
        $region92: #{e_net_forward.1} parent=59 // pred_fallthru
          _
        %s561 = sand.u32 %s23, 1
        %s562 = scalar_lea.sflag [#allocation3], %s561
        %s563 = sand.u32 %s255, 1
        %s564 = smul.addr %s563, 4
        %s565 = scalar_lea.vmem [#allocation12], %s564
        // Predicated region
        $region93: #{e_net_forward.1} parent=59 // pred_check
          %p566 = pneg %p268
        $region94: #{e_net_forward.1} parent=59 // pred_check_branch
          %568 = sbr.rel (%p566) target = $region96
        $region95: #{e_net_forward.1} parent=59 // pred_region
          %570 = dma.done %s562, 64
        $region96: #{e_net_forward.1} parent=59 // pred_fallthru
          _
        %p571 = scmp.lt.s32.totalorder %s23, 1
        %s572 = scalar_select %p571, %s23, 1
        %s573 = smul.addr %s572, 64
        %s574 = smul.addr %s573, 4
        %s575 = scalar_lea.vmem %s0, %s574
        %p576 = pneg %p44
        %p577 = pneg %p41
        %p578 = pneg %p65
        %p579 = pneg %p62
        %p580 = pneg %p86
        %p581 = pneg %p83
        %s582 = sand.u32 %s23, 1
        %s583 = scalar_lea.sflag [#allocation3], %s582
        %s584 = sand.u32 %s99, 1
        %s585 = smul.addr %s584, 2560
        %s586 = scalar_lea.vmem [#allocation6], %s585
        %p587 = pneg %p112
        %p588 = pneg %p109
        %s589 = sand.u32 %s23, 1
        %s590 = scalar_lea.sflag [#allocation3], %s589
        %s591 = sand.u32 %s125, 1
        %s592 = smul.addr %s591, 8
        %s593 = scalar_lea.vmem [#allocation7], %s592
        %p594 = pneg %p138
        %p595 = pneg %p135
        %s596 = sand.u32 %s23, 1
        %s597 = scalar_lea.sflag [#allocation3], %s596
        %s598 = sand.u32 %s151, 1
        %s599 = smul.addr %s598, 8
        %s600 = scalar_lea.vmem [#allocation8], %s599
        %p601 = pneg %p164
        %p602 = pneg %p161
        %s603 = sand.u32 %s23, 1
        %s604 = scalar_lea.sflag [#allocation3], %s603
        %s605 = sand.u32 %s177, 1
        %s606 = smul.addr %s605, 1024
        %s607 = scalar_lea.vmem [#allocation9], %s606
        %p608 = pneg %p190
        %p609 = pneg %p187
        %s610 = sand.u32 %s23, 1
        %s611 = scalar_lea.sflag [#allocation3], %s610
        %s612 = sand.u32 %s203, 1
        %s613 = smul.addr %s612, 4
        %s614 = scalar_lea.vmem [#allocation10], %s613
        %p615 = pneg %p216
        %p616 = pneg %p213
        %s617 = sand.u32 %s23, 1
        %s618 = scalar_lea.sflag [#allocation3], %s617
        %s619 = sand.u32 %s229, 1
        %s620 = smul.addr %s619, 4
        %s621 = scalar_lea.vmem [#allocation11], %s620
        %p622 = pneg %p242
        %p623 = pneg %p239
        %s624 = sand.u32 %s23, 1
        %s625 = scalar_lea.sflag [#allocation3], %s624
        %s626 = sand.u32 %s255, 1
        %s627 = smul.addr %s626, 4
        %s628 = scalar_lea.vmem [#allocation12], %s627
        %p629 = pneg %p268
        %p630 = pneg %p265
        %p631 = pneg %p294
        %p632 = pneg %p291
        %p633 = scmp.lt.s32.totalorder %s23, 1
        %s634 = scalar_select %p633, %s23, 1
        %s635 = smul.addr %s634, 2
        %s636 = scalar_lea.vmem %s10, %s635
        %p637 = scmp.lt.s32.totalorder %s23, 1
        %s638 = scalar_select %p637, %s23, 1
        %s639 = smul.addr %s638, 64
        %s640 = smul.addr %s639, 4
        %s641 = scalar_lea.vmem %s0, %s640
        %p642 = scmp.lt.s32.totalorder %s23, 1
        %s643 = scalar_select %p642, %s23, 1
        %s644 = smul.addr %s643, 2
        %s645 = scalar_lea.vmem %s10, %s644
        %v647 = vld [vmem:[%s641] sm:$0xf]
        %v648 = vld [vmem:[%s641 + $0x4] sm:$0xf]
        %v649 = vld [vmem:[%s641 + $0x8] sm:$0xf]
        %v650 = vld [vmem:[%s641 + $0xc] sm:$0xf]
        %v651 = vld [vmem:[%s641 + $0x10] sm:$0xf]
        %v652 = vld [vmem:[%s641 + $0x14] sm:$0xf]
        %v653 = vld [vmem:[%s641 + $0x18] sm:$0xf]
        %v654 = vld [vmem:[%s641 + $0x1c] sm:$0xf]
        %v655 = vld [vmem:[%s641 + $0x20] sm:$0xf]
        %v656 = vld [vmem:[%s641 + $0x24] sm:$0xf]
        %v657 = vld [vmem:[%s641 + $0x28] sm:$0xf]
        %v658 = vld [vmem:[%s641 + $0x2c] sm:$0xf]
        %v659 = vld [vmem:[%s641 + $0x30] sm:$0xf]
        %v660 = vld [vmem:[%s641 + $0x34] sm:$0xf]
        %v661 = vld [vmem:[%s641 + $0x38] sm:$0xf]
        %v662 = vld [vmem:[%s641 + $0x3c] sm:$0xf]
        %v663 = vld [vmem:[%s641 + $0x40] sm:$0xf]
        %v664 = vld [vmem:[%s641 + $0x44] sm:$0xf]
        %v665 = vld [vmem:[%s641 + $0x48] sm:$0xf]
        %v666 = vld [vmem:[%s641 + $0x4c] sm:$0xf]
        %v667 = vld [vmem:[%s641 + $0x50] sm:$0xf]
        %v668 = vld [vmem:[%s641 + $0x54] sm:$0xf]
        %v669 = vld [vmem:[%s641 + $0x58] sm:$0xf]
        %v670 = vld [vmem:[%s641 + $0x5c] sm:$0xf]
        %v671 = vld [vmem:[%s641 + $0x60] sm:$0xf]
        %v672 = vld [vmem:[%s641 + $0x64] sm:$0xf]
        %v673 = vld [vmem:[%s641 + $0x68] sm:$0xf]
        %v674 = vld [vmem:[%s641 + $0x6c] sm:$0xf]
        %v675 = vld [vmem:[%s641 + $0x70] sm:$0xf]
        %v676 = vld [vmem:[%s641 + $0x74] sm:$0xf]
        %v677 = vld [vmem:[%s641 + $0x78] sm:$0xf]
        %v678 = vld [vmem:[%s641 + $0x7c] sm:$0xf]
        %v679 = vld [vmem:[%s641 + $0x80] sm:$0xf]
        %v680 = vld [vmem:[%s641 + $0x84] sm:$0xf]
        %v681 = vld [vmem:[%s641 + $0x88] sm:$0xf]
        %v682 = vld [vmem:[%s641 + $0x8c] sm:$0xf]
        %v683 = vld [vmem:[%s641 + $0x90] sm:$0xf]
        %v684 = vld [vmem:[%s641 + $0x94] sm:$0xf]
        %v685 = vld [vmem:[%s641 + $0x98] sm:$0xf]
        %v686 = vld [vmem:[%s641 + $0x9c] sm:$0xf]
        %v687 = vld [vmem:[%s641 + $0xa0] sm:$0xf]
        %v688 = vld [vmem:[%s641 + $0xa4] sm:$0xf]
        %v689 = vld [vmem:[%s641 + $0xa8] sm:$0xf]
        %v690 = vld [vmem:[%s641 + $0xac] sm:$0xf]
        %v691 = vld [vmem:[%s641 + $0xb0] sm:$0xf]
        %v692 = vld [vmem:[%s641 + $0xb4] sm:$0xf]
        %v693 = vld [vmem:[%s641 + $0xb8] sm:$0xf]
        %v694 = vld [vmem:[%s641 + $0xbc] sm:$0xf]
        %v695 = vld [vmem:[%s641 + $0xc0] sm:$0xf]
        %v696 = vld [vmem:[%s641 + $0xc4] sm:$0xf]
        %v697 = vld [vmem:[%s641 + $0xc8] sm:$0xf]
        %v698 = vld [vmem:[%s641 + $0xcc] sm:$0xf]
        %v699 = vld [vmem:[%s641 + $0xd0] sm:$0xf]
        %v700 = vld [vmem:[%s641 + $0xd4] sm:$0xf]
        %v701 = vld [vmem:[%s641 + $0xd8] sm:$0xf]
        %v702 = vld [vmem:[%s641 + $0xdc] sm:$0xf]
        %v703 = vld [vmem:[%s641 + $0xe0] sm:$0xf]
        %v704 = vld [vmem:[%s641 + $0xe4] sm:$0xf]
        %v705 = vld [vmem:[%s641 + $0xe8] sm:$0xf]
        %v706 = vld [vmem:[%s641 + $0xec] sm:$0xf]
        %v707 = vld [vmem:[%s641 + $0xf0] sm:$0xf]
        %v708 = vld [vmem:[%s641 + $0xf4] sm:$0xf]
        %v709 = vld [vmem:[%s641 + $0xf8] sm:$0xf]
        %v710 = vld [vmem:[%s641 + $0xfc] sm:$0xf]
        %v711 = vld [vmem:[#allocation2] sm:$0xff]
        %v712 = vld [vmem:[#allocation2 + $0x8] sm:$0xff]
        %v713 = vld [vmem:[#allocation2 + $0x10] sm:$0xff]
        %v714 = vld [vmem:[#allocation2 + $0x18] sm:$0xff]
        %v715 = vld [vmem:[#allocation2 + $0x20] sm:$0xff]
        %v716 = vld [vmem:[#allocation4] sm:$0xff]
        %v717 = vld [vmem:[#allocation4 + $0x8] sm:$0x3]
        %v720 = vperm.slane %v716, 0
        %v721 = vperm.slane %v716, 1
        %v722 = vperm.slane %v716, 2
        %v723 = vperm.slane %v716, 3
        %v724 = vperm.slane %v716, 4
        %v725 = vperm.slane %v716, 5
        %v726 = vperm.slane %v716, 6
        %v727 = vperm.slane %v716, 7
        %v728 = vperm.slane %v717, 0
        %v729 = vperm.slane %v717, 1
        %v804 = vunpack.c.l.b16 %v647
        %v805 = vunpack.c.l.b16 %v648
        %v806 = vunpack.c.l.b16 %v649
        %v807 = vunpack.c.l.b16 %v650
        %v808 = vunpack.c.l.b16 %v651
        %v809 = vunpack.c.l.b16 %v652
        %v810 = vunpack.c.l.b16 %v653
        %v811 = vunpack.c.l.b16 %v654
        %v812 = vunpack.c.l.b16 %v655
        %v813 = vunpack.c.l.b16 %v656
        %v814 = vunpack.c.l.b16 %v657
        %v815 = vunpack.c.l.b16 %v658
        %v816 = vunpack.c.l.b16 %v659
        %v817 = vunpack.c.l.b16 %v660
        %v818 = vunpack.c.l.b16 %v661
        %v819 = vunpack.c.l.b16 %v662
        %v820 = vunpack.c.l.b16 %v663
        %v821 = vunpack.c.l.b16 %v664
        %v822 = vunpack.c.l.b16 %v665
        %v823 = vunpack.c.l.b16 %v666
        %v824 = vunpack.c.l.b16 %v667
        %v825 = vunpack.c.l.b16 %v668
        %v826 = vunpack.c.l.b16 %v669
        %v827 = vunpack.c.l.b16 %v670
        %v828 = vunpack.c.l.b16 %v671
        %v829 = vunpack.c.l.b16 %v672
        %v830 = vunpack.c.l.b16 %v673
        %v831 = vunpack.c.l.b16 %v674
        %v832 = vunpack.c.l.b16 %v675
        %v833 = vunpack.c.l.b16 %v676
        %v834 = vunpack.c.l.b16 %v677
        %v835 = vunpack.c.l.b16 %v678
        %v836 = vunpack.c.l.b16 %v679
        %v837 = vunpack.c.l.b16 %v680
        %v838 = vunpack.c.l.b16 %v681
        %v839 = vunpack.c.l.b16 %v682
        %v840 = vunpack.c.l.b16 %v683
        %v841 = vunpack.c.l.b16 %v684
        %v842 = vunpack.c.l.b16 %v685
        %v843 = vunpack.c.l.b16 %v686
        %v844 = vunpack.c.l.b16 %v687
        %v845 = vunpack.c.l.b16 %v688
        %v846 = vunpack.c.l.b16 %v689
        %v847 = vunpack.c.l.b16 %v690
        %v848 = vunpack.c.l.b16 %v691
        %v849 = vunpack.c.l.b16 %v692
        %v850 = vunpack.c.l.b16 %v693
        %v851 = vunpack.c.l.b16 %v694
        %v852 = vunpack.c.l.b16 %v695
        %v853 = vunpack.c.l.b16 %v696
        %v854 = vunpack.c.l.b16 %v697
        %v855 = vunpack.c.l.b16 %v698
        %v856 = vunpack.c.l.b16 %v699
        %v857 = vunpack.c.l.b16 %v700
        %v858 = vunpack.c.l.b16 %v701
        %v859 = vunpack.c.l.b16 %v702
        %v860 = vunpack.c.l.b16 %v703
        %v861 = vunpack.c.l.b16 %v704
        %v862 = vunpack.c.l.b16 %v705
        %v863 = vunpack.c.l.b16 %v706
        %v864 = vunpack.c.l.b16 %v707
        %v865 = vunpack.c.l.b16 %v708
        %v866 = vunpack.c.l.b16 %v709
        %v867 = vunpack.c.l.b16 %v710
        %v868 = vpack.c.b16 %v805, %v804
        %v869 = vpack.c.b16 %v807, %v806
        %v870 = vpack.c.b16 %v809, %v808
        %v871 = vpack.c.b16 %v811, %v810
        %v872 = vpack.c.b16 %v813, %v812
        %v873 = vpack.c.b16 %v815, %v814
        %v874 = vpack.c.b16 %v817, %v816
        %v875 = vpack.c.b16 %v819, %v818
        %v876 = vpack.c.b16 %v821, %v820
        %v877 = vpack.c.b16 %v823, %v822
        %v878 = vpack.c.b16 %v825, %v824
        %v879 = vpack.c.b16 %v827, %v826
        %v880 = vpack.c.b16 %v829, %v828
        %v881 = vpack.c.b16 %v831, %v830
        %v882 = vpack.c.b16 %v833, %v832
        %v883 = vpack.c.b16 %v835, %v834
        %v884 = vpack.c.b16 %v837, %v836
        %v885 = vpack.c.b16 %v839, %v838
        %v886 = vpack.c.b16 %v841, %v840
        %v887 = vpack.c.b16 %v843, %v842
        %v888 = vpack.c.b16 %v845, %v844
        %v889 = vpack.c.b16 %v847, %v846
        %v890 = vpack.c.b16 %v849, %v848
        %v891 = vpack.c.b16 %v851, %v850
        %v892 = vpack.c.b16 %v853, %v852
        %v893 = vpack.c.b16 %v855, %v854
        %v894 = vpack.c.b16 %v857, %v856
        %v895 = vpack.c.b16 %v859, %v858
        %v896 = vpack.c.b16 %v861, %v860
        %v897 = vpack.c.b16 %v863, %v862
        %v898 = vpack.c.b16 %v865, %v864
        %v899 = vpack.c.b16 %v867, %v866
        %v905 = vunpack.c.l.b16 %v711
        %v906 = vunpack.c.h.b16 %v711
        %v907 = vunpack.c.l.b16 %v712
        %v908 = vunpack.c.h.b16 %v712
        %v909 = vunpack.c.l.b16 %v713
        %v910 = vunpack.c.h.b16 %v713
        %v911 = vunpack.c.l.b16 %v714
        %v912 = vunpack.c.h.b16 %v714
        %v913 = vunpack.c.l.b16 %v715
        %v914 = vunpack.c.h.b16 %v715
        %v915 = vpack.c.b16 %v905, %v905
        %v916 = vpack.c.b16 %v906, %v906
        %v917 = vpack.c.b16 %v907, %v907
        %v918 = vpack.c.b16 %v908, %v908
        %v919 = vpack.c.b16 %v909, %v909
        %v920 = vpack.c.b16 %v910, %v910
        %v921 = vpack.c.b16 %v911, %v911
        %v922 = vpack.c.b16 %v912, %v912
        %v923 = vpack.c.b16 %v913, %v913
        %v924 = vpack.c.b16 %v914, %v914
        %vm925 = vcmask 64512
        %v927 = vsel %vm925, %v868, 0
        %v930 = vsel %vm925, %v869, 0
        %v933 = vsel %vm925, %v870, 0
        %v936 = vsel %vm925, %v871, 0
        %v939 = vsel %vm925, %v872, 0
        %v942 = vsel %vm925, %v873, 0
        %v945 = vsel %vm925, %v874, 0
        %v948 = vsel %vm925, %v875, 0
        %v951 = vsel %vm925, %v876, 0
        %v954 = vsel %vm925, %v877, 0
        %v957 = vsel %vm925, %v878, 0
        %v960 = vsel %vm925, %v879, 0
        %v963 = vsel %vm925, %v880, 0
        %v966 = vsel %vm925, %v881, 0
        %v969 = vsel %vm925, %v882, 0
        %v972 = vsel %vm925, %v883, 0
        %v975 = vsel %vm925, %v884, 0
        %v978 = vsel %vm925, %v885, 0
        %v981 = vsel %vm925, %v886, 0
        %v984 = vsel %vm925, %v887, 0
        %v987 = vsel %vm925, %v888, 0
        %v990 = vsel %vm925, %v889, 0
        %v993 = vsel %vm925, %v890, 0
        %v996 = vsel %vm925, %v891, 0
        %v999 = vsel %vm925, %v892, 0
        %v1002 = vsel %vm925, %v893, 0
        %v1005 = vsel %vm925, %v894, 0
        %v1008 = vsel %vm925, %v895, 0
        %v1011 = vsel %vm925, %v896, 0
        %v1014 = vsel %vm925, %v897, 0
        %v1017 = vsel %vm925, %v898, 0
        %v1020 = vsel %vm925, %v899, 0
        %vm1022 = vcmask 1043456
        %v1024 = vsel %vm1022, %v915, 0
        %v1027 = vsel %vm1022, %v916, 0
        %v1030 = vsel %vm1022, %v917, 0
        %v1033 = vsel %vm1022, %v918, 0
        %v1036 = vsel %vm1022, %v919, 0
        %v1039 = vsel %vm1022, %v920, 0
        %v1042 = vsel %vm1022, %v921, 0
        %v1045 = vsel %vm1022, %v922, 0
        %v1048 = vsel %vm1022, %v923, 0
        %v1051 = vsel %vm1022, %v924, 0
        %1053 = vmatpush.bf16.msra.mxu0 0
        %1054 = vmatpush.bf16.msra.mxu0 0
        %1055 = vmatpush.bf16.msra.mxu0 0
        %1056 = vmatpush.bf16.msra.mxu0 0
        %1057 = vmatpush.bf16.msra.mxu0 0
        %1058 = vmatpush.bf16.msra.mxu0 0
        %1059 = vmatpush.bf16.msra.mxu0 0
        %1060 = vmatpush.bf16.msra.mxu0 %v1024
        %1061 = vmatmul.bf16.gmra.mxu0 %v927
        %v1062 = vpop.f32.mrf.mxu0
        %v1063 = vadd.f32 %v720, %v1062
        %v1064 = vpop.f32.mrf.mxu0
        %v1065 = vadd.f32 %v720, %v1064
        %1066 = vmatmul.bf16.gmra.mxu0 %v930
        %v1067 = vpop.f32.mrf.mxu0
        %v1068 = vadd.f32 %v720, %v1067
        %v1069 = vpop.f32.mrf.mxu0
        %v1070 = vadd.f32 %v720, %v1069
        %1071 = vmatmul.bf16.gmra.mxu0 %v933
        %v1072 = vpop.f32.mrf.mxu0
        %v1073 = vadd.f32 %v720, %v1072
        %v1074 = vpop.f32.mrf.mxu0
        %v1075 = vadd.f32 %v720, %v1074
        %1076 = vmatmul.bf16.gmra.mxu0 %v936
        %v1077 = vpop.f32.mrf.mxu0
        %v1078 = vadd.f32 %v720, %v1077
        %v1079 = vpop.f32.mrf.mxu0
        %v1080 = vadd.f32 %v720, %v1079
        %1081 = vmatmul.bf16.gmra.mxu0 %v939
        %v1082 = vpop.f32.mrf.mxu0
        %v1083 = vadd.f32 %v720, %v1082
        %v1084 = vpop.f32.mrf.mxu0
        %v1085 = vadd.f32 %v720, %v1084
        %1086 = vmatmul.bf16.gmra.mxu0 %v942
        %v1087 = vpop.f32.mrf.mxu0
        %v1088 = vadd.f32 %v720, %v1087
        %v1089 = vpop.f32.mrf.mxu0
        %v1090 = vadd.f32 %v720, %v1089
        %1091 = vmatmul.bf16.gmra.mxu0 %v945
        %v1092 = vpop.f32.mrf.mxu0
        %v1093 = vadd.f32 %v720, %v1092
        %v1094 = vpop.f32.mrf.mxu0
        %v1095 = vadd.f32 %v720, %v1094
        %1096 = vmatmul.bf16.gmra.mxu0 %v948
        %v1097 = vpop.f32.mrf.mxu0
        %v1098 = vadd.f32 %v720, %v1097
        %v1099 = vpop.f32.mrf.mxu0
        %v1100 = vadd.f32 %v720, %v1099
        %1101 = vmatmul.bf16.gmra.mxu0 %v951
        %v1102 = vpop.f32.mrf.mxu0
        %v1103 = vadd.f32 %v720, %v1102
        %v1104 = vpop.f32.mrf.mxu0
        %v1105 = vadd.f32 %v720, %v1104
        %1106 = vmatmul.bf16.gmra.mxu0 %v954
        %v1107 = vpop.f32.mrf.mxu0
        %v1108 = vadd.f32 %v720, %v1107
        %v1109 = vpop.f32.mrf.mxu0
        %v1110 = vadd.f32 %v720, %v1109
        %1111 = vmatmul.bf16.gmra.mxu0 %v957
        %v1112 = vpop.f32.mrf.mxu0
        %v1113 = vadd.f32 %v720, %v1112
        %v1114 = vpop.f32.mrf.mxu0
        %v1115 = vadd.f32 %v720, %v1114
        %1116 = vmatmul.bf16.gmra.mxu0 %v960
        %v1117 = vpop.f32.mrf.mxu0
        %v1118 = vadd.f32 %v720, %v1117
        %v1119 = vpop.f32.mrf.mxu0
        %v1120 = vadd.f32 %v720, %v1119
        %1121 = vmatmul.bf16.gmra.mxu0 %v963
        %v1122 = vpop.f32.mrf.mxu0
        %v1123 = vadd.f32 %v720, %v1122
        %v1124 = vpop.f32.mrf.mxu0
        %v1125 = vadd.f32 %v720, %v1124
        %1126 = vmatmul.bf16.gmra.mxu0 %v966
        %v1127 = vpop.f32.mrf.mxu0
        %v1128 = vadd.f32 %v720, %v1127
        %v1129 = vpop.f32.mrf.mxu0
        %v1130 = vadd.f32 %v720, %v1129
        %1131 = vmatmul.bf16.gmra.mxu0 %v969
        %v1132 = vpop.f32.mrf.mxu0
        %v1133 = vadd.f32 %v720, %v1132
        %v1134 = vpop.f32.mrf.mxu0
        %v1135 = vadd.f32 %v720, %v1134
        %1136 = vmatmul.bf16.gmra.mxu0 %v972
        %v1137 = vpop.f32.mrf.mxu0
        %v1138 = vadd.f32 %v720, %v1137
        %v1139 = vpop.f32.mrf.mxu0
        %v1140 = vadd.f32 %v720, %v1139
        %1141 = vmatmul.bf16.gmra.mxu0 %v975
        %v1142 = vpop.f32.mrf.mxu0
        %v1143 = vadd.f32 %v720, %v1142
        %v1144 = vpop.f32.mrf.mxu0
        %v1145 = vadd.f32 %v720, %v1144
        %1146 = vmatmul.bf16.gmra.mxu0 %v978
        %v1147 = vpop.f32.mrf.mxu0
        %v1148 = vadd.f32 %v720, %v1147
        %v1149 = vpop.f32.mrf.mxu0
        %v1150 = vadd.f32 %v720, %v1149
        %1151 = vmatmul.bf16.gmra.mxu0 %v981
        %v1152 = vpop.f32.mrf.mxu0
        %v1153 = vadd.f32 %v720, %v1152
        %v1154 = vpop.f32.mrf.mxu0
        %v1155 = vadd.f32 %v720, %v1154
        %1156 = vmatmul.bf16.gmra.mxu0 %v984
        %v1157 = vpop.f32.mrf.mxu0
        %v1158 = vadd.f32 %v720, %v1157
        %v1159 = vpop.f32.mrf.mxu0
        %v1160 = vadd.f32 %v720, %v1159
        %1161 = vmatmul.bf16.gmra.mxu0 %v987
        %v1162 = vpop.f32.mrf.mxu0
        %v1163 = vadd.f32 %v720, %v1162
        %v1164 = vpop.f32.mrf.mxu0
        %v1165 = vadd.f32 %v720, %v1164
        %1166 = vmatmul.bf16.gmra.mxu0 %v990
        %v1167 = vpop.f32.mrf.mxu0
        %v1168 = vadd.f32 %v720, %v1167
        %v1169 = vpop.f32.mrf.mxu0
        %v1170 = vadd.f32 %v720, %v1169
        %1171 = vmatmul.bf16.gmra.mxu0 %v993
        %v1172 = vpop.f32.mrf.mxu0
        %v1173 = vadd.f32 %v720, %v1172
        %v1174 = vpop.f32.mrf.mxu0
        %v1175 = vadd.f32 %v720, %v1174
        %1176 = vmatmul.bf16.gmra.mxu0 %v996
        %v1177 = vpop.f32.mrf.mxu0
        %v1178 = vadd.f32 %v720, %v1177
        %v1179 = vpop.f32.mrf.mxu0
        %v1180 = vadd.f32 %v720, %v1179
        %1181 = vmatmul.bf16.gmra.mxu0 %v999
        %v1182 = vpop.f32.mrf.mxu0
        %v1183 = vadd.f32 %v720, %v1182
        %v1184 = vpop.f32.mrf.mxu0
        %v1185 = vadd.f32 %v720, %v1184
        %1186 = vmatmul.bf16.gmra.mxu0 %v1002
        %v1187 = vpop.f32.mrf.mxu0
        %v1188 = vadd.f32 %v720, %v1187
        %v1189 = vpop.f32.mrf.mxu0
        %v1190 = vadd.f32 %v720, %v1189
        %1191 = vmatmul.bf16.gmra.mxu0 %v1005
        %v1192 = vpop.f32.mrf.mxu0
        %v1193 = vadd.f32 %v720, %v1192
        %v1194 = vpop.f32.mrf.mxu0
        %v1195 = vadd.f32 %v720, %v1194
        %1196 = vmatmul.bf16.gmra.mxu0 %v1008
        %v1197 = vpop.f32.mrf.mxu0
        %v1198 = vadd.f32 %v720, %v1197
        %v1199 = vpop.f32.mrf.mxu0
        %v1200 = vadd.f32 %v720, %v1199
        %1201 = vmatmul.bf16.gmra.mxu0 %v1011
        %v1202 = vpop.f32.mrf.mxu0
        %v1203 = vadd.f32 %v720, %v1202
        %v1204 = vpop.f32.mrf.mxu0
        %v1205 = vadd.f32 %v720, %v1204
        %1206 = vmatmul.bf16.gmra.mxu0 %v1014
        %v1207 = vpop.f32.mrf.mxu0
        %v1208 = vadd.f32 %v720, %v1207
        %v1209 = vpop.f32.mrf.mxu0
        %v1210 = vadd.f32 %v720, %v1209
        %1211 = vmatmul.bf16.gmra.mxu0 %v1017
        %v1212 = vpop.f32.mrf.mxu0
        %v1213 = vadd.f32 %v720, %v1212
        %v1214 = vpop.f32.mrf.mxu0
        %v1215 = vadd.f32 %v720, %v1214
        %1216 = vmatmul.bf16.gmra.mxu0 %v1020
        %v1217 = vpop.f32.mrf.mxu0
        %v1218 = vadd.f32 %v720, %v1217
        %v1219 = vpop.f32.mrf.mxu0
        %v1220 = vadd.f32 %v720, %v1219
        %1221 = vdwg.mxu0
        %1222 = vmatpush.bf16.msra.mxu0 0
        %1223 = vmatpush.bf16.msra.mxu0 0
        %1224 = vmatpush.bf16.msra.mxu0 0
        %1225 = vmatpush.bf16.msra.mxu0 0
        %1226 = vmatpush.bf16.msra.mxu0 0
        %1227 = vmatpush.bf16.msra.mxu0 0
        %1228 = vmatpush.bf16.msra.mxu0 0
        %1229 = vmatpush.bf16.msra.mxu0 %v1027
        %1230 = vmatmul.bf16.gmra.mxu0 %v927
        %v1231 = vpop.f32.mrf.mxu0
        %v1232 = vadd.f32 %v721, %v1231
        %v1233 = vpop.f32.mrf.mxu0
        %v1234 = vadd.f32 %v721, %v1233
        %1235 = vmatmul.bf16.gmra.mxu0 %v930
        %v1236 = vpop.f32.mrf.mxu0
        %v1237 = vadd.f32 %v721, %v1236
        %v1238 = vpop.f32.mrf.mxu0
        %v1239 = vadd.f32 %v721, %v1238
        %1240 = vmatmul.bf16.gmra.mxu0 %v933
        %v1241 = vpop.f32.mrf.mxu0
        %v1242 = vadd.f32 %v721, %v1241
        %v1243 = vpop.f32.mrf.mxu0
        %v1244 = vadd.f32 %v721, %v1243
        %1245 = vmatmul.bf16.gmra.mxu0 %v936
        %v1246 = vpop.f32.mrf.mxu0
        %v1247 = vadd.f32 %v721, %v1246
        %v1248 = vpop.f32.mrf.mxu0
        %v1249 = vadd.f32 %v721, %v1248
        %1250 = vmatmul.bf16.gmra.mxu0 %v939
        %v1251 = vpop.f32.mrf.mxu0
        %v1252 = vadd.f32 %v721, %v1251
        %v1253 = vpop.f32.mrf.mxu0
        %v1254 = vadd.f32 %v721, %v1253
        %1255 = vmatmul.bf16.gmra.mxu0 %v942
        %v1256 = vpop.f32.mrf.mxu0
        %v1257 = vadd.f32 %v721, %v1256
        %v1258 = vpop.f32.mrf.mxu0
        %v1259 = vadd.f32 %v721, %v1258
        %1260 = vmatmul.bf16.gmra.mxu0 %v945
        %v1261 = vpop.f32.mrf.mxu0
        %v1262 = vadd.f32 %v721, %v1261
        %v1263 = vpop.f32.mrf.mxu0
        %v1264 = vadd.f32 %v721, %v1263
        %1265 = vmatmul.bf16.gmra.mxu0 %v948
        %v1266 = vpop.f32.mrf.mxu0
        %v1267 = vadd.f32 %v721, %v1266
        %v1268 = vpop.f32.mrf.mxu0
        %v1269 = vadd.f32 %v721, %v1268
        %1270 = vmatmul.bf16.gmra.mxu0 %v951
        %v1271 = vpop.f32.mrf.mxu0
        %v1272 = vadd.f32 %v721, %v1271
        %v1273 = vpop.f32.mrf.mxu0
        %v1274 = vadd.f32 %v721, %v1273
        %1275 = vmatmul.bf16.gmra.mxu0 %v954
        %v1276 = vpop.f32.mrf.mxu0
        %v1277 = vadd.f32 %v721, %v1276
        %v1278 = vpop.f32.mrf.mxu0
        %v1279 = vadd.f32 %v721, %v1278
        %1280 = vmatmul.bf16.gmra.mxu0 %v957
        %v1281 = vpop.f32.mrf.mxu0
        %v1282 = vadd.f32 %v721, %v1281
        %v1283 = vpop.f32.mrf.mxu0
        %v1284 = vadd.f32 %v721, %v1283
        %1285 = vmatmul.bf16.gmra.mxu0 %v960
        %v1286 = vpop.f32.mrf.mxu0
        %v1287 = vadd.f32 %v721, %v1286
        %v1288 = vpop.f32.mrf.mxu0
        %v1289 = vadd.f32 %v721, %v1288
        %1290 = vmatmul.bf16.gmra.mxu0 %v963
        %v1291 = vpop.f32.mrf.mxu0
        %v1292 = vadd.f32 %v721, %v1291
        %v1293 = vpop.f32.mrf.mxu0
        %v1294 = vadd.f32 %v721, %v1293
        %1295 = vmatmul.bf16.gmra.mxu0 %v966
        %v1296 = vpop.f32.mrf.mxu0
        %v1297 = vadd.f32 %v721, %v1296
        %v1298 = vpop.f32.mrf.mxu0
        %v1299 = vadd.f32 %v721, %v1298
        %1300 = vmatmul.bf16.gmra.mxu0 %v969
        %v1301 = vpop.f32.mrf.mxu0
        %v1302 = vadd.f32 %v721, %v1301
        %v1303 = vpop.f32.mrf.mxu0
        %v1304 = vadd.f32 %v721, %v1303
        %1305 = vmatmul.bf16.gmra.mxu0 %v972
        %v1306 = vpop.f32.mrf.mxu0
        %v1307 = vadd.f32 %v721, %v1306
        %v1308 = vpop.f32.mrf.mxu0
        %v1309 = vadd.f32 %v721, %v1308
        %1310 = vmatmul.bf16.gmra.mxu0 %v975
        %v1311 = vpop.f32.mrf.mxu0
        %v1312 = vadd.f32 %v721, %v1311
        %v1313 = vpop.f32.mrf.mxu0
        %v1314 = vadd.f32 %v721, %v1313
        %1315 = vmatmul.bf16.gmra.mxu0 %v978
        %v1316 = vpop.f32.mrf.mxu0
        %v1317 = vadd.f32 %v721, %v1316
        %v1318 = vpop.f32.mrf.mxu0
        %v1319 = vadd.f32 %v721, %v1318
        %1320 = vmatmul.bf16.gmra.mxu0 %v981
        %v1321 = vpop.f32.mrf.mxu0
        %v1322 = vadd.f32 %v721, %v1321
        %v1323 = vpop.f32.mrf.mxu0
        %v1324 = vadd.f32 %v721, %v1323
        %1325 = vmatmul.bf16.gmra.mxu0 %v984
        %v1326 = vpop.f32.mrf.mxu0
        %v1327 = vadd.f32 %v721, %v1326
        %v1328 = vpop.f32.mrf.mxu0
        %v1329 = vadd.f32 %v721, %v1328
        %1330 = vmatmul.bf16.gmra.mxu0 %v987
        %v1331 = vpop.f32.mrf.mxu0
        %v1332 = vadd.f32 %v721, %v1331
        %v1333 = vpop.f32.mrf.mxu0
        %v1334 = vadd.f32 %v721, %v1333
        %1335 = vmatmul.bf16.gmra.mxu0 %v990
        %v1336 = vpop.f32.mrf.mxu0
        %v1337 = vadd.f32 %v721, %v1336
        %v1338 = vpop.f32.mrf.mxu0
        %v1339 = vadd.f32 %v721, %v1338
        %1340 = vmatmul.bf16.gmra.mxu0 %v993
        %v1341 = vpop.f32.mrf.mxu0
        %v1342 = vadd.f32 %v721, %v1341
        %v1343 = vpop.f32.mrf.mxu0
        %v1344 = vadd.f32 %v721, %v1343
        %1345 = vmatmul.bf16.gmra.mxu0 %v996
        %v1346 = vpop.f32.mrf.mxu0
        %v1347 = vadd.f32 %v721, %v1346
        %v1348 = vpop.f32.mrf.mxu0
        %v1349 = vadd.f32 %v721, %v1348
        %1350 = vmatmul.bf16.gmra.mxu0 %v999
        %v1351 = vpop.f32.mrf.mxu0
        %v1352 = vadd.f32 %v721, %v1351
        %v1353 = vpop.f32.mrf.mxu0
        %v1354 = vadd.f32 %v721, %v1353
        %1355 = vmatmul.bf16.gmra.mxu0 %v1002
        %v1356 = vpop.f32.mrf.mxu0
        %v1357 = vadd.f32 %v721, %v1356
        %v1358 = vpop.f32.mrf.mxu0
        %v1359 = vadd.f32 %v721, %v1358
        %1360 = vmatmul.bf16.gmra.mxu0 %v1005
        %v1361 = vpop.f32.mrf.mxu0
        %v1362 = vadd.f32 %v721, %v1361
        %v1363 = vpop.f32.mrf.mxu0
        %v1364 = vadd.f32 %v721, %v1363
        %1365 = vmatmul.bf16.gmra.mxu0 %v1008
        %v1366 = vpop.f32.mrf.mxu0
        %v1367 = vadd.f32 %v721, %v1366
        %v1368 = vpop.f32.mrf.mxu0
        %v1369 = vadd.f32 %v721, %v1368
        %1370 = vmatmul.bf16.gmra.mxu0 %v1011
        %v1371 = vpop.f32.mrf.mxu0
        %v1372 = vadd.f32 %v721, %v1371
        %v1373 = vpop.f32.mrf.mxu0
        %v1374 = vadd.f32 %v721, %v1373
        %1375 = vmatmul.bf16.gmra.mxu0 %v1014
        %v1376 = vpop.f32.mrf.mxu0
        %v1377 = vadd.f32 %v721, %v1376
        %v1378 = vpop.f32.mrf.mxu0
        %v1379 = vadd.f32 %v721, %v1378
        %1380 = vmatmul.bf16.gmra.mxu0 %v1017
        %v1381 = vpop.f32.mrf.mxu0
        %v1382 = vadd.f32 %v721, %v1381
        %v1383 = vpop.f32.mrf.mxu0
        %v1384 = vadd.f32 %v721, %v1383
        %1385 = vmatmul.bf16.gmra.mxu0 %v1020
        %v1386 = vpop.f32.mrf.mxu0
        %v1387 = vadd.f32 %v721, %v1386
        %v1388 = vpop.f32.mrf.mxu0
        %v1389 = vadd.f32 %v721, %v1388
        %1390 = vdwg.mxu0
        %1391 = vmatpush.bf16.msra.mxu0 0
        %1392 = vmatpush.bf16.msra.mxu0 0
        %1393 = vmatpush.bf16.msra.mxu0 0
        %1394 = vmatpush.bf16.msra.mxu0 0
        %1395 = vmatpush.bf16.msra.mxu0 0
        %1396 = vmatpush.bf16.msra.mxu0 0
        %1397 = vmatpush.bf16.msra.mxu0 0
        %1398 = vmatpush.bf16.msra.mxu0 %v1030
        %1399 = vmatmul.bf16.gmra.mxu0 %v927
        %v1400 = vpop.f32.mrf.mxu0
        %v1401 = vadd.f32 %v722, %v1400
        %v1402 = vpop.f32.mrf.mxu0
        %v1403 = vadd.f32 %v722, %v1402
        %1404 = vmatmul.bf16.gmra.mxu0 %v930
        %v1405 = vpop.f32.mrf.mxu0
        %v1406 = vadd.f32 %v722, %v1405
        %v1407 = vpop.f32.mrf.mxu0
        %v1408 = vadd.f32 %v722, %v1407
        %1409 = vmatmul.bf16.gmra.mxu0 %v933
        %v1410 = vpop.f32.mrf.mxu0
        %v1411 = vadd.f32 %v722, %v1410
        %v1412 = vpop.f32.mrf.mxu0
        %v1413 = vadd.f32 %v722, %v1412
        %1414 = vmatmul.bf16.gmra.mxu0 %v936
        %v1415 = vpop.f32.mrf.mxu0
        %v1416 = vadd.f32 %v722, %v1415
        %v1417 = vpop.f32.mrf.mxu0
        %v1418 = vadd.f32 %v722, %v1417
        %1419 = vmatmul.bf16.gmra.mxu0 %v939
        %v1420 = vpop.f32.mrf.mxu0
        %v1421 = vadd.f32 %v722, %v1420
        %v1422 = vpop.f32.mrf.mxu0
        %v1423 = vadd.f32 %v722, %v1422
        %1424 = vmatmul.bf16.gmra.mxu0 %v942
        %v1425 = vpop.f32.mrf.mxu0
        %v1426 = vadd.f32 %v722, %v1425
        %v1427 = vpop.f32.mrf.mxu0
        %v1428 = vadd.f32 %v722, %v1427
        %1429 = vmatmul.bf16.gmra.mxu0 %v945
        %v1430 = vpop.f32.mrf.mxu0
        %v1431 = vadd.f32 %v722, %v1430
        %v1432 = vpop.f32.mrf.mxu0
        %v1433 = vadd.f32 %v722, %v1432
        %1434 = vmatmul.bf16.gmra.mxu0 %v948
        %v1435 = vpop.f32.mrf.mxu0
        %v1436 = vadd.f32 %v722, %v1435
        %v1437 = vpop.f32.mrf.mxu0
        %v1438 = vadd.f32 %v722, %v1437
        %1439 = vmatmul.bf16.gmra.mxu0 %v951
        %v1440 = vpop.f32.mrf.mxu0
        %v1441 = vadd.f32 %v722, %v1440
        %v1442 = vpop.f32.mrf.mxu0
        %v1443 = vadd.f32 %v722, %v1442
        %1444 = vmatmul.bf16.gmra.mxu0 %v954
        %v1445 = vpop.f32.mrf.mxu0
        %v1446 = vadd.f32 %v722, %v1445
        %v1447 = vpop.f32.mrf.mxu0
        %v1448 = vadd.f32 %v722, %v1447
        %1449 = vmatmul.bf16.gmra.mxu0 %v957
        %v1450 = vpop.f32.mrf.mxu0
        %v1451 = vadd.f32 %v722, %v1450
        %v1452 = vpop.f32.mrf.mxu0
        %v1453 = vadd.f32 %v722, %v1452
        %1454 = vmatmul.bf16.gmra.mxu0 %v960
        %v1455 = vpop.f32.mrf.mxu0
        %v1456 = vadd.f32 %v722, %v1455
        %v1457 = vpop.f32.mrf.mxu0
        %v1458 = vadd.f32 %v722, %v1457
        %1459 = vmatmul.bf16.gmra.mxu0 %v963
        %v1460 = vpop.f32.mrf.mxu0
        %v1461 = vadd.f32 %v722, %v1460
        %v1462 = vpop.f32.mrf.mxu0
        %v1463 = vadd.f32 %v722, %v1462
        %1464 = vmatmul.bf16.gmra.mxu0 %v966
        %v1465 = vpop.f32.mrf.mxu0
        %v1466 = vadd.f32 %v722, %v1465
        %v1467 = vpop.f32.mrf.mxu0
        %v1468 = vadd.f32 %v722, %v1467
        %1469 = vmatmul.bf16.gmra.mxu0 %v969
        %v1470 = vpop.f32.mrf.mxu0
        %v1471 = vadd.f32 %v722, %v1470
        %v1472 = vpop.f32.mrf.mxu0
        %v1473 = vadd.f32 %v722, %v1472
        %1474 = vmatmul.bf16.gmra.mxu0 %v972
        %v1475 = vpop.f32.mrf.mxu0
        %v1476 = vadd.f32 %v722, %v1475
        %v1477 = vpop.f32.mrf.mxu0
        %v1478 = vadd.f32 %v722, %v1477
        %1479 = vmatmul.bf16.gmra.mxu0 %v975
        %v1480 = vpop.f32.mrf.mxu0
        %v1481 = vadd.f32 %v722, %v1480
        %v1482 = vpop.f32.mrf.mxu0
        %v1483 = vadd.f32 %v722, %v1482
        %1484 = vmatmul.bf16.gmra.mxu0 %v978
        %v1485 = vpop.f32.mrf.mxu0
        %v1486 = vadd.f32 %v722, %v1485
        %v1487 = vpop.f32.mrf.mxu0
        %v1488 = vadd.f32 %v722, %v1487
        %1489 = vmatmul.bf16.gmra.mxu0 %v981
        %v1490 = vpop.f32.mrf.mxu0
        %v1491 = vadd.f32 %v722, %v1490
        %v1492 = vpop.f32.mrf.mxu0
        %v1493 = vadd.f32 %v722, %v1492
        %1494 = vmatmul.bf16.gmra.mxu0 %v984
        %v1495 = vpop.f32.mrf.mxu0
        %v1496 = vadd.f32 %v722, %v1495
        %v1497 = vpop.f32.mrf.mxu0
        %v1498 = vadd.f32 %v722, %v1497
        %1499 = vmatmul.bf16.gmra.mxu0 %v987
        %v1500 = vpop.f32.mrf.mxu0
        %v1501 = vadd.f32 %v722, %v1500
        %v1502 = vpop.f32.mrf.mxu0
        %v1503 = vadd.f32 %v722, %v1502
        %1504 = vmatmul.bf16.gmra.mxu0 %v990
        %v1505 = vpop.f32.mrf.mxu0
        %v1506 = vadd.f32 %v722, %v1505
        %v1507 = vpop.f32.mrf.mxu0
        %v1508 = vadd.f32 %v722, %v1507
        %1509 = vmatmul.bf16.gmra.mxu0 %v993
        %v1510 = vpop.f32.mrf.mxu0
        %v1511 = vadd.f32 %v722, %v1510
        %v1512 = vpop.f32.mrf.mxu0
        %v1513 = vadd.f32 %v722, %v1512
        %1514 = vmatmul.bf16.gmra.mxu0 %v996
        %v1515 = vpop.f32.mrf.mxu0
        %v1516 = vadd.f32 %v722, %v1515
        %v1517 = vpop.f32.mrf.mxu0
        %v1518 = vadd.f32 %v722, %v1517
        %1519 = vmatmul.bf16.gmra.mxu0 %v999
        %v1520 = vpop.f32.mrf.mxu0
        %v1521 = vadd.f32 %v722, %v1520
        %v1522 = vpop.f32.mrf.mxu0
        %v1523 = vadd.f32 %v722, %v1522
        %1524 = vmatmul.bf16.gmra.mxu0 %v1002
        %v1525 = vpop.f32.mrf.mxu0
        %v1526 = vadd.f32 %v722, %v1525
        %v1527 = vpop.f32.mrf.mxu0
        %v1528 = vadd.f32 %v722, %v1527
        %1529 = vmatmul.bf16.gmra.mxu0 %v1005
        %v1530 = vpop.f32.mrf.mxu0
        %v1531 = vadd.f32 %v722, %v1530
        %v1532 = vpop.f32.mrf.mxu0
        %v1533 = vadd.f32 %v722, %v1532
        %1534 = vmatmul.bf16.gmra.mxu0 %v1008
        %v1535 = vpop.f32.mrf.mxu0
        %v1536 = vadd.f32 %v722, %v1535
        %v1537 = vpop.f32.mrf.mxu0
        %v1538 = vadd.f32 %v722, %v1537
        %1539 = vmatmul.bf16.gmra.mxu0 %v1011
        %v1540 = vpop.f32.mrf.mxu0
        %v1541 = vadd.f32 %v722, %v1540
        %v1542 = vpop.f32.mrf.mxu0
        %v1543 = vadd.f32 %v722, %v1542
        %1544 = vmatmul.bf16.gmra.mxu0 %v1014
        %v1545 = vpop.f32.mrf.mxu0
        %v1546 = vadd.f32 %v722, %v1545
        %v1547 = vpop.f32.mrf.mxu0
        %v1548 = vadd.f32 %v722, %v1547
        %1549 = vmatmul.bf16.gmra.mxu0 %v1017
        %v1550 = vpop.f32.mrf.mxu0
        %v1551 = vadd.f32 %v722, %v1550
        %v1552 = vpop.f32.mrf.mxu0
        %v1553 = vadd.f32 %v722, %v1552
        %1554 = vmatmul.bf16.gmra.mxu0 %v1020
        %v1555 = vpop.f32.mrf.mxu0
        %v1556 = vadd.f32 %v722, %v1555
        %v1557 = vpop.f32.mrf.mxu0
        %v1558 = vadd.f32 %v722, %v1557
        %1559 = vdwg.mxu0
        %1560 = vmatpush.bf16.msra.mxu0 0
        %1561 = vmatpush.bf16.msra.mxu0 0
        %1562 = vmatpush.bf16.msra.mxu0 0
        %1563 = vmatpush.bf16.msra.mxu0 0
        %1564 = vmatpush.bf16.msra.mxu0 0
        %1565 = vmatpush.bf16.msra.mxu0 0
        %1566 = vmatpush.bf16.msra.mxu0 0
        %1567 = vmatpush.bf16.msra.mxu0 %v1033
        %1568 = vmatmul.bf16.gmra.mxu0 %v927
        %v1569 = vpop.f32.mrf.mxu0
        %v1570 = vadd.f32 %v723, %v1569
        %v1571 = vpop.f32.mrf.mxu0
        %v1572 = vadd.f32 %v723, %v1571
        %1573 = vmatmul.bf16.gmra.mxu0 %v930
        %v1574 = vpop.f32.mrf.mxu0
        %v1575 = vadd.f32 %v723, %v1574
        %v1576 = vpop.f32.mrf.mxu0
        %v1577 = vadd.f32 %v723, %v1576
        %1578 = vmatmul.bf16.gmra.mxu0 %v933
        %v1579 = vpop.f32.mrf.mxu0
        %v1580 = vadd.f32 %v723, %v1579
        %v1581 = vpop.f32.mrf.mxu0
        %v1582 = vadd.f32 %v723, %v1581
        %1583 = vmatmul.bf16.gmra.mxu0 %v936
        %v1584 = vpop.f32.mrf.mxu0
        %v1585 = vadd.f32 %v723, %v1584
        %v1586 = vpop.f32.mrf.mxu0
        %v1587 = vadd.f32 %v723, %v1586
        %1588 = vmatmul.bf16.gmra.mxu0 %v939
        %v1589 = vpop.f32.mrf.mxu0
        %v1590 = vadd.f32 %v723, %v1589
        %v1591 = vpop.f32.mrf.mxu0
        %v1592 = vadd.f32 %v723, %v1591
        %1593 = vmatmul.bf16.gmra.mxu0 %v942
        %v1594 = vpop.f32.mrf.mxu0
        %v1595 = vadd.f32 %v723, %v1594
        %v1596 = vpop.f32.mrf.mxu0
        %v1597 = vadd.f32 %v723, %v1596
        %1598 = vmatmul.bf16.gmra.mxu0 %v945
        %v1599 = vpop.f32.mrf.mxu0
        %v1600 = vadd.f32 %v723, %v1599
        %v1601 = vpop.f32.mrf.mxu0
        %v1602 = vadd.f32 %v723, %v1601
        %1603 = vmatmul.bf16.gmra.mxu0 %v948
        %v1604 = vpop.f32.mrf.mxu0
        %v1605 = vadd.f32 %v723, %v1604
        %v1606 = vpop.f32.mrf.mxu0
        %v1607 = vadd.f32 %v723, %v1606
        %1608 = vmatmul.bf16.gmra.mxu0 %v951
        %v1609 = vpop.f32.mrf.mxu0
        %v1610 = vadd.f32 %v723, %v1609
        %v1611 = vpop.f32.mrf.mxu0
        %v1612 = vadd.f32 %v723, %v1611
        %1613 = vmatmul.bf16.gmra.mxu0 %v954
        %v1614 = vpop.f32.mrf.mxu0
        %v1615 = vadd.f32 %v723, %v1614
        %v1616 = vpop.f32.mrf.mxu0
        %v1617 = vadd.f32 %v723, %v1616
        %1618 = vmatmul.bf16.gmra.mxu0 %v957
        %v1619 = vpop.f32.mrf.mxu0
        %v1620 = vadd.f32 %v723, %v1619
        %v1621 = vpop.f32.mrf.mxu0
        %v1622 = vadd.f32 %v723, %v1621
        %1623 = vmatmul.bf16.gmra.mxu0 %v960
        %v1624 = vpop.f32.mrf.mxu0
        %v1625 = vadd.f32 %v723, %v1624
        %v1626 = vpop.f32.mrf.mxu0
        %v1627 = vadd.f32 %v723, %v1626
        %1628 = vmatmul.bf16.gmra.mxu0 %v963
        %v1629 = vpop.f32.mrf.mxu0
        %v1630 = vadd.f32 %v723, %v1629
        %v1631 = vpop.f32.mrf.mxu0
        %v1632 = vadd.f32 %v723, %v1631
        %1633 = vmatmul.bf16.gmra.mxu0 %v966
        %v1634 = vpop.f32.mrf.mxu0
        %v1635 = vadd.f32 %v723, %v1634
        %v1636 = vpop.f32.mrf.mxu0
        %v1637 = vadd.f32 %v723, %v1636
        %1638 = vmatmul.bf16.gmra.mxu0 %v969
        %v1639 = vpop.f32.mrf.mxu0
        %v1640 = vadd.f32 %v723, %v1639
        %v1641 = vpop.f32.mrf.mxu0
        %v1642 = vadd.f32 %v723, %v1641
        %1643 = vmatmul.bf16.gmra.mxu0 %v972
        %v1644 = vpop.f32.mrf.mxu0
        %v1645 = vadd.f32 %v723, %v1644
        %v1646 = vpop.f32.mrf.mxu0
        %v1647 = vadd.f32 %v723, %v1646
        %1648 = vmatmul.bf16.gmra.mxu0 %v975
        %v1649 = vpop.f32.mrf.mxu0
        %v1650 = vadd.f32 %v723, %v1649
        %v1651 = vpop.f32.mrf.mxu0
        %v1652 = vadd.f32 %v723, %v1651
        %1653 = vmatmul.bf16.gmra.mxu0 %v978
        %v1654 = vpop.f32.mrf.mxu0
        %v1655 = vadd.f32 %v723, %v1654
        %v1656 = vpop.f32.mrf.mxu0
        %v1657 = vadd.f32 %v723, %v1656
        %1658 = vmatmul.bf16.gmra.mxu0 %v981
        %v1659 = vpop.f32.mrf.mxu0
        %v1660 = vadd.f32 %v723, %v1659
        %v1661 = vpop.f32.mrf.mxu0
        %v1662 = vadd.f32 %v723, %v1661
        %1663 = vmatmul.bf16.gmra.mxu0 %v984
        %v1664 = vpop.f32.mrf.mxu0
        %v1665 = vadd.f32 %v723, %v1664
        %v1666 = vpop.f32.mrf.mxu0
        %v1667 = vadd.f32 %v723, %v1666
        %1668 = vmatmul.bf16.gmra.mxu0 %v987
        %v1669 = vpop.f32.mrf.mxu0
        %v1670 = vadd.f32 %v723, %v1669
        %v1671 = vpop.f32.mrf.mxu0
        %v1672 = vadd.f32 %v723, %v1671
        %1673 = vmatmul.bf16.gmra.mxu0 %v990
        %v1674 = vpop.f32.mrf.mxu0
        %v1675 = vadd.f32 %v723, %v1674
        %v1676 = vpop.f32.mrf.mxu0
        %v1677 = vadd.f32 %v723, %v1676
        %1678 = vmatmul.bf16.gmra.mxu0 %v993
        %v1679 = vpop.f32.mrf.mxu0
        %v1680 = vadd.f32 %v723, %v1679
        %v1681 = vpop.f32.mrf.mxu0
        %v1682 = vadd.f32 %v723, %v1681
        %1683 = vmatmul.bf16.gmra.mxu0 %v996
        %v1684 = vpop.f32.mrf.mxu0
        %v1685 = vadd.f32 %v723, %v1684
        %v1686 = vpop.f32.mrf.mxu0
        %v1687 = vadd.f32 %v723, %v1686
        %1688 = vmatmul.bf16.gmra.mxu0 %v999
        %v1689 = vpop.f32.mrf.mxu0
        %v1690 = vadd.f32 %v723, %v1689
        %v1691 = vpop.f32.mrf.mxu0
        %v1692 = vadd.f32 %v723, %v1691
        %1693 = vmatmul.bf16.gmra.mxu0 %v1002
        %v1694 = vpop.f32.mrf.mxu0
        %v1695 = vadd.f32 %v723, %v1694
        %v1696 = vpop.f32.mrf.mxu0
        %v1697 = vadd.f32 %v723, %v1696
        %1698 = vmatmul.bf16.gmra.mxu0 %v1005
        %v1699 = vpop.f32.mrf.mxu0
        %v1700 = vadd.f32 %v723, %v1699
        %v1701 = vpop.f32.mrf.mxu0
        %v1702 = vadd.f32 %v723, %v1701
        %1703 = vmatmul.bf16.gmra.mxu0 %v1008
        %v1704 = vpop.f32.mrf.mxu0
        %v1705 = vadd.f32 %v723, %v1704
        %v1706 = vpop.f32.mrf.mxu0
        %v1707 = vadd.f32 %v723, %v1706
        %1708 = vmatmul.bf16.gmra.mxu0 %v1011
        %v1709 = vpop.f32.mrf.mxu0
        %v1710 = vadd.f32 %v723, %v1709
        %v1711 = vpop.f32.mrf.mxu0
        %v1712 = vadd.f32 %v723, %v1711
        %1713 = vmatmul.bf16.gmra.mxu0 %v1014
        %v1714 = vpop.f32.mrf.mxu0
        %v1715 = vadd.f32 %v723, %v1714
        %v1716 = vpop.f32.mrf.mxu0
        %v1717 = vadd.f32 %v723, %v1716
        %1718 = vmatmul.bf16.gmra.mxu0 %v1017
        %v1719 = vpop.f32.mrf.mxu0
        %v1720 = vadd.f32 %v723, %v1719
        %v1721 = vpop.f32.mrf.mxu0
        %v1722 = vadd.f32 %v723, %v1721
        %1723 = vmatmul.bf16.gmra.mxu0 %v1020
        %v1724 = vpop.f32.mrf.mxu0
        %v1725 = vadd.f32 %v723, %v1724
        %v1726 = vpop.f32.mrf.mxu0
        %v1727 = vadd.f32 %v723, %v1726
        %1728 = vdwg.mxu0
        %1729 = vmatpush.bf16.msra.mxu0 0
        %1730 = vmatpush.bf16.msra.mxu0 0
        %1731 = vmatpush.bf16.msra.mxu0 0
        %1732 = vmatpush.bf16.msra.mxu0 0
        %1733 = vmatpush.bf16.msra.mxu0 0
        %1734 = vmatpush.bf16.msra.mxu0 0
        %1735 = vmatpush.bf16.msra.mxu0 0
        %1736 = vmatpush.bf16.msra.mxu0 %v1036
        %1737 = vmatmul.bf16.gmra.mxu0 %v927
        %v1738 = vpop.f32.mrf.mxu0
        %v1739 = vadd.f32 %v724, %v1738
        %v1740 = vpop.f32.mrf.mxu0
        %v1741 = vadd.f32 %v724, %v1740
        %1742 = vmatmul.bf16.gmra.mxu0 %v930
        %v1743 = vpop.f32.mrf.mxu0
        %v1744 = vadd.f32 %v724, %v1743
        %v1745 = vpop.f32.mrf.mxu0
        %v1746 = vadd.f32 %v724, %v1745
        %1747 = vmatmul.bf16.gmra.mxu0 %v933
        %v1748 = vpop.f32.mrf.mxu0
        %v1749 = vadd.f32 %v724, %v1748
        %v1750 = vpop.f32.mrf.mxu0
        %v1751 = vadd.f32 %v724, %v1750
        %1752 = vmatmul.bf16.gmra.mxu0 %v936
        %v1753 = vpop.f32.mrf.mxu0
        %v1754 = vadd.f32 %v724, %v1753
        %v1755 = vpop.f32.mrf.mxu0
        %v1756 = vadd.f32 %v724, %v1755
        %1757 = vmatmul.bf16.gmra.mxu0 %v939
        %v1758 = vpop.f32.mrf.mxu0
        %v1759 = vadd.f32 %v724, %v1758
        %v1760 = vpop.f32.mrf.mxu0
        %v1761 = vadd.f32 %v724, %v1760
        %1762 = vmatmul.bf16.gmra.mxu0 %v942
        %v1763 = vpop.f32.mrf.mxu0
        %v1764 = vadd.f32 %v724, %v1763
        %v1765 = vpop.f32.mrf.mxu0
        %v1766 = vadd.f32 %v724, %v1765
        %1767 = vmatmul.bf16.gmra.mxu0 %v945
        %v1768 = vpop.f32.mrf.mxu0
        %v1769 = vadd.f32 %v724, %v1768
        %v1770 = vpop.f32.mrf.mxu0
        %v1771 = vadd.f32 %v724, %v1770
        %1772 = vmatmul.bf16.gmra.mxu0 %v948
        %v1773 = vpop.f32.mrf.mxu0
        %v1774 = vadd.f32 %v724, %v1773
        %v1775 = vpop.f32.mrf.mxu0
        %v1776 = vadd.f32 %v724, %v1775
        %1777 = vmatmul.bf16.gmra.mxu0 %v951
        %v1778 = vpop.f32.mrf.mxu0
        %v1779 = vadd.f32 %v724, %v1778
        %v1780 = vpop.f32.mrf.mxu0
        %v1781 = vadd.f32 %v724, %v1780
        %1782 = vmatmul.bf16.gmra.mxu0 %v954
        %v1783 = vpop.f32.mrf.mxu0
        %v1784 = vadd.f32 %v724, %v1783
        %v1785 = vpop.f32.mrf.mxu0
        %v1786 = vadd.f32 %v724, %v1785
        %1787 = vmatmul.bf16.gmra.mxu0 %v957
        %v1788 = vpop.f32.mrf.mxu0
        %v1789 = vadd.f32 %v724, %v1788
        %v1790 = vpop.f32.mrf.mxu0
        %v1791 = vadd.f32 %v724, %v1790
        %1792 = vmatmul.bf16.gmra.mxu0 %v960
        %v1793 = vpop.f32.mrf.mxu0
        %v1794 = vadd.f32 %v724, %v1793
        %v1795 = vpop.f32.mrf.mxu0
        %v1796 = vadd.f32 %v724, %v1795
        %1797 = vmatmul.bf16.gmra.mxu0 %v963
        %v1798 = vpop.f32.mrf.mxu0
        %v1799 = vadd.f32 %v724, %v1798
        %v1800 = vpop.f32.mrf.mxu0
        %v1801 = vadd.f32 %v724, %v1800
        %1802 = vmatmul.bf16.gmra.mxu0 %v966
        %v1803 = vpop.f32.mrf.mxu0
        %v1804 = vadd.f32 %v724, %v1803
        %v1805 = vpop.f32.mrf.mxu0
        %v1806 = vadd.f32 %v724, %v1805
        %1807 = vmatmul.bf16.gmra.mxu0 %v969
        %v1808 = vpop.f32.mrf.mxu0
        %v1809 = vadd.f32 %v724, %v1808
        %v1810 = vpop.f32.mrf.mxu0
        %v1811 = vadd.f32 %v724, %v1810
        %1812 = vmatmul.bf16.gmra.mxu0 %v972
        %v1813 = vpop.f32.mrf.mxu0
        %v1814 = vadd.f32 %v724, %v1813
        %v1815 = vpop.f32.mrf.mxu0
        %v1816 = vadd.f32 %v724, %v1815
        %1817 = vmatmul.bf16.gmra.mxu0 %v975
        %v1818 = vpop.f32.mrf.mxu0
        %v1819 = vadd.f32 %v724, %v1818
        %v1820 = vpop.f32.mrf.mxu0
        %v1821 = vadd.f32 %v724, %v1820
        %1822 = vmatmul.bf16.gmra.mxu0 %v978
        %v1823 = vpop.f32.mrf.mxu0
        %v1824 = vadd.f32 %v724, %v1823
        %v1825 = vpop.f32.mrf.mxu0
        %v1826 = vadd.f32 %v724, %v1825
        %1827 = vmatmul.bf16.gmra.mxu0 %v981
        %v1828 = vpop.f32.mrf.mxu0
        %v1829 = vadd.f32 %v724, %v1828
        %v1830 = vpop.f32.mrf.mxu0
        %v1831 = vadd.f32 %v724, %v1830
        %1832 = vmatmul.bf16.gmra.mxu0 %v984
        %v1833 = vpop.f32.mrf.mxu0
        %v1834 = vadd.f32 %v724, %v1833
        %v1835 = vpop.f32.mrf.mxu0
        %v1836 = vadd.f32 %v724, %v1835
        %1837 = vmatmul.bf16.gmra.mxu0 %v987
        %v1838 = vpop.f32.mrf.mxu0
        %v1839 = vadd.f32 %v724, %v1838
        %v1840 = vpop.f32.mrf.mxu0
        %v1841 = vadd.f32 %v724, %v1840
        %1842 = vmatmul.bf16.gmra.mxu0 %v990
        %v1843 = vpop.f32.mrf.mxu0
        %v1844 = vadd.f32 %v724, %v1843
        %v1845 = vpop.f32.mrf.mxu0
        %v1846 = vadd.f32 %v724, %v1845
        %1847 = vmatmul.bf16.gmra.mxu0 %v993
        %v1848 = vpop.f32.mrf.mxu0
        %v1849 = vadd.f32 %v724, %v1848
        %v1850 = vpop.f32.mrf.mxu0
        %v1851 = vadd.f32 %v724, %v1850
        %1852 = vmatmul.bf16.gmra.mxu0 %v996
        %v1853 = vpop.f32.mrf.mxu0
        %v1854 = vadd.f32 %v724, %v1853
        %v1855 = vpop.f32.mrf.mxu0
        %v1856 = vadd.f32 %v724, %v1855
        %1857 = vmatmul.bf16.gmra.mxu0 %v999
        %v1858 = vpop.f32.mrf.mxu0
        %v1859 = vadd.f32 %v724, %v1858
        %v1860 = vpop.f32.mrf.mxu0
        %v1861 = vadd.f32 %v724, %v1860
        %1862 = vmatmul.bf16.gmra.mxu0 %v1002
        %v1863 = vpop.f32.mrf.mxu0
        %v1864 = vadd.f32 %v724, %v1863
        %v1865 = vpop.f32.mrf.mxu0
        %v1866 = vadd.f32 %v724, %v1865
        %1867 = vmatmul.bf16.gmra.mxu0 %v1005
        %v1868 = vpop.f32.mrf.mxu0
        %v1869 = vadd.f32 %v724, %v1868
        %v1870 = vpop.f32.mrf.mxu0
        %v1871 = vadd.f32 %v724, %v1870
        %1872 = vmatmul.bf16.gmra.mxu0 %v1008
        %v1873 = vpop.f32.mrf.mxu0
        %v1874 = vadd.f32 %v724, %v1873
        %v1875 = vpop.f32.mrf.mxu0
        %v1876 = vadd.f32 %v724, %v1875
        %1877 = vmatmul.bf16.gmra.mxu0 %v1011
        %v1878 = vpop.f32.mrf.mxu0
        %v1879 = vadd.f32 %v724, %v1878
        %v1880 = vpop.f32.mrf.mxu0
        %v1881 = vadd.f32 %v724, %v1880
        %1882 = vmatmul.bf16.gmra.mxu0 %v1014
        %v1883 = vpop.f32.mrf.mxu0
        %v1884 = vadd.f32 %v724, %v1883
        %v1885 = vpop.f32.mrf.mxu0
        %v1886 = vadd.f32 %v724, %v1885
        %1887 = vmatmul.bf16.gmra.mxu0 %v1017
        %v1888 = vpop.f32.mrf.mxu0
        %v1889 = vadd.f32 %v724, %v1888
        %v1890 = vpop.f32.mrf.mxu0
        %v1891 = vadd.f32 %v724, %v1890
        %1892 = vmatmul.bf16.gmra.mxu0 %v1020
        %v1893 = vpop.f32.mrf.mxu0
        %v1894 = vadd.f32 %v724, %v1893
        %v1895 = vpop.f32.mrf.mxu0
        %v1896 = vadd.f32 %v724, %v1895
        %1897 = vdwg.mxu0
        %1898 = vmatpush.bf16.msra.mxu0 0
        %1899 = vmatpush.bf16.msra.mxu0 0
        %1900 = vmatpush.bf16.msra.mxu0 0
        %1901 = vmatpush.bf16.msra.mxu0 0
        %1902 = vmatpush.bf16.msra.mxu0 0
        %1903 = vmatpush.bf16.msra.mxu0 0
        %1904 = vmatpush.bf16.msra.mxu0 0
        %1905 = vmatpush.bf16.msra.mxu0 %v1039
        %1906 = vmatmul.bf16.gmra.mxu0 %v927
        %v1907 = vpop.f32.mrf.mxu0
        %v1908 = vadd.f32 %v725, %v1907
        %v1909 = vpop.f32.mrf.mxu0
        %v1910 = vadd.f32 %v725, %v1909
        %1911 = vmatmul.bf16.gmra.mxu0 %v930
        %v1912 = vpop.f32.mrf.mxu0
        %v1913 = vadd.f32 %v725, %v1912
        %v1914 = vpop.f32.mrf.mxu0
        %v1915 = vadd.f32 %v725, %v1914
        %1916 = vmatmul.bf16.gmra.mxu0 %v933
        %v1917 = vpop.f32.mrf.mxu0
        %v1918 = vadd.f32 %v725, %v1917
        %v1919 = vpop.f32.mrf.mxu0
        %v1920 = vadd.f32 %v725, %v1919
        %1921 = vmatmul.bf16.gmra.mxu0 %v936
        %v1922 = vpop.f32.mrf.mxu0
        %v1923 = vadd.f32 %v725, %v1922
        %v1924 = vpop.f32.mrf.mxu0
        %v1925 = vadd.f32 %v725, %v1924
        %1926 = vmatmul.bf16.gmra.mxu0 %v939
        %v1927 = vpop.f32.mrf.mxu0
        %v1928 = vadd.f32 %v725, %v1927
        %v1929 = vpop.f32.mrf.mxu0
        %v1930 = vadd.f32 %v725, %v1929
        %1931 = vmatmul.bf16.gmra.mxu0 %v942
        %v1932 = vpop.f32.mrf.mxu0
        %v1933 = vadd.f32 %v725, %v1932
        %v1934 = vpop.f32.mrf.mxu0
        %v1935 = vadd.f32 %v725, %v1934
        %1936 = vmatmul.bf16.gmra.mxu0 %v945
        %v1937 = vpop.f32.mrf.mxu0
        %v1938 = vadd.f32 %v725, %v1937
        %v1939 = vpop.f32.mrf.mxu0
        %v1940 = vadd.f32 %v725, %v1939
        %1941 = vmatmul.bf16.gmra.mxu0 %v948
        %v1942 = vpop.f32.mrf.mxu0
        %v1943 = vadd.f32 %v725, %v1942
        %v1944 = vpop.f32.mrf.mxu0
        %v1945 = vadd.f32 %v725, %v1944
        %1946 = vmatmul.bf16.gmra.mxu0 %v951
        %v1947 = vpop.f32.mrf.mxu0
        %v1948 = vadd.f32 %v725, %v1947
        %v1949 = vpop.f32.mrf.mxu0
        %v1950 = vadd.f32 %v725, %v1949
        %1951 = vmatmul.bf16.gmra.mxu0 %v954
        %v1952 = vpop.f32.mrf.mxu0
        %v1953 = vadd.f32 %v725, %v1952
        %v1954 = vpop.f32.mrf.mxu0
        %v1955 = vadd.f32 %v725, %v1954
        %1956 = vmatmul.bf16.gmra.mxu0 %v957
        %v1957 = vpop.f32.mrf.mxu0
        %v1958 = vadd.f32 %v725, %v1957
        %v1959 = vpop.f32.mrf.mxu0
        %v1960 = vadd.f32 %v725, %v1959
        %1961 = vmatmul.bf16.gmra.mxu0 %v960
        %v1962 = vpop.f32.mrf.mxu0
        %v1963 = vadd.f32 %v725, %v1962
        %v1964 = vpop.f32.mrf.mxu0
        %v1965 = vadd.f32 %v725, %v1964
        %1966 = vmatmul.bf16.gmra.mxu0 %v963
        %v1967 = vpop.f32.mrf.mxu0
        %v1968 = vadd.f32 %v725, %v1967
        %v1969 = vpop.f32.mrf.mxu0
        %v1970 = vadd.f32 %v725, %v1969
        %1971 = vmatmul.bf16.gmra.mxu0 %v966
        %v1972 = vpop.f32.mrf.mxu0
        %v1973 = vadd.f32 %v725, %v1972
        %v1974 = vpop.f32.mrf.mxu0
        %v1975 = vadd.f32 %v725, %v1974
        %1976 = vmatmul.bf16.gmra.mxu0 %v969
        %v1977 = vpop.f32.mrf.mxu0
        %v1978 = vadd.f32 %v725, %v1977
        %v1979 = vpop.f32.mrf.mxu0
        %v1980 = vadd.f32 %v725, %v1979
        %1981 = vmatmul.bf16.gmra.mxu0 %v972
        %v1982 = vpop.f32.mrf.mxu0
        %v1983 = vadd.f32 %v725, %v1982
        %v1984 = vpop.f32.mrf.mxu0
        %v1985 = vadd.f32 %v725, %v1984
        %1986 = vmatmul.bf16.gmra.mxu0 %v975
        %v1987 = vpop.f32.mrf.mxu0
        %v1988 = vadd.f32 %v725, %v1987
        %v1989 = vpop.f32.mrf.mxu0
        %v1990 = vadd.f32 %v725, %v1989
        %1991 = vmatmul.bf16.gmra.mxu0 %v978
        %v1992 = vpop.f32.mrf.mxu0
        %v1993 = vadd.f32 %v725, %v1992
        %v1994 = vpop.f32.mrf.mxu0
        %v1995 = vadd.f32 %v725, %v1994
        %1996 = vmatmul.bf16.gmra.mxu0 %v981
        %v1997 = vpop.f32.mrf.mxu0
        %v1998 = vadd.f32 %v725, %v1997
        %v1999 = vpop.f32.mrf.mxu0
        %v2000 = vadd.f32 %v725, %v1999
        %2001 = vmatmul.bf16.gmra.mxu0 %v984
        %v2002 = vpop.f32.mrf.mxu0
        %v2003 = vadd.f32 %v725, %v2002
        %v2004 = vpop.f32.mrf.mxu0
        %v2005 = vadd.f32 %v725, %v2004
        %2006 = vmatmul.bf16.gmra.mxu0 %v987
        %v2007 = vpop.f32.mrf.mxu0
        %v2008 = vadd.f32 %v725, %v2007
        %v2009 = vpop.f32.mrf.mxu0
        %v2010 = vadd.f32 %v725, %v2009
        %2011 = vmatmul.bf16.gmra.mxu0 %v990
        %v2012 = vpop.f32.mrf.mxu0
        %v2013 = vadd.f32 %v725, %v2012
        %v2014 = vpop.f32.mrf.mxu0
        %v2015 = vadd.f32 %v725, %v2014
        %2016 = vmatmul.bf16.gmra.mxu0 %v993
        %v2017 = vpop.f32.mrf.mxu0
        %v2018 = vadd.f32 %v725, %v2017
        %v2019 = vpop.f32.mrf.mxu0
        %v2020 = vadd.f32 %v725, %v2019
        %2021 = vmatmul.bf16.gmra.mxu0 %v996
        %v2022 = vpop.f32.mrf.mxu0
        %v2023 = vadd.f32 %v725, %v2022
        %v2024 = vpop.f32.mrf.mxu0
        %v2025 = vadd.f32 %v725, %v2024
        %2026 = vmatmul.bf16.gmra.mxu0 %v999
        %v2027 = vpop.f32.mrf.mxu0
        %v2028 = vadd.f32 %v725, %v2027
        %v2029 = vpop.f32.mrf.mxu0
        %v2030 = vadd.f32 %v725, %v2029
        %2031 = vmatmul.bf16.gmra.mxu0 %v1002
        %v2032 = vpop.f32.mrf.mxu0
        %v2033 = vadd.f32 %v725, %v2032
        %v2034 = vpop.f32.mrf.mxu0
        %v2035 = vadd.f32 %v725, %v2034
        %2036 = vmatmul.bf16.gmra.mxu0 %v1005
        %v2037 = vpop.f32.mrf.mxu0
        %v2038 = vadd.f32 %v725, %v2037
        %v2039 = vpop.f32.mrf.mxu0
        %v2040 = vadd.f32 %v725, %v2039
        %2041 = vmatmul.bf16.gmra.mxu0 %v1008
        %v2042 = vpop.f32.mrf.mxu0
        %v2043 = vadd.f32 %v725, %v2042
        %v2044 = vpop.f32.mrf.mxu0
        %v2045 = vadd.f32 %v725, %v2044
        %2046 = vmatmul.bf16.gmra.mxu0 %v1011
        %v2047 = vpop.f32.mrf.mxu0
        %v2048 = vadd.f32 %v725, %v2047
        %v2049 = vpop.f32.mrf.mxu0
        %v2050 = vadd.f32 %v725, %v2049
        %2051 = vmatmul.bf16.gmra.mxu0 %v1014
        %v2052 = vpop.f32.mrf.mxu0
        %v2053 = vadd.f32 %v725, %v2052
        %v2054 = vpop.f32.mrf.mxu0
        %v2055 = vadd.f32 %v725, %v2054
        %2056 = vmatmul.bf16.gmra.mxu0 %v1017
        %v2057 = vpop.f32.mrf.mxu0
        %v2058 = vadd.f32 %v725, %v2057
        %v2059 = vpop.f32.mrf.mxu0
        %v2060 = vadd.f32 %v725, %v2059
        %2061 = vmatmul.bf16.gmra.mxu0 %v1020
        %v2062 = vpop.f32.mrf.mxu0
        %v2063 = vadd.f32 %v725, %v2062
        %v2064 = vpop.f32.mrf.mxu0
        %v2065 = vadd.f32 %v725, %v2064
        %2066 = vdwg.mxu0
        %2067 = vmatpush.bf16.msra.mxu0 0
        %2068 = vmatpush.bf16.msra.mxu0 0
        %2069 = vmatpush.bf16.msra.mxu0 0
        %2070 = vmatpush.bf16.msra.mxu0 0
        %2071 = vmatpush.bf16.msra.mxu0 0
        %2072 = vmatpush.bf16.msra.mxu0 0
        %2073 = vmatpush.bf16.msra.mxu0 0
        %2074 = vmatpush.bf16.msra.mxu0 %v1042
        %2075 = vmatmul.bf16.gmra.mxu0 %v927
        %v2076 = vpop.f32.mrf.mxu0
        %v2077 = vadd.f32 %v726, %v2076
        %v2078 = vpop.f32.mrf.mxu0
        %v2079 = vadd.f32 %v726, %v2078
        %2080 = vmatmul.bf16.gmra.mxu0 %v930
        %v2081 = vpop.f32.mrf.mxu0
        %v2082 = vadd.f32 %v726, %v2081
        %v2083 = vpop.f32.mrf.mxu0
        %v2084 = vadd.f32 %v726, %v2083
        %2085 = vmatmul.bf16.gmra.mxu0 %v933
        %v2086 = vpop.f32.mrf.mxu0
        %v2087 = vadd.f32 %v726, %v2086
        %v2088 = vpop.f32.mrf.mxu0
        %v2089 = vadd.f32 %v726, %v2088
        %2090 = vmatmul.bf16.gmra.mxu0 %v936
        %v2091 = vpop.f32.mrf.mxu0
        %v2092 = vadd.f32 %v726, %v2091
        %v2093 = vpop.f32.mrf.mxu0
        %v2094 = vadd.f32 %v726, %v2093
        %2095 = vmatmul.bf16.gmra.mxu0 %v939
        %v2096 = vpop.f32.mrf.mxu0
        %v2097 = vadd.f32 %v726, %v2096
        %v2098 = vpop.f32.mrf.mxu0
        %v2099 = vadd.f32 %v726, %v2098
        %2100 = vmatmul.bf16.gmra.mxu0 %v942
        %v2101 = vpop.f32.mrf.mxu0
        %v2102 = vadd.f32 %v726, %v2101
        %v2103 = vpop.f32.mrf.mxu0
        %v2104 = vadd.f32 %v726, %v2103
        %2105 = vmatmul.bf16.gmra.mxu0 %v945
        %v2106 = vpop.f32.mrf.mxu0
        %v2107 = vadd.f32 %v726, %v2106
        %v2108 = vpop.f32.mrf.mxu0
        %v2109 = vadd.f32 %v726, %v2108
        %2110 = vmatmul.bf16.gmra.mxu0 %v948
        %v2111 = vpop.f32.mrf.mxu0
        %v2112 = vadd.f32 %v726, %v2111
        %v2113 = vpop.f32.mrf.mxu0
        %v2114 = vadd.f32 %v726, %v2113
        %2115 = vmatmul.bf16.gmra.mxu0 %v951
        %v2116 = vpop.f32.mrf.mxu0
        %v2117 = vadd.f32 %v726, %v2116
        %v2118 = vpop.f32.mrf.mxu0
        %v2119 = vadd.f32 %v726, %v2118
        %2120 = vmatmul.bf16.gmra.mxu0 %v954
        %v2121 = vpop.f32.mrf.mxu0
        %v2122 = vadd.f32 %v726, %v2121
        %v2123 = vpop.f32.mrf.mxu0
        %v2124 = vadd.f32 %v726, %v2123
        %2125 = vmatmul.bf16.gmra.mxu0 %v957
        %v2126 = vpop.f32.mrf.mxu0
        %v2127 = vadd.f32 %v726, %v2126
        %v2128 = vpop.f32.mrf.mxu0
        %v2129 = vadd.f32 %v726, %v2128
        %2130 = vmatmul.bf16.gmra.mxu0 %v960
        %v2131 = vpop.f32.mrf.mxu0
        %v2132 = vadd.f32 %v726, %v2131
        %v2133 = vpop.f32.mrf.mxu0
        %v2134 = vadd.f32 %v726, %v2133
        %2135 = vmatmul.bf16.gmra.mxu0 %v963
        %v2136 = vpop.f32.mrf.mxu0
        %v2137 = vadd.f32 %v726, %v2136
        %v2138 = vpop.f32.mrf.mxu0
        %v2139 = vadd.f32 %v726, %v2138
        %2140 = vmatmul.bf16.gmra.mxu0 %v966
        %v2141 = vpop.f32.mrf.mxu0
        %v2142 = vadd.f32 %v726, %v2141
        %v2143 = vpop.f32.mrf.mxu0
        %v2144 = vadd.f32 %v726, %v2143
        %2145 = vmatmul.bf16.gmra.mxu0 %v969
        %v2146 = vpop.f32.mrf.mxu0
        %v2147 = vadd.f32 %v726, %v2146
        %v2148 = vpop.f32.mrf.mxu0
        %v2149 = vadd.f32 %v726, %v2148
        %2150 = vmatmul.bf16.gmra.mxu0 %v972
        %v2151 = vpop.f32.mrf.mxu0
        %v2152 = vadd.f32 %v726, %v2151
        %v2153 = vpop.f32.mrf.mxu0
        %v2154 = vadd.f32 %v726, %v2153
        %2155 = vmatmul.bf16.gmra.mxu0 %v975
        %v2156 = vpop.f32.mrf.mxu0
        %v2157 = vadd.f32 %v726, %v2156
        %v2158 = vpop.f32.mrf.mxu0
        %v2159 = vadd.f32 %v726, %v2158
        %2160 = vmatmul.bf16.gmra.mxu0 %v978
        %v2161 = vpop.f32.mrf.mxu0
        %v2162 = vadd.f32 %v726, %v2161
        %v2163 = vpop.f32.mrf.mxu0
        %v2164 = vadd.f32 %v726, %v2163
        %2165 = vmatmul.bf16.gmra.mxu0 %v981
        %v2166 = vpop.f32.mrf.mxu0
        %v2167 = vadd.f32 %v726, %v2166
        %v2168 = vpop.f32.mrf.mxu0
        %v2169 = vadd.f32 %v726, %v2168
        %2170 = vmatmul.bf16.gmra.mxu0 %v984
        %v2171 = vpop.f32.mrf.mxu0
        %v2172 = vadd.f32 %v726, %v2171
        %v2173 = vpop.f32.mrf.mxu0
        %v2174 = vadd.f32 %v726, %v2173
        %2175 = vmatmul.bf16.gmra.mxu0 %v987
        %v2176 = vpop.f32.mrf.mxu0
        %v2177 = vadd.f32 %v726, %v2176
        %v2178 = vpop.f32.mrf.mxu0
        %v2179 = vadd.f32 %v726, %v2178
        %2180 = vmatmul.bf16.gmra.mxu0 %v990
        %v2181 = vpop.f32.mrf.mxu0
        %v2182 = vadd.f32 %v726, %v2181
        %v2183 = vpop.f32.mrf.mxu0
        %v2184 = vadd.f32 %v726, %v2183
        %2185 = vmatmul.bf16.gmra.mxu0 %v993
        %v2186 = vpop.f32.mrf.mxu0
        %v2187 = vadd.f32 %v726, %v2186
        %v2188 = vpop.f32.mrf.mxu0
        %v2189 = vadd.f32 %v726, %v2188
        %2190 = vmatmul.bf16.gmra.mxu0 %v996
        %v2191 = vpop.f32.mrf.mxu0
        %v2192 = vadd.f32 %v726, %v2191
        %v2193 = vpop.f32.mrf.mxu0
        %v2194 = vadd.f32 %v726, %v2193
        %2195 = vmatmul.bf16.gmra.mxu0 %v999
        %v2196 = vpop.f32.mrf.mxu0
        %v2197 = vadd.f32 %v726, %v2196
        %v2198 = vpop.f32.mrf.mxu0
        %v2199 = vadd.f32 %v726, %v2198
        %2200 = vmatmul.bf16.gmra.mxu0 %v1002
        %v2201 = vpop.f32.mrf.mxu0
        %v2202 = vadd.f32 %v726, %v2201
        %v2203 = vpop.f32.mrf.mxu0
        %v2204 = vadd.f32 %v726, %v2203
        %2205 = vmatmul.bf16.gmra.mxu0 %v1005
        %v2206 = vpop.f32.mrf.mxu0
        %v2207 = vadd.f32 %v726, %v2206
        %v2208 = vpop.f32.mrf.mxu0
        %v2209 = vadd.f32 %v726, %v2208
        %2210 = vmatmul.bf16.gmra.mxu0 %v1008
        %v2211 = vpop.f32.mrf.mxu0
        %v2212 = vadd.f32 %v726, %v2211
        %v2213 = vpop.f32.mrf.mxu0
        %v2214 = vadd.f32 %v726, %v2213
        %2215 = vmatmul.bf16.gmra.mxu0 %v1011
        %v2216 = vpop.f32.mrf.mxu0
        %v2217 = vadd.f32 %v726, %v2216
        %v2218 = vpop.f32.mrf.mxu0
        %v2219 = vadd.f32 %v726, %v2218
        %2220 = vmatmul.bf16.gmra.mxu0 %v1014
        %v2221 = vpop.f32.mrf.mxu0
        %v2222 = vadd.f32 %v726, %v2221
        %v2223 = vpop.f32.mrf.mxu0
        %v2224 = vadd.f32 %v726, %v2223
        %2225 = vmatmul.bf16.gmra.mxu0 %v1017
        %v2226 = vpop.f32.mrf.mxu0
        %v2227 = vadd.f32 %v726, %v2226
        %v2228 = vpop.f32.mrf.mxu0
        %v2229 = vadd.f32 %v726, %v2228
        %2230 = vmatmul.bf16.gmra.mxu0 %v1020
        %v2231 = vpop.f32.mrf.mxu0
        %v2232 = vadd.f32 %v726, %v2231
        %v2233 = vpop.f32.mrf.mxu0
        %v2234 = vadd.f32 %v726, %v2233
        %2235 = vdwg.mxu0
        %2236 = vmatpush.bf16.msra.mxu0 0
        %2237 = vmatpush.bf16.msra.mxu0 0
        %2238 = vmatpush.bf16.msra.mxu0 0
        %2239 = vmatpush.bf16.msra.mxu0 0
        %2240 = vmatpush.bf16.msra.mxu0 0
        %2241 = vmatpush.bf16.msra.mxu0 0
        %2242 = vmatpush.bf16.msra.mxu0 0
        %2243 = vmatpush.bf16.msra.mxu0 %v1045
        %2244 = vmatmul.bf16.gmra.mxu0 %v927
        %v2245 = vpop.f32.mrf.mxu0
        %v2246 = vadd.f32 %v727, %v2245
        %v2247 = vpop.f32.mrf.mxu0
        %v2248 = vadd.f32 %v727, %v2247
        %2249 = vmatmul.bf16.gmra.mxu0 %v930
        %v2250 = vpop.f32.mrf.mxu0
        %v2251 = vadd.f32 %v727, %v2250
        %v2252 = vpop.f32.mrf.mxu0
        %v2253 = vadd.f32 %v727, %v2252
        %2254 = vmatmul.bf16.gmra.mxu0 %v933
        %v2255 = vpop.f32.mrf.mxu0
        %v2256 = vadd.f32 %v727, %v2255
        %v2257 = vpop.f32.mrf.mxu0
        %v2258 = vadd.f32 %v727, %v2257
        %2259 = vmatmul.bf16.gmra.mxu0 %v936
        %v2260 = vpop.f32.mrf.mxu0
        %v2261 = vadd.f32 %v727, %v2260
        %v2262 = vpop.f32.mrf.mxu0
        %v2263 = vadd.f32 %v727, %v2262
        %2264 = vmatmul.bf16.gmra.mxu0 %v939
        %v2265 = vpop.f32.mrf.mxu0
        %v2266 = vadd.f32 %v727, %v2265
        %v2267 = vpop.f32.mrf.mxu0
        %v2268 = vadd.f32 %v727, %v2267
        %2269 = vmatmul.bf16.gmra.mxu0 %v942
        %v2270 = vpop.f32.mrf.mxu0
        %v2271 = vadd.f32 %v727, %v2270
        %v2272 = vpop.f32.mrf.mxu0
        %v2273 = vadd.f32 %v727, %v2272
        %2274 = vmatmul.bf16.gmra.mxu0 %v945
        %v2275 = vpop.f32.mrf.mxu0
        %v2276 = vadd.f32 %v727, %v2275
        %v2277 = vpop.f32.mrf.mxu0
        %v2278 = vadd.f32 %v727, %v2277
        %2279 = vmatmul.bf16.gmra.mxu0 %v948
        %v2280 = vpop.f32.mrf.mxu0
        %v2281 = vadd.f32 %v727, %v2280
        %v2282 = vpop.f32.mrf.mxu0
        %v2283 = vadd.f32 %v727, %v2282
        %2284 = vmatmul.bf16.gmra.mxu0 %v951
        %v2285 = vpop.f32.mrf.mxu0
        %v2286 = vadd.f32 %v727, %v2285
        %v2287 = vpop.f32.mrf.mxu0
        %v2288 = vadd.f32 %v727, %v2287
        %2289 = vmatmul.bf16.gmra.mxu0 %v954
        %v2290 = vpop.f32.mrf.mxu0
        %v2291 = vadd.f32 %v727, %v2290
        %v2292 = vpop.f32.mrf.mxu0
        %v2293 = vadd.f32 %v727, %v2292
        %2294 = vmatmul.bf16.gmra.mxu0 %v957
        %v2295 = vpop.f32.mrf.mxu0
        %v2296 = vadd.f32 %v727, %v2295
        %v2297 = vpop.f32.mrf.mxu0
        %v2298 = vadd.f32 %v727, %v2297
        %2299 = vmatmul.bf16.gmra.mxu0 %v960
        %v2300 = vpop.f32.mrf.mxu0
        %v2301 = vadd.f32 %v727, %v2300
        %v2302 = vpop.f32.mrf.mxu0
        %v2303 = vadd.f32 %v727, %v2302
        %2304 = vmatmul.bf16.gmra.mxu0 %v963
        %v2305 = vpop.f32.mrf.mxu0
        %v2306 = vadd.f32 %v727, %v2305
        %v2307 = vpop.f32.mrf.mxu0
        %v2308 = vadd.f32 %v727, %v2307
        %2309 = vmatmul.bf16.gmra.mxu0 %v966
        %v2310 = vpop.f32.mrf.mxu0
        %v2311 = vadd.f32 %v727, %v2310
        %v2312 = vpop.f32.mrf.mxu0
        %v2313 = vadd.f32 %v727, %v2312
        %2314 = vmatmul.bf16.gmra.mxu0 %v969
        %v2315 = vpop.f32.mrf.mxu0
        %v2316 = vadd.f32 %v727, %v2315
        %v2317 = vpop.f32.mrf.mxu0
        %v2318 = vadd.f32 %v727, %v2317
        %2319 = vmatmul.bf16.gmra.mxu0 %v972
        %v2320 = vpop.f32.mrf.mxu0
        %v2321 = vadd.f32 %v727, %v2320
        %v2322 = vpop.f32.mrf.mxu0
        %v2323 = vadd.f32 %v727, %v2322
        %2324 = vmatmul.bf16.gmra.mxu0 %v975
        %v2325 = vpop.f32.mrf.mxu0
        %v2326 = vadd.f32 %v727, %v2325
        %v2327 = vpop.f32.mrf.mxu0
        %v2328 = vadd.f32 %v727, %v2327
        %2329 = vmatmul.bf16.gmra.mxu0 %v978
        %v2330 = vpop.f32.mrf.mxu0
        %v2331 = vadd.f32 %v727, %v2330
        %v2332 = vpop.f32.mrf.mxu0
        %v2333 = vadd.f32 %v727, %v2332
        %2334 = vmatmul.bf16.gmra.mxu0 %v981
        %v2335 = vpop.f32.mrf.mxu0
        %v2336 = vadd.f32 %v727, %v2335
        %v2337 = vpop.f32.mrf.mxu0
        %v2338 = vadd.f32 %v727, %v2337
        %2339 = vmatmul.bf16.gmra.mxu0 %v984
        %v2340 = vpop.f32.mrf.mxu0
        %v2341 = vadd.f32 %v727, %v2340
        %v2342 = vpop.f32.mrf.mxu0
        %v2343 = vadd.f32 %v727, %v2342
        %2344 = vmatmul.bf16.gmra.mxu0 %v987
        %v2345 = vpop.f32.mrf.mxu0
        %v2346 = vadd.f32 %v727, %v2345
        %v2347 = vpop.f32.mrf.mxu0
        %v2348 = vadd.f32 %v727, %v2347
        %2349 = vmatmul.bf16.gmra.mxu0 %v990
        %v2350 = vpop.f32.mrf.mxu0
        %v2351 = vadd.f32 %v727, %v2350
        %v2352 = vpop.f32.mrf.mxu0
        %v2353 = vadd.f32 %v727, %v2352
        %2354 = vmatmul.bf16.gmra.mxu0 %v993
        %v2355 = vpop.f32.mrf.mxu0
        %v2356 = vadd.f32 %v727, %v2355
        %v2357 = vpop.f32.mrf.mxu0
        %v2358 = vadd.f32 %v727, %v2357
        %2359 = vmatmul.bf16.gmra.mxu0 %v996
        %v2360 = vpop.f32.mrf.mxu0
        %v2361 = vadd.f32 %v727, %v2360
        %v2362 = vpop.f32.mrf.mxu0
        %v2363 = vadd.f32 %v727, %v2362
        %2364 = vmatmul.bf16.gmra.mxu0 %v999
        %v2365 = vpop.f32.mrf.mxu0
        %v2366 = vadd.f32 %v727, %v2365
        %v2367 = vpop.f32.mrf.mxu0
        %v2368 = vadd.f32 %v727, %v2367
        %2369 = vmatmul.bf16.gmra.mxu0 %v1002
        %v2370 = vpop.f32.mrf.mxu0
        %v2371 = vadd.f32 %v727, %v2370
        %v2372 = vpop.f32.mrf.mxu0
        %v2373 = vadd.f32 %v727, %v2372
        %2374 = vmatmul.bf16.gmra.mxu0 %v1005
        %v2375 = vpop.f32.mrf.mxu0
        %v2376 = vadd.f32 %v727, %v2375
        %v2377 = vpop.f32.mrf.mxu0
        %v2378 = vadd.f32 %v727, %v2377
        %2379 = vmatmul.bf16.gmra.mxu0 %v1008
        %v2380 = vpop.f32.mrf.mxu0
        %v2381 = vadd.f32 %v727, %v2380
        %v2382 = vpop.f32.mrf.mxu0
        %v2383 = vadd.f32 %v727, %v2382
        %2384 = vmatmul.bf16.gmra.mxu0 %v1011
        %v2385 = vpop.f32.mrf.mxu0
        %v2386 = vadd.f32 %v727, %v2385
        %v2387 = vpop.f32.mrf.mxu0
        %v2388 = vadd.f32 %v727, %v2387
        %2389 = vmatmul.bf16.gmra.mxu0 %v1014
        %v2390 = vpop.f32.mrf.mxu0
        %v2391 = vadd.f32 %v727, %v2390
        %v2392 = vpop.f32.mrf.mxu0
        %v2393 = vadd.f32 %v727, %v2392
        %2394 = vmatmul.bf16.gmra.mxu0 %v1017
        %v2395 = vpop.f32.mrf.mxu0
        %v2396 = vadd.f32 %v727, %v2395
        %v2397 = vpop.f32.mrf.mxu0
        %v2398 = vadd.f32 %v727, %v2397
        %2399 = vmatmul.bf16.gmra.mxu0 %v1020
        %v2400 = vpop.f32.mrf.mxu0
        %v2401 = vadd.f32 %v727, %v2400
        %v2402 = vpop.f32.mrf.mxu0
        %v2403 = vadd.f32 %v727, %v2402
        %2404 = vdwg.mxu0
        %2405 = vmatpush.bf16.msra.mxu0 0
        %2406 = vmatpush.bf16.msra.mxu0 0
        %2407 = vmatpush.bf16.msra.mxu0 0
        %2408 = vmatpush.bf16.msra.mxu0 0
        %2409 = vmatpush.bf16.msra.mxu0 0
        %2410 = vmatpush.bf16.msra.mxu0 0
        %2411 = vmatpush.bf16.msra.mxu0 0
        %2412 = vmatpush.bf16.msra.mxu0 %v1048
        %2413 = vmatmul.bf16.gmra.mxu0 %v927
        %v2414 = vpop.f32.mrf.mxu0
        %v2415 = vadd.f32 %v728, %v2414
        %v2416 = vpop.f32.mrf.mxu0
        %v2417 = vadd.f32 %v728, %v2416
        %2418 = vmatmul.bf16.gmra.mxu0 %v930
        %v2419 = vpop.f32.mrf.mxu0
        %v2420 = vadd.f32 %v728, %v2419
        %v2421 = vpop.f32.mrf.mxu0
        %v2422 = vadd.f32 %v728, %v2421
        %2423 = vmatmul.bf16.gmra.mxu0 %v933
        %v2424 = vpop.f32.mrf.mxu0
        %v2425 = vadd.f32 %v728, %v2424
        %v2426 = vpop.f32.mrf.mxu0
        %v2427 = vadd.f32 %v728, %v2426
        %2428 = vmatmul.bf16.gmra.mxu0 %v936
        %v2429 = vpop.f32.mrf.mxu0
        %v2430 = vadd.f32 %v728, %v2429
        %v2431 = vpop.f32.mrf.mxu0
        %v2432 = vadd.f32 %v728, %v2431
        %2433 = vmatmul.bf16.gmra.mxu0 %v939
        %v2434 = vpop.f32.mrf.mxu0
        %v2435 = vadd.f32 %v728, %v2434
        %v2436 = vpop.f32.mrf.mxu0
        %v2437 = vadd.f32 %v728, %v2436
        %2438 = vmatmul.bf16.gmra.mxu0 %v942
        %v2439 = vpop.f32.mrf.mxu0
        %v2440 = vadd.f32 %v728, %v2439
        %v2441 = vpop.f32.mrf.mxu0
        %v2442 = vadd.f32 %v728, %v2441
        %2443 = vmatmul.bf16.gmra.mxu0 %v945
        %v2444 = vpop.f32.mrf.mxu0
        %v2445 = vadd.f32 %v728, %v2444
        %v2446 = vpop.f32.mrf.mxu0
        %v2447 = vadd.f32 %v728, %v2446
        %2448 = vmatmul.bf16.gmra.mxu0 %v948
        %v2449 = vpop.f32.mrf.mxu0
        %v2450 = vadd.f32 %v728, %v2449
        %v2451 = vpop.f32.mrf.mxu0
        %v2452 = vadd.f32 %v728, %v2451
        %2453 = vmatmul.bf16.gmra.mxu0 %v951
        %v2454 = vpop.f32.mrf.mxu0
        %v2455 = vadd.f32 %v728, %v2454
        %v2456 = vpop.f32.mrf.mxu0
        %v2457 = vadd.f32 %v728, %v2456
        %2458 = vmatmul.bf16.gmra.mxu0 %v954
        %v2459 = vpop.f32.mrf.mxu0
        %v2460 = vadd.f32 %v728, %v2459
        %v2461 = vpop.f32.mrf.mxu0
        %v2462 = vadd.f32 %v728, %v2461
        %2463 = vmatmul.bf16.gmra.mxu0 %v957
        %v2464 = vpop.f32.mrf.mxu0
        %v2465 = vadd.f32 %v728, %v2464
        %v2466 = vpop.f32.mrf.mxu0
        %v2467 = vadd.f32 %v728, %v2466
        %2468 = vmatmul.bf16.gmra.mxu0 %v960
        %v2469 = vpop.f32.mrf.mxu0
        %v2470 = vadd.f32 %v728, %v2469
        %v2471 = vpop.f32.mrf.mxu0
        %v2472 = vadd.f32 %v728, %v2471
        %2473 = vmatmul.bf16.gmra.mxu0 %v963
        %v2474 = vpop.f32.mrf.mxu0
        %v2475 = vadd.f32 %v728, %v2474
        %v2476 = vpop.f32.mrf.mxu0
        %v2477 = vadd.f32 %v728, %v2476
        %2478 = vmatmul.bf16.gmra.mxu0 %v966
        %v2479 = vpop.f32.mrf.mxu0
        %v2480 = vadd.f32 %v728, %v2479
        %v2481 = vpop.f32.mrf.mxu0
        %v2482 = vadd.f32 %v728, %v2481
        %2483 = vmatmul.bf16.gmra.mxu0 %v969
        %v2484 = vpop.f32.mrf.mxu0
        %v2485 = vadd.f32 %v728, %v2484
        %v2486 = vpop.f32.mrf.mxu0
        %v2487 = vadd.f32 %v728, %v2486
        %2488 = vmatmul.bf16.gmra.mxu0 %v972
        %v2489 = vpop.f32.mrf.mxu0
        %v2490 = vadd.f32 %v728, %v2489
        %v2491 = vpop.f32.mrf.mxu0
        %v2492 = vadd.f32 %v728, %v2491
        %2493 = vmatmul.bf16.gmra.mxu0 %v975
        %v2494 = vpop.f32.mrf.mxu0
        %v2495 = vadd.f32 %v728, %v2494
        %v2496 = vpop.f32.mrf.mxu0
        %v2497 = vadd.f32 %v728, %v2496
        %2498 = vmatmul.bf16.gmra.mxu0 %v978
        %v2499 = vpop.f32.mrf.mxu0
        %v2500 = vadd.f32 %v728, %v2499
        %v2501 = vpop.f32.mrf.mxu0
        %v2502 = vadd.f32 %v728, %v2501
        %2503 = vmatmul.bf16.gmra.mxu0 %v981
        %v2504 = vpop.f32.mrf.mxu0
        %v2505 = vadd.f32 %v728, %v2504
        %v2506 = vpop.f32.mrf.mxu0
        %v2507 = vadd.f32 %v728, %v2506
        %2508 = vmatmul.bf16.gmra.mxu0 %v984
        %v2509 = vpop.f32.mrf.mxu0
        %v2510 = vadd.f32 %v728, %v2509
        %v2511 = vpop.f32.mrf.mxu0
        %v2512 = vadd.f32 %v728, %v2511
        %2513 = vmatmul.bf16.gmra.mxu0 %v987
        %v2514 = vpop.f32.mrf.mxu0
        %v2515 = vadd.f32 %v728, %v2514
        %v2516 = vpop.f32.mrf.mxu0
        %v2517 = vadd.f32 %v728, %v2516
        %2518 = vmatmul.bf16.gmra.mxu0 %v990
        %v2519 = vpop.f32.mrf.mxu0
        %v2520 = vadd.f32 %v728, %v2519
        %v2521 = vpop.f32.mrf.mxu0
        %v2522 = vadd.f32 %v728, %v2521
        %2523 = vmatmul.bf16.gmra.mxu0 %v993
        %v2524 = vpop.f32.mrf.mxu0
        %v2525 = vadd.f32 %v728, %v2524
        %v2526 = vpop.f32.mrf.mxu0
        %v2527 = vadd.f32 %v728, %v2526
        %2528 = vmatmul.bf16.gmra.mxu0 %v996
        %v2529 = vpop.f32.mrf.mxu0
        %v2530 = vadd.f32 %v728, %v2529
        %v2531 = vpop.f32.mrf.mxu0
        %v2532 = vadd.f32 %v728, %v2531
        %2533 = vmatmul.bf16.gmra.mxu0 %v999
        %v2534 = vpop.f32.mrf.mxu0
        %v2535 = vadd.f32 %v728, %v2534
        %v2536 = vpop.f32.mrf.mxu0
        %v2537 = vadd.f32 %v728, %v2536
        %2538 = vmatmul.bf16.gmra.mxu0 %v1002
        %v2539 = vpop.f32.mrf.mxu0
        %v2540 = vadd.f32 %v728, %v2539
        %v2541 = vpop.f32.mrf.mxu0
        %v2542 = vadd.f32 %v728, %v2541
        %2543 = vmatmul.bf16.gmra.mxu0 %v1005
        %v2544 = vpop.f32.mrf.mxu0
        %v2545 = vadd.f32 %v728, %v2544
        %v2546 = vpop.f32.mrf.mxu0
        %v2547 = vadd.f32 %v728, %v2546
        %2548 = vmatmul.bf16.gmra.mxu0 %v1008
        %v2549 = vpop.f32.mrf.mxu0
        %v2550 = vadd.f32 %v728, %v2549
        %v2551 = vpop.f32.mrf.mxu0
        %v2552 = vadd.f32 %v728, %v2551
        %2553 = vmatmul.bf16.gmra.mxu0 %v1011
        %v2554 = vpop.f32.mrf.mxu0
        %v2555 = vadd.f32 %v728, %v2554
        %v2556 = vpop.f32.mrf.mxu0
        %v2557 = vadd.f32 %v728, %v2556
        %2558 = vmatmul.bf16.gmra.mxu0 %v1014
        %v2559 = vpop.f32.mrf.mxu0
        %v2560 = vadd.f32 %v728, %v2559
        %v2561 = vpop.f32.mrf.mxu0
        %v2562 = vadd.f32 %v728, %v2561
        %2563 = vmatmul.bf16.gmra.mxu0 %v1017
        %v2564 = vpop.f32.mrf.mxu0
        %v2565 = vadd.f32 %v728, %v2564
        %v2566 = vpop.f32.mrf.mxu0
        %v2567 = vadd.f32 %v728, %v2566
        %2568 = vmatmul.bf16.gmra.mxu0 %v1020
        %v2569 = vpop.f32.mrf.mxu0
        %v2570 = vadd.f32 %v728, %v2569
        %v2571 = vpop.f32.mrf.mxu0
        %v2572 = vadd.f32 %v728, %v2571
        %2573 = vdwg.mxu0
        %2574 = vmatpush.bf16.msra.mxu0 0
        %2575 = vmatpush.bf16.msra.mxu0 0
        %2576 = vmatpush.bf16.msra.mxu0 0
        %2577 = vmatpush.bf16.msra.mxu0 0
        %2578 = vmatpush.bf16.msra.mxu0 0
        %2579 = vmatpush.bf16.msra.mxu0 0
        %2580 = vmatpush.bf16.msra.mxu0 0
        %2581 = vmatpush.bf16.msra.mxu0 %v1051
        %2582 = vmatmul.bf16.gmra.mxu0 %v927
        %v2583 = vpop.f32.mrf.mxu0
        %v2584 = vadd.f32 %v729, %v2583
        %v2585 = vpop.f32.mrf.mxu0
        %v2586 = vadd.f32 %v729, %v2585
        %2587 = vmatmul.bf16.gmra.mxu0 %v930
        %v2588 = vpop.f32.mrf.mxu0
        %v2589 = vadd.f32 %v729, %v2588
        %v2590 = vpop.f32.mrf.mxu0
        %v2591 = vadd.f32 %v729, %v2590
        %2592 = vmatmul.bf16.gmra.mxu0 %v933
        %v2593 = vpop.f32.mrf.mxu0
        %v2594 = vadd.f32 %v729, %v2593
        %v2595 = vpop.f32.mrf.mxu0
        %v2596 = vadd.f32 %v729, %v2595
        %2597 = vmatmul.bf16.gmra.mxu0 %v936
        %v2598 = vpop.f32.mrf.mxu0
        %v2599 = vadd.f32 %v729, %v2598
        %v2600 = vpop.f32.mrf.mxu0
        %v2601 = vadd.f32 %v729, %v2600
        %2602 = vmatmul.bf16.gmra.mxu0 %v939
        %v2603 = vpop.f32.mrf.mxu0
        %v2604 = vadd.f32 %v729, %v2603
        %v2605 = vpop.f32.mrf.mxu0
        %v2606 = vadd.f32 %v729, %v2605
        %2607 = vmatmul.bf16.gmra.mxu0 %v942
        %v2608 = vpop.f32.mrf.mxu0
        %v2609 = vadd.f32 %v729, %v2608
        %v2610 = vpop.f32.mrf.mxu0
        %v2611 = vadd.f32 %v729, %v2610
        %2612 = vmatmul.bf16.gmra.mxu0 %v945
        %v2613 = vpop.f32.mrf.mxu0
        %v2614 = vadd.f32 %v729, %v2613
        %v2615 = vpop.f32.mrf.mxu0
        %v2616 = vadd.f32 %v729, %v2615
        %2617 = vmatmul.bf16.gmra.mxu0 %v948
        %v2618 = vpop.f32.mrf.mxu0
        %v2619 = vadd.f32 %v729, %v2618
        %v2620 = vpop.f32.mrf.mxu0
        %v2621 = vadd.f32 %v729, %v2620
        %2622 = vmatmul.bf16.gmra.mxu0 %v951
        %v2623 = vpop.f32.mrf.mxu0
        %v2624 = vadd.f32 %v729, %v2623
        %v2625 = vpop.f32.mrf.mxu0
        %v2626 = vadd.f32 %v729, %v2625
        %2627 = vmatmul.bf16.gmra.mxu0 %v954
        %v2628 = vpop.f32.mrf.mxu0
        %v2629 = vadd.f32 %v729, %v2628
        %v2630 = vpop.f32.mrf.mxu0
        %v2631 = vadd.f32 %v729, %v2630
        %2632 = vmatmul.bf16.gmra.mxu0 %v957
        %v2633 = vpop.f32.mrf.mxu0
        %v2634 = vadd.f32 %v729, %v2633
        %v2635 = vpop.f32.mrf.mxu0
        %v2636 = vadd.f32 %v729, %v2635
        %2637 = vmatmul.bf16.gmra.mxu0 %v960
        %v2638 = vpop.f32.mrf.mxu0
        %v2639 = vadd.f32 %v729, %v2638
        %v2640 = vpop.f32.mrf.mxu0
        %v2641 = vadd.f32 %v729, %v2640
        %2642 = vmatmul.bf16.gmra.mxu0 %v963
        %v2643 = vpop.f32.mrf.mxu0
        %v2644 = vadd.f32 %v729, %v2643
        %v2645 = vpop.f32.mrf.mxu0
        %v2646 = vadd.f32 %v729, %v2645
        %2647 = vmatmul.bf16.gmra.mxu0 %v966
        %v2648 = vpop.f32.mrf.mxu0
        %v2649 = vadd.f32 %v729, %v2648
        %v2650 = vpop.f32.mrf.mxu0
        %v2651 = vadd.f32 %v729, %v2650
        %2652 = vmatmul.bf16.gmra.mxu0 %v969
        %v2653 = vpop.f32.mrf.mxu0
        %v2654 = vadd.f32 %v729, %v2653
        %v2655 = vpop.f32.mrf.mxu0
        %v2656 = vadd.f32 %v729, %v2655
        %2657 = vmatmul.bf16.gmra.mxu0 %v972
        %v2658 = vpop.f32.mrf.mxu0
        %v2659 = vadd.f32 %v729, %v2658
        %v2660 = vpop.f32.mrf.mxu0
        %v2661 = vadd.f32 %v729, %v2660
        %2662 = vmatmul.bf16.gmra.mxu0 %v975
        %v2663 = vpop.f32.mrf.mxu0
        %v2664 = vadd.f32 %v729, %v2663
        %v2665 = vpop.f32.mrf.mxu0
        %v2666 = vadd.f32 %v729, %v2665
        %2667 = vmatmul.bf16.gmra.mxu0 %v978
        %v2668 = vpop.f32.mrf.mxu0
        %v2669 = vadd.f32 %v729, %v2668
        %v2670 = vpop.f32.mrf.mxu0
        %v2671 = vadd.f32 %v729, %v2670
        %2672 = vmatmul.bf16.gmra.mxu0 %v981
        %v2673 = vpop.f32.mrf.mxu0
        %v2674 = vadd.f32 %v729, %v2673
        %v2675 = vpop.f32.mrf.mxu0
        %v2676 = vadd.f32 %v729, %v2675
        %2677 = vmatmul.bf16.gmra.mxu0 %v984
        %v2678 = vpop.f32.mrf.mxu0
        %v2679 = vadd.f32 %v729, %v2678
        %v2680 = vpop.f32.mrf.mxu0
        %v2681 = vadd.f32 %v729, %v2680
        %2682 = vmatmul.bf16.gmra.mxu0 %v987
        %v2683 = vpop.f32.mrf.mxu0
        %v2684 = vadd.f32 %v729, %v2683
        %v2685 = vpop.f32.mrf.mxu0
        %v2686 = vadd.f32 %v729, %v2685
        %2687 = vmatmul.bf16.gmra.mxu0 %v990
        %v2688 = vpop.f32.mrf.mxu0
        %v2689 = vadd.f32 %v729, %v2688
        %v2690 = vpop.f32.mrf.mxu0
        %v2691 = vadd.f32 %v729, %v2690
        %2692 = vmatmul.bf16.gmra.mxu0 %v993
        %v2693 = vpop.f32.mrf.mxu0
        %v2694 = vadd.f32 %v729, %v2693
        %v2695 = vpop.f32.mrf.mxu0
        %v2696 = vadd.f32 %v729, %v2695
        %2697 = vmatmul.bf16.gmra.mxu0 %v996
        %v2698 = vpop.f32.mrf.mxu0
        %v2699 = vadd.f32 %v729, %v2698
        %v2700 = vpop.f32.mrf.mxu0
        %v2701 = vadd.f32 %v729, %v2700
        %2702 = vmatmul.bf16.gmra.mxu0 %v999
        %v2703 = vpop.f32.mrf.mxu0
        %v2704 = vadd.f32 %v729, %v2703
        %v2705 = vpop.f32.mrf.mxu0
        %v2706 = vadd.f32 %v729, %v2705
        %2707 = vmatmul.bf16.gmra.mxu0 %v1002
        %v2708 = vpop.f32.mrf.mxu0
        %v2709 = vadd.f32 %v729, %v2708
        %v2710 = vpop.f32.mrf.mxu0
        %v2711 = vadd.f32 %v729, %v2710
        %2712 = vmatmul.bf16.gmra.mxu0 %v1005
        %v2713 = vpop.f32.mrf.mxu0
        %v2714 = vadd.f32 %v729, %v2713
        %v2715 = vpop.f32.mrf.mxu0
        %v2716 = vadd.f32 %v729, %v2715
        %2717 = vmatmul.bf16.gmra.mxu0 %v1008
        %v2718 = vpop.f32.mrf.mxu0
        %v2719 = vadd.f32 %v729, %v2718
        %v2720 = vpop.f32.mrf.mxu0
        %v2721 = vadd.f32 %v729, %v2720
        %2722 = vmatmul.bf16.gmra.mxu0 %v1011
        %v2723 = vpop.f32.mrf.mxu0
        %v2724 = vadd.f32 %v729, %v2723
        %v2725 = vpop.f32.mrf.mxu0
        %v2726 = vadd.f32 %v729, %v2725
        %2727 = vmatmul.bf16.gmra.mxu0 %v1014
        %v2728 = vpop.f32.mrf.mxu0
        %v2729 = vadd.f32 %v729, %v2728
        %v2730 = vpop.f32.mrf.mxu0
        %v2731 = vadd.f32 %v729, %v2730
        %2732 = vmatmul.bf16.gmra.mxu0 %v1017
        %v2733 = vpop.f32.mrf.mxu0
        %v2734 = vadd.f32 %v729, %v2733
        %v2735 = vpop.f32.mrf.mxu0
        %v2736 = vadd.f32 %v729, %v2735
        %2737 = vmatmul.bf16.gmra.mxu0 %v1020
        %v2738 = vpop.f32.mrf.mxu0
        %v2739 = vadd.f32 %v729, %v2738
        %v2740 = vpop.f32.mrf.mxu0
        %v2741 = vadd.f32 %v729, %v2740
        %2742 = vdwg.mxu0
        %v2743 = vmax.f32 %v1063, 0.0
        %v2744 = vmax.f32 %v1232, 0.0
        %v2745 = vmax.f32 %v1401, 0.0
        %v2746 = vmax.f32 %v1570, 0.0
        %v2747 = vmax.f32 %v1739, 0.0
        %v2748 = vmax.f32 %v1908, 0.0
        %v2749 = vmax.f32 %v2077, 0.0
        %v2750 = vmax.f32 %v2246, 0.0
        %v2751 = vmax.f32 %v2415, 0.0
        %v2752 = vmax.f32 %v2584, 0.0
        %v2753 = vmax.f32 %v1065, 0.0
        %v2754 = vmax.f32 %v1234, 0.0
        %v2755 = vmax.f32 %v1403, 0.0
        %v2756 = vmax.f32 %v1572, 0.0
        %v2757 = vmax.f32 %v1741, 0.0
        %v2758 = vmax.f32 %v1910, 0.0
        %v2759 = vmax.f32 %v2079, 0.0
        %v2760 = vmax.f32 %v2248, 0.0
        %v2761 = vmax.f32 %v2417, 0.0
        %v2762 = vmax.f32 %v2586, 0.0
        %v2763 = vmax.f32 %v1068, 0.0
        %v2764 = vmax.f32 %v1237, 0.0
        %v2765 = vmax.f32 %v1406, 0.0
        %v2766 = vmax.f32 %v1575, 0.0
        %v2767 = vmax.f32 %v1744, 0.0
        %v2768 = vmax.f32 %v1913, 0.0
        %v2769 = vmax.f32 %v2082, 0.0
        %v2770 = vmax.f32 %v2251, 0.0
        %v2771 = vmax.f32 %v2420, 0.0
        %v2772 = vmax.f32 %v2589, 0.0
        %v2773 = vmax.f32 %v1070, 0.0
        %v2774 = vmax.f32 %v1239, 0.0
        %v2775 = vmax.f32 %v1408, 0.0
        %v2776 = vmax.f32 %v1577, 0.0
        %v2777 = vmax.f32 %v1746, 0.0
        %v2778 = vmax.f32 %v1915, 0.0
        %v2779 = vmax.f32 %v2084, 0.0
        %v2780 = vmax.f32 %v2253, 0.0
        %v2781 = vmax.f32 %v2422, 0.0
        %v2782 = vmax.f32 %v2591, 0.0
        %v2783 = vmax.f32 %v1073, 0.0
        %v2784 = vmax.f32 %v1242, 0.0
        %v2785 = vmax.f32 %v1411, 0.0
        %v2786 = vmax.f32 %v1580, 0.0
        %v2787 = vmax.f32 %v1749, 0.0
        %v2788 = vmax.f32 %v1918, 0.0
        %v2789 = vmax.f32 %v2087, 0.0
        %v2790 = vmax.f32 %v2256, 0.0
        %v2791 = vmax.f32 %v2425, 0.0
        %v2792 = vmax.f32 %v2594, 0.0
        %v2793 = vmax.f32 %v1075, 0.0
        %v2794 = vmax.f32 %v1244, 0.0
        %v2795 = vmax.f32 %v1413, 0.0
        %v2796 = vmax.f32 %v1582, 0.0
        %v2797 = vmax.f32 %v1751, 0.0
        %v2798 = vmax.f32 %v1920, 0.0
        %v2799 = vmax.f32 %v2089, 0.0
        %v2800 = vmax.f32 %v2258, 0.0
        %v2801 = vmax.f32 %v2427, 0.0
        %v2802 = vmax.f32 %v2596, 0.0
        %v2803 = vmax.f32 %v1078, 0.0
        %v2804 = vmax.f32 %v1247, 0.0
        %v2805 = vmax.f32 %v1416, 0.0
        %v2806 = vmax.f32 %v1585, 0.0
        %v2807 = vmax.f32 %v1754, 0.0
        %v2808 = vmax.f32 %v1923, 0.0
        %v2809 = vmax.f32 %v2092, 0.0
        %v2810 = vmax.f32 %v2261, 0.0
        %v2811 = vmax.f32 %v2430, 0.0
        %v2812 = vmax.f32 %v2599, 0.0
        %v2813 = vmax.f32 %v1080, 0.0
        %v2814 = vmax.f32 %v1249, 0.0
        %v2815 = vmax.f32 %v1418, 0.0
        %v2816 = vmax.f32 %v1587, 0.0
        %v2817 = vmax.f32 %v1756, 0.0
        %v2818 = vmax.f32 %v1925, 0.0
        %v2819 = vmax.f32 %v2094, 0.0
        %v2820 = vmax.f32 %v2263, 0.0
        %v2821 = vmax.f32 %v2432, 0.0
        %v2822 = vmax.f32 %v2601, 0.0
        %v2823 = vmax.f32 %v1083, 0.0
        %v2824 = vmax.f32 %v1252, 0.0
        %v2825 = vmax.f32 %v1421, 0.0
        %v2826 = vmax.f32 %v1590, 0.0
        %v2827 = vmax.f32 %v1759, 0.0
        %v2828 = vmax.f32 %v1928, 0.0
        %v2829 = vmax.f32 %v2097, 0.0
        %v2830 = vmax.f32 %v2266, 0.0
        %v2831 = vmax.f32 %v2435, 0.0
        %v2832 = vmax.f32 %v2604, 0.0
        %v2833 = vmax.f32 %v1085, 0.0
        %v2834 = vmax.f32 %v1254, 0.0
        %v2835 = vmax.f32 %v1423, 0.0
        %v2836 = vmax.f32 %v1592, 0.0
        %v2837 = vmax.f32 %v1761, 0.0
        %v2838 = vmax.f32 %v1930, 0.0
        %v2839 = vmax.f32 %v2099, 0.0
        %v2840 = vmax.f32 %v2268, 0.0
        %v2841 = vmax.f32 %v2437, 0.0
        %v2842 = vmax.f32 %v2606, 0.0
        %v2843 = vmax.f32 %v1088, 0.0
        %v2844 = vmax.f32 %v1257, 0.0
        %v2845 = vmax.f32 %v1426, 0.0
        %v2846 = vmax.f32 %v1595, 0.0
        %v2847 = vmax.f32 %v1764, 0.0
        %v2848 = vmax.f32 %v1933, 0.0
        %v2849 = vmax.f32 %v2102, 0.0
        %v2850 = vmax.f32 %v2271, 0.0
        %v2851 = vmax.f32 %v2440, 0.0
        %v2852 = vmax.f32 %v2609, 0.0
        %v2853 = vmax.f32 %v1090, 0.0
        %v2854 = vmax.f32 %v1259, 0.0
        %v2855 = vmax.f32 %v1428, 0.0
        %v2856 = vmax.f32 %v1597, 0.0
        %v2857 = vmax.f32 %v1766, 0.0
        %v2858 = vmax.f32 %v1935, 0.0
        %v2859 = vmax.f32 %v2104, 0.0
        %v2860 = vmax.f32 %v2273, 0.0
        %v2861 = vmax.f32 %v2442, 0.0
        %v2862 = vmax.f32 %v2611, 0.0
        %v2863 = vmax.f32 %v1093, 0.0
        %v2864 = vmax.f32 %v1262, 0.0
        %v2865 = vmax.f32 %v1431, 0.0
        %v2866 = vmax.f32 %v1600, 0.0
        %v2867 = vmax.f32 %v1769, 0.0
        %v2868 = vmax.f32 %v1938, 0.0
        %v2869 = vmax.f32 %v2107, 0.0
        %v2870 = vmax.f32 %v2276, 0.0
        %v2871 = vmax.f32 %v2445, 0.0
        %v2872 = vmax.f32 %v2614, 0.0
        %v2873 = vmax.f32 %v1095, 0.0
        %v2874 = vmax.f32 %v1264, 0.0
        %v2875 = vmax.f32 %v1433, 0.0
        %v2876 = vmax.f32 %v1602, 0.0
        %v2877 = vmax.f32 %v1771, 0.0
        %v2878 = vmax.f32 %v1940, 0.0
        %v2879 = vmax.f32 %v2109, 0.0
        %v2880 = vmax.f32 %v2278, 0.0
        %v2881 = vmax.f32 %v2447, 0.0
        %v2882 = vmax.f32 %v2616, 0.0
        %v2883 = vmax.f32 %v1098, 0.0
        %v2884 = vmax.f32 %v1267, 0.0
        %v2885 = vmax.f32 %v1436, 0.0
        %v2886 = vmax.f32 %v1605, 0.0
        %v2887 = vmax.f32 %v1774, 0.0
        %v2888 = vmax.f32 %v1943, 0.0
        %v2889 = vmax.f32 %v2112, 0.0
        %v2890 = vmax.f32 %v2281, 0.0
        %v2891 = vmax.f32 %v2450, 0.0
        %v2892 = vmax.f32 %v2619, 0.0
        %v2893 = vmax.f32 %v1100, 0.0
        %v2894 = vmax.f32 %v1269, 0.0
        %v2895 = vmax.f32 %v1438, 0.0
        %v2896 = vmax.f32 %v1607, 0.0
        %v2897 = vmax.f32 %v1776, 0.0
        %v2898 = vmax.f32 %v1945, 0.0
        %v2899 = vmax.f32 %v2114, 0.0
        %v2900 = vmax.f32 %v2283, 0.0
        %v2901 = vmax.f32 %v2452, 0.0
        %v2902 = vmax.f32 %v2621, 0.0
        %v2903 = vmax.f32 %v1103, 0.0
        %v2904 = vmax.f32 %v1272, 0.0
        %v2905 = vmax.f32 %v1441, 0.0
        %v2906 = vmax.f32 %v1610, 0.0
        %v2907 = vmax.f32 %v1779, 0.0
        %v2908 = vmax.f32 %v1948, 0.0
        %v2909 = vmax.f32 %v2117, 0.0
        %v2910 = vmax.f32 %v2286, 0.0
        %v2911 = vmax.f32 %v2455, 0.0
        %v2912 = vmax.f32 %v2624, 0.0
        %v2913 = vmax.f32 %v1105, 0.0
        %v2914 = vmax.f32 %v1274, 0.0
        %v2915 = vmax.f32 %v1443, 0.0
        %v2916 = vmax.f32 %v1612, 0.0
        %v2917 = vmax.f32 %v1781, 0.0
        %v2918 = vmax.f32 %v1950, 0.0
        %v2919 = vmax.f32 %v2119, 0.0
        %v2920 = vmax.f32 %v2288, 0.0
        %v2921 = vmax.f32 %v2457, 0.0
        %v2922 = vmax.f32 %v2626, 0.0
        %v2923 = vmax.f32 %v1108, 0.0
        %v2924 = vmax.f32 %v1277, 0.0
        %v2925 = vmax.f32 %v1446, 0.0
        %v2926 = vmax.f32 %v1615, 0.0
        %v2927 = vmax.f32 %v1784, 0.0
        %v2928 = vmax.f32 %v1953, 0.0
        %v2929 = vmax.f32 %v2122, 0.0
        %v2930 = vmax.f32 %v2291, 0.0
        %v2931 = vmax.f32 %v2460, 0.0
        %v2932 = vmax.f32 %v2629, 0.0
        %v2933 = vmax.f32 %v1110, 0.0
        %v2934 = vmax.f32 %v1279, 0.0
        %v2935 = vmax.f32 %v1448, 0.0
        %v2936 = vmax.f32 %v1617, 0.0
        %v2937 = vmax.f32 %v1786, 0.0
        %v2938 = vmax.f32 %v1955, 0.0
        %v2939 = vmax.f32 %v2124, 0.0
        %v2940 = vmax.f32 %v2293, 0.0
        %v2941 = vmax.f32 %v2462, 0.0
        %v2942 = vmax.f32 %v2631, 0.0
        %v2943 = vmax.f32 %v1113, 0.0
        %v2944 = vmax.f32 %v1282, 0.0
        %v2945 = vmax.f32 %v1451, 0.0
        %v2946 = vmax.f32 %v1620, 0.0
        %v2947 = vmax.f32 %v1789, 0.0
        %v2948 = vmax.f32 %v1958, 0.0
        %v2949 = vmax.f32 %v2127, 0.0
        %v2950 = vmax.f32 %v2296, 0.0
        %v2951 = vmax.f32 %v2465, 0.0
        %v2952 = vmax.f32 %v2634, 0.0
        %v2953 = vmax.f32 %v1115, 0.0
        %v2954 = vmax.f32 %v1284, 0.0
        %v2955 = vmax.f32 %v1453, 0.0
        %v2956 = vmax.f32 %v1622, 0.0
        %v2957 = vmax.f32 %v1791, 0.0
        %v2958 = vmax.f32 %v1960, 0.0
        %v2959 = vmax.f32 %v2129, 0.0
        %v2960 = vmax.f32 %v2298, 0.0
        %v2961 = vmax.f32 %v2467, 0.0
        %v2962 = vmax.f32 %v2636, 0.0
        %v2963 = vmax.f32 %v1118, 0.0
        %v2964 = vmax.f32 %v1287, 0.0
        %v2965 = vmax.f32 %v1456, 0.0
        %v2966 = vmax.f32 %v1625, 0.0
        %v2967 = vmax.f32 %v1794, 0.0
        %v2968 = vmax.f32 %v1963, 0.0
        %v2969 = vmax.f32 %v2132, 0.0
        %v2970 = vmax.f32 %v2301, 0.0
        %v2971 = vmax.f32 %v2470, 0.0
        %v2972 = vmax.f32 %v2639, 0.0
        %v2973 = vmax.f32 %v1120, 0.0
        %v2974 = vmax.f32 %v1289, 0.0
        %v2975 = vmax.f32 %v1458, 0.0
        %v2976 = vmax.f32 %v1627, 0.0
        %v2977 = vmax.f32 %v1796, 0.0
        %v2978 = vmax.f32 %v1965, 0.0
        %v2979 = vmax.f32 %v2134, 0.0
        %v2980 = vmax.f32 %v2303, 0.0
        %v2981 = vmax.f32 %v2472, 0.0
        %v2982 = vmax.f32 %v2641, 0.0
        %v2983 = vmax.f32 %v1123, 0.0
        %v2984 = vmax.f32 %v1292, 0.0
        %v2985 = vmax.f32 %v1461, 0.0
        %v2986 = vmax.f32 %v1630, 0.0
        %v2987 = vmax.f32 %v1799, 0.0
        %v2988 = vmax.f32 %v1968, 0.0
        %v2989 = vmax.f32 %v2137, 0.0
        %v2990 = vmax.f32 %v2306, 0.0
        %v2991 = vmax.f32 %v2475, 0.0
        %v2992 = vmax.f32 %v2644, 0.0
        %v2993 = vmax.f32 %v1125, 0.0
        %v2994 = vmax.f32 %v1294, 0.0
        %v2995 = vmax.f32 %v1463, 0.0
        %v2996 = vmax.f32 %v1632, 0.0
        %v2997 = vmax.f32 %v1801, 0.0
        %v2998 = vmax.f32 %v1970, 0.0
        %v2999 = vmax.f32 %v2139, 0.0
        %v3000 = vmax.f32 %v2308, 0.0
        %v3001 = vmax.f32 %v2477, 0.0
        %v3002 = vmax.f32 %v2646, 0.0
        %v3003 = vmax.f32 %v1128, 0.0
        %v3004 = vmax.f32 %v1297, 0.0
        %v3005 = vmax.f32 %v1466, 0.0
        %v3006 = vmax.f32 %v1635, 0.0
        %v3007 = vmax.f32 %v1804, 0.0
        %v3008 = vmax.f32 %v1973, 0.0
        %v3009 = vmax.f32 %v2142, 0.0
        %v3010 = vmax.f32 %v2311, 0.0
        %v3011 = vmax.f32 %v2480, 0.0
        %v3012 = vmax.f32 %v2649, 0.0
        %v3013 = vmax.f32 %v1130, 0.0
        %v3014 = vmax.f32 %v1299, 0.0
        %v3015 = vmax.f32 %v1468, 0.0
        %v3016 = vmax.f32 %v1637, 0.0
        %v3017 = vmax.f32 %v1806, 0.0
        %v3018 = vmax.f32 %v1975, 0.0
        %v3019 = vmax.f32 %v2144, 0.0
        %v3020 = vmax.f32 %v2313, 0.0
        %v3021 = vmax.f32 %v2482, 0.0
        %v3022 = vmax.f32 %v2651, 0.0
        %v3023 = vmax.f32 %v1133, 0.0
        %v3024 = vmax.f32 %v1302, 0.0
        %v3025 = vmax.f32 %v1471, 0.0
        %v3026 = vmax.f32 %v1640, 0.0
        %v3027 = vmax.f32 %v1809, 0.0
        %v3028 = vmax.f32 %v1978, 0.0
        %v3029 = vmax.f32 %v2147, 0.0
        %v3030 = vmax.f32 %v2316, 0.0
        %v3031 = vmax.f32 %v2485, 0.0
        %v3032 = vmax.f32 %v2654, 0.0
        %v3033 = vmax.f32 %v1135, 0.0
        %v3034 = vmax.f32 %v1304, 0.0
        %v3035 = vmax.f32 %v1473, 0.0
        %v3036 = vmax.f32 %v1642, 0.0
        %v3037 = vmax.f32 %v1811, 0.0
        %v3038 = vmax.f32 %v1980, 0.0
        %v3039 = vmax.f32 %v2149, 0.0
        %v3040 = vmax.f32 %v2318, 0.0
        %v3041 = vmax.f32 %v2487, 0.0
        %v3042 = vmax.f32 %v2656, 0.0
        %v3043 = vmax.f32 %v1138, 0.0
        %v3044 = vmax.f32 %v1307, 0.0
        %v3045 = vmax.f32 %v1476, 0.0
        %v3046 = vmax.f32 %v1645, 0.0
        %v3047 = vmax.f32 %v1814, 0.0
        %v3048 = vmax.f32 %v1983, 0.0
        %v3049 = vmax.f32 %v2152, 0.0
        %v3050 = vmax.f32 %v2321, 0.0
        %v3051 = vmax.f32 %v2490, 0.0
        %v3052 = vmax.f32 %v2659, 0.0
        %v3053 = vmax.f32 %v1140, 0.0
        %v3054 = vmax.f32 %v1309, 0.0
        %v3055 = vmax.f32 %v1478, 0.0
        %v3056 = vmax.f32 %v1647, 0.0
        %v3057 = vmax.f32 %v1816, 0.0
        %v3058 = vmax.f32 %v1985, 0.0
        %v3059 = vmax.f32 %v2154, 0.0
        %v3060 = vmax.f32 %v2323, 0.0
        %v3061 = vmax.f32 %v2492, 0.0
        %v3062 = vmax.f32 %v2661, 0.0
        %v3063 = vmax.f32 %v1143, 0.0
        %v3064 = vmax.f32 %v1312, 0.0
        %v3065 = vmax.f32 %v1481, 0.0
        %v3066 = vmax.f32 %v1650, 0.0
        %v3067 = vmax.f32 %v1819, 0.0
        %v3068 = vmax.f32 %v1988, 0.0
        %v3069 = vmax.f32 %v2157, 0.0
        %v3070 = vmax.f32 %v2326, 0.0
        %v3071 = vmax.f32 %v2495, 0.0
        %v3072 = vmax.f32 %v2664, 0.0
        %v3073 = vmax.f32 %v1145, 0.0
        %v3074 = vmax.f32 %v1314, 0.0
        %v3075 = vmax.f32 %v1483, 0.0
        %v3076 = vmax.f32 %v1652, 0.0
        %v3077 = vmax.f32 %v1821, 0.0
        %v3078 = vmax.f32 %v1990, 0.0
        %v3079 = vmax.f32 %v2159, 0.0
        %v3080 = vmax.f32 %v2328, 0.0
        %v3081 = vmax.f32 %v2497, 0.0
        %v3082 = vmax.f32 %v2666, 0.0
        %v3083 = vmax.f32 %v1148, 0.0
        %v3084 = vmax.f32 %v1317, 0.0
        %v3085 = vmax.f32 %v1486, 0.0
        %v3086 = vmax.f32 %v1655, 0.0
        %v3087 = vmax.f32 %v1824, 0.0
        %v3088 = vmax.f32 %v1993, 0.0
        %v3089 = vmax.f32 %v2162, 0.0
        %v3090 = vmax.f32 %v2331, 0.0
        %v3091 = vmax.f32 %v2500, 0.0
        %v3092 = vmax.f32 %v2669, 0.0
        %v3093 = vmax.f32 %v1150, 0.0
        %v3094 = vmax.f32 %v1319, 0.0
        %v3095 = vmax.f32 %v1488, 0.0
        %v3096 = vmax.f32 %v1657, 0.0
        %v3097 = vmax.f32 %v1826, 0.0
        %v3098 = vmax.f32 %v1995, 0.0
        %v3099 = vmax.f32 %v2164, 0.0
        %v3100 = vmax.f32 %v2333, 0.0
        %v3101 = vmax.f32 %v2502, 0.0
        %v3102 = vmax.f32 %v2671, 0.0
        %v3103 = vmax.f32 %v1153, 0.0
        %v3104 = vmax.f32 %v1322, 0.0
        %v3105 = vmax.f32 %v1491, 0.0
        %v3106 = vmax.f32 %v1660, 0.0
        %v3107 = vmax.f32 %v1829, 0.0
        %v3108 = vmax.f32 %v1998, 0.0
        %v3109 = vmax.f32 %v2167, 0.0
        %v3110 = vmax.f32 %v2336, 0.0
        %v3111 = vmax.f32 %v2505, 0.0
        %v3112 = vmax.f32 %v2674, 0.0
        %v3113 = vmax.f32 %v1155, 0.0
        %v3114 = vmax.f32 %v1324, 0.0
        %v3115 = vmax.f32 %v1493, 0.0
        %v3116 = vmax.f32 %v1662, 0.0
        %v3117 = vmax.f32 %v1831, 0.0
        %v3118 = vmax.f32 %v2000, 0.0
        %v3119 = vmax.f32 %v2169, 0.0
        %v3120 = vmax.f32 %v2338, 0.0
        %v3121 = vmax.f32 %v2507, 0.0
        %v3122 = vmax.f32 %v2676, 0.0
        %v3123 = vmax.f32 %v1158, 0.0
        %v3124 = vmax.f32 %v1327, 0.0
        %v3125 = vmax.f32 %v1496, 0.0
        %v3126 = vmax.f32 %v1665, 0.0
        %v3127 = vmax.f32 %v1834, 0.0
        %v3128 = vmax.f32 %v2003, 0.0
        %v3129 = vmax.f32 %v2172, 0.0
        %v3130 = vmax.f32 %v2341, 0.0
        %v3131 = vmax.f32 %v2510, 0.0
        %v3132 = vmax.f32 %v2679, 0.0
        %v3133 = vmax.f32 %v1160, 0.0
        %v3134 = vmax.f32 %v1329, 0.0
        %v3135 = vmax.f32 %v1498, 0.0
        %v3136 = vmax.f32 %v1667, 0.0
        %v3137 = vmax.f32 %v1836, 0.0
        %v3138 = vmax.f32 %v2005, 0.0
        %v3139 = vmax.f32 %v2174, 0.0
        %v3140 = vmax.f32 %v2343, 0.0
        %v3141 = vmax.f32 %v2512, 0.0
        %v3142 = vmax.f32 %v2681, 0.0
        %v3143 = vmax.f32 %v1163, 0.0
        %v3144 = vmax.f32 %v1332, 0.0
        %v3145 = vmax.f32 %v1501, 0.0
        %v3146 = vmax.f32 %v1670, 0.0
        %v3147 = vmax.f32 %v1839, 0.0
        %v3148 = vmax.f32 %v2008, 0.0
        %v3149 = vmax.f32 %v2177, 0.0
        %v3150 = vmax.f32 %v2346, 0.0
        %v3151 = vmax.f32 %v2515, 0.0
        %v3152 = vmax.f32 %v2684, 0.0
        %v3153 = vmax.f32 %v1165, 0.0
        %v3154 = vmax.f32 %v1334, 0.0
        %v3155 = vmax.f32 %v1503, 0.0
        %v3156 = vmax.f32 %v1672, 0.0
        %v3157 = vmax.f32 %v1841, 0.0
        %v3158 = vmax.f32 %v2010, 0.0
        %v3159 = vmax.f32 %v2179, 0.0
        %v3160 = vmax.f32 %v2348, 0.0
        %v3161 = vmax.f32 %v2517, 0.0
        %v3162 = vmax.f32 %v2686, 0.0
        %v3163 = vmax.f32 %v1168, 0.0
        %v3164 = vmax.f32 %v1337, 0.0
        %v3165 = vmax.f32 %v1506, 0.0
        %v3166 = vmax.f32 %v1675, 0.0
        %v3167 = vmax.f32 %v1844, 0.0
        %v3168 = vmax.f32 %v2013, 0.0
        %v3169 = vmax.f32 %v2182, 0.0
        %v3170 = vmax.f32 %v2351, 0.0
        %v3171 = vmax.f32 %v2520, 0.0
        %v3172 = vmax.f32 %v2689, 0.0
        %v3173 = vmax.f32 %v1170, 0.0
        %v3174 = vmax.f32 %v1339, 0.0
        %v3175 = vmax.f32 %v1508, 0.0
        %v3176 = vmax.f32 %v1677, 0.0
        %v3177 = vmax.f32 %v1846, 0.0
        %v3178 = vmax.f32 %v2015, 0.0
        %v3179 = vmax.f32 %v2184, 0.0
        %v3180 = vmax.f32 %v2353, 0.0
        %v3181 = vmax.f32 %v2522, 0.0
        %v3182 = vmax.f32 %v2691, 0.0
        %v3183 = vmax.f32 %v1173, 0.0
        %v3184 = vmax.f32 %v1342, 0.0
        %v3185 = vmax.f32 %v1511, 0.0
        %v3186 = vmax.f32 %v1680, 0.0
        %v3187 = vmax.f32 %v1849, 0.0
        %v3188 = vmax.f32 %v2018, 0.0
        %v3189 = vmax.f32 %v2187, 0.0
        %v3190 = vmax.f32 %v2356, 0.0
        %v3191 = vmax.f32 %v2525, 0.0
        %v3192 = vmax.f32 %v2694, 0.0
        %v3193 = vmax.f32 %v1175, 0.0
        %v3194 = vmax.f32 %v1344, 0.0
        %v3195 = vmax.f32 %v1513, 0.0
        %v3196 = vmax.f32 %v1682, 0.0
        %v3197 = vmax.f32 %v1851, 0.0
        %v3198 = vmax.f32 %v2020, 0.0
        %v3199 = vmax.f32 %v2189, 0.0
        %v3200 = vmax.f32 %v2358, 0.0
        %v3201 = vmax.f32 %v2527, 0.0
        %v3202 = vmax.f32 %v2696, 0.0
        %v3203 = vmax.f32 %v1178, 0.0
        %v3204 = vmax.f32 %v1347, 0.0
        %v3205 = vmax.f32 %v1516, 0.0
        %v3206 = vmax.f32 %v1685, 0.0
        %v3207 = vmax.f32 %v1854, 0.0
        %v3208 = vmax.f32 %v2023, 0.0
        %v3209 = vmax.f32 %v2192, 0.0
        %v3210 = vmax.f32 %v2361, 0.0
        %v3211 = vmax.f32 %v2530, 0.0
        %v3212 = vmax.f32 %v2699, 0.0
        %v3213 = vmax.f32 %v1180, 0.0
        %v3214 = vmax.f32 %v1349, 0.0
        %v3215 = vmax.f32 %v1518, 0.0
        %v3216 = vmax.f32 %v1687, 0.0
        %v3217 = vmax.f32 %v1856, 0.0
        %v3218 = vmax.f32 %v2025, 0.0
        %v3219 = vmax.f32 %v2194, 0.0
        %v3220 = vmax.f32 %v2363, 0.0
        %v3221 = vmax.f32 %v2532, 0.0
        %v3222 = vmax.f32 %v2701, 0.0
        %v3223 = vmax.f32 %v1183, 0.0
        %v3224 = vmax.f32 %v1352, 0.0
        %v3225 = vmax.f32 %v1521, 0.0
        %v3226 = vmax.f32 %v1690, 0.0
        %v3227 = vmax.f32 %v1859, 0.0
        %v3228 = vmax.f32 %v2028, 0.0
        %v3229 = vmax.f32 %v2197, 0.0
        %v3230 = vmax.f32 %v2366, 0.0
        %v3231 = vmax.f32 %v2535, 0.0
        %v3232 = vmax.f32 %v2704, 0.0
        %v3233 = vmax.f32 %v1185, 0.0
        %v3234 = vmax.f32 %v1354, 0.0
        %v3235 = vmax.f32 %v1523, 0.0
        %v3236 = vmax.f32 %v1692, 0.0
        %v3237 = vmax.f32 %v1861, 0.0
        %v3238 = vmax.f32 %v2030, 0.0
        %v3239 = vmax.f32 %v2199, 0.0
        %v3240 = vmax.f32 %v2368, 0.0
        %v3241 = vmax.f32 %v2537, 0.0
        %v3242 = vmax.f32 %v2706, 0.0
        %v3243 = vmax.f32 %v1188, 0.0
        %v3244 = vmax.f32 %v1357, 0.0
        %v3245 = vmax.f32 %v1526, 0.0
        %v3246 = vmax.f32 %v1695, 0.0
        %v3247 = vmax.f32 %v1864, 0.0
        %v3248 = vmax.f32 %v2033, 0.0
        %v3249 = vmax.f32 %v2202, 0.0
        %v3250 = vmax.f32 %v2371, 0.0
        %v3251 = vmax.f32 %v2540, 0.0
        %v3252 = vmax.f32 %v2709, 0.0
        %v3253 = vmax.f32 %v1190, 0.0
        %v3254 = vmax.f32 %v1359, 0.0
        %v3255 = vmax.f32 %v1528, 0.0
        %v3256 = vmax.f32 %v1697, 0.0
        %v3257 = vmax.f32 %v1866, 0.0
        %v3258 = vmax.f32 %v2035, 0.0
        %v3259 = vmax.f32 %v2204, 0.0
        %v3260 = vmax.f32 %v2373, 0.0
        %v3261 = vmax.f32 %v2542, 0.0
        %v3262 = vmax.f32 %v2711, 0.0
        %v3263 = vmax.f32 %v1193, 0.0
        %v3264 = vmax.f32 %v1362, 0.0
        %v3265 = vmax.f32 %v1531, 0.0
        %v3266 = vmax.f32 %v1700, 0.0
        %v3267 = vmax.f32 %v1869, 0.0
        %v3268 = vmax.f32 %v2038, 0.0
        %v3269 = vmax.f32 %v2207, 0.0
        %v3270 = vmax.f32 %v2376, 0.0
        %v3271 = vmax.f32 %v2545, 0.0
        %v3272 = vmax.f32 %v2714, 0.0
        %v3273 = vmax.f32 %v1195, 0.0
        %v3274 = vmax.f32 %v1364, 0.0
        %v3275 = vmax.f32 %v1533, 0.0
        %v3276 = vmax.f32 %v1702, 0.0
        %v3277 = vmax.f32 %v1871, 0.0
        %v3278 = vmax.f32 %v2040, 0.0
        %v3279 = vmax.f32 %v2209, 0.0
        %v3280 = vmax.f32 %v2378, 0.0
        %v3281 = vmax.f32 %v2547, 0.0
        %v3282 = vmax.f32 %v2716, 0.0
        %v3283 = vmax.f32 %v1198, 0.0
        %v3284 = vmax.f32 %v1367, 0.0
        %v3285 = vmax.f32 %v1536, 0.0
        %v3286 = vmax.f32 %v1705, 0.0
        %v3287 = vmax.f32 %v1874, 0.0
        %v3288 = vmax.f32 %v2043, 0.0
        %v3289 = vmax.f32 %v2212, 0.0
        %v3290 = vmax.f32 %v2381, 0.0
        %v3291 = vmax.f32 %v2550, 0.0
        %v3292 = vmax.f32 %v2719, 0.0
        %v3293 = vmax.f32 %v1200, 0.0
        %v3294 = vmax.f32 %v1369, 0.0
        %v3295 = vmax.f32 %v1538, 0.0
        %v3296 = vmax.f32 %v1707, 0.0
        %v3297 = vmax.f32 %v1876, 0.0
        %v3298 = vmax.f32 %v2045, 0.0
        %v3299 = vmax.f32 %v2214, 0.0
        %v3300 = vmax.f32 %v2383, 0.0
        %v3301 = vmax.f32 %v2552, 0.0
        %v3302 = vmax.f32 %v2721, 0.0
        %v3303 = vmax.f32 %v1203, 0.0
        %v3304 = vmax.f32 %v1372, 0.0
        %v3305 = vmax.f32 %v1541, 0.0
        %v3306 = vmax.f32 %v1710, 0.0
        %v3307 = vmax.f32 %v1879, 0.0
        %v3308 = vmax.f32 %v2048, 0.0
        %v3309 = vmax.f32 %v2217, 0.0
        %v3310 = vmax.f32 %v2386, 0.0
        %v3311 = vmax.f32 %v2555, 0.0
        %v3312 = vmax.f32 %v2724, 0.0
        %v3313 = vmax.f32 %v1205, 0.0
        %v3314 = vmax.f32 %v1374, 0.0
        %v3315 = vmax.f32 %v1543, 0.0
        %v3316 = vmax.f32 %v1712, 0.0
        %v3317 = vmax.f32 %v1881, 0.0
        %v3318 = vmax.f32 %v2050, 0.0
        %v3319 = vmax.f32 %v2219, 0.0
        %v3320 = vmax.f32 %v2388, 0.0
        %v3321 = vmax.f32 %v2557, 0.0
        %v3322 = vmax.f32 %v2726, 0.0
        %v3323 = vmax.f32 %v1208, 0.0
        %v3324 = vmax.f32 %v1377, 0.0
        %v3325 = vmax.f32 %v1546, 0.0
        %v3326 = vmax.f32 %v1715, 0.0
        %v3327 = vmax.f32 %v1884, 0.0
        %v3328 = vmax.f32 %v2053, 0.0
        %v3329 = vmax.f32 %v2222, 0.0
        %v3330 = vmax.f32 %v2391, 0.0
        %v3331 = vmax.f32 %v2560, 0.0
        %v3332 = vmax.f32 %v2729, 0.0
        %v3333 = vmax.f32 %v1210, 0.0
        %v3334 = vmax.f32 %v1379, 0.0
        %v3335 = vmax.f32 %v1548, 0.0
        %v3336 = vmax.f32 %v1717, 0.0
        %v3337 = vmax.f32 %v1886, 0.0
        %v3338 = vmax.f32 %v2055, 0.0
        %v3339 = vmax.f32 %v2224, 0.0
        %v3340 = vmax.f32 %v2393, 0.0
        %v3341 = vmax.f32 %v2562, 0.0
        %v3342 = vmax.f32 %v2731, 0.0
        %v3343 = vmax.f32 %v1213, 0.0
        %v3344 = vmax.f32 %v1382, 0.0
        %v3345 = vmax.f32 %v1551, 0.0
        %v3346 = vmax.f32 %v1720, 0.0
        %v3347 = vmax.f32 %v1889, 0.0
        %v3348 = vmax.f32 %v2058, 0.0
        %v3349 = vmax.f32 %v2227, 0.0
        %v3350 = vmax.f32 %v2396, 0.0
        %v3351 = vmax.f32 %v2565, 0.0
        %v3352 = vmax.f32 %v2734, 0.0
        %v3353 = vmax.f32 %v1215, 0.0
        %v3354 = vmax.f32 %v1384, 0.0
        %v3355 = vmax.f32 %v1553, 0.0
        %v3356 = vmax.f32 %v1722, 0.0
        %v3357 = vmax.f32 %v1891, 0.0
        %v3358 = vmax.f32 %v2060, 0.0
        %v3359 = vmax.f32 %v2229, 0.0
        %v3360 = vmax.f32 %v2398, 0.0
        %v3361 = vmax.f32 %v2567, 0.0
        %v3362 = vmax.f32 %v2736, 0.0
        %v3363 = vmax.f32 %v1218, 0.0
        %v3364 = vmax.f32 %v1387, 0.0
        %v3365 = vmax.f32 %v1556, 0.0
        %v3366 = vmax.f32 %v1725, 0.0
        %v3367 = vmax.f32 %v1894, 0.0
        %v3368 = vmax.f32 %v2063, 0.0
        %v3369 = vmax.f32 %v2232, 0.0
        %v3370 = vmax.f32 %v2401, 0.0
        %v3371 = vmax.f32 %v2570, 0.0
        %v3372 = vmax.f32 %v2739, 0.0
        %v3373 = vmax.f32 %v1220, 0.0
        %v3374 = vmax.f32 %v1389, 0.0
        %v3375 = vmax.f32 %v1558, 0.0
        %v3376 = vmax.f32 %v1727, 0.0
        %v3377 = vmax.f32 %v1896, 0.0
        %v3378 = vmax.f32 %v2065, 0.0
        %v3379 = vmax.f32 %v2234, 0.0
        %v3380 = vmax.f32 %v2403, 0.0
        %v3381 = vmax.f32 %v2572, 0.0
        %v3382 = vmax.f32 %v2741, 0.0
        %v3383 = vmin.f32 %v2743, 6.0
        %v3384 = vmin.f32 %v2744, 6.0
        %v3385 = vmin.f32 %v2745, 6.0
        %v3386 = vmin.f32 %v2746, 6.0
        %v3387 = vmin.f32 %v2747, 6.0
        %v3388 = vmin.f32 %v2748, 6.0
        %v3389 = vmin.f32 %v2749, 6.0
        %v3390 = vmin.f32 %v2750, 6.0
        %v3391 = vmin.f32 %v2751, 6.0
        %v3392 = vmin.f32 %v2752, 6.0
        %v3393 = vmin.f32 %v2753, 6.0
        %v3394 = vmin.f32 %v2754, 6.0
        %v3395 = vmin.f32 %v2755, 6.0
        %v3396 = vmin.f32 %v2756, 6.0
        %v3397 = vmin.f32 %v2757, 6.0
        %v3398 = vmin.f32 %v2758, 6.0
        %v3399 = vmin.f32 %v2759, 6.0
        %v3400 = vmin.f32 %v2760, 6.0
        %v3401 = vmin.f32 %v2761, 6.0
        %v3402 = vmin.f32 %v2762, 6.0
        %v3403 = vmin.f32 %v2763, 6.0
        %v3404 = vmin.f32 %v2764, 6.0
        %v3405 = vmin.f32 %v2765, 6.0
        %v3406 = vmin.f32 %v2766, 6.0
        %v3407 = vmin.f32 %v2767, 6.0
        %v3408 = vmin.f32 %v2768, 6.0
        %v3409 = vmin.f32 %v2769, 6.0
        %v3410 = vmin.f32 %v2770, 6.0
        %v3411 = vmin.f32 %v2771, 6.0
        %v3412 = vmin.f32 %v2772, 6.0
        %v3413 = vmin.f32 %v2773, 6.0
        %v3414 = vmin.f32 %v2774, 6.0
        %v3415 = vmin.f32 %v2775, 6.0
        %v3416 = vmin.f32 %v2776, 6.0
        %v3417 = vmin.f32 %v2777, 6.0
        %v3418 = vmin.f32 %v2778, 6.0
        %v3419 = vmin.f32 %v2779, 6.0
        %v3420 = vmin.f32 %v2780, 6.0
        %v3421 = vmin.f32 %v2781, 6.0
        %v3422 = vmin.f32 %v2782, 6.0
        %v3423 = vmin.f32 %v2783, 6.0
        %v3424 = vmin.f32 %v2784, 6.0
        %v3425 = vmin.f32 %v2785, 6.0
        %v3426 = vmin.f32 %v2786, 6.0
        %v3427 = vmin.f32 %v2787, 6.0
        %v3428 = vmin.f32 %v2788, 6.0
        %v3429 = vmin.f32 %v2789, 6.0
        %v3430 = vmin.f32 %v2790, 6.0
        %v3431 = vmin.f32 %v2791, 6.0
        %v3432 = vmin.f32 %v2792, 6.0
        %v3433 = vmin.f32 %v2793, 6.0
        %v3434 = vmin.f32 %v2794, 6.0
        %v3435 = vmin.f32 %v2795, 6.0
        %v3436 = vmin.f32 %v2796, 6.0
        %v3437 = vmin.f32 %v2797, 6.0
        %v3438 = vmin.f32 %v2798, 6.0
        %v3439 = vmin.f32 %v2799, 6.0
        %v3440 = vmin.f32 %v2800, 6.0
        %v3441 = vmin.f32 %v2801, 6.0
        %v3442 = vmin.f32 %v2802, 6.0
        %v3443 = vmin.f32 %v2803, 6.0
        %v3444 = vmin.f32 %v2804, 6.0
        %v3445 = vmin.f32 %v2805, 6.0
        %v3446 = vmin.f32 %v2806, 6.0
        %v3447 = vmin.f32 %v2807, 6.0
        %v3448 = vmin.f32 %v2808, 6.0
        %v3449 = vmin.f32 %v2809, 6.0
        %v3450 = vmin.f32 %v2810, 6.0
        %v3451 = vmin.f32 %v2811, 6.0
        %v3452 = vmin.f32 %v2812, 6.0
        %v3453 = vmin.f32 %v2813, 6.0
        %v3454 = vmin.f32 %v2814, 6.0
        %v3455 = vmin.f32 %v2815, 6.0
        %v3456 = vmin.f32 %v2816, 6.0
        %v3457 = vmin.f32 %v2817, 6.0
        %v3458 = vmin.f32 %v2818, 6.0
        %v3459 = vmin.f32 %v2819, 6.0
        %v3460 = vmin.f32 %v2820, 6.0
        %v3461 = vmin.f32 %v2821, 6.0
        %v3462 = vmin.f32 %v2822, 6.0
        %v3463 = vmin.f32 %v2823, 6.0
        %v3464 = vmin.f32 %v2824, 6.0
        %v3465 = vmin.f32 %v2825, 6.0
        %v3466 = vmin.f32 %v2826, 6.0
        %v3467 = vmin.f32 %v2827, 6.0
        %v3468 = vmin.f32 %v2828, 6.0
        %v3469 = vmin.f32 %v2829, 6.0
        %v3470 = vmin.f32 %v2830, 6.0
        %v3471 = vmin.f32 %v2831, 6.0
        %v3472 = vmin.f32 %v2832, 6.0
        %v3473 = vmin.f32 %v2833, 6.0
        %v3474 = vmin.f32 %v2834, 6.0
        %v3475 = vmin.f32 %v2835, 6.0
        %v3476 = vmin.f32 %v2836, 6.0
        %v3477 = vmin.f32 %v2837, 6.0
        %v3478 = vmin.f32 %v2838, 6.0
        %v3479 = vmin.f32 %v2839, 6.0
        %v3480 = vmin.f32 %v2840, 6.0
        %v3481 = vmin.f32 %v2841, 6.0
        %v3482 = vmin.f32 %v2842, 6.0
        %v3483 = vmin.f32 %v2843, 6.0
        %v3484 = vmin.f32 %v2844, 6.0
        %v3485 = vmin.f32 %v2845, 6.0
        %v3486 = vmin.f32 %v2846, 6.0
        %v3487 = vmin.f32 %v2847, 6.0
        %v3488 = vmin.f32 %v2848, 6.0
        %v3489 = vmin.f32 %v2849, 6.0
        %v3490 = vmin.f32 %v2850, 6.0
        %v3491 = vmin.f32 %v2851, 6.0
        %v3492 = vmin.f32 %v2852, 6.0
        %v3493 = vmin.f32 %v2853, 6.0
        %v3494 = vmin.f32 %v2854, 6.0
        %v3495 = vmin.f32 %v2855, 6.0
        %v3496 = vmin.f32 %v2856, 6.0
        %v3497 = vmin.f32 %v2857, 6.0
        %v3498 = vmin.f32 %v2858, 6.0
        %v3499 = vmin.f32 %v2859, 6.0
        %v3500 = vmin.f32 %v2860, 6.0
        %v3501 = vmin.f32 %v2861, 6.0
        %v3502 = vmin.f32 %v2862, 6.0
        %v3503 = vmin.f32 %v2863, 6.0
        %v3504 = vmin.f32 %v2864, 6.0
        %v3505 = vmin.f32 %v2865, 6.0
        %v3506 = vmin.f32 %v2866, 6.0
        %v3507 = vmin.f32 %v2867, 6.0
        %v3508 = vmin.f32 %v2868, 6.0
        %v3509 = vmin.f32 %v2869, 6.0
        %v3510 = vmin.f32 %v2870, 6.0
        %v3511 = vmin.f32 %v2871, 6.0
        %v3512 = vmin.f32 %v2872, 6.0
        %v3513 = vmin.f32 %v2873, 6.0
        %v3514 = vmin.f32 %v2874, 6.0
        %v3515 = vmin.f32 %v2875, 6.0
        %v3516 = vmin.f32 %v2876, 6.0
        %v3517 = vmin.f32 %v2877, 6.0
        %v3518 = vmin.f32 %v2878, 6.0
        %v3519 = vmin.f32 %v2879, 6.0
        %v3520 = vmin.f32 %v2880, 6.0
        %v3521 = vmin.f32 %v2881, 6.0
        %v3522 = vmin.f32 %v2882, 6.0
        %v3523 = vmin.f32 %v2883, 6.0
        %v3524 = vmin.f32 %v2884, 6.0
        %v3525 = vmin.f32 %v2885, 6.0
        %v3526 = vmin.f32 %v2886, 6.0
        %v3527 = vmin.f32 %v2887, 6.0
        %v3528 = vmin.f32 %v2888, 6.0
        %v3529 = vmin.f32 %v2889, 6.0
        %v3530 = vmin.f32 %v2890, 6.0
        %v3531 = vmin.f32 %v2891, 6.0
        %v3532 = vmin.f32 %v2892, 6.0
        %v3533 = vmin.f32 %v2893, 6.0
        %v3534 = vmin.f32 %v2894, 6.0
        %v3535 = vmin.f32 %v2895, 6.0
        %v3536 = vmin.f32 %v2896, 6.0
        %v3537 = vmin.f32 %v2897, 6.0
        %v3538 = vmin.f32 %v2898, 6.0
        %v3539 = vmin.f32 %v2899, 6.0
        %v3540 = vmin.f32 %v2900, 6.0
        %v3541 = vmin.f32 %v2901, 6.0
        %v3542 = vmin.f32 %v2902, 6.0
        %v3543 = vmin.f32 %v2903, 6.0
        %v3544 = vmin.f32 %v2904, 6.0
        %v3545 = vmin.f32 %v2905, 6.0
        %v3546 = vmin.f32 %v2906, 6.0
        %v3547 = vmin.f32 %v2907, 6.0
        %v3548 = vmin.f32 %v2908, 6.0
        %v3549 = vmin.f32 %v2909, 6.0
        %v3550 = vmin.f32 %v2910, 6.0
        %v3551 = vmin.f32 %v2911, 6.0
        %v3552 = vmin.f32 %v2912, 6.0
        %v3553 = vmin.f32 %v2913, 6.0
        %v3554 = vmin.f32 %v2914, 6.0
        %v3555 = vmin.f32 %v2915, 6.0
        %v3556 = vmin.f32 %v2916, 6.0
        %v3557 = vmin.f32 %v2917, 6.0
        %v3558 = vmin.f32 %v2918, 6.0
        %v3559 = vmin.f32 %v2919, 6.0
        %v3560 = vmin.f32 %v2920, 6.0
        %v3561 = vmin.f32 %v2921, 6.0
        %v3562 = vmin.f32 %v2922, 6.0
        %v3563 = vmin.f32 %v2923, 6.0
        %v3564 = vmin.f32 %v2924, 6.0
        %v3565 = vmin.f32 %v2925, 6.0
        %v3566 = vmin.f32 %v2926, 6.0
        %v3567 = vmin.f32 %v2927, 6.0
        %v3568 = vmin.f32 %v2928, 6.0
        %v3569 = vmin.f32 %v2929, 6.0
        %v3570 = vmin.f32 %v2930, 6.0
        %v3571 = vmin.f32 %v2931, 6.0
        %v3572 = vmin.f32 %v2932, 6.0
        %v3573 = vmin.f32 %v2933, 6.0
        %v3574 = vmin.f32 %v2934, 6.0
        %v3575 = vmin.f32 %v2935, 6.0
        %v3576 = vmin.f32 %v2936, 6.0
        %v3577 = vmin.f32 %v2937, 6.0
        %v3578 = vmin.f32 %v2938, 6.0
        %v3579 = vmin.f32 %v2939, 6.0
        %v3580 = vmin.f32 %v2940, 6.0
        %v3581 = vmin.f32 %v2941, 6.0
        %v3582 = vmin.f32 %v2942, 6.0
        %v3583 = vmin.f32 %v2943, 6.0
        %v3584 = vmin.f32 %v2944, 6.0
        %v3585 = vmin.f32 %v2945, 6.0
        %v3586 = vmin.f32 %v2946, 6.0
        %v3587 = vmin.f32 %v2947, 6.0
        %v3588 = vmin.f32 %v2948, 6.0
        %v3589 = vmin.f32 %v2949, 6.0
        %v3590 = vmin.f32 %v2950, 6.0
        %v3591 = vmin.f32 %v2951, 6.0
        %v3592 = vmin.f32 %v2952, 6.0
        %v3593 = vmin.f32 %v2953, 6.0
        %v3594 = vmin.f32 %v2954, 6.0
        %v3595 = vmin.f32 %v2955, 6.0
        %v3596 = vmin.f32 %v2956, 6.0
        %v3597 = vmin.f32 %v2957, 6.0
        %v3598 = vmin.f32 %v2958, 6.0
        %v3599 = vmin.f32 %v2959, 6.0
        %v3600 = vmin.f32 %v2960, 6.0
        %v3601 = vmin.f32 %v2961, 6.0
        %v3602 = vmin.f32 %v2962, 6.0
        %v3603 = vmin.f32 %v2963, 6.0
        %v3604 = vmin.f32 %v2964, 6.0
        %v3605 = vmin.f32 %v2965, 6.0
        %v3606 = vmin.f32 %v2966, 6.0
        %v3607 = vmin.f32 %v2967, 6.0
        %v3608 = vmin.f32 %v2968, 6.0
        %v3609 = vmin.f32 %v2969, 6.0
        %v3610 = vmin.f32 %v2970, 6.0
        %v3611 = vmin.f32 %v2971, 6.0
        %v3612 = vmin.f32 %v2972, 6.0
        %v3613 = vmin.f32 %v2973, 6.0
        %v3614 = vmin.f32 %v2974, 6.0
        %v3615 = vmin.f32 %v2975, 6.0
        %v3616 = vmin.f32 %v2976, 6.0
        %v3617 = vmin.f32 %v2977, 6.0
        %v3618 = vmin.f32 %v2978, 6.0
        %v3619 = vmin.f32 %v2979, 6.0
        %v3620 = vmin.f32 %v2980, 6.0
        %v3621 = vmin.f32 %v2981, 6.0
        %v3622 = vmin.f32 %v2982, 6.0
        %v3623 = vmin.f32 %v2983, 6.0
        %v3624 = vmin.f32 %v2984, 6.0
        %v3625 = vmin.f32 %v2985, 6.0
        %v3626 = vmin.f32 %v2986, 6.0
        %v3627 = vmin.f32 %v2987, 6.0
        %v3628 = vmin.f32 %v2988, 6.0
        %v3629 = vmin.f32 %v2989, 6.0
        %v3630 = vmin.f32 %v2990, 6.0
        %v3631 = vmin.f32 %v2991, 6.0
        %v3632 = vmin.f32 %v2992, 6.0
        %v3633 = vmin.f32 %v2993, 6.0
        %v3634 = vmin.f32 %v2994, 6.0
        %v3635 = vmin.f32 %v2995, 6.0
        %v3636 = vmin.f32 %v2996, 6.0
        %v3637 = vmin.f32 %v2997, 6.0
        %v3638 = vmin.f32 %v2998, 6.0
        %v3639 = vmin.f32 %v2999, 6.0
        %v3640 = vmin.f32 %v3000, 6.0
        %v3641 = vmin.f32 %v3001, 6.0
        %v3642 = vmin.f32 %v3002, 6.0
        %v3643 = vmin.f32 %v3003, 6.0
        %v3644 = vmin.f32 %v3004, 6.0
        %v3645 = vmin.f32 %v3005, 6.0
        %v3646 = vmin.f32 %v3006, 6.0
        %v3647 = vmin.f32 %v3007, 6.0
        %v3648 = vmin.f32 %v3008, 6.0
        %v3649 = vmin.f32 %v3009, 6.0
        %v3650 = vmin.f32 %v3010, 6.0
        %v3651 = vmin.f32 %v3011, 6.0
        %v3652 = vmin.f32 %v3012, 6.0
        %v3653 = vmin.f32 %v3013, 6.0
        %v3654 = vmin.f32 %v3014, 6.0
        %v3655 = vmin.f32 %v3015, 6.0
        %v3656 = vmin.f32 %v3016, 6.0
        %v3657 = vmin.f32 %v3017, 6.0
        %v3658 = vmin.f32 %v3018, 6.0
        %v3659 = vmin.f32 %v3019, 6.0
        %v3660 = vmin.f32 %v3020, 6.0
        %v3661 = vmin.f32 %v3021, 6.0
        %v3662 = vmin.f32 %v3022, 6.0
        %v3663 = vmin.f32 %v3023, 6.0
        %v3664 = vmin.f32 %v3024, 6.0
        %v3665 = vmin.f32 %v3025, 6.0
        %v3666 = vmin.f32 %v3026, 6.0
        %v3667 = vmin.f32 %v3027, 6.0
        %v3668 = vmin.f32 %v3028, 6.0
        %v3669 = vmin.f32 %v3029, 6.0
        %v3670 = vmin.f32 %v3030, 6.0
        %v3671 = vmin.f32 %v3031, 6.0
        %v3672 = vmin.f32 %v3032, 6.0
        %v3673 = vmin.f32 %v3033, 6.0
        %v3674 = vmin.f32 %v3034, 6.0
        %v3675 = vmin.f32 %v3035, 6.0
        %v3676 = vmin.f32 %v3036, 6.0
        %v3677 = vmin.f32 %v3037, 6.0
        %v3678 = vmin.f32 %v3038, 6.0
        %v3679 = vmin.f32 %v3039, 6.0
        %v3680 = vmin.f32 %v3040, 6.0
        %v3681 = vmin.f32 %v3041, 6.0
        %v3682 = vmin.f32 %v3042, 6.0
        %v3683 = vmin.f32 %v3043, 6.0
        %v3684 = vmin.f32 %v3044, 6.0
        %v3685 = vmin.f32 %v3045, 6.0
        %v3686 = vmin.f32 %v3046, 6.0
        %v3687 = vmin.f32 %v3047, 6.0
        %v3688 = vmin.f32 %v3048, 6.0
        %v3689 = vmin.f32 %v3049, 6.0
        %v3690 = vmin.f32 %v3050, 6.0
        %v3691 = vmin.f32 %v3051, 6.0
        %v3692 = vmin.f32 %v3052, 6.0
        %v3693 = vmin.f32 %v3053, 6.0
        %v3694 = vmin.f32 %v3054, 6.0
        %v3695 = vmin.f32 %v3055, 6.0
        %v3696 = vmin.f32 %v3056, 6.0
        %v3697 = vmin.f32 %v3057, 6.0
        %v3698 = vmin.f32 %v3058, 6.0
        %v3699 = vmin.f32 %v3059, 6.0
        %v3700 = vmin.f32 %v3060, 6.0
        %v3701 = vmin.f32 %v3061, 6.0
        %v3702 = vmin.f32 %v3062, 6.0
        %v3703 = vmin.f32 %v3063, 6.0
        %v3704 = vmin.f32 %v3064, 6.0
        %v3705 = vmin.f32 %v3065, 6.0
        %v3706 = vmin.f32 %v3066, 6.0
        %v3707 = vmin.f32 %v3067, 6.0
        %v3708 = vmin.f32 %v3068, 6.0
        %v3709 = vmin.f32 %v3069, 6.0
        %v3710 = vmin.f32 %v3070, 6.0
        %v3711 = vmin.f32 %v3071, 6.0
        %v3712 = vmin.f32 %v3072, 6.0
        %v3713 = vmin.f32 %v3073, 6.0
        %v3714 = vmin.f32 %v3074, 6.0
        %v3715 = vmin.f32 %v3075, 6.0
        %v3716 = vmin.f32 %v3076, 6.0
        %v3717 = vmin.f32 %v3077, 6.0
        %v3718 = vmin.f32 %v3078, 6.0
        %v3719 = vmin.f32 %v3079, 6.0
        %v3720 = vmin.f32 %v3080, 6.0
        %v3721 = vmin.f32 %v3081, 6.0
        %v3722 = vmin.f32 %v3082, 6.0
        %v3723 = vmin.f32 %v3083, 6.0
        %v3724 = vmin.f32 %v3084, 6.0
        %v3725 = vmin.f32 %v3085, 6.0
        %v3726 = vmin.f32 %v3086, 6.0
        %v3727 = vmin.f32 %v3087, 6.0
        %v3728 = vmin.f32 %v3088, 6.0
        %v3729 = vmin.f32 %v3089, 6.0
        %v3730 = vmin.f32 %v3090, 6.0
        %v3731 = vmin.f32 %v3091, 6.0
        %v3732 = vmin.f32 %v3092, 6.0
        %v3733 = vmin.f32 %v3093, 6.0
        %v3734 = vmin.f32 %v3094, 6.0
        %v3735 = vmin.f32 %v3095, 6.0
        %v3736 = vmin.f32 %v3096, 6.0
        %v3737 = vmin.f32 %v3097, 6.0
        %v3738 = vmin.f32 %v3098, 6.0
        %v3739 = vmin.f32 %v3099, 6.0
        %v3740 = vmin.f32 %v3100, 6.0
        %v3741 = vmin.f32 %v3101, 6.0
        %v3742 = vmin.f32 %v3102, 6.0
        %v3743 = vmin.f32 %v3103, 6.0
        %v3744 = vmin.f32 %v3104, 6.0
        %v3745 = vmin.f32 %v3105, 6.0
        %v3746 = vmin.f32 %v3106, 6.0
        %v3747 = vmin.f32 %v3107, 6.0
        %v3748 = vmin.f32 %v3108, 6.0
        %v3749 = vmin.f32 %v3109, 6.0
        %v3750 = vmin.f32 %v3110, 6.0
        %v3751 = vmin.f32 %v3111, 6.0
        %v3752 = vmin.f32 %v3112, 6.0
        %v3753 = vmin.f32 %v3113, 6.0
        %v3754 = vmin.f32 %v3114, 6.0
        %v3755 = vmin.f32 %v3115, 6.0
        %v3756 = vmin.f32 %v3116, 6.0
        %v3757 = vmin.f32 %v3117, 6.0
        %v3758 = vmin.f32 %v3118, 6.0
        %v3759 = vmin.f32 %v3119, 6.0
        %v3760 = vmin.f32 %v3120, 6.0
        %v3761 = vmin.f32 %v3121, 6.0
        %v3762 = vmin.f32 %v3122, 6.0
        %v3763 = vmin.f32 %v3123, 6.0
        %v3764 = vmin.f32 %v3124, 6.0
        %v3765 = vmin.f32 %v3125, 6.0
        %v3766 = vmin.f32 %v3126, 6.0
        %v3767 = vmin.f32 %v3127, 6.0
        %v3768 = vmin.f32 %v3128, 6.0
        %v3769 = vmin.f32 %v3129, 6.0
        %v3770 = vmin.f32 %v3130, 6.0
        %v3771 = vmin.f32 %v3131, 6.0
        %v3772 = vmin.f32 %v3132, 6.0
        %v3773 = vmin.f32 %v3133, 6.0
        %v3774 = vmin.f32 %v3134, 6.0
        %v3775 = vmin.f32 %v3135, 6.0
        %v3776 = vmin.f32 %v3136, 6.0
        %v3777 = vmin.f32 %v3137, 6.0
        %v3778 = vmin.f32 %v3138, 6.0
        %v3779 = vmin.f32 %v3139, 6.0
        %v3780 = vmin.f32 %v3140, 6.0
        %v3781 = vmin.f32 %v3141, 6.0
        %v3782 = vmin.f32 %v3142, 6.0
        %v3783 = vmin.f32 %v3143, 6.0
        %v3784 = vmin.f32 %v3144, 6.0
        %v3785 = vmin.f32 %v3145, 6.0
        %v3786 = vmin.f32 %v3146, 6.0
        %v3787 = vmin.f32 %v3147, 6.0
        %v3788 = vmin.f32 %v3148, 6.0
        %v3789 = vmin.f32 %v3149, 6.0
        %v3790 = vmin.f32 %v3150, 6.0
        %v3791 = vmin.f32 %v3151, 6.0
        %v3792 = vmin.f32 %v3152, 6.0
        %v3793 = vmin.f32 %v3153, 6.0
        %v3794 = vmin.f32 %v3154, 6.0
        %v3795 = vmin.f32 %v3155, 6.0
        %v3796 = vmin.f32 %v3156, 6.0
        %v3797 = vmin.f32 %v3157, 6.0
        %v3798 = vmin.f32 %v3158, 6.0
        %v3799 = vmin.f32 %v3159, 6.0
        %v3800 = vmin.f32 %v3160, 6.0
        %v3801 = vmin.f32 %v3161, 6.0
        %v3802 = vmin.f32 %v3162, 6.0
        %v3803 = vmin.f32 %v3163, 6.0
        %v3804 = vmin.f32 %v3164, 6.0
        %v3805 = vmin.f32 %v3165, 6.0
        %v3806 = vmin.f32 %v3166, 6.0
        %v3807 = vmin.f32 %v3167, 6.0
        %v3808 = vmin.f32 %v3168, 6.0
        %v3809 = vmin.f32 %v3169, 6.0
        %v3810 = vmin.f32 %v3170, 6.0
        %v3811 = vmin.f32 %v3171, 6.0
        %v3812 = vmin.f32 %v3172, 6.0
        %v3813 = vmin.f32 %v3173, 6.0
        %v3814 = vmin.f32 %v3174, 6.0
        %v3815 = vmin.f32 %v3175, 6.0
        %v3816 = vmin.f32 %v3176, 6.0
        %v3817 = vmin.f32 %v3177, 6.0
        %v3818 = vmin.f32 %v3178, 6.0
        %v3819 = vmin.f32 %v3179, 6.0
        %v3820 = vmin.f32 %v3180, 6.0
        %v3821 = vmin.f32 %v3181, 6.0
        %v3822 = vmin.f32 %v3182, 6.0
        %v3823 = vmin.f32 %v3183, 6.0
        %v3824 = vmin.f32 %v3184, 6.0
        %v3825 = vmin.f32 %v3185, 6.0
        %v3826 = vmin.f32 %v3186, 6.0
        %v3827 = vmin.f32 %v3187, 6.0
        %v3828 = vmin.f32 %v3188, 6.0
        %v3829 = vmin.f32 %v3189, 6.0
        %v3830 = vmin.f32 %v3190, 6.0
        %v3831 = vmin.f32 %v3191, 6.0
        %v3832 = vmin.f32 %v3192, 6.0
        %v3833 = vmin.f32 %v3193, 6.0
        %v3834 = vmin.f32 %v3194, 6.0
        %v3835 = vmin.f32 %v3195, 6.0
        %v3836 = vmin.f32 %v3196, 6.0
        %v3837 = vmin.f32 %v3197, 6.0
        %v3838 = vmin.f32 %v3198, 6.0
        %v3839 = vmin.f32 %v3199, 6.0
        %v3840 = vmin.f32 %v3200, 6.0
        %v3841 = vmin.f32 %v3201, 6.0
        %v3842 = vmin.f32 %v3202, 6.0
        %v3843 = vmin.f32 %v3203, 6.0
        %v3844 = vmin.f32 %v3204, 6.0
        %v3845 = vmin.f32 %v3205, 6.0
        %v3846 = vmin.f32 %v3206, 6.0
        %v3847 = vmin.f32 %v3207, 6.0
        %v3848 = vmin.f32 %v3208, 6.0
        %v3849 = vmin.f32 %v3209, 6.0
        %v3850 = vmin.f32 %v3210, 6.0
        %v3851 = vmin.f32 %v3211, 6.0
        %v3852 = vmin.f32 %v3212, 6.0
        %v3853 = vmin.f32 %v3213, 6.0
        %v3854 = vmin.f32 %v3214, 6.0
        %v3855 = vmin.f32 %v3215, 6.0
        %v3856 = vmin.f32 %v3216, 6.0
        %v3857 = vmin.f32 %v3217, 6.0
        %v3858 = vmin.f32 %v3218, 6.0
        %v3859 = vmin.f32 %v3219, 6.0
        %v3860 = vmin.f32 %v3220, 6.0
        %v3861 = vmin.f32 %v3221, 6.0
        %v3862 = vmin.f32 %v3222, 6.0
        %v3863 = vmin.f32 %v3223, 6.0
        %v3864 = vmin.f32 %v3224, 6.0
        %v3865 = vmin.f32 %v3225, 6.0
        %v3866 = vmin.f32 %v3226, 6.0
        %v3867 = vmin.f32 %v3227, 6.0
        %v3868 = vmin.f32 %v3228, 6.0
        %v3869 = vmin.f32 %v3229, 6.0
        %v3870 = vmin.f32 %v3230, 6.0
        %v3871 = vmin.f32 %v3231, 6.0
        %v3872 = vmin.f32 %v3232, 6.0
        %v3873 = vmin.f32 %v3233, 6.0
        %v3874 = vmin.f32 %v3234, 6.0
        %v3875 = vmin.f32 %v3235, 6.0
        %v3876 = vmin.f32 %v3236, 6.0
        %v3877 = vmin.f32 %v3237, 6.0
        %v3878 = vmin.f32 %v3238, 6.0
        %v3879 = vmin.f32 %v3239, 6.0
        %v3880 = vmin.f32 %v3240, 6.0
        %v3881 = vmin.f32 %v3241, 6.0
        %v3882 = vmin.f32 %v3242, 6.0
        %v3883 = vmin.f32 %v3243, 6.0
        %v3884 = vmin.f32 %v3244, 6.0
        %v3885 = vmin.f32 %v3245, 6.0
        %v3886 = vmin.f32 %v3246, 6.0
        %v3887 = vmin.f32 %v3247, 6.0
        %v3888 = vmin.f32 %v3248, 6.0
        %v3889 = vmin.f32 %v3249, 6.0
        %v3890 = vmin.f32 %v3250, 6.0
        %v3891 = vmin.f32 %v3251, 6.0
        %v3892 = vmin.f32 %v3252, 6.0
        %v3893 = vmin.f32 %v3253, 6.0
        %v3894 = vmin.f32 %v3254, 6.0
        %v3895 = vmin.f32 %v3255, 6.0
        %v3896 = vmin.f32 %v3256, 6.0
        %v3897 = vmin.f32 %v3257, 6.0
        %v3898 = vmin.f32 %v3258, 6.0
        %v3899 = vmin.f32 %v3259, 6.0
        %v3900 = vmin.f32 %v3260, 6.0
        %v3901 = vmin.f32 %v3261, 6.0
        %v3902 = vmin.f32 %v3262, 6.0
        %v3903 = vmin.f32 %v3263, 6.0
        %v3904 = vmin.f32 %v3264, 6.0
        %v3905 = vmin.f32 %v3265, 6.0
        %v3906 = vmin.f32 %v3266, 6.0
        %v3907 = vmin.f32 %v3267, 6.0
        %v3908 = vmin.f32 %v3268, 6.0
        %v3909 = vmin.f32 %v3269, 6.0
        %v3910 = vmin.f32 %v3270, 6.0
        %v3911 = vmin.f32 %v3271, 6.0
        %v3912 = vmin.f32 %v3272, 6.0
        %v3913 = vmin.f32 %v3273, 6.0
        %v3914 = vmin.f32 %v3274, 6.0
        %v3915 = vmin.f32 %v3275, 6.0
        %v3916 = vmin.f32 %v3276, 6.0
        %v3917 = vmin.f32 %v3277, 6.0
        %v3918 = vmin.f32 %v3278, 6.0
        %v3919 = vmin.f32 %v3279, 6.0
        %v3920 = vmin.f32 %v3280, 6.0
        %v3921 = vmin.f32 %v3281, 6.0
        %v3922 = vmin.f32 %v3282, 6.0
        %v3923 = vmin.f32 %v3283, 6.0
        %v3924 = vmin.f32 %v3284, 6.0
        %v3925 = vmin.f32 %v3285, 6.0
        %v3926 = vmin.f32 %v3286, 6.0
        %v3927 = vmin.f32 %v3287, 6.0
        %v3928 = vmin.f32 %v3288, 6.0
        %v3929 = vmin.f32 %v3289, 6.0
        %v3930 = vmin.f32 %v3290, 6.0
        %v3931 = vmin.f32 %v3291, 6.0
        %v3932 = vmin.f32 %v3292, 6.0
        %v3933 = vmin.f32 %v3293, 6.0
        %v3934 = vmin.f32 %v3294, 6.0
        %v3935 = vmin.f32 %v3295, 6.0
        %v3936 = vmin.f32 %v3296, 6.0
        %v3937 = vmin.f32 %v3297, 6.0
        %v3938 = vmin.f32 %v3298, 6.0
        %v3939 = vmin.f32 %v3299, 6.0
        %v3940 = vmin.f32 %v3300, 6.0
        %v3941 = vmin.f32 %v3301, 6.0
        %v3942 = vmin.f32 %v3302, 6.0
        %v3943 = vmin.f32 %v3303, 6.0
        %v3944 = vmin.f32 %v3304, 6.0
        %v3945 = vmin.f32 %v3305, 6.0
        %v3946 = vmin.f32 %v3306, 6.0
        %v3947 = vmin.f32 %v3307, 6.0
        %v3948 = vmin.f32 %v3308, 6.0
        %v3949 = vmin.f32 %v3309, 6.0
        %v3950 = vmin.f32 %v3310, 6.0
        %v3951 = vmin.f32 %v3311, 6.0
        %v3952 = vmin.f32 %v3312, 6.0
        %v3953 = vmin.f32 %v3313, 6.0
        %v3954 = vmin.f32 %v3314, 6.0
        %v3955 = vmin.f32 %v3315, 6.0
        %v3956 = vmin.f32 %v3316, 6.0
        %v3957 = vmin.f32 %v3317, 6.0
        %v3958 = vmin.f32 %v3318, 6.0
        %v3959 = vmin.f32 %v3319, 6.0
        %v3960 = vmin.f32 %v3320, 6.0
        %v3961 = vmin.f32 %v3321, 6.0
        %v3962 = vmin.f32 %v3322, 6.0
        %v3963 = vmin.f32 %v3323, 6.0
        %v3964 = vmin.f32 %v3324, 6.0
        %v3965 = vmin.f32 %v3325, 6.0
        %v3966 = vmin.f32 %v3326, 6.0
        %v3967 = vmin.f32 %v3327, 6.0
        %v3968 = vmin.f32 %v3328, 6.0
        %v3969 = vmin.f32 %v3329, 6.0
        %v3970 = vmin.f32 %v3330, 6.0
        %v3971 = vmin.f32 %v3331, 6.0
        %v3972 = vmin.f32 %v3332, 6.0
        %v3973 = vmin.f32 %v3333, 6.0
        %v3974 = vmin.f32 %v3334, 6.0
        %v3975 = vmin.f32 %v3335, 6.0
        %v3976 = vmin.f32 %v3336, 6.0
        %v3977 = vmin.f32 %v3337, 6.0
        %v3978 = vmin.f32 %v3338, 6.0
        %v3979 = vmin.f32 %v3339, 6.0
        %v3980 = vmin.f32 %v3340, 6.0
        %v3981 = vmin.f32 %v3341, 6.0
        %v3982 = vmin.f32 %v3342, 6.0
        %v3983 = vmin.f32 %v3343, 6.0
        %v3984 = vmin.f32 %v3344, 6.0
        %v3985 = vmin.f32 %v3345, 6.0
        %v3986 = vmin.f32 %v3346, 6.0
        %v3987 = vmin.f32 %v3347, 6.0
        %v3988 = vmin.f32 %v3348, 6.0
        %v3989 = vmin.f32 %v3349, 6.0
        %v3990 = vmin.f32 %v3350, 6.0
        %v3991 = vmin.f32 %v3351, 6.0
        %v3992 = vmin.f32 %v3352, 6.0
        %v3993 = vmin.f32 %v3353, 6.0
        %v3994 = vmin.f32 %v3354, 6.0
        %v3995 = vmin.f32 %v3355, 6.0
        %v3996 = vmin.f32 %v3356, 6.0
        %v3997 = vmin.f32 %v3357, 6.0
        %v3998 = vmin.f32 %v3358, 6.0
        %v3999 = vmin.f32 %v3359, 6.0
        %v4000 = vmin.f32 %v3360, 6.0
        %v4001 = vmin.f32 %v3361, 6.0
        %v4002 = vmin.f32 %v3362, 6.0
        %v4003 = vmin.f32 %v3363, 6.0
        %v4004 = vmin.f32 %v3364, 6.0
        %v4005 = vmin.f32 %v3365, 6.0
        %v4006 = vmin.f32 %v3366, 6.0
        %v4007 = vmin.f32 %v3367, 6.0
        %v4008 = vmin.f32 %v3368, 6.0
        %v4009 = vmin.f32 %v3369, 6.0
        %v4010 = vmin.f32 %v3370, 6.0
        %v4011 = vmin.f32 %v3371, 6.0
        %v4012 = vmin.f32 %v3372, 6.0
        %v4013 = vmin.f32 %v3373, 6.0
        %v4014 = vmin.f32 %v3374, 6.0
        %v4015 = vmin.f32 %v3375, 6.0
        %v4016 = vmin.f32 %v3376, 6.0
        %v4017 = vmin.f32 %v3377, 6.0
        %v4018 = vmin.f32 %v3378, 6.0
        %v4019 = vmin.f32 %v3379, 6.0
        %v4020 = vmin.f32 %v3380, 6.0
        %v4021 = vmin.f32 %v3381, 6.0
        %v4022 = vmin.f32 %v3382, 6.0
        %v4023 = vadd.f32 %v3383, %v3393
        %v4024 = vadd.f32 %v4023, %v3403
        %v4025 = vadd.f32 %v4024, %v3413
        %v4026 = vadd.f32 %v4025, %v3423
        %v4027 = vadd.f32 %v4026, %v3433
        %v4028 = vadd.f32 %v4027, %v3443
        %v4029 = vadd.f32 %v4028, %v3453
        %v4030 = vadd.f32 %v4029, %v3463
        %v4031 = vadd.f32 %v4030, %v3473
        %v4032 = vadd.f32 %v4031, %v3483
        %v4033 = vadd.f32 %v4032, %v3493
        %v4034 = vadd.f32 %v4033, %v3503
        %v4035 = vadd.f32 %v4034, %v3513
        %v4036 = vadd.f32 %v4035, %v3523
        %v4037 = vadd.f32 %v4036, %v3533
        %v4038 = vadd.f32 %v4037, %v3543
        %v4039 = vadd.f32 %v4038, %v3553
        %v4040 = vadd.f32 %v4039, %v3563
        %v4041 = vadd.f32 %v4040, %v3573
        %v4042 = vadd.f32 %v4041, %v3583
        %v4043 = vadd.f32 %v4042, %v3593
        %v4044 = vadd.f32 %v4043, %v3603
        %v4045 = vadd.f32 %v4044, %v3613
        %v4046 = vadd.f32 %v4045, %v3623
        %v4047 = vadd.f32 %v4046, %v3633
        %v4048 = vadd.f32 %v4047, %v3643
        %v4049 = vadd.f32 %v4048, %v3653
        %v4050 = vadd.f32 %v4049, %v3663
        %v4051 = vadd.f32 %v4050, %v3673
        %v4052 = vadd.f32 %v4051, %v3683
        %v4053 = vadd.f32 %v4052, %v3693
        %v4054 = vrot.slane %v4053, 4
        %v4055 = vadd.f32 %v4053, %v4054
        %v4056 = vrot.slane %v4055, 2
        %v4057 = vadd.f32 %v4055, %v4056
        %v4058 = vrot.slane %v4057, 1
        %v4059 = vadd.f32 %v4057, %v4058
        %v4060 = vadd.f32 %v3384, %v3394
        %v4061 = vadd.f32 %v4060, %v3404
        %v4062 = vadd.f32 %v4061, %v3414
        %v4063 = vadd.f32 %v4062, %v3424
        %v4064 = vadd.f32 %v4063, %v3434
        %v4065 = vadd.f32 %v4064, %v3444
        %v4066 = vadd.f32 %v4065, %v3454
        %v4067 = vadd.f32 %v4066, %v3464
        %v4068 = vadd.f32 %v4067, %v3474
        %v4069 = vadd.f32 %v4068, %v3484
        %v4070 = vadd.f32 %v4069, %v3494
        %v4071 = vadd.f32 %v4070, %v3504
        %v4072 = vadd.f32 %v4071, %v3514
        %v4073 = vadd.f32 %v4072, %v3524
        %v4074 = vadd.f32 %v4073, %v3534
        %v4075 = vadd.f32 %v4074, %v3544
        %v4076 = vadd.f32 %v4075, %v3554
        %v4077 = vadd.f32 %v4076, %v3564
        %v4078 = vadd.f32 %v4077, %v3574
        %v4079 = vadd.f32 %v4078, %v3584
        %v4080 = vadd.f32 %v4079, %v3594
        %v4081 = vadd.f32 %v4080, %v3604
        %v4082 = vadd.f32 %v4081, %v3614
        %v4083 = vadd.f32 %v4082, %v3624
        %v4084 = vadd.f32 %v4083, %v3634
        %v4085 = vadd.f32 %v4084, %v3644
        %v4086 = vadd.f32 %v4085, %v3654
        %v4087 = vadd.f32 %v4086, %v3664
        %v4088 = vadd.f32 %v4087, %v3674
        %v4089 = vadd.f32 %v4088, %v3684
        %v4090 = vadd.f32 %v4089, %v3694
        %v4091 = vrot.slane %v4090, 4
        %v4092 = vadd.f32 %v4090, %v4091
        %v4093 = vrot.slane %v4092, 2
        %v4094 = vadd.f32 %v4092, %v4093
        %v4095 = vrot.slane %v4094, 1
        %v4096 = vadd.f32 %v4094, %v4095
        %v4097 = vadd.f32 %v3385, %v3395
        %v4098 = vadd.f32 %v4097, %v3405
        %v4099 = vadd.f32 %v4098, %v3415
        %v4100 = vadd.f32 %v4099, %v3425
        %v4101 = vadd.f32 %v4100, %v3435
        %v4102 = vadd.f32 %v4101, %v3445
        %v4103 = vadd.f32 %v4102, %v3455
        %v4104 = vadd.f32 %v4103, %v3465
        %v4105 = vadd.f32 %v4104, %v3475
        %v4106 = vadd.f32 %v4105, %v3485
        %v4107 = vadd.f32 %v4106, %v3495
        %v4108 = vadd.f32 %v4107, %v3505
        %v4109 = vadd.f32 %v4108, %v3515
        %v4110 = vadd.f32 %v4109, %v3525
        %v4111 = vadd.f32 %v4110, %v3535
        %v4112 = vadd.f32 %v4111, %v3545
        %v4113 = vadd.f32 %v4112, %v3555
        %v4114 = vadd.f32 %v4113, %v3565
        %v4115 = vadd.f32 %v4114, %v3575
        %v4116 = vadd.f32 %v4115, %v3585
        %v4117 = vadd.f32 %v4116, %v3595
        %v4118 = vadd.f32 %v4117, %v3605
        %v4119 = vadd.f32 %v4118, %v3615
        %v4120 = vadd.f32 %v4119, %v3625
        %v4121 = vadd.f32 %v4120, %v3635
        %v4122 = vadd.f32 %v4121, %v3645
        %v4123 = vadd.f32 %v4122, %v3655
        %v4124 = vadd.f32 %v4123, %v3665
        %v4125 = vadd.f32 %v4124, %v3675
        %v4126 = vadd.f32 %v4125, %v3685
        %v4127 = vadd.f32 %v4126, %v3695
        %v4128 = vrot.slane %v4127, 4
        %v4129 = vadd.f32 %v4127, %v4128
        %v4130 = vrot.slane %v4129, 2
        %v4131 = vadd.f32 %v4129, %v4130
        %v4132 = vrot.slane %v4131, 1
        %v4133 = vadd.f32 %v4131, %v4132
        %v4134 = vadd.f32 %v3386, %v3396
        %v4135 = vadd.f32 %v4134, %v3406
        %v4136 = vadd.f32 %v4135, %v3416
        %v4137 = vadd.f32 %v4136, %v3426
        %v4138 = vadd.f32 %v4137, %v3436
        %v4139 = vadd.f32 %v4138, %v3446
        %v4140 = vadd.f32 %v4139, %v3456
        %v4141 = vadd.f32 %v4140, %v3466
        %v4142 = vadd.f32 %v4141, %v3476
        %v4143 = vadd.f32 %v4142, %v3486
        %v4144 = vadd.f32 %v4143, %v3496
        %v4145 = vadd.f32 %v4144, %v3506
        %v4146 = vadd.f32 %v4145, %v3516
        %v4147 = vadd.f32 %v4146, %v3526
        %v4148 = vadd.f32 %v4147, %v3536
        %v4149 = vadd.f32 %v4148, %v3546
        %v4150 = vadd.f32 %v4149, %v3556
        %v4151 = vadd.f32 %v4150, %v3566
        %v4152 = vadd.f32 %v4151, %v3576
        %v4153 = vadd.f32 %v4152, %v3586
        %v4154 = vadd.f32 %v4153, %v3596
        %v4155 = vadd.f32 %v4154, %v3606
        %v4156 = vadd.f32 %v4155, %v3616
        %v4157 = vadd.f32 %v4156, %v3626
        %v4158 = vadd.f32 %v4157, %v3636
        %v4159 = vadd.f32 %v4158, %v3646
        %v4160 = vadd.f32 %v4159, %v3656
        %v4161 = vadd.f32 %v4160, %v3666
        %v4162 = vadd.f32 %v4161, %v3676
        %v4163 = vadd.f32 %v4162, %v3686
        %v4164 = vadd.f32 %v4163, %v3696
        %v4165 = vrot.slane %v4164, 4
        %v4166 = vadd.f32 %v4164, %v4165
        %v4167 = vrot.slane %v4166, 2
        %v4168 = vadd.f32 %v4166, %v4167
        %v4169 = vrot.slane %v4168, 1
        %v4170 = vadd.f32 %v4168, %v4169
        %v4171 = vadd.f32 %v3387, %v3397
        %v4172 = vadd.f32 %v4171, %v3407
        %v4173 = vadd.f32 %v4172, %v3417
        %v4174 = vadd.f32 %v4173, %v3427
        %v4175 = vadd.f32 %v4174, %v3437
        %v4176 = vadd.f32 %v4175, %v3447
        %v4177 = vadd.f32 %v4176, %v3457
        %v4178 = vadd.f32 %v4177, %v3467
        %v4179 = vadd.f32 %v4178, %v3477
        %v4180 = vadd.f32 %v4179, %v3487
        %v4181 = vadd.f32 %v4180, %v3497
        %v4182 = vadd.f32 %v4181, %v3507
        %v4183 = vadd.f32 %v4182, %v3517
        %v4184 = vadd.f32 %v4183, %v3527
        %v4185 = vadd.f32 %v4184, %v3537
        %v4186 = vadd.f32 %v4185, %v3547
        %v4187 = vadd.f32 %v4186, %v3557
        %v4188 = vadd.f32 %v4187, %v3567
        %v4189 = vadd.f32 %v4188, %v3577
        %v4190 = vadd.f32 %v4189, %v3587
        %v4191 = vadd.f32 %v4190, %v3597
        %v4192 = vadd.f32 %v4191, %v3607
        %v4193 = vadd.f32 %v4192, %v3617
        %v4194 = vadd.f32 %v4193, %v3627
        %v4195 = vadd.f32 %v4194, %v3637
        %v4196 = vadd.f32 %v4195, %v3647
        %v4197 = vadd.f32 %v4196, %v3657
        %v4198 = vadd.f32 %v4197, %v3667
        %v4199 = vadd.f32 %v4198, %v3677
        %v4200 = vadd.f32 %v4199, %v3687
        %v4201 = vadd.f32 %v4200, %v3697
        %v4202 = vrot.slane %v4201, 4
        %v4203 = vadd.f32 %v4201, %v4202
        %v4204 = vrot.slane %v4203, 2
        %v4205 = vadd.f32 %v4203, %v4204
        %v4206 = vrot.slane %v4205, 1
        %v4207 = vadd.f32 %v4205, %v4206
        %v4208 = vadd.f32 %v3388, %v3398
        %v4209 = vadd.f32 %v4208, %v3408
        %v4210 = vadd.f32 %v4209, %v3418
        %v4211 = vadd.f32 %v4210, %v3428
        %v4212 = vadd.f32 %v4211, %v3438
        %v4213 = vadd.f32 %v4212, %v3448
        %v4214 = vadd.f32 %v4213, %v3458
        %v4215 = vadd.f32 %v4214, %v3468
        %v4216 = vadd.f32 %v4215, %v3478
        %v4217 = vadd.f32 %v4216, %v3488
        %v4218 = vadd.f32 %v4217, %v3498
        %v4219 = vadd.f32 %v4218, %v3508
        %v4220 = vadd.f32 %v4219, %v3518
        %v4221 = vadd.f32 %v4220, %v3528
        %v4222 = vadd.f32 %v4221, %v3538
        %v4223 = vadd.f32 %v4222, %v3548
        %v4224 = vadd.f32 %v4223, %v3558
        %v4225 = vadd.f32 %v4224, %v3568
        %v4226 = vadd.f32 %v4225, %v3578
        %v4227 = vadd.f32 %v4226, %v3588
        %v4228 = vadd.f32 %v4227, %v3598
        %v4229 = vadd.f32 %v4228, %v3608
        %v4230 = vadd.f32 %v4229, %v3618
        %v4231 = vadd.f32 %v4230, %v3628
        %v4232 = vadd.f32 %v4231, %v3638
        %v4233 = vadd.f32 %v4232, %v3648
        %v4234 = vadd.f32 %v4233, %v3658
        %v4235 = vadd.f32 %v4234, %v3668
        %v4236 = vadd.f32 %v4235, %v3678
        %v4237 = vadd.f32 %v4236, %v3688
        %v4238 = vadd.f32 %v4237, %v3698
        %v4239 = vrot.slane %v4238, 4
        %v4240 = vadd.f32 %v4238, %v4239
        %v4241 = vrot.slane %v4240, 2
        %v4242 = vadd.f32 %v4240, %v4241
        %v4243 = vrot.slane %v4242, 1
        %v4244 = vadd.f32 %v4242, %v4243
        %v4245 = vadd.f32 %v3389, %v3399
        %v4246 = vadd.f32 %v4245, %v3409
        %v4247 = vadd.f32 %v4246, %v3419
        %v4248 = vadd.f32 %v4247, %v3429
        %v4249 = vadd.f32 %v4248, %v3439
        %v4250 = vadd.f32 %v4249, %v3449
        %v4251 = vadd.f32 %v4250, %v3459
        %v4252 = vadd.f32 %v4251, %v3469
        %v4253 = vadd.f32 %v4252, %v3479
        %v4254 = vadd.f32 %v4253, %v3489
        %v4255 = vadd.f32 %v4254, %v3499
        %v4256 = vadd.f32 %v4255, %v3509
        %v4257 = vadd.f32 %v4256, %v3519
        %v4258 = vadd.f32 %v4257, %v3529
        %v4259 = vadd.f32 %v4258, %v3539
        %v4260 = vadd.f32 %v4259, %v3549
        %v4261 = vadd.f32 %v4260, %v3559
        %v4262 = vadd.f32 %v4261, %v3569
        %v4263 = vadd.f32 %v4262, %v3579
        %v4264 = vadd.f32 %v4263, %v3589
        %v4265 = vadd.f32 %v4264, %v3599
        %v4266 = vadd.f32 %v4265, %v3609
        %v4267 = vadd.f32 %v4266, %v3619
        %v4268 = vadd.f32 %v4267, %v3629
        %v4269 = vadd.f32 %v4268, %v3639
        %v4270 = vadd.f32 %v4269, %v3649
        %v4271 = vadd.f32 %v4270, %v3659
        %v4272 = vadd.f32 %v4271, %v3669
        %v4273 = vadd.f32 %v4272, %v3679
        %v4274 = vadd.f32 %v4273, %v3689
        %v4275 = vadd.f32 %v4274, %v3699
        %v4276 = vrot.slane %v4275, 4
        %v4277 = vadd.f32 %v4275, %v4276
        %v4278 = vrot.slane %v4277, 2
        %v4279 = vadd.f32 %v4277, %v4278
        %v4280 = vrot.slane %v4279, 1
        %v4281 = vadd.f32 %v4279, %v4280
        %v4282 = vadd.f32 %v3390, %v3400
        %v4283 = vadd.f32 %v4282, %v3410
        %v4284 = vadd.f32 %v4283, %v3420
        %v4285 = vadd.f32 %v4284, %v3430
        %v4286 = vadd.f32 %v4285, %v3440
        %v4287 = vadd.f32 %v4286, %v3450
        %v4288 = vadd.f32 %v4287, %v3460
        %v4289 = vadd.f32 %v4288, %v3470
        %v4290 = vadd.f32 %v4289, %v3480
        %v4291 = vadd.f32 %v4290, %v3490
        %v4292 = vadd.f32 %v4291, %v3500
        %v4293 = vadd.f32 %v4292, %v3510
        %v4294 = vadd.f32 %v4293, %v3520
        %v4295 = vadd.f32 %v4294, %v3530
        %v4296 = vadd.f32 %v4295, %v3540
        %v4297 = vadd.f32 %v4296, %v3550
        %v4298 = vadd.f32 %v4297, %v3560
        %v4299 = vadd.f32 %v4298, %v3570
        %v4300 = vadd.f32 %v4299, %v3580
        %v4301 = vadd.f32 %v4300, %v3590
        %v4302 = vadd.f32 %v4301, %v3600
        %v4303 = vadd.f32 %v4302, %v3610
        %v4304 = vadd.f32 %v4303, %v3620
        %v4305 = vadd.f32 %v4304, %v3630
        %v4306 = vadd.f32 %v4305, %v3640
        %v4307 = vadd.f32 %v4306, %v3650
        %v4308 = vadd.f32 %v4307, %v3660
        %v4309 = vadd.f32 %v4308, %v3670
        %v4310 = vadd.f32 %v4309, %v3680
        %v4311 = vadd.f32 %v4310, %v3690
        %v4312 = vadd.f32 %v4311, %v3700
        %v4313 = vrot.slane %v4312, 4
        %v4314 = vadd.f32 %v4312, %v4313
        %v4315 = vrot.slane %v4314, 2
        %v4316 = vadd.f32 %v4314, %v4315
        %v4317 = vrot.slane %v4316, 1
        %v4318 = vadd.f32 %v4316, %v4317
        %v4319 = vadd.f32 %v3391, %v3401
        %v4320 = vadd.f32 %v4319, %v3411
        %v4321 = vadd.f32 %v4320, %v3421
        %v4322 = vadd.f32 %v4321, %v3431
        %v4323 = vadd.f32 %v4322, %v3441
        %v4324 = vadd.f32 %v4323, %v3451
        %v4325 = vadd.f32 %v4324, %v3461
        %v4326 = vadd.f32 %v4325, %v3471
        %v4327 = vadd.f32 %v4326, %v3481
        %v4328 = vadd.f32 %v4327, %v3491
        %v4329 = vadd.f32 %v4328, %v3501
        %v4330 = vadd.f32 %v4329, %v3511
        %v4331 = vadd.f32 %v4330, %v3521
        %v4332 = vadd.f32 %v4331, %v3531
        %v4333 = vadd.f32 %v4332, %v3541
        %v4334 = vadd.f32 %v4333, %v3551
        %v4335 = vadd.f32 %v4334, %v3561
        %v4336 = vadd.f32 %v4335, %v3571
        %v4337 = vadd.f32 %v4336, %v3581
        %v4338 = vadd.f32 %v4337, %v3591
        %v4339 = vadd.f32 %v4338, %v3601
        %v4340 = vadd.f32 %v4339, %v3611
        %v4341 = vadd.f32 %v4340, %v3621
        %v4342 = vadd.f32 %v4341, %v3631
        %v4343 = vadd.f32 %v4342, %v3641
        %v4344 = vadd.f32 %v4343, %v3651
        %v4345 = vadd.f32 %v4344, %v3661
        %v4346 = vadd.f32 %v4345, %v3671
        %v4347 = vadd.f32 %v4346, %v3681
        %v4348 = vadd.f32 %v4347, %v3691
        %v4349 = vadd.f32 %v4348, %v3701
        %v4350 = vrot.slane %v4349, 4
        %v4351 = vadd.f32 %v4349, %v4350
        %v4352 = vrot.slane %v4351, 2
        %v4353 = vadd.f32 %v4351, %v4352
        %v4354 = vrot.slane %v4353, 1
        %v4355 = vadd.f32 %v4353, %v4354
        %v4356 = vadd.f32 %v3392, %v3402
        %v4357 = vadd.f32 %v4356, %v3412
        %v4358 = vadd.f32 %v4357, %v3422
        %v4359 = vadd.f32 %v4358, %v3432
        %v4360 = vadd.f32 %v4359, %v3442
        %v4361 = vadd.f32 %v4360, %v3452
        %v4362 = vadd.f32 %v4361, %v3462
        %v4363 = vadd.f32 %v4362, %v3472
        %v4364 = vadd.f32 %v4363, %v3482
        %v4365 = vadd.f32 %v4364, %v3492
        %v4366 = vadd.f32 %v4365, %v3502
        %v4367 = vadd.f32 %v4366, %v3512
        %v4368 = vadd.f32 %v4367, %v3522
        %v4369 = vadd.f32 %v4368, %v3532
        %v4370 = vadd.f32 %v4369, %v3542
        %v4371 = vadd.f32 %v4370, %v3552
        %v4372 = vadd.f32 %v4371, %v3562
        %v4373 = vadd.f32 %v4372, %v3572
        %v4374 = vadd.f32 %v4373, %v3582
        %v4375 = vadd.f32 %v4374, %v3592
        %v4376 = vadd.f32 %v4375, %v3602
        %v4377 = vadd.f32 %v4376, %v3612
        %v4378 = vadd.f32 %v4377, %v3622
        %v4379 = vadd.f32 %v4378, %v3632
        %v4380 = vadd.f32 %v4379, %v3642
        %v4381 = vadd.f32 %v4380, %v3652
        %v4382 = vadd.f32 %v4381, %v3662
        %v4383 = vadd.f32 %v4382, %v3672
        %v4384 = vadd.f32 %v4383, %v3682
        %v4385 = vadd.f32 %v4384, %v3692
        %v4386 = vadd.f32 %v4385, %v3702
        %v4387 = vrot.slane %v4386, 4
        %v4388 = vadd.f32 %v4386, %v4387
        %v4389 = vrot.slane %v4388, 2
        %v4390 = vadd.f32 %v4388, %v4389
        %v4391 = vrot.slane %v4390, 1
        %v4392 = vadd.f32 %v4390, %v4391
        %v4393 = vadd.f32 %v3703, %v3713
        %v4394 = vadd.f32 %v4393, %v3723
        %v4395 = vadd.f32 %v4394, %v3733
        %v4396 = vadd.f32 %v4395, %v3743
        %v4397 = vadd.f32 %v4396, %v3753
        %v4398 = vadd.f32 %v4397, %v3763
        %v4399 = vadd.f32 %v4398, %v3773
        %v4400 = vadd.f32 %v4399, %v3783
        %v4401 = vadd.f32 %v4400, %v3793
        %v4402 = vadd.f32 %v4401, %v3803
        %v4403 = vadd.f32 %v4402, %v3813
        %v4404 = vadd.f32 %v4403, %v3823
        %v4405 = vadd.f32 %v4404, %v3833
        %v4406 = vadd.f32 %v4405, %v3843
        %v4407 = vadd.f32 %v4406, %v3853
        %v4408 = vadd.f32 %v4407, %v3863
        %v4409 = vadd.f32 %v4408, %v3873
        %v4410 = vadd.f32 %v4409, %v3883
        %v4411 = vadd.f32 %v4410, %v3893
        %v4412 = vadd.f32 %v4411, %v3903
        %v4413 = vadd.f32 %v4412, %v3913
        %v4414 = vadd.f32 %v4413, %v3923
        %v4415 = vadd.f32 %v4414, %v3933
        %v4416 = vadd.f32 %v4415, %v3943
        %v4417 = vadd.f32 %v4416, %v3953
        %v4418 = vadd.f32 %v4417, %v3963
        %v4419 = vadd.f32 %v4418, %v3973
        %v4420 = vadd.f32 %v4419, %v3983
        %v4421 = vadd.f32 %v4420, %v3993
        %v4422 = vadd.f32 %v4421, %v4003
        %v4423 = vadd.f32 %v4422, %v4013
        %v4424 = vrot.slane %v4423, 4
        %v4425 = vadd.f32 %v4423, %v4424
        %v4426 = vrot.slane %v4425, 2
        %v4427 = vadd.f32 %v4425, %v4426
        %v4428 = vrot.slane %v4427, 1
        %v4429 = vadd.f32 %v4427, %v4428
        %v4430 = vadd.f32 %v3704, %v3714
        %v4431 = vadd.f32 %v4430, %v3724
        %v4432 = vadd.f32 %v4431, %v3734
        %v4433 = vadd.f32 %v4432, %v3744
        %v4434 = vadd.f32 %v4433, %v3754
        %v4435 = vadd.f32 %v4434, %v3764
        %v4436 = vadd.f32 %v4435, %v3774
        %v4437 = vadd.f32 %v4436, %v3784
        %v4438 = vadd.f32 %v4437, %v3794
        %v4439 = vadd.f32 %v4438, %v3804
        %v4440 = vadd.f32 %v4439, %v3814
        %v4441 = vadd.f32 %v4440, %v3824
        %v4442 = vadd.f32 %v4441, %v3834
        %v4443 = vadd.f32 %v4442, %v3844
        %v4444 = vadd.f32 %v4443, %v3854
        %v4445 = vadd.f32 %v4444, %v3864
        %v4446 = vadd.f32 %v4445, %v3874
        %v4447 = vadd.f32 %v4446, %v3884
        %v4448 = vadd.f32 %v4447, %v3894
        %v4449 = vadd.f32 %v4448, %v3904
        %v4450 = vadd.f32 %v4449, %v3914
        %v4451 = vadd.f32 %v4450, %v3924
        %v4452 = vadd.f32 %v4451, %v3934
        %v4453 = vadd.f32 %v4452, %v3944
        %v4454 = vadd.f32 %v4453, %v3954
        %v4455 = vadd.f32 %v4454, %v3964
        %v4456 = vadd.f32 %v4455, %v3974
        %v4457 = vadd.f32 %v4456, %v3984
        %v4458 = vadd.f32 %v4457, %v3994
        %v4459 = vadd.f32 %v4458, %v4004
        %v4460 = vadd.f32 %v4459, %v4014
        %v4461 = vrot.slane %v4460, 4
        %v4462 = vadd.f32 %v4460, %v4461
        %v4463 = vrot.slane %v4462, 2
        %v4464 = vadd.f32 %v4462, %v4463
        %v4465 = vrot.slane %v4464, 1
        %v4466 = vadd.f32 %v4464, %v4465
        %v4467 = vadd.f32 %v3705, %v3715
        %v4468 = vadd.f32 %v4467, %v3725
        %v4469 = vadd.f32 %v4468, %v3735
        %v4470 = vadd.f32 %v4469, %v3745
        %v4471 = vadd.f32 %v4470, %v3755
        %v4472 = vadd.f32 %v4471, %v3765
        %v4473 = vadd.f32 %v4472, %v3775
        %v4474 = vadd.f32 %v4473, %v3785
        %v4475 = vadd.f32 %v4474, %v3795
        %v4476 = vadd.f32 %v4475, %v3805
        %v4477 = vadd.f32 %v4476, %v3815
        %v4478 = vadd.f32 %v4477, %v3825
        %v4479 = vadd.f32 %v4478, %v3835
        %v4480 = vadd.f32 %v4479, %v3845
        %v4481 = vadd.f32 %v4480, %v3855
        %v4482 = vadd.f32 %v4481, %v3865
        %v4483 = vadd.f32 %v4482, %v3875
        %v4484 = vadd.f32 %v4483, %v3885
        %v4485 = vadd.f32 %v4484, %v3895
        %v4486 = vadd.f32 %v4485, %v3905
        %v4487 = vadd.f32 %v4486, %v3915
        %v4488 = vadd.f32 %v4487, %v3925
        %v4489 = vadd.f32 %v4488, %v3935
        %v4490 = vadd.f32 %v4489, %v3945
        %v4491 = vadd.f32 %v4490, %v3955
        %v4492 = vadd.f32 %v4491, %v3965
        %v4493 = vadd.f32 %v4492, %v3975
        %v4494 = vadd.f32 %v4493, %v3985
        %v4495 = vadd.f32 %v4494, %v3995
        %v4496 = vadd.f32 %v4495, %v4005
        %v4497 = vadd.f32 %v4496, %v4015
        %v4498 = vrot.slane %v4497, 4
        %v4499 = vadd.f32 %v4497, %v4498
        %v4500 = vrot.slane %v4499, 2
        %v4501 = vadd.f32 %v4499, %v4500
        %v4502 = vrot.slane %v4501, 1
        %v4503 = vadd.f32 %v4501, %v4502
        %v4504 = vadd.f32 %v3706, %v3716
        %v4505 = vadd.f32 %v4504, %v3726
        %v4506 = vadd.f32 %v4505, %v3736
        %v4507 = vadd.f32 %v4506, %v3746
        %v4508 = vadd.f32 %v4507, %v3756
        %v4509 = vadd.f32 %v4508, %v3766
        %v4510 = vadd.f32 %v4509, %v3776
        %v4511 = vadd.f32 %v4510, %v3786
        %v4512 = vadd.f32 %v4511, %v3796
        %v4513 = vadd.f32 %v4512, %v3806
        %v4514 = vadd.f32 %v4513, %v3816
        %v4515 = vadd.f32 %v4514, %v3826
        %v4516 = vadd.f32 %v4515, %v3836
        %v4517 = vadd.f32 %v4516, %v3846
        %v4518 = vadd.f32 %v4517, %v3856
        %v4519 = vadd.f32 %v4518, %v3866
        %v4520 = vadd.f32 %v4519, %v3876
        %v4521 = vadd.f32 %v4520, %v3886
        %v4522 = vadd.f32 %v4521, %v3896
        %v4523 = vadd.f32 %v4522, %v3906
        %v4524 = vadd.f32 %v4523, %v3916
        %v4525 = vadd.f32 %v4524, %v3926
        %v4526 = vadd.f32 %v4525, %v3936
        %v4527 = vadd.f32 %v4526, %v3946
        %v4528 = vadd.f32 %v4527, %v3956
        %v4529 = vadd.f32 %v4528, %v3966
        %v4530 = vadd.f32 %v4529, %v3976
        %v4531 = vadd.f32 %v4530, %v3986
        %v4532 = vadd.f32 %v4531, %v3996
        %v4533 = vadd.f32 %v4532, %v4006
        %v4534 = vadd.f32 %v4533, %v4016
        %v4535 = vrot.slane %v4534, 4
        %v4536 = vadd.f32 %v4534, %v4535
        %v4537 = vrot.slane %v4536, 2
        %v4538 = vadd.f32 %v4536, %v4537
        %v4539 = vrot.slane %v4538, 1
        %v4540 = vadd.f32 %v4538, %v4539
        %v4541 = vadd.f32 %v3707, %v3717
        %v4542 = vadd.f32 %v4541, %v3727
        %v4543 = vadd.f32 %v4542, %v3737
        %v4544 = vadd.f32 %v4543, %v3747
        %v4545 = vadd.f32 %v4544, %v3757
        %v4546 = vadd.f32 %v4545, %v3767
        %v4547 = vadd.f32 %v4546, %v3777
        %v4548 = vadd.f32 %v4547, %v3787
        %v4549 = vadd.f32 %v4548, %v3797
        %v4550 = vadd.f32 %v4549, %v3807
        %v4551 = vadd.f32 %v4550, %v3817
        %v4552 = vadd.f32 %v4551, %v3827
        %v4553 = vadd.f32 %v4552, %v3837
        %v4554 = vadd.f32 %v4553, %v3847
        %v4555 = vadd.f32 %v4554, %v3857
        %v4556 = vadd.f32 %v4555, %v3867
        %v4557 = vadd.f32 %v4556, %v3877
        %v4558 = vadd.f32 %v4557, %v3887
        %v4559 = vadd.f32 %v4558, %v3897
        %v4560 = vadd.f32 %v4559, %v3907
        %v4561 = vadd.f32 %v4560, %v3917
        %v4562 = vadd.f32 %v4561, %v3927
        %v4563 = vadd.f32 %v4562, %v3937
        %v4564 = vadd.f32 %v4563, %v3947
        %v4565 = vadd.f32 %v4564, %v3957
        %v4566 = vadd.f32 %v4565, %v3967
        %v4567 = vadd.f32 %v4566, %v3977
        %v4568 = vadd.f32 %v4567, %v3987
        %v4569 = vadd.f32 %v4568, %v3997
        %v4570 = vadd.f32 %v4569, %v4007
        %v4571 = vadd.f32 %v4570, %v4017
        %v4572 = vrot.slane %v4571, 4
        %v4573 = vadd.f32 %v4571, %v4572
        %v4574 = vrot.slane %v4573, 2
        %v4575 = vadd.f32 %v4573, %v4574
        %v4576 = vrot.slane %v4575, 1
        %v4577 = vadd.f32 %v4575, %v4576
        %v4578 = vadd.f32 %v3708, %v3718
        %v4579 = vadd.f32 %v4578, %v3728
        %v4580 = vadd.f32 %v4579, %v3738
        %v4581 = vadd.f32 %v4580, %v3748
        %v4582 = vadd.f32 %v4581, %v3758
        %v4583 = vadd.f32 %v4582, %v3768
        %v4584 = vadd.f32 %v4583, %v3778
        %v4585 = vadd.f32 %v4584, %v3788
        %v4586 = vadd.f32 %v4585, %v3798
        %v4587 = vadd.f32 %v4586, %v3808
        %v4588 = vadd.f32 %v4587, %v3818
        %v4589 = vadd.f32 %v4588, %v3828
        %v4590 = vadd.f32 %v4589, %v3838
        %v4591 = vadd.f32 %v4590, %v3848
        %v4592 = vadd.f32 %v4591, %v3858
        %v4593 = vadd.f32 %v4592, %v3868
        %v4594 = vadd.f32 %v4593, %v3878
        %v4595 = vadd.f32 %v4594, %v3888
        %v4596 = vadd.f32 %v4595, %v3898
        %v4597 = vadd.f32 %v4596, %v3908
        %v4598 = vadd.f32 %v4597, %v3918
        %v4599 = vadd.f32 %v4598, %v3928
        %v4600 = vadd.f32 %v4599, %v3938
        %v4601 = vadd.f32 %v4600, %v3948
        %v4602 = vadd.f32 %v4601, %v3958
        %v4603 = vadd.f32 %v4602, %v3968
        %v4604 = vadd.f32 %v4603, %v3978
        %v4605 = vadd.f32 %v4604, %v3988
        %v4606 = vadd.f32 %v4605, %v3998
        %v4607 = vadd.f32 %v4606, %v4008
        %v4608 = vadd.f32 %v4607, %v4018
        %v4609 = vrot.slane %v4608, 4
        %v4610 = vadd.f32 %v4608, %v4609
        %v4611 = vrot.slane %v4610, 2
        %v4612 = vadd.f32 %v4610, %v4611
        %v4613 = vrot.slane %v4612, 1
        %v4614 = vadd.f32 %v4612, %v4613
        %v4615 = vadd.f32 %v3709, %v3719
        %v4616 = vadd.f32 %v4615, %v3729
        %v4617 = vadd.f32 %v4616, %v3739
        %v4618 = vadd.f32 %v4617, %v3749
        %v4619 = vadd.f32 %v4618, %v3759
        %v4620 = vadd.f32 %v4619, %v3769
        %v4621 = vadd.f32 %v4620, %v3779
        %v4622 = vadd.f32 %v4621, %v3789
        %v4623 = vadd.f32 %v4622, %v3799
        %v4624 = vadd.f32 %v4623, %v3809
        %v4625 = vadd.f32 %v4624, %v3819
        %v4626 = vadd.f32 %v4625, %v3829
        %v4627 = vadd.f32 %v4626, %v3839
        %v4628 = vadd.f32 %v4627, %v3849
        %v4629 = vadd.f32 %v4628, %v3859
        %v4630 = vadd.f32 %v4629, %v3869
        %v4631 = vadd.f32 %v4630, %v3879
        %v4632 = vadd.f32 %v4631, %v3889
        %v4633 = vadd.f32 %v4632, %v3899
        %v4634 = vadd.f32 %v4633, %v3909
        %v4635 = vadd.f32 %v4634, %v3919
        %v4636 = vadd.f32 %v4635, %v3929
        %v4637 = vadd.f32 %v4636, %v3939
        %v4638 = vadd.f32 %v4637, %v3949
        %v4639 = vadd.f32 %v4638, %v3959
        %v4640 = vadd.f32 %v4639, %v3969
        %v4641 = vadd.f32 %v4640, %v3979
        %v4642 = vadd.f32 %v4641, %v3989
        %v4643 = vadd.f32 %v4642, %v3999
        %v4644 = vadd.f32 %v4643, %v4009
        %v4645 = vadd.f32 %v4644, %v4019
        %v4646 = vrot.slane %v4645, 4
        %v4647 = vadd.f32 %v4645, %v4646
        %v4648 = vrot.slane %v4647, 2
        %v4649 = vadd.f32 %v4647, %v4648
        %v4650 = vrot.slane %v4649, 1
        %v4651 = vadd.f32 %v4649, %v4650
        %v4652 = vadd.f32 %v3710, %v3720
        %v4653 = vadd.f32 %v4652, %v3730
        %v4654 = vadd.f32 %v4653, %v3740
        %v4655 = vadd.f32 %v4654, %v3750
        %v4656 = vadd.f32 %v4655, %v3760
        %v4657 = vadd.f32 %v4656, %v3770
        %v4658 = vadd.f32 %v4657, %v3780
        %v4659 = vadd.f32 %v4658, %v3790
        %v4660 = vadd.f32 %v4659, %v3800
        %v4661 = vadd.f32 %v4660, %v3810
        %v4662 = vadd.f32 %v4661, %v3820
        %v4663 = vadd.f32 %v4662, %v3830
        %v4664 = vadd.f32 %v4663, %v3840
        %v4665 = vadd.f32 %v4664, %v3850
        %v4666 = vadd.f32 %v4665, %v3860
        %v4667 = vadd.f32 %v4666, %v3870
        %v4668 = vadd.f32 %v4667, %v3880
        %v4669 = vadd.f32 %v4668, %v3890
        %v4670 = vadd.f32 %v4669, %v3900
        %v4671 = vadd.f32 %v4670, %v3910
        %v4672 = vadd.f32 %v4671, %v3920
        %v4673 = vadd.f32 %v4672, %v3930
        %v4674 = vadd.f32 %v4673, %v3940
        %v4675 = vadd.f32 %v4674, %v3950
        %v4676 = vadd.f32 %v4675, %v3960
        %v4677 = vadd.f32 %v4676, %v3970
        %v4678 = vadd.f32 %v4677, %v3980
        %v4679 = vadd.f32 %v4678, %v3990
        %v4680 = vadd.f32 %v4679, %v4000
        %v4681 = vadd.f32 %v4680, %v4010
        %v4682 = vadd.f32 %v4681, %v4020
        %v4683 = vrot.slane %v4682, 4
        %v4684 = vadd.f32 %v4682, %v4683
        %v4685 = vrot.slane %v4684, 2
        %v4686 = vadd.f32 %v4684, %v4685
        %v4687 = vrot.slane %v4686, 1
        %v4688 = vadd.f32 %v4686, %v4687
        %v4689 = vadd.f32 %v3711, %v3721
        %v4690 = vadd.f32 %v4689, %v3731
        %v4691 = vadd.f32 %v4690, %v3741
        %v4692 = vadd.f32 %v4691, %v3751
        %v4693 = vadd.f32 %v4692, %v3761
        %v4694 = vadd.f32 %v4693, %v3771
        %v4695 = vadd.f32 %v4694, %v3781
        %v4696 = vadd.f32 %v4695, %v3791
        %v4697 = vadd.f32 %v4696, %v3801
        %v4698 = vadd.f32 %v4697, %v3811
        %v4699 = vadd.f32 %v4698, %v3821
        %v4700 = vadd.f32 %v4699, %v3831
        %v4701 = vadd.f32 %v4700, %v3841
        %v4702 = vadd.f32 %v4701, %v3851
        %v4703 = vadd.f32 %v4702, %v3861
        %v4704 = vadd.f32 %v4703, %v3871
        %v4705 = vadd.f32 %v4704, %v3881
        %v4706 = vadd.f32 %v4705, %v3891
        %v4707 = vadd.f32 %v4706, %v3901
        %v4708 = vadd.f32 %v4707, %v3911
        %v4709 = vadd.f32 %v4708, %v3921
        %v4710 = vadd.f32 %v4709, %v3931
        %v4711 = vadd.f32 %v4710, %v3941
        %v4712 = vadd.f32 %v4711, %v3951
        %v4713 = vadd.f32 %v4712, %v3961
        %v4714 = vadd.f32 %v4713, %v3971
        %v4715 = vadd.f32 %v4714, %v3981
        %v4716 = vadd.f32 %v4715, %v3991
        %v4717 = vadd.f32 %v4716, %v4001
        %v4718 = vadd.f32 %v4717, %v4011
        %v4719 = vadd.f32 %v4718, %v4021
        %v4720 = vrot.slane %v4719, 4
        %v4721 = vadd.f32 %v4719, %v4720
        %v4722 = vrot.slane %v4721, 2
        %v4723 = vadd.f32 %v4721, %v4722
        %v4724 = vrot.slane %v4723, 1
        %v4725 = vadd.f32 %v4723, %v4724
        %v4726 = vadd.f32 %v3712, %v3722
        %v4727 = vadd.f32 %v4726, %v3732
        %v4728 = vadd.f32 %v4727, %v3742
        %v4729 = vadd.f32 %v4728, %v3752
        %v4730 = vadd.f32 %v4729, %v3762
        %v4731 = vadd.f32 %v4730, %v3772
        %v4732 = vadd.f32 %v4731, %v3782
        %v4733 = vadd.f32 %v4732, %v3792
        %v4734 = vadd.f32 %v4733, %v3802
        %v4735 = vadd.f32 %v4734, %v3812
        %v4736 = vadd.f32 %v4735, %v3822
        %v4737 = vadd.f32 %v4736, %v3832
        %v4738 = vadd.f32 %v4737, %v3842
        %v4739 = vadd.f32 %v4738, %v3852
        %v4740 = vadd.f32 %v4739, %v3862
        %v4741 = vadd.f32 %v4740, %v3872
        %v4742 = vadd.f32 %v4741, %v3882
        %v4743 = vadd.f32 %v4742, %v3892
        %v4744 = vadd.f32 %v4743, %v3902
        %v4745 = vadd.f32 %v4744, %v3912
        %v4746 = vadd.f32 %v4745, %v3922
        %v4747 = vadd.f32 %v4746, %v3932
        %v4748 = vadd.f32 %v4747, %v3942
        %v4749 = vadd.f32 %v4748, %v3952
        %v4750 = vadd.f32 %v4749, %v3962
        %v4751 = vadd.f32 %v4750, %v3972
        %v4752 = vadd.f32 %v4751, %v3982
        %v4753 = vadd.f32 %v4752, %v3992
        %v4754 = vadd.f32 %v4753, %v4002
        %v4755 = vadd.f32 %v4754, %v4012
        %v4756 = vadd.f32 %v4755, %v4022
        %v4757 = vrot.slane %v4756, 4
        %v4758 = vadd.f32 %v4756, %v4757
        %v4759 = vrot.slane %v4758, 2
        %v4760 = vadd.f32 %v4758, %v4759
        %v4761 = vrot.slane %v4760, 1
        %v4762 = vadd.f32 %v4760, %v4761
        %v4763 = vrcp.pop 256.0
        %v4764 = vmul.f32 256.0, %v4763
        %v4765 = vsub.f32 1.0, %v4764
        %v4766 = vmul.f32 %v4763, %v4765
        %v4767 = vadd.f32 %v4763, %v4766
        %vm4768 = vweird.f32 %v4763
        %v4769 = vsel %vm4768, %v4763, %v4767
        %v4770 = vmul.f32 %v4059, %v4769
        %v4771 = vmul.f32 %v4096, %v4769
        %v4772 = vmul.f32 %v4133, %v4769
        %v4773 = vmul.f32 %v4170, %v4769
        %v4774 = vmul.f32 %v4207, %v4769
        %v4775 = vmul.f32 %v4244, %v4769
        %v4776 = vmul.f32 %v4281, %v4769
        %v4777 = vmul.f32 %v4318, %v4769
        %v4778 = vmul.f32 %v4355, %v4769
        %v4779 = vmul.f32 %v4392, %v4769
        %v4780 = vmul.f32 %v4429, %v4769
        %v4781 = vmul.f32 %v4466, %v4769
        %v4782 = vmul.f32 %v4503, %v4769
        %v4783 = vmul.f32 %v4540, %v4769
        %v4784 = vmul.f32 %v4577, %v4769
        %v4785 = vmul.f32 %v4614, %v4769
        %v4786 = vmul.f32 %v4651, %v4769
        %v4787 = vmul.f32 %v4688, %v4769
        %v4788 = vmul.f32 %v4725, %v4769
        %v4789 = vmul.f32 %v4762, %v4769
        %v4790 = vld [vmem:[%s505] sm:$0xff]
        %v4791 = vld [vmem:[%s505 + $0x8] sm:$0xff]
        %v4792 = vld [vmem:[%s505 + $0x10] sm:$0xff]
        %v4793 = vld [vmem:[%s505 + $0x18] sm:$0xff]
        %v4794 = vld [vmem:[%s505 + $0x20] sm:$0xff]
        %v4795 = vld [vmem:[%s505 + $0x28] sm:$0xff]
        %v4796 = vld [vmem:[%s505 + $0x30] sm:$0xff]
        %v4797 = vld [vmem:[%s505 + $0x38] sm:$0xff]
        %v4798 = vld [vmem:[%s505 + $0x40] sm:$0xff]
        %v4799 = vld [vmem:[%s505 + $0x48] sm:$0xff]
        %v4800 = vld [vmem:[%s505 + $0x50] sm:$0xff]
        %v4801 = vld [vmem:[%s505 + $0x58] sm:$0xff]
        %v4802 = vld [vmem:[%s505 + $0x60] sm:$0xff]
        %v4803 = vld [vmem:[%s505 + $0x68] sm:$0xff]
        %v4804 = vld [vmem:[%s505 + $0x70] sm:$0xff]
        %v4805 = vld [vmem:[%s505 + $0x78] sm:$0xff]
        %v4806 = vld [vmem:[%s505 + $0x80] sm:$0xff]
        %v4807 = vld [vmem:[%s505 + $0x88] sm:$0xff]
        %v4808 = vld [vmem:[%s505 + $0x90] sm:$0xff]
        %v4809 = vld [vmem:[%s505 + $0x98] sm:$0xff]
        %v4810 = vld [vmem:[%s505 + $0xa0] sm:$0xff]
        %v4811 = vld [vmem:[%s505 + $0xa8] sm:$0xff]
        %v4812 = vld [vmem:[%s505 + $0xb0] sm:$0xff]
        %v4813 = vld [vmem:[%s505 + $0xb8] sm:$0xff]
        %v4814 = vld [vmem:[%s505 + $0xc0] sm:$0xff]
        %v4815 = vld [vmem:[%s505 + $0xc8] sm:$0xff]
        %v4816 = vld [vmem:[%s505 + $0xd0] sm:$0xff]
        %v4817 = vld [vmem:[%s505 + $0xd8] sm:$0xff]
        %v4818 = vld [vmem:[%s505 + $0xe0] sm:$0xff]
        %v4819 = vld [vmem:[%s505 + $0xe8] sm:$0xff]
        %v4820 = vld [vmem:[%s505 + $0xf0] sm:$0xff]
        %v4821 = vld [vmem:[%s505 + $0xf8] sm:$0xff]
        %v4822 = vld [vmem:[%s505 + $0x100] sm:$0xff]
        %v4823 = vld [vmem:[%s505 + $0x108] sm:$0xff]
        %v4824 = vld [vmem:[%s505 + $0x110] sm:$0xff]
        %v4825 = vld [vmem:[%s505 + $0x118] sm:$0xff]
        %v4826 = vld [vmem:[%s505 + $0x120] sm:$0xff]
        %v4827 = vld [vmem:[%s505 + $0x128] sm:$0xff]
        %v4828 = vld [vmem:[%s505 + $0x130] sm:$0xff]
        %v4829 = vld [vmem:[%s505 + $0x138] sm:$0xff]
        %v4830 = vld [vmem:[%s505 + $0x140] sm:$0xff]
        %v4831 = vld [vmem:[%s505 + $0x148] sm:$0xff]
        %v4832 = vld [vmem:[%s505 + $0x150] sm:$0xff]
        %v4833 = vld [vmem:[%s505 + $0x158] sm:$0xff]
        %v4834 = vld [vmem:[%s505 + $0x160] sm:$0xff]
        %v4835 = vld [vmem:[%s505 + $0x168] sm:$0xff]
        %v4836 = vld [vmem:[%s505 + $0x170] sm:$0xff]
        %v4837 = vld [vmem:[%s505 + $0x178] sm:$0xff]
        %v4838 = vld [vmem:[%s505 + $0x180] sm:$0xff]
        %v4839 = vld [vmem:[%s505 + $0x188] sm:$0xff]
        %v4840 = vld [vmem:[%s505 + $0x190] sm:$0xff]
        %v4841 = vld [vmem:[%s505 + $0x198] sm:$0xff]
        %v4842 = vld [vmem:[%s505 + $0x1a0] sm:$0xff]
        %v4843 = vld [vmem:[%s505 + $0x1a8] sm:$0xff]
        %v4844 = vld [vmem:[%s505 + $0x1b0] sm:$0xff]
        %v4845 = vld [vmem:[%s505 + $0x1b8] sm:$0xff]
        %v4846 = vld [vmem:[%s505 + $0x1c0] sm:$0xff]
        %v4847 = vld [vmem:[%s505 + $0x1c8] sm:$0xff]
        %v4848 = vld [vmem:[%s505 + $0x1d0] sm:$0xff]
        %v4849 = vld [vmem:[%s505 + $0x1d8] sm:$0xff]
        %v4850 = vld [vmem:[%s505 + $0x1e0] sm:$0xff]
        %v4851 = vld [vmem:[%s505 + $0x1e8] sm:$0xff]
        %v4852 = vld [vmem:[%s505 + $0x1f0] sm:$0xff]
        %v4853 = vld [vmem:[%s505 + $0x1f8] sm:$0xff]
        %v4854 = vld [vmem:[%s505 + $0x200] sm:$0xff]
        %v4855 = vld [vmem:[%s505 + $0x208] sm:$0xff]
        %v4856 = vld [vmem:[%s505 + $0x210] sm:$0xff]
        %v4857 = vld [vmem:[%s505 + $0x218] sm:$0xff]
        %v4858 = vld [vmem:[%s505 + $0x220] sm:$0xff]
        %v4859 = vld [vmem:[%s505 + $0x228] sm:$0xff]
        %v4860 = vld [vmem:[%s505 + $0x230] sm:$0xff]
        %v4861 = vld [vmem:[%s505 + $0x238] sm:$0xff]
        %v4862 = vld [vmem:[%s505 + $0x240] sm:$0xff]
        %v4863 = vld [vmem:[%s505 + $0x248] sm:$0xff]
        %v4864 = vld [vmem:[%s505 + $0x250] sm:$0xff]
        %v4865 = vld [vmem:[%s505 + $0x258] sm:$0xff]
        %v4866 = vld [vmem:[%s505 + $0x260] sm:$0xff]
        %v4867 = vld [vmem:[%s505 + $0x268] sm:$0xff]
        %v4868 = vld [vmem:[%s505 + $0x270] sm:$0xff]
        %v4869 = vld [vmem:[%s505 + $0x278] sm:$0xff]
        %v4870 = vld [vmem:[%s505 + $0x280] sm:$0xff]
        %v4871 = vld [vmem:[%s505 + $0x288] sm:$0xff]
        %v4872 = vld [vmem:[%s505 + $0x290] sm:$0xff]
        %v4873 = vld [vmem:[%s505 + $0x298] sm:$0xff]
        %v4874 = vld [vmem:[%s505 + $0x2a0] sm:$0xff]
        %v4875 = vld [vmem:[%s505 + $0x2a8] sm:$0xff]
        %v4876 = vld [vmem:[%s505 + $0x2b0] sm:$0xff]
        %v4877 = vld [vmem:[%s505 + $0x2b8] sm:$0xff]
        %v4878 = vld [vmem:[%s505 + $0x2c0] sm:$0xff]
        %v4879 = vld [vmem:[%s505 + $0x2c8] sm:$0xff]
        %v4880 = vld [vmem:[%s505 + $0x2d0] sm:$0xff]
        %v4881 = vld [vmem:[%s505 + $0x2d8] sm:$0xff]
        %v4882 = vld [vmem:[%s505 + $0x2e0] sm:$0xff]
        %v4883 = vld [vmem:[%s505 + $0x2e8] sm:$0xff]
        %v4884 = vld [vmem:[%s505 + $0x2f0] sm:$0xff]
        %v4885 = vld [vmem:[%s505 + $0x2f8] sm:$0xff]
        %v4886 = vld [vmem:[%s505 + $0x300] sm:$0xff]
        %v4887 = vld [vmem:[%s505 + $0x308] sm:$0xff]
        %v4888 = vld [vmem:[%s505 + $0x310] sm:$0xff]
        %v4889 = vld [vmem:[%s505 + $0x318] sm:$0xff]
        %v4890 = vld [vmem:[%s505 + $0x320] sm:$0xff]
        %v4891 = vld [vmem:[%s505 + $0x328] sm:$0xff]
        %v4892 = vld [vmem:[%s505 + $0x330] sm:$0xff]
        %v4893 = vld [vmem:[%s505 + $0x338] sm:$0xff]
        %v4894 = vld [vmem:[%s505 + $0x340] sm:$0xff]
        %v4895 = vld [vmem:[%s505 + $0x348] sm:$0xff]
        %v4896 = vld [vmem:[%s505 + $0x350] sm:$0xff]
        %v4897 = vld [vmem:[%s505 + $0x358] sm:$0xff]
        %v4898 = vld [vmem:[%s505 + $0x360] sm:$0xff]
        %v4899 = vld [vmem:[%s505 + $0x368] sm:$0xff]
        %v4900 = vld [vmem:[%s505 + $0x370] sm:$0xff]
        %v4901 = vld [vmem:[%s505 + $0x378] sm:$0xff]
        %v4902 = vld [vmem:[%s505 + $0x380] sm:$0xff]
        %v4903 = vld [vmem:[%s505 + $0x388] sm:$0xff]
        %v4904 = vld [vmem:[%s505 + $0x390] sm:$0xff]
        %v4905 = vld [vmem:[%s505 + $0x398] sm:$0xff]
        %v4906 = vld [vmem:[%s505 + $0x3a0] sm:$0xff]
        %v4907 = vld [vmem:[%s505 + $0x3a8] sm:$0xff]
        %v4908 = vld [vmem:[%s505 + $0x3b0] sm:$0xff]
        %v4909 = vld [vmem:[%s505 + $0x3b8] sm:$0xff]
        %v4910 = vld [vmem:[%s505 + $0x3c0] sm:$0xff]
        %v4911 = vld [vmem:[%s505 + $0x3c8] sm:$0xff]
        %v4912 = vld [vmem:[%s505 + $0x3d0] sm:$0xff]
        %v4913 = vld [vmem:[%s505 + $0x3d8] sm:$0xff]
        %v4914 = vld [vmem:[%s505 + $0x3e0] sm:$0xff]
        %v4915 = vld [vmem:[%s505 + $0x3e8] sm:$0xff]
        %v4916 = vld [vmem:[%s505 + $0x3f0] sm:$0xff]
        %v4917 = vld [vmem:[%s505 + $0x3f8] sm:$0xff]
        %v4918 = vld [vmem:[%s505 + $0x400] sm:$0xff]
        %v4919 = vld [vmem:[%s505 + $0x408] sm:$0xff]
        %v4920 = vld [vmem:[%s505 + $0x410] sm:$0xff]
        %v4921 = vld [vmem:[%s505 + $0x418] sm:$0xff]
        %v4922 = vld [vmem:[%s505 + $0x420] sm:$0xff]
        %v4923 = vld [vmem:[%s505 + $0x428] sm:$0xff]
        %v4924 = vld [vmem:[%s505 + $0x430] sm:$0xff]
        %v4925 = vld [vmem:[%s505 + $0x438] sm:$0xff]
        %v4926 = vld [vmem:[%s505 + $0x440] sm:$0xff]
        %v4927 = vld [vmem:[%s505 + $0x448] sm:$0xff]
        %v4928 = vld [vmem:[%s505 + $0x450] sm:$0xff]
        %v4929 = vld [vmem:[%s505 + $0x458] sm:$0xff]
        %v4930 = vld [vmem:[%s505 + $0x460] sm:$0xff]
        %v4931 = vld [vmem:[%s505 + $0x468] sm:$0xff]
        %v4932 = vld [vmem:[%s505 + $0x470] sm:$0xff]
        %v4933 = vld [vmem:[%s505 + $0x478] sm:$0xff]
        %v4934 = vld [vmem:[%s505 + $0x480] sm:$0xff]
        %v4935 = vld [vmem:[%s505 + $0x488] sm:$0xff]
        %v4936 = vld [vmem:[%s505 + $0x490] sm:$0xff]
        %v4937 = vld [vmem:[%s505 + $0x498] sm:$0xff]
        %v4938 = vld [vmem:[%s505 + $0x4a0] sm:$0xff]
        %v4939 = vld [vmem:[%s505 + $0x4a8] sm:$0xff]
        %v4940 = vld [vmem:[%s505 + $0x4b0] sm:$0xff]
        %v4941 = vld [vmem:[%s505 + $0x4b8] sm:$0xff]
        %v4942 = vld [vmem:[%s505 + $0x4c0] sm:$0xff]
        %v4943 = vld [vmem:[%s505 + $0x4c8] sm:$0xff]
        %v4944 = vld [vmem:[%s505 + $0x4d0] sm:$0xff]
        %v4945 = vld [vmem:[%s505 + $0x4d8] sm:$0xff]
        %v4946 = vld [vmem:[%s505 + $0x4e0] sm:$0xff]
        %v4947 = vld [vmem:[%s505 + $0x4e8] sm:$0xff]
        %v4948 = vld [vmem:[%s505 + $0x4f0] sm:$0xff]
        %v4949 = vld [vmem:[%s505 + $0x4f8] sm:$0xff]
        %v4950 = vld [vmem:[%s505 + $0x500] sm:$0xff]
        %v4951 = vld [vmem:[%s505 + $0x508] sm:$0xff]
        %v4952 = vld [vmem:[%s505 + $0x510] sm:$0xff]
        %v4953 = vld [vmem:[%s505 + $0x518] sm:$0xff]
        %v4954 = vld [vmem:[%s505 + $0x520] sm:$0xff]
        %v4955 = vld [vmem:[%s505 + $0x528] sm:$0xff]
        %v4956 = vld [vmem:[%s505 + $0x530] sm:$0xff]
        %v4957 = vld [vmem:[%s505 + $0x538] sm:$0xff]
        %v4958 = vld [vmem:[%s505 + $0x540] sm:$0xff]
        %v4959 = vld [vmem:[%s505 + $0x548] sm:$0xff]
        %v4960 = vld [vmem:[%s505 + $0x550] sm:$0xff]
        %v4961 = vld [vmem:[%s505 + $0x558] sm:$0xff]
        %v4962 = vld [vmem:[%s505 + $0x560] sm:$0xff]
        %v4963 = vld [vmem:[%s505 + $0x568] sm:$0xff]
        %v4964 = vld [vmem:[%s505 + $0x570] sm:$0xff]
        %v4965 = vld [vmem:[%s505 + $0x578] sm:$0xff]
        %v4966 = vld [vmem:[%s505 + $0x580] sm:$0xff]
        %v4967 = vld [vmem:[%s505 + $0x588] sm:$0xff]
        %v4968 = vld [vmem:[%s505 + $0x590] sm:$0xff]
        %v4969 = vld [vmem:[%s505 + $0x598] sm:$0xff]
        %v4970 = vld [vmem:[%s505 + $0x5a0] sm:$0xff]
        %v4971 = vld [vmem:[%s505 + $0x5a8] sm:$0xff]
        %v4972 = vld [vmem:[%s505 + $0x5b0] sm:$0xff]
        %v4973 = vld [vmem:[%s505 + $0x5b8] sm:$0xff]
        %v4974 = vld [vmem:[%s505 + $0x5c0] sm:$0xff]
        %v4975 = vld [vmem:[%s505 + $0x5c8] sm:$0xff]
        %v4976 = vld [vmem:[%s505 + $0x5d0] sm:$0xff]
        %v4977 = vld [vmem:[%s505 + $0x5d8] sm:$0xff]
        %v4978 = vld [vmem:[%s505 + $0x5e0] sm:$0xff]
        %v4979 = vld [vmem:[%s505 + $0x5e8] sm:$0xff]
        %v4980 = vld [vmem:[%s505 + $0x5f0] sm:$0xff]
        %v4981 = vld [vmem:[%s505 + $0x5f8] sm:$0xff]
        %v4982 = vld [vmem:[%s505 + $0x600] sm:$0xff]
        %v4983 = vld [vmem:[%s505 + $0x608] sm:$0xff]
        %v4984 = vld [vmem:[%s505 + $0x610] sm:$0xff]
        %v4985 = vld [vmem:[%s505 + $0x618] sm:$0xff]
        %v4986 = vld [vmem:[%s505 + $0x620] sm:$0xff]
        %v4987 = vld [vmem:[%s505 + $0x628] sm:$0xff]
        %v4988 = vld [vmem:[%s505 + $0x630] sm:$0xff]
        %v4989 = vld [vmem:[%s505 + $0x638] sm:$0xff]
        %v4990 = vld [vmem:[%s505 + $0x640] sm:$0xff]
        %v4991 = vld [vmem:[%s505 + $0x648] sm:$0xff]
        %v4992 = vld [vmem:[%s505 + $0x650] sm:$0xff]
        %v4993 = vld [vmem:[%s505 + $0x658] sm:$0xff]
        %v4994 = vld [vmem:[%s505 + $0x660] sm:$0xff]
        %v4995 = vld [vmem:[%s505 + $0x668] sm:$0xff]
        %v4996 = vld [vmem:[%s505 + $0x670] sm:$0xff]
        %v4997 = vld [vmem:[%s505 + $0x678] sm:$0xff]
        %v4998 = vld [vmem:[%s505 + $0x680] sm:$0xff]
        %v4999 = vld [vmem:[%s505 + $0x688] sm:$0xff]
        %v5000 = vld [vmem:[%s505 + $0x690] sm:$0xff]
        %v5001 = vld [vmem:[%s505 + $0x698] sm:$0xff]
        %v5002 = vld [vmem:[%s505 + $0x6a0] sm:$0xff]
        %v5003 = vld [vmem:[%s505 + $0x6a8] sm:$0xff]
        %v5004 = vld [vmem:[%s505 + $0x6b0] sm:$0xff]
        %v5005 = vld [vmem:[%s505 + $0x6b8] sm:$0xff]
        %v5006 = vld [vmem:[%s505 + $0x6c0] sm:$0xff]
        %v5007 = vld [vmem:[%s505 + $0x6c8] sm:$0xff]
        %v5008 = vld [vmem:[%s505 + $0x6d0] sm:$0xff]
        %v5009 = vld [vmem:[%s505 + $0x6d8] sm:$0xff]
        %v5010 = vld [vmem:[%s505 + $0x6e0] sm:$0xff]
        %v5011 = vld [vmem:[%s505 + $0x6e8] sm:$0xff]
        %v5012 = vld [vmem:[%s505 + $0x6f0] sm:$0xff]
        %v5013 = vld [vmem:[%s505 + $0x6f8] sm:$0xff]
        %v5014 = vld [vmem:[%s505 + $0x700] sm:$0xff]
        %v5015 = vld [vmem:[%s505 + $0x708] sm:$0xff]
        %v5016 = vld [vmem:[%s505 + $0x710] sm:$0xff]
        %v5017 = vld [vmem:[%s505 + $0x718] sm:$0xff]
        %v5018 = vld [vmem:[%s505 + $0x720] sm:$0xff]
        %v5019 = vld [vmem:[%s505 + $0x728] sm:$0xff]
        %v5020 = vld [vmem:[%s505 + $0x730] sm:$0xff]
        %v5021 = vld [vmem:[%s505 + $0x738] sm:$0xff]
        %v5022 = vld [vmem:[%s505 + $0x740] sm:$0xff]
        %v5023 = vld [vmem:[%s505 + $0x748] sm:$0xff]
        %v5024 = vld [vmem:[%s505 + $0x750] sm:$0xff]
        %v5025 = vld [vmem:[%s505 + $0x758] sm:$0xff]
        %v5026 = vld [vmem:[%s505 + $0x760] sm:$0xff]
        %v5027 = vld [vmem:[%s505 + $0x768] sm:$0xff]
        %v5028 = vld [vmem:[%s505 + $0x770] sm:$0xff]
        %v5029 = vld [vmem:[%s505 + $0x778] sm:$0xff]
        %v5030 = vld [vmem:[%s505 + $0x780] sm:$0xff]
        %v5031 = vld [vmem:[%s505 + $0x788] sm:$0xff]
        %v5032 = vld [vmem:[%s505 + $0x790] sm:$0xff]
        %v5033 = vld [vmem:[%s505 + $0x798] sm:$0xff]
        %v5034 = vld [vmem:[%s505 + $0x7a0] sm:$0xff]
        %v5035 = vld [vmem:[%s505 + $0x7a8] sm:$0xff]
        %v5036 = vld [vmem:[%s505 + $0x7b0] sm:$0xff]
        %v5037 = vld [vmem:[%s505 + $0x7b8] sm:$0xff]
        %v5038 = vld [vmem:[%s505 + $0x7c0] sm:$0xff]
        %v5039 = vld [vmem:[%s505 + $0x7c8] sm:$0xff]
        %v5040 = vld [vmem:[%s505 + $0x7d0] sm:$0xff]
        %v5041 = vld [vmem:[%s505 + $0x7d8] sm:$0xff]
        %v5042 = vld [vmem:[%s505 + $0x7e0] sm:$0xff]
        %v5043 = vld [vmem:[%s505 + $0x7e8] sm:$0xff]
        %v5044 = vld [vmem:[%s505 + $0x7f0] sm:$0xff]
        %v5045 = vld [vmem:[%s505 + $0x7f8] sm:$0xff]
        %v5046 = vld [vmem:[%s505 + $0x800] sm:$0xff]
        %v5047 = vld [vmem:[%s505 + $0x808] sm:$0xff]
        %v5048 = vld [vmem:[%s505 + $0x810] sm:$0xff]
        %v5049 = vld [vmem:[%s505 + $0x818] sm:$0xff]
        %v5050 = vld [vmem:[%s505 + $0x820] sm:$0xff]
        %v5051 = vld [vmem:[%s505 + $0x828] sm:$0xff]
        %v5052 = vld [vmem:[%s505 + $0x830] sm:$0xff]
        %v5053 = vld [vmem:[%s505 + $0x838] sm:$0xff]
        %v5054 = vld [vmem:[%s505 + $0x840] sm:$0xff]
        %v5055 = vld [vmem:[%s505 + $0x848] sm:$0xff]
        %v5056 = vld [vmem:[%s505 + $0x850] sm:$0xff]
        %v5057 = vld [vmem:[%s505 + $0x858] sm:$0xff]
        %v5058 = vld [vmem:[%s505 + $0x860] sm:$0xff]
        %v5059 = vld [vmem:[%s505 + $0x868] sm:$0xff]
        %v5060 = vld [vmem:[%s505 + $0x870] sm:$0xff]
        %v5061 = vld [vmem:[%s505 + $0x878] sm:$0xff]
        %v5062 = vld [vmem:[%s505 + $0x880] sm:$0xff]
        %v5063 = vld [vmem:[%s505 + $0x888] sm:$0xff]
        %v5064 = vld [vmem:[%s505 + $0x890] sm:$0xff]
        %v5065 = vld [vmem:[%s505 + $0x898] sm:$0xff]
        %v5066 = vld [vmem:[%s505 + $0x8a0] sm:$0xff]
        %v5067 = vld [vmem:[%s505 + $0x8a8] sm:$0xff]
        %v5068 = vld [vmem:[%s505 + $0x8b0] sm:$0xff]
        %v5069 = vld [vmem:[%s505 + $0x8b8] sm:$0xff]
        %v5070 = vld [vmem:[%s505 + $0x8c0] sm:$0xff]
        %v5071 = vld [vmem:[%s505 + $0x8c8] sm:$0xff]
        %v5072 = vld [vmem:[%s505 + $0x8d0] sm:$0xff]
        %v5073 = vld [vmem:[%s505 + $0x8d8] sm:$0xff]
        %v5074 = vld [vmem:[%s505 + $0x8e0] sm:$0xff]
        %v5075 = vld [vmem:[%s505 + $0x8e8] sm:$0xff]
        %v5076 = vld [vmem:[%s505 + $0x8f0] sm:$0xff]
        %v5077 = vld [vmem:[%s505 + $0x8f8] sm:$0xff]
        %v5078 = vld [vmem:[%s505 + $0x900] sm:$0xff]
        %v5079 = vld [vmem:[%s505 + $0x908] sm:$0xff]
        %v5080 = vld [vmem:[%s505 + $0x910] sm:$0xff]
        %v5081 = vld [vmem:[%s505 + $0x918] sm:$0xff]
        %v5082 = vld [vmem:[%s505 + $0x920] sm:$0xff]
        %v5083 = vld [vmem:[%s505 + $0x928] sm:$0xff]
        %v5084 = vld [vmem:[%s505 + $0x930] sm:$0xff]
        %v5085 = vld [vmem:[%s505 + $0x938] sm:$0xff]
        %v5086 = vld [vmem:[%s505 + $0x940] sm:$0xff]
        %v5087 = vld [vmem:[%s505 + $0x948] sm:$0xff]
        %v5088 = vld [vmem:[%s505 + $0x950] sm:$0xff]
        %v5089 = vld [vmem:[%s505 + $0x958] sm:$0xff]
        %v5090 = vld [vmem:[%s505 + $0x960] sm:$0xff]
        %v5091 = vld [vmem:[%s505 + $0x968] sm:$0xff]
        %v5092 = vld [vmem:[%s505 + $0x970] sm:$0xff]
        %v5093 = vld [vmem:[%s505 + $0x978] sm:$0xff]
        %v5094 = vld [vmem:[%s505 + $0x980] sm:$0xff]
        %v5095 = vld [vmem:[%s505 + $0x988] sm:$0xff]
        %v5096 = vld [vmem:[%s505 + $0x990] sm:$0xff]
        %v5097 = vld [vmem:[%s505 + $0x998] sm:$0xff]
        %v5098 = vld [vmem:[%s505 + $0x9a0] sm:$0xff]
        %v5099 = vld [vmem:[%s505 + $0x9a8] sm:$0xff]
        %v5100 = vld [vmem:[%s505 + $0x9b0] sm:$0xff]
        %v5101 = vld [vmem:[%s505 + $0x9b8] sm:$0xff]
        %v5102 = vld [vmem:[%s505 + $0x9c0] sm:$0xff]
        %v5103 = vld [vmem:[%s505 + $0x9c8] sm:$0xff]
        %v5104 = vld [vmem:[%s505 + $0x9d0] sm:$0xff]
        %v5105 = vld [vmem:[%s505 + $0x9d8] sm:$0xff]
        %v5106 = vld [vmem:[%s505 + $0x9e0] sm:$0xff]
        %v5107 = vld [vmem:[%s505 + $0x9e8] sm:$0xff]
        %v5108 = vld [vmem:[%s505 + $0x9f0] sm:$0xff]
        %v5109 = vld [vmem:[%s505 + $0x9f8] sm:$0xff]
        %v5110 = vunpack.c.0.s8 %v4790
        %v5111 = vunpack.c.0.s8 %v4791
        %v5112 = vunpack.c.0.s8 %v4792
        %v5113 = vunpack.c.0.s8 %v4793
        %v5114 = vunpack.c.0.s8 %v4794
        %v5115 = vunpack.c.0.s8 %v4795
        %v5116 = vunpack.c.0.s8 %v4796
        %v5117 = vunpack.c.0.s8 %v4797
        %v5118 = vunpack.c.1.s8 %v4790
        %v5119 = vunpack.c.1.s8 %v4791
        %v5120 = vunpack.c.1.s8 %v4792
        %v5121 = vunpack.c.1.s8 %v4793
        %v5122 = vunpack.c.1.s8 %v4794
        %v5123 = vunpack.c.1.s8 %v4795
        %v5124 = vunpack.c.1.s8 %v4796
        %v5125 = vunpack.c.1.s8 %v4797
        %v5126 = vunpack.c.2.s8 %v4790
        %v5127 = vunpack.c.2.s8 %v4791
        %v5128 = vunpack.c.2.s8 %v4792
        %v5129 = vunpack.c.2.s8 %v4793
        %v5130 = vunpack.c.2.s8 %v4794
        %v5131 = vunpack.c.2.s8 %v4795
        %v5132 = vunpack.c.2.s8 %v4796
        %v5133 = vunpack.c.2.s8 %v4797
        %v5134 = vunpack.c.3.s8 %v4790
        %v5135 = vunpack.c.3.s8 %v4791
        %v5136 = vunpack.c.3.s8 %v4792
        %v5137 = vunpack.c.3.s8 %v4793
        %v5138 = vunpack.c.3.s8 %v4794
        %v5139 = vunpack.c.3.s8 %v4795
        %v5140 = vunpack.c.3.s8 %v4796
        %v5141 = vunpack.c.3.s8 %v4797
        %v5142 = vunpack.c.0.s8 %v4798
        %v5143 = vunpack.c.0.s8 %v4799
        %v5144 = vunpack.c.0.s8 %v4800
        %v5145 = vunpack.c.0.s8 %v4801
        %v5146 = vunpack.c.0.s8 %v4802
        %v5147 = vunpack.c.0.s8 %v4803
        %v5148 = vunpack.c.0.s8 %v4804
        %v5149 = vunpack.c.0.s8 %v4805
        %v5150 = vunpack.c.1.s8 %v4798
        %v5151 = vunpack.c.1.s8 %v4799
        %v5152 = vunpack.c.1.s8 %v4800
        %v5153 = vunpack.c.1.s8 %v4801
        %v5154 = vunpack.c.1.s8 %v4802
        %v5155 = vunpack.c.1.s8 %v4803
        %v5156 = vunpack.c.1.s8 %v4804
        %v5157 = vunpack.c.1.s8 %v4805
        %v5158 = vunpack.c.2.s8 %v4798
        %v5159 = vunpack.c.2.s8 %v4799
        %v5160 = vunpack.c.2.s8 %v4800
        %v5161 = vunpack.c.2.s8 %v4801
        %v5162 = vunpack.c.2.s8 %v4802
        %v5163 = vunpack.c.2.s8 %v4803
        %v5164 = vunpack.c.2.s8 %v4804
        %v5165 = vunpack.c.2.s8 %v4805
        %v5166 = vunpack.c.3.s8 %v4798
        %v5167 = vunpack.c.3.s8 %v4799
        %v5168 = vunpack.c.3.s8 %v4800
        %v5169 = vunpack.c.3.s8 %v4801
        %v5170 = vunpack.c.3.s8 %v4802
        %v5171 = vunpack.c.3.s8 %v4803
        %v5172 = vunpack.c.3.s8 %v4804
        %v5173 = vunpack.c.3.s8 %v4805
        %v5174 = vunpack.c.0.s8 %v4806
        %v5175 = vunpack.c.0.s8 %v4807
        %v5176 = vunpack.c.0.s8 %v4808
        %v5177 = vunpack.c.0.s8 %v4809
        %v5178 = vunpack.c.0.s8 %v4810
        %v5179 = vunpack.c.0.s8 %v4811
        %v5180 = vunpack.c.0.s8 %v4812
        %v5181 = vunpack.c.0.s8 %v4813
        %v5182 = vunpack.c.1.s8 %v4806
        %v5183 = vunpack.c.1.s8 %v4807
        %v5184 = vunpack.c.1.s8 %v4808
        %v5185 = vunpack.c.1.s8 %v4809
        %v5186 = vunpack.c.1.s8 %v4810
        %v5187 = vunpack.c.1.s8 %v4811
        %v5188 = vunpack.c.1.s8 %v4812
        %v5189 = vunpack.c.1.s8 %v4813
        %v5190 = vunpack.c.2.s8 %v4806
        %v5191 = vunpack.c.2.s8 %v4807
        %v5192 = vunpack.c.2.s8 %v4808
        %v5193 = vunpack.c.2.s8 %v4809
        %v5194 = vunpack.c.2.s8 %v4810
        %v5195 = vunpack.c.2.s8 %v4811
        %v5196 = vunpack.c.2.s8 %v4812
        %v5197 = vunpack.c.2.s8 %v4813
        %v5198 = vunpack.c.3.s8 %v4806
        %v5199 = vunpack.c.3.s8 %v4807
        %v5200 = vunpack.c.3.s8 %v4808
        %v5201 = vunpack.c.3.s8 %v4809
        %v5202 = vunpack.c.3.s8 %v4810
        %v5203 = vunpack.c.3.s8 %v4811
        %v5204 = vunpack.c.3.s8 %v4812
        %v5205 = vunpack.c.3.s8 %v4813
        %v5206 = vunpack.c.0.s8 %v4814
        %v5207 = vunpack.c.0.s8 %v4815
        %v5208 = vunpack.c.0.s8 %v4816
        %v5209 = vunpack.c.0.s8 %v4817
        %v5210 = vunpack.c.0.s8 %v4818
        %v5211 = vunpack.c.0.s8 %v4819
        %v5212 = vunpack.c.0.s8 %v4820
        %v5213 = vunpack.c.0.s8 %v4821
        %v5214 = vunpack.c.1.s8 %v4814
        %v5215 = vunpack.c.1.s8 %v4815
        %v5216 = vunpack.c.1.s8 %v4816
        %v5217 = vunpack.c.1.s8 %v4817
        %v5218 = vunpack.c.1.s8 %v4818
        %v5219 = vunpack.c.1.s8 %v4819
        %v5220 = vunpack.c.1.s8 %v4820
        %v5221 = vunpack.c.1.s8 %v4821
        %v5222 = vunpack.c.2.s8 %v4814
        %v5223 = vunpack.c.2.s8 %v4815
        %v5224 = vunpack.c.2.s8 %v4816
        %v5225 = vunpack.c.2.s8 %v4817
        %v5226 = vunpack.c.2.s8 %v4818
        %v5227 = vunpack.c.2.s8 %v4819
        %v5228 = vunpack.c.2.s8 %v4820
        %v5229 = vunpack.c.2.s8 %v4821
        %v5230 = vunpack.c.3.s8 %v4814
        %v5231 = vunpack.c.3.s8 %v4815
        %v5232 = vunpack.c.3.s8 %v4816
        %v5233 = vunpack.c.3.s8 %v4817
        %v5234 = vunpack.c.3.s8 %v4818
        %v5235 = vunpack.c.3.s8 %v4819
        %v5236 = vunpack.c.3.s8 %v4820
        %v5237 = vunpack.c.3.s8 %v4821
        %v5238 = vunpack.c.0.s8 %v4822
        %v5239 = vunpack.c.0.s8 %v4823
        %v5240 = vunpack.c.0.s8 %v4824
        %v5241 = vunpack.c.0.s8 %v4825
        %v5242 = vunpack.c.0.s8 %v4826
        %v5243 = vunpack.c.0.s8 %v4827
        %v5244 = vunpack.c.0.s8 %v4828
        %v5245 = vunpack.c.0.s8 %v4829
        %v5246 = vunpack.c.1.s8 %v4822
        %v5247 = vunpack.c.1.s8 %v4823
        %v5248 = vunpack.c.1.s8 %v4824
        %v5249 = vunpack.c.1.s8 %v4825
        %v5250 = vunpack.c.1.s8 %v4826
        %v5251 = vunpack.c.1.s8 %v4827
        %v5252 = vunpack.c.1.s8 %v4828
        %v5253 = vunpack.c.1.s8 %v4829
        %v5254 = vunpack.c.2.s8 %v4822
        %v5255 = vunpack.c.2.s8 %v4823
        %v5256 = vunpack.c.2.s8 %v4824
        %v5257 = vunpack.c.2.s8 %v4825
        %v5258 = vunpack.c.2.s8 %v4826
        %v5259 = vunpack.c.2.s8 %v4827
        %v5260 = vunpack.c.2.s8 %v4828
        %v5261 = vunpack.c.2.s8 %v4829
        %v5262 = vunpack.c.3.s8 %v4822
        %v5263 = vunpack.c.3.s8 %v4823
        %v5264 = vunpack.c.3.s8 %v4824
        %v5265 = vunpack.c.3.s8 %v4825
        %v5266 = vunpack.c.3.s8 %v4826
        %v5267 = vunpack.c.3.s8 %v4827
        %v5268 = vunpack.c.3.s8 %v4828
        %v5269 = vunpack.c.3.s8 %v4829
        %v5270 = vunpack.c.0.s8 %v4830
        %v5271 = vunpack.c.0.s8 %v4831
        %v5272 = vunpack.c.0.s8 %v4832
        %v5273 = vunpack.c.0.s8 %v4833
        %v5274 = vunpack.c.0.s8 %v4834
        %v5275 = vunpack.c.0.s8 %v4835
        %v5276 = vunpack.c.0.s8 %v4836
        %v5277 = vunpack.c.0.s8 %v4837
        %v5278 = vunpack.c.1.s8 %v4830
        %v5279 = vunpack.c.1.s8 %v4831
        %v5280 = vunpack.c.1.s8 %v4832
        %v5281 = vunpack.c.1.s8 %v4833
        %v5282 = vunpack.c.1.s8 %v4834
        %v5283 = vunpack.c.1.s8 %v4835
        %v5284 = vunpack.c.1.s8 %v4836
        %v5285 = vunpack.c.1.s8 %v4837
        %v5286 = vunpack.c.2.s8 %v4830
        %v5287 = vunpack.c.2.s8 %v4831
        %v5288 = vunpack.c.2.s8 %v4832
        %v5289 = vunpack.c.2.s8 %v4833
        %v5290 = vunpack.c.2.s8 %v4834
        %v5291 = vunpack.c.2.s8 %v4835
        %v5292 = vunpack.c.2.s8 %v4836
        %v5293 = vunpack.c.2.s8 %v4837
        %v5294 = vunpack.c.3.s8 %v4830
        %v5295 = vunpack.c.3.s8 %v4831
        %v5296 = vunpack.c.3.s8 %v4832
        %v5297 = vunpack.c.3.s8 %v4833
        %v5298 = vunpack.c.3.s8 %v4834
        %v5299 = vunpack.c.3.s8 %v4835
        %v5300 = vunpack.c.3.s8 %v4836
        %v5301 = vunpack.c.3.s8 %v4837
        %v5302 = vunpack.c.0.s8 %v4838
        %v5303 = vunpack.c.0.s8 %v4839
        %v5304 = vunpack.c.0.s8 %v4840
        %v5305 = vunpack.c.0.s8 %v4841
        %v5306 = vunpack.c.0.s8 %v4842
        %v5307 = vunpack.c.0.s8 %v4843
        %v5308 = vunpack.c.0.s8 %v4844
        %v5309 = vunpack.c.0.s8 %v4845
        %v5310 = vunpack.c.1.s8 %v4838
        %v5311 = vunpack.c.1.s8 %v4839
        %v5312 = vunpack.c.1.s8 %v4840
        %v5313 = vunpack.c.1.s8 %v4841
        %v5314 = vunpack.c.1.s8 %v4842
        %v5315 = vunpack.c.1.s8 %v4843
        %v5316 = vunpack.c.1.s8 %v4844
        %v5317 = vunpack.c.1.s8 %v4845
        %v5318 = vunpack.c.2.s8 %v4838
        %v5319 = vunpack.c.2.s8 %v4839
        %v5320 = vunpack.c.2.s8 %v4840
        %v5321 = vunpack.c.2.s8 %v4841
        %v5322 = vunpack.c.2.s8 %v4842
        %v5323 = vunpack.c.2.s8 %v4843
        %v5324 = vunpack.c.2.s8 %v4844
        %v5325 = vunpack.c.2.s8 %v4845
        %v5326 = vunpack.c.3.s8 %v4838
        %v5327 = vunpack.c.3.s8 %v4839
        %v5328 = vunpack.c.3.s8 %v4840
        %v5329 = vunpack.c.3.s8 %v4841
        %v5330 = vunpack.c.3.s8 %v4842
        %v5331 = vunpack.c.3.s8 %v4843
        %v5332 = vunpack.c.3.s8 %v4844
        %v5333 = vunpack.c.3.s8 %v4845
        %v5334 = vunpack.c.0.s8 %v4846
        %v5335 = vunpack.c.0.s8 %v4847
        %v5336 = vunpack.c.0.s8 %v4848
        %v5337 = vunpack.c.0.s8 %v4849
        %v5338 = vunpack.c.0.s8 %v4850
        %v5339 = vunpack.c.0.s8 %v4851
        %v5340 = vunpack.c.0.s8 %v4852
        %v5341 = vunpack.c.0.s8 %v4853
        %v5342 = vunpack.c.1.s8 %v4846
        %v5343 = vunpack.c.1.s8 %v4847
        %v5344 = vunpack.c.1.s8 %v4848
        %v5345 = vunpack.c.1.s8 %v4849
        %v5346 = vunpack.c.1.s8 %v4850
        %v5347 = vunpack.c.1.s8 %v4851
        %v5348 = vunpack.c.1.s8 %v4852
        %v5349 = vunpack.c.1.s8 %v4853
        %v5350 = vunpack.c.2.s8 %v4846
        %v5351 = vunpack.c.2.s8 %v4847
        %v5352 = vunpack.c.2.s8 %v4848
        %v5353 = vunpack.c.2.s8 %v4849
        %v5354 = vunpack.c.2.s8 %v4850
        %v5355 = vunpack.c.2.s8 %v4851
        %v5356 = vunpack.c.2.s8 %v4852
        %v5357 = vunpack.c.2.s8 %v4853
        %v5358 = vunpack.c.3.s8 %v4846
        %v5359 = vunpack.c.3.s8 %v4847
        %v5360 = vunpack.c.3.s8 %v4848
        %v5361 = vunpack.c.3.s8 %v4849
        %v5362 = vunpack.c.3.s8 %v4850
        %v5363 = vunpack.c.3.s8 %v4851
        %v5364 = vunpack.c.3.s8 %v4852
        %v5365 = vunpack.c.3.s8 %v4853
        %v5366 = vunpack.c.0.s8 %v4854
        %v5367 = vunpack.c.0.s8 %v4855
        %v5368 = vunpack.c.0.s8 %v4856
        %v5369 = vunpack.c.0.s8 %v4857
        %v5370 = vunpack.c.0.s8 %v4858
        %v5371 = vunpack.c.0.s8 %v4859
        %v5372 = vunpack.c.0.s8 %v4860
        %v5373 = vunpack.c.0.s8 %v4861
        %v5374 = vunpack.c.1.s8 %v4854
        %v5375 = vunpack.c.1.s8 %v4855
        %v5376 = vunpack.c.1.s8 %v4856
        %v5377 = vunpack.c.1.s8 %v4857
        %v5378 = vunpack.c.1.s8 %v4858
        %v5379 = vunpack.c.1.s8 %v4859
        %v5380 = vunpack.c.1.s8 %v4860
        %v5381 = vunpack.c.1.s8 %v4861
        %v5382 = vunpack.c.2.s8 %v4854
        %v5383 = vunpack.c.2.s8 %v4855
        %v5384 = vunpack.c.2.s8 %v4856
        %v5385 = vunpack.c.2.s8 %v4857
        %v5386 = vunpack.c.2.s8 %v4858
        %v5387 = vunpack.c.2.s8 %v4859
        %v5388 = vunpack.c.2.s8 %v4860
        %v5389 = vunpack.c.2.s8 %v4861
        %v5390 = vunpack.c.3.s8 %v4854
        %v5391 = vunpack.c.3.s8 %v4855
        %v5392 = vunpack.c.3.s8 %v4856
        %v5393 = vunpack.c.3.s8 %v4857
        %v5394 = vunpack.c.3.s8 %v4858
        %v5395 = vunpack.c.3.s8 %v4859
        %v5396 = vunpack.c.3.s8 %v4860
        %v5397 = vunpack.c.3.s8 %v4861
        %v5398 = vunpack.c.0.s8 %v4862
        %v5399 = vunpack.c.0.s8 %v4863
        %v5400 = vunpack.c.0.s8 %v4864
        %v5401 = vunpack.c.0.s8 %v4865
        %v5402 = vunpack.c.0.s8 %v4866
        %v5403 = vunpack.c.0.s8 %v4867
        %v5404 = vunpack.c.0.s8 %v4868
        %v5405 = vunpack.c.0.s8 %v4869
        %v5406 = vunpack.c.1.s8 %v4862
        %v5407 = vunpack.c.1.s8 %v4863
        %v5408 = vunpack.c.1.s8 %v4864
        %v5409 = vunpack.c.1.s8 %v4865
        %v5410 = vunpack.c.1.s8 %v4866
        %v5411 = vunpack.c.1.s8 %v4867
        %v5412 = vunpack.c.1.s8 %v4868
        %v5413 = vunpack.c.1.s8 %v4869
        %v5414 = vunpack.c.2.s8 %v4862
        %v5415 = vunpack.c.2.s8 %v4863
        %v5416 = vunpack.c.2.s8 %v4864
        %v5417 = vunpack.c.2.s8 %v4865
        %v5418 = vunpack.c.2.s8 %v4866
        %v5419 = vunpack.c.2.s8 %v4867
        %v5420 = vunpack.c.2.s8 %v4868
        %v5421 = vunpack.c.2.s8 %v4869
        %v5422 = vunpack.c.3.s8 %v4862
        %v5423 = vunpack.c.3.s8 %v4863
        %v5424 = vunpack.c.3.s8 %v4864
        %v5425 = vunpack.c.3.s8 %v4865
        %v5426 = vunpack.c.3.s8 %v4866
        %v5427 = vunpack.c.3.s8 %v4867
        %v5428 = vunpack.c.3.s8 %v4868
        %v5429 = vunpack.c.3.s8 %v4869
        %v5430 = vunpack.c.0.s8 %v4870
        %v5431 = vunpack.c.0.s8 %v4871
        %v5432 = vunpack.c.0.s8 %v4872
        %v5433 = vunpack.c.0.s8 %v4873
        %v5434 = vunpack.c.0.s8 %v4874
        %v5435 = vunpack.c.0.s8 %v4875
        %v5436 = vunpack.c.0.s8 %v4876
        %v5437 = vunpack.c.0.s8 %v4877
        %v5438 = vunpack.c.1.s8 %v4870
        %v5439 = vunpack.c.1.s8 %v4871
        %v5440 = vunpack.c.1.s8 %v4872
        %v5441 = vunpack.c.1.s8 %v4873
        %v5442 = vunpack.c.1.s8 %v4874
        %v5443 = vunpack.c.1.s8 %v4875
        %v5444 = vunpack.c.1.s8 %v4876
        %v5445 = vunpack.c.1.s8 %v4877
        %v5446 = vunpack.c.2.s8 %v4870
        %v5447 = vunpack.c.2.s8 %v4871
        %v5448 = vunpack.c.2.s8 %v4872
        %v5449 = vunpack.c.2.s8 %v4873
        %v5450 = vunpack.c.2.s8 %v4874
        %v5451 = vunpack.c.2.s8 %v4875
        %v5452 = vunpack.c.2.s8 %v4876
        %v5453 = vunpack.c.2.s8 %v4877
        %v5454 = vunpack.c.3.s8 %v4870
        %v5455 = vunpack.c.3.s8 %v4871
        %v5456 = vunpack.c.3.s8 %v4872
        %v5457 = vunpack.c.3.s8 %v4873
        %v5458 = vunpack.c.3.s8 %v4874
        %v5459 = vunpack.c.3.s8 %v4875
        %v5460 = vunpack.c.3.s8 %v4876
        %v5461 = vunpack.c.3.s8 %v4877
        %v5462 = vunpack.c.0.s8 %v4878
        %v5463 = vunpack.c.0.s8 %v4879
        %v5464 = vunpack.c.0.s8 %v4880
        %v5465 = vunpack.c.0.s8 %v4881
        %v5466 = vunpack.c.0.s8 %v4882
        %v5467 = vunpack.c.0.s8 %v4883
        %v5468 = vunpack.c.0.s8 %v4884
        %v5469 = vunpack.c.0.s8 %v4885
        %v5470 = vunpack.c.1.s8 %v4878
        %v5471 = vunpack.c.1.s8 %v4879
        %v5472 = vunpack.c.1.s8 %v4880
        %v5473 = vunpack.c.1.s8 %v4881
        %v5474 = vunpack.c.1.s8 %v4882
        %v5475 = vunpack.c.1.s8 %v4883
        %v5476 = vunpack.c.1.s8 %v4884
        %v5477 = vunpack.c.1.s8 %v4885
        %v5478 = vunpack.c.2.s8 %v4878
        %v5479 = vunpack.c.2.s8 %v4879
        %v5480 = vunpack.c.2.s8 %v4880
        %v5481 = vunpack.c.2.s8 %v4881
        %v5482 = vunpack.c.2.s8 %v4882
        %v5483 = vunpack.c.2.s8 %v4883
        %v5484 = vunpack.c.2.s8 %v4884
        %v5485 = vunpack.c.2.s8 %v4885
        %v5486 = vunpack.c.3.s8 %v4878
        %v5487 = vunpack.c.3.s8 %v4879
        %v5488 = vunpack.c.3.s8 %v4880
        %v5489 = vunpack.c.3.s8 %v4881
        %v5490 = vunpack.c.3.s8 %v4882
        %v5491 = vunpack.c.3.s8 %v4883
        %v5492 = vunpack.c.3.s8 %v4884
        %v5493 = vunpack.c.3.s8 %v4885
        %v5494 = vunpack.c.0.s8 %v4886
        %v5495 = vunpack.c.0.s8 %v4887
        %v5496 = vunpack.c.0.s8 %v4888
        %v5497 = vunpack.c.0.s8 %v4889
        %v5498 = vunpack.c.0.s8 %v4890
        %v5499 = vunpack.c.0.s8 %v4891
        %v5500 = vunpack.c.0.s8 %v4892
        %v5501 = vunpack.c.0.s8 %v4893
        %v5502 = vunpack.c.1.s8 %v4886
        %v5503 = vunpack.c.1.s8 %v4887
        %v5504 = vunpack.c.1.s8 %v4888
        %v5505 = vunpack.c.1.s8 %v4889
        %v5506 = vunpack.c.1.s8 %v4890
        %v5507 = vunpack.c.1.s8 %v4891
        %v5508 = vunpack.c.1.s8 %v4892
        %v5509 = vunpack.c.1.s8 %v4893
        %v5510 = vunpack.c.2.s8 %v4886
        %v5511 = vunpack.c.2.s8 %v4887
        %v5512 = vunpack.c.2.s8 %v4888
        %v5513 = vunpack.c.2.s8 %v4889
        %v5514 = vunpack.c.2.s8 %v4890
        %v5515 = vunpack.c.2.s8 %v4891
        %v5516 = vunpack.c.2.s8 %v4892
        %v5517 = vunpack.c.2.s8 %v4893
        %v5518 = vunpack.c.3.s8 %v4886
        %v5519 = vunpack.c.3.s8 %v4887
        %v5520 = vunpack.c.3.s8 %v4888
        %v5521 = vunpack.c.3.s8 %v4889
        %v5522 = vunpack.c.3.s8 %v4890
        %v5523 = vunpack.c.3.s8 %v4891
        %v5524 = vunpack.c.3.s8 %v4892
        %v5525 = vunpack.c.3.s8 %v4893
        %v5526 = vunpack.c.0.s8 %v4894
        %v5527 = vunpack.c.0.s8 %v4895
        %v5528 = vunpack.c.0.s8 %v4896
        %v5529 = vunpack.c.0.s8 %v4897
        %v5530 = vunpack.c.0.s8 %v4898
        %v5531 = vunpack.c.0.s8 %v4899
        %v5532 = vunpack.c.0.s8 %v4900
        %v5533 = vunpack.c.0.s8 %v4901
        %v5534 = vunpack.c.1.s8 %v4894
        %v5535 = vunpack.c.1.s8 %v4895
        %v5536 = vunpack.c.1.s8 %v4896
        %v5537 = vunpack.c.1.s8 %v4897
        %v5538 = vunpack.c.1.s8 %v4898
        %v5539 = vunpack.c.1.s8 %v4899
        %v5540 = vunpack.c.1.s8 %v4900
        %v5541 = vunpack.c.1.s8 %v4901
        %v5542 = vunpack.c.2.s8 %v4894
        %v5543 = vunpack.c.2.s8 %v4895
        %v5544 = vunpack.c.2.s8 %v4896
        %v5545 = vunpack.c.2.s8 %v4897
        %v5546 = vunpack.c.2.s8 %v4898
        %v5547 = vunpack.c.2.s8 %v4899
        %v5548 = vunpack.c.2.s8 %v4900
        %v5549 = vunpack.c.2.s8 %v4901
        %v5550 = vunpack.c.3.s8 %v4894
        %v5551 = vunpack.c.3.s8 %v4895
        %v5552 = vunpack.c.3.s8 %v4896
        %v5553 = vunpack.c.3.s8 %v4897
        %v5554 = vunpack.c.3.s8 %v4898
        %v5555 = vunpack.c.3.s8 %v4899
        %v5556 = vunpack.c.3.s8 %v4900
        %v5557 = vunpack.c.3.s8 %v4901
        %v5558 = vunpack.c.0.s8 %v4902
        %v5559 = vunpack.c.0.s8 %v4903
        %v5560 = vunpack.c.0.s8 %v4904
        %v5561 = vunpack.c.0.s8 %v4905
        %v5562 = vunpack.c.0.s8 %v4906
        %v5563 = vunpack.c.0.s8 %v4907
        %v5564 = vunpack.c.0.s8 %v4908
        %v5565 = vunpack.c.0.s8 %v4909
        %v5566 = vunpack.c.1.s8 %v4902
        %v5567 = vunpack.c.1.s8 %v4903
        %v5568 = vunpack.c.1.s8 %v4904
        %v5569 = vunpack.c.1.s8 %v4905
        %v5570 = vunpack.c.1.s8 %v4906
        %v5571 = vunpack.c.1.s8 %v4907
        %v5572 = vunpack.c.1.s8 %v4908
        %v5573 = vunpack.c.1.s8 %v4909
        %v5574 = vunpack.c.2.s8 %v4902
        %v5575 = vunpack.c.2.s8 %v4903
        %v5576 = vunpack.c.2.s8 %v4904
        %v5577 = vunpack.c.2.s8 %v4905
        %v5578 = vunpack.c.2.s8 %v4906
        %v5579 = vunpack.c.2.s8 %v4907
        %v5580 = vunpack.c.2.s8 %v4908
        %v5581 = vunpack.c.2.s8 %v4909
        %v5582 = vunpack.c.3.s8 %v4902
        %v5583 = vunpack.c.3.s8 %v4903
        %v5584 = vunpack.c.3.s8 %v4904
        %v5585 = vunpack.c.3.s8 %v4905
        %v5586 = vunpack.c.3.s8 %v4906
        %v5587 = vunpack.c.3.s8 %v4907
        %v5588 = vunpack.c.3.s8 %v4908
        %v5589 = vunpack.c.3.s8 %v4909
        %v5590 = vunpack.c.0.s8 %v4910
        %v5591 = vunpack.c.0.s8 %v4911
        %v5592 = vunpack.c.0.s8 %v4912
        %v5593 = vunpack.c.0.s8 %v4913
        %v5594 = vunpack.c.0.s8 %v4914
        %v5595 = vunpack.c.0.s8 %v4915
        %v5596 = vunpack.c.0.s8 %v4916
        %v5597 = vunpack.c.0.s8 %v4917
        %v5598 = vunpack.c.1.s8 %v4910
        %v5599 = vunpack.c.1.s8 %v4911
        %v5600 = vunpack.c.1.s8 %v4912
        %v5601 = vunpack.c.1.s8 %v4913
        %v5602 = vunpack.c.1.s8 %v4914
        %v5603 = vunpack.c.1.s8 %v4915
        %v5604 = vunpack.c.1.s8 %v4916
        %v5605 = vunpack.c.1.s8 %v4917
        %v5606 = vunpack.c.2.s8 %v4910
        %v5607 = vunpack.c.2.s8 %v4911
        %v5608 = vunpack.c.2.s8 %v4912
        %v5609 = vunpack.c.2.s8 %v4913
        %v5610 = vunpack.c.2.s8 %v4914
        %v5611 = vunpack.c.2.s8 %v4915
        %v5612 = vunpack.c.2.s8 %v4916
        %v5613 = vunpack.c.2.s8 %v4917
        %v5614 = vunpack.c.3.s8 %v4910
        %v5615 = vunpack.c.3.s8 %v4911
        %v5616 = vunpack.c.3.s8 %v4912
        %v5617 = vunpack.c.3.s8 %v4913
        %v5618 = vunpack.c.3.s8 %v4914
        %v5619 = vunpack.c.3.s8 %v4915
        %v5620 = vunpack.c.3.s8 %v4916
        %v5621 = vunpack.c.3.s8 %v4917
        %v5622 = vunpack.c.0.s8 %v4918
        %v5623 = vunpack.c.0.s8 %v4919
        %v5624 = vunpack.c.0.s8 %v4920
        %v5625 = vunpack.c.0.s8 %v4921
        %v5626 = vunpack.c.0.s8 %v4922
        %v5627 = vunpack.c.0.s8 %v4923
        %v5628 = vunpack.c.0.s8 %v4924
        %v5629 = vunpack.c.0.s8 %v4925
        %v5630 = vunpack.c.1.s8 %v4918
        %v5631 = vunpack.c.1.s8 %v4919
        %v5632 = vunpack.c.1.s8 %v4920
        %v5633 = vunpack.c.1.s8 %v4921
        %v5634 = vunpack.c.1.s8 %v4922
        %v5635 = vunpack.c.1.s8 %v4923
        %v5636 = vunpack.c.1.s8 %v4924
        %v5637 = vunpack.c.1.s8 %v4925
        %v5638 = vunpack.c.2.s8 %v4918
        %v5639 = vunpack.c.2.s8 %v4919
        %v5640 = vunpack.c.2.s8 %v4920
        %v5641 = vunpack.c.2.s8 %v4921
        %v5642 = vunpack.c.2.s8 %v4922
        %v5643 = vunpack.c.2.s8 %v4923
        %v5644 = vunpack.c.2.s8 %v4924
        %v5645 = vunpack.c.2.s8 %v4925
        %v5646 = vunpack.c.3.s8 %v4918
        %v5647 = vunpack.c.3.s8 %v4919
        %v5648 = vunpack.c.3.s8 %v4920
        %v5649 = vunpack.c.3.s8 %v4921
        %v5650 = vunpack.c.3.s8 %v4922
        %v5651 = vunpack.c.3.s8 %v4923
        %v5652 = vunpack.c.3.s8 %v4924
        %v5653 = vunpack.c.3.s8 %v4925
        %v5654 = vunpack.c.0.s8 %v4926
        %v5655 = vunpack.c.0.s8 %v4927
        %v5656 = vunpack.c.0.s8 %v4928
        %v5657 = vunpack.c.0.s8 %v4929
        %v5658 = vunpack.c.0.s8 %v4930
        %v5659 = vunpack.c.0.s8 %v4931
        %v5660 = vunpack.c.0.s8 %v4932
        %v5661 = vunpack.c.0.s8 %v4933
        %v5662 = vunpack.c.1.s8 %v4926
        %v5663 = vunpack.c.1.s8 %v4927
        %v5664 = vunpack.c.1.s8 %v4928
        %v5665 = vunpack.c.1.s8 %v4929
        %v5666 = vunpack.c.1.s8 %v4930
        %v5667 = vunpack.c.1.s8 %v4931
        %v5668 = vunpack.c.1.s8 %v4932
        %v5669 = vunpack.c.1.s8 %v4933
        %v5670 = vunpack.c.2.s8 %v4926
        %v5671 = vunpack.c.2.s8 %v4927
        %v5672 = vunpack.c.2.s8 %v4928
        %v5673 = vunpack.c.2.s8 %v4929
        %v5674 = vunpack.c.2.s8 %v4930
        %v5675 = vunpack.c.2.s8 %v4931
        %v5676 = vunpack.c.2.s8 %v4932
        %v5677 = vunpack.c.2.s8 %v4933
        %v5678 = vunpack.c.3.s8 %v4926
        %v5679 = vunpack.c.3.s8 %v4927
        %v5680 = vunpack.c.3.s8 %v4928
        %v5681 = vunpack.c.3.s8 %v4929
        %v5682 = vunpack.c.3.s8 %v4930
        %v5683 = vunpack.c.3.s8 %v4931
        %v5684 = vunpack.c.3.s8 %v4932
        %v5685 = vunpack.c.3.s8 %v4933
        %v5686 = vunpack.c.0.s8 %v4934
        %v5687 = vunpack.c.0.s8 %v4935
        %v5688 = vunpack.c.0.s8 %v4936
        %v5689 = vunpack.c.0.s8 %v4937
        %v5690 = vunpack.c.0.s8 %v4938
        %v5691 = vunpack.c.0.s8 %v4939
        %v5692 = vunpack.c.0.s8 %v4940
        %v5693 = vunpack.c.0.s8 %v4941
        %v5694 = vunpack.c.1.s8 %v4934
        %v5695 = vunpack.c.1.s8 %v4935
        %v5696 = vunpack.c.1.s8 %v4936
        %v5697 = vunpack.c.1.s8 %v4937
        %v5698 = vunpack.c.1.s8 %v4938
        %v5699 = vunpack.c.1.s8 %v4939
        %v5700 = vunpack.c.1.s8 %v4940
        %v5701 = vunpack.c.1.s8 %v4941
        %v5702 = vunpack.c.2.s8 %v4934
        %v5703 = vunpack.c.2.s8 %v4935
        %v5704 = vunpack.c.2.s8 %v4936
        %v5705 = vunpack.c.2.s8 %v4937
        %v5706 = vunpack.c.2.s8 %v4938
        %v5707 = vunpack.c.2.s8 %v4939
        %v5708 = vunpack.c.2.s8 %v4940
        %v5709 = vunpack.c.2.s8 %v4941
        %v5710 = vunpack.c.3.s8 %v4934
        %v5711 = vunpack.c.3.s8 %v4935
        %v5712 = vunpack.c.3.s8 %v4936
        %v5713 = vunpack.c.3.s8 %v4937
        %v5714 = vunpack.c.3.s8 %v4938
        %v5715 = vunpack.c.3.s8 %v4939
        %v5716 = vunpack.c.3.s8 %v4940
        %v5717 = vunpack.c.3.s8 %v4941
        %v5718 = vunpack.c.0.s8 %v4942
        %v5719 = vunpack.c.0.s8 %v4943
        %v5720 = vunpack.c.0.s8 %v4944
        %v5721 = vunpack.c.0.s8 %v4945
        %v5722 = vunpack.c.0.s8 %v4946
        %v5723 = vunpack.c.0.s8 %v4947
        %v5724 = vunpack.c.0.s8 %v4948
        %v5725 = vunpack.c.0.s8 %v4949
        %v5726 = vunpack.c.1.s8 %v4942
        %v5727 = vunpack.c.1.s8 %v4943
        %v5728 = vunpack.c.1.s8 %v4944
        %v5729 = vunpack.c.1.s8 %v4945
        %v5730 = vunpack.c.1.s8 %v4946
        %v5731 = vunpack.c.1.s8 %v4947
        %v5732 = vunpack.c.1.s8 %v4948
        %v5733 = vunpack.c.1.s8 %v4949
        %v5734 = vunpack.c.2.s8 %v4942
        %v5735 = vunpack.c.2.s8 %v4943
        %v5736 = vunpack.c.2.s8 %v4944
        %v5737 = vunpack.c.2.s8 %v4945
        %v5738 = vunpack.c.2.s8 %v4946
        %v5739 = vunpack.c.2.s8 %v4947
        %v5740 = vunpack.c.2.s8 %v4948
        %v5741 = vunpack.c.2.s8 %v4949
        %v5742 = vunpack.c.3.s8 %v4942
        %v5743 = vunpack.c.3.s8 %v4943
        %v5744 = vunpack.c.3.s8 %v4944
        %v5745 = vunpack.c.3.s8 %v4945
        %v5746 = vunpack.c.3.s8 %v4946
        %v5747 = vunpack.c.3.s8 %v4947
        %v5748 = vunpack.c.3.s8 %v4948
        %v5749 = vunpack.c.3.s8 %v4949
        %v5750 = vunpack.c.0.s8 %v4950
        %v5751 = vunpack.c.0.s8 %v4951
        %v5752 = vunpack.c.0.s8 %v4952
        %v5753 = vunpack.c.0.s8 %v4953
        %v5754 = vunpack.c.0.s8 %v4954
        %v5755 = vunpack.c.0.s8 %v4955
        %v5756 = vunpack.c.0.s8 %v4956
        %v5757 = vunpack.c.0.s8 %v4957
        %v5758 = vunpack.c.1.s8 %v4950
        %v5759 = vunpack.c.1.s8 %v4951
        %v5760 = vunpack.c.1.s8 %v4952
        %v5761 = vunpack.c.1.s8 %v4953
        %v5762 = vunpack.c.1.s8 %v4954
        %v5763 = vunpack.c.1.s8 %v4955
        %v5764 = vunpack.c.1.s8 %v4956
        %v5765 = vunpack.c.1.s8 %v4957
        %v5766 = vunpack.c.2.s8 %v4950
        %v5767 = vunpack.c.2.s8 %v4951
        %v5768 = vunpack.c.2.s8 %v4952
        %v5769 = vunpack.c.2.s8 %v4953
        %v5770 = vunpack.c.2.s8 %v4954
        %v5771 = vunpack.c.2.s8 %v4955
        %v5772 = vunpack.c.2.s8 %v4956
        %v5773 = vunpack.c.2.s8 %v4957
        %v5774 = vunpack.c.3.s8 %v4950
        %v5775 = vunpack.c.3.s8 %v4951
        %v5776 = vunpack.c.3.s8 %v4952
        %v5777 = vunpack.c.3.s8 %v4953
        %v5778 = vunpack.c.3.s8 %v4954
        %v5779 = vunpack.c.3.s8 %v4955
        %v5780 = vunpack.c.3.s8 %v4956
        %v5781 = vunpack.c.3.s8 %v4957
        %v5782 = vunpack.c.0.s8 %v4958
        %v5783 = vunpack.c.0.s8 %v4959
        %v5784 = vunpack.c.0.s8 %v4960
        %v5785 = vunpack.c.0.s8 %v4961
        %v5786 = vunpack.c.0.s8 %v4962
        %v5787 = vunpack.c.0.s8 %v4963
        %v5788 = vunpack.c.0.s8 %v4964
        %v5789 = vunpack.c.0.s8 %v4965
        %v5790 = vunpack.c.1.s8 %v4958
        %v5791 = vunpack.c.1.s8 %v4959
        %v5792 = vunpack.c.1.s8 %v4960
        %v5793 = vunpack.c.1.s8 %v4961
        %v5794 = vunpack.c.1.s8 %v4962
        %v5795 = vunpack.c.1.s8 %v4963
        %v5796 = vunpack.c.1.s8 %v4964
        %v5797 = vunpack.c.1.s8 %v4965
        %v5798 = vunpack.c.2.s8 %v4958
        %v5799 = vunpack.c.2.s8 %v4959
        %v5800 = vunpack.c.2.s8 %v4960
        %v5801 = vunpack.c.2.s8 %v4961
        %v5802 = vunpack.c.2.s8 %v4962
        %v5803 = vunpack.c.2.s8 %v4963
        %v5804 = vunpack.c.2.s8 %v4964
        %v5805 = vunpack.c.2.s8 %v4965
        %v5806 = vunpack.c.3.s8 %v4958
        %v5807 = vunpack.c.3.s8 %v4959
        %v5808 = vunpack.c.3.s8 %v4960
        %v5809 = vunpack.c.3.s8 %v4961
        %v5810 = vunpack.c.3.s8 %v4962
        %v5811 = vunpack.c.3.s8 %v4963
        %v5812 = vunpack.c.3.s8 %v4964
        %v5813 = vunpack.c.3.s8 %v4965
        %v5814 = vunpack.c.0.s8 %v4966
        %v5815 = vunpack.c.0.s8 %v4967
        %v5816 = vunpack.c.0.s8 %v4968
        %v5817 = vunpack.c.0.s8 %v4969
        %v5818 = vunpack.c.0.s8 %v4970
        %v5819 = vunpack.c.0.s8 %v4971
        %v5820 = vunpack.c.0.s8 %v4972
        %v5821 = vunpack.c.0.s8 %v4973
        %v5822 = vunpack.c.1.s8 %v4966
        %v5823 = vunpack.c.1.s8 %v4967
        %v5824 = vunpack.c.1.s8 %v4968
        %v5825 = vunpack.c.1.s8 %v4969
        %v5826 = vunpack.c.1.s8 %v4970
        %v5827 = vunpack.c.1.s8 %v4971
        %v5828 = vunpack.c.1.s8 %v4972
        %v5829 = vunpack.c.1.s8 %v4973
        %v5830 = vunpack.c.2.s8 %v4966
        %v5831 = vunpack.c.2.s8 %v4967
        %v5832 = vunpack.c.2.s8 %v4968
        %v5833 = vunpack.c.2.s8 %v4969
        %v5834 = vunpack.c.2.s8 %v4970
        %v5835 = vunpack.c.2.s8 %v4971
        %v5836 = vunpack.c.2.s8 %v4972
        %v5837 = vunpack.c.2.s8 %v4973
        %v5838 = vunpack.c.3.s8 %v4966
        %v5839 = vunpack.c.3.s8 %v4967
        %v5840 = vunpack.c.3.s8 %v4968
        %v5841 = vunpack.c.3.s8 %v4969
        %v5842 = vunpack.c.3.s8 %v4970
        %v5843 = vunpack.c.3.s8 %v4971
        %v5844 = vunpack.c.3.s8 %v4972
        %v5845 = vunpack.c.3.s8 %v4973
        %v5846 = vunpack.c.0.s8 %v4974
        %v5847 = vunpack.c.0.s8 %v4975
        %v5848 = vunpack.c.0.s8 %v4976
        %v5849 = vunpack.c.0.s8 %v4977
        %v5850 = vunpack.c.0.s8 %v4978
        %v5851 = vunpack.c.0.s8 %v4979
        %v5852 = vunpack.c.0.s8 %v4980
        %v5853 = vunpack.c.0.s8 %v4981
        %v5854 = vunpack.c.1.s8 %v4974
        %v5855 = vunpack.c.1.s8 %v4975
        %v5856 = vunpack.c.1.s8 %v4976
        %v5857 = vunpack.c.1.s8 %v4977
        %v5858 = vunpack.c.1.s8 %v4978
        %v5859 = vunpack.c.1.s8 %v4979
        %v5860 = vunpack.c.1.s8 %v4980
        %v5861 = vunpack.c.1.s8 %v4981
        %v5862 = vunpack.c.2.s8 %v4974
        %v5863 = vunpack.c.2.s8 %v4975
        %v5864 = vunpack.c.2.s8 %v4976
        %v5865 = vunpack.c.2.s8 %v4977
        %v5866 = vunpack.c.2.s8 %v4978
        %v5867 = vunpack.c.2.s8 %v4979
        %v5868 = vunpack.c.2.s8 %v4980
        %v5869 = vunpack.c.2.s8 %v4981
        %v5870 = vunpack.c.3.s8 %v4974
        %v5871 = vunpack.c.3.s8 %v4975
        %v5872 = vunpack.c.3.s8 %v4976
        %v5873 = vunpack.c.3.s8 %v4977
        %v5874 = vunpack.c.3.s8 %v4978
        %v5875 = vunpack.c.3.s8 %v4979
        %v5876 = vunpack.c.3.s8 %v4980
        %v5877 = vunpack.c.3.s8 %v4981
        %v5878 = vunpack.c.0.s8 %v4982
        %v5879 = vunpack.c.0.s8 %v4983
        %v5880 = vunpack.c.0.s8 %v4984
        %v5881 = vunpack.c.0.s8 %v4985
        %v5882 = vunpack.c.0.s8 %v4986
        %v5883 = vunpack.c.0.s8 %v4987
        %v5884 = vunpack.c.0.s8 %v4988
        %v5885 = vunpack.c.0.s8 %v4989
        %v5886 = vunpack.c.1.s8 %v4982
        %v5887 = vunpack.c.1.s8 %v4983
        %v5888 = vunpack.c.1.s8 %v4984
        %v5889 = vunpack.c.1.s8 %v4985
        %v5890 = vunpack.c.1.s8 %v4986
        %v5891 = vunpack.c.1.s8 %v4987
        %v5892 = vunpack.c.1.s8 %v4988
        %v5893 = vunpack.c.1.s8 %v4989
        %v5894 = vunpack.c.2.s8 %v4982
        %v5895 = vunpack.c.2.s8 %v4983
        %v5896 = vunpack.c.2.s8 %v4984
        %v5897 = vunpack.c.2.s8 %v4985
        %v5898 = vunpack.c.2.s8 %v4986
        %v5899 = vunpack.c.2.s8 %v4987
        %v5900 = vunpack.c.2.s8 %v4988
        %v5901 = vunpack.c.2.s8 %v4989
        %v5902 = vunpack.c.3.s8 %v4982
        %v5903 = vunpack.c.3.s8 %v4983
        %v5904 = vunpack.c.3.s8 %v4984
        %v5905 = vunpack.c.3.s8 %v4985
        %v5906 = vunpack.c.3.s8 %v4986
        %v5907 = vunpack.c.3.s8 %v4987
        %v5908 = vunpack.c.3.s8 %v4988
        %v5909 = vunpack.c.3.s8 %v4989
        %v5910 = vunpack.c.0.s8 %v4990
        %v5911 = vunpack.c.0.s8 %v4991
        %v5912 = vunpack.c.0.s8 %v4992
        %v5913 = vunpack.c.0.s8 %v4993
        %v5914 = vunpack.c.0.s8 %v4994
        %v5915 = vunpack.c.0.s8 %v4995
        %v5916 = vunpack.c.0.s8 %v4996
        %v5917 = vunpack.c.0.s8 %v4997
        %v5918 = vunpack.c.1.s8 %v4990
        %v5919 = vunpack.c.1.s8 %v4991
        %v5920 = vunpack.c.1.s8 %v4992
        %v5921 = vunpack.c.1.s8 %v4993
        %v5922 = vunpack.c.1.s8 %v4994
        %v5923 = vunpack.c.1.s8 %v4995
        %v5924 = vunpack.c.1.s8 %v4996
        %v5925 = vunpack.c.1.s8 %v4997
        %v5926 = vunpack.c.2.s8 %v4990
        %v5927 = vunpack.c.2.s8 %v4991
        %v5928 = vunpack.c.2.s8 %v4992
        %v5929 = vunpack.c.2.s8 %v4993
        %v5930 = vunpack.c.2.s8 %v4994
        %v5931 = vunpack.c.2.s8 %v4995
        %v5932 = vunpack.c.2.s8 %v4996
        %v5933 = vunpack.c.2.s8 %v4997
        %v5934 = vunpack.c.3.s8 %v4990
        %v5935 = vunpack.c.3.s8 %v4991
        %v5936 = vunpack.c.3.s8 %v4992
        %v5937 = vunpack.c.3.s8 %v4993
        %v5938 = vunpack.c.3.s8 %v4994
        %v5939 = vunpack.c.3.s8 %v4995
        %v5940 = vunpack.c.3.s8 %v4996
        %v5941 = vunpack.c.3.s8 %v4997
        %v5942 = vunpack.c.0.s8 %v4998
        %v5943 = vunpack.c.0.s8 %v4999
        %v5944 = vunpack.c.0.s8 %v5000
        %v5945 = vunpack.c.0.s8 %v5001
        %v5946 = vunpack.c.0.s8 %v5002
        %v5947 = vunpack.c.0.s8 %v5003
        %v5948 = vunpack.c.0.s8 %v5004
        %v5949 = vunpack.c.0.s8 %v5005
        %v5950 = vunpack.c.1.s8 %v4998
        %v5951 = vunpack.c.1.s8 %v4999
        %v5952 = vunpack.c.1.s8 %v5000
        %v5953 = vunpack.c.1.s8 %v5001
        %v5954 = vunpack.c.1.s8 %v5002
        %v5955 = vunpack.c.1.s8 %v5003
        %v5956 = vunpack.c.1.s8 %v5004
        %v5957 = vunpack.c.1.s8 %v5005
        %v5958 = vunpack.c.2.s8 %v4998
        %v5959 = vunpack.c.2.s8 %v4999
        %v5960 = vunpack.c.2.s8 %v5000
        %v5961 = vunpack.c.2.s8 %v5001
        %v5962 = vunpack.c.2.s8 %v5002
        %v5963 = vunpack.c.2.s8 %v5003
        %v5964 = vunpack.c.2.s8 %v5004
        %v5965 = vunpack.c.2.s8 %v5005
        %v5966 = vunpack.c.3.s8 %v4998
        %v5967 = vunpack.c.3.s8 %v4999
        %v5968 = vunpack.c.3.s8 %v5000
        %v5969 = vunpack.c.3.s8 %v5001
        %v5970 = vunpack.c.3.s8 %v5002
        %v5971 = vunpack.c.3.s8 %v5003
        %v5972 = vunpack.c.3.s8 %v5004
        %v5973 = vunpack.c.3.s8 %v5005
        %v5974 = vunpack.c.0.s8 %v5006
        %v5975 = vunpack.c.0.s8 %v5007
        %v5976 = vunpack.c.0.s8 %v5008
        %v5977 = vunpack.c.0.s8 %v5009
        %v5978 = vunpack.c.0.s8 %v5010
        %v5979 = vunpack.c.0.s8 %v5011
        %v5980 = vunpack.c.0.s8 %v5012
        %v5981 = vunpack.c.0.s8 %v5013
        %v5982 = vunpack.c.1.s8 %v5006
        %v5983 = vunpack.c.1.s8 %v5007
        %v5984 = vunpack.c.1.s8 %v5008
        %v5985 = vunpack.c.1.s8 %v5009
        %v5986 = vunpack.c.1.s8 %v5010
        %v5987 = vunpack.c.1.s8 %v5011
        %v5988 = vunpack.c.1.s8 %v5012
        %v5989 = vunpack.c.1.s8 %v5013
        %v5990 = vunpack.c.2.s8 %v5006
        %v5991 = vunpack.c.2.s8 %v5007
        %v5992 = vunpack.c.2.s8 %v5008
        %v5993 = vunpack.c.2.s8 %v5009
        %v5994 = vunpack.c.2.s8 %v5010
        %v5995 = vunpack.c.2.s8 %v5011
        %v5996 = vunpack.c.2.s8 %v5012
        %v5997 = vunpack.c.2.s8 %v5013
        %v5998 = vunpack.c.3.s8 %v5006
        %v5999 = vunpack.c.3.s8 %v5007
        %v6000 = vunpack.c.3.s8 %v5008
        %v6001 = vunpack.c.3.s8 %v5009
        %v6002 = vunpack.c.3.s8 %v5010
        %v6003 = vunpack.c.3.s8 %v5011
        %v6004 = vunpack.c.3.s8 %v5012
        %v6005 = vunpack.c.3.s8 %v5013
        %v6006 = vunpack.c.0.s8 %v5014
        %v6007 = vunpack.c.0.s8 %v5015
        %v6008 = vunpack.c.0.s8 %v5016
        %v6009 = vunpack.c.0.s8 %v5017
        %v6010 = vunpack.c.0.s8 %v5018
        %v6011 = vunpack.c.0.s8 %v5019
        %v6012 = vunpack.c.0.s8 %v5020
        %v6013 = vunpack.c.0.s8 %v5021
        %v6014 = vunpack.c.1.s8 %v5014
        %v6015 = vunpack.c.1.s8 %v5015
        %v6016 = vunpack.c.1.s8 %v5016
        %v6017 = vunpack.c.1.s8 %v5017
        %v6018 = vunpack.c.1.s8 %v5018
        %v6019 = vunpack.c.1.s8 %v5019
        %v6020 = vunpack.c.1.s8 %v5020
        %v6021 = vunpack.c.1.s8 %v5021
        %v6022 = vunpack.c.2.s8 %v5014
        %v6023 = vunpack.c.2.s8 %v5015
        %v6024 = vunpack.c.2.s8 %v5016
        %v6025 = vunpack.c.2.s8 %v5017
        %v6026 = vunpack.c.2.s8 %v5018
        %v6027 = vunpack.c.2.s8 %v5019
        %v6028 = vunpack.c.2.s8 %v5020
        %v6029 = vunpack.c.2.s8 %v5021
        %v6030 = vunpack.c.3.s8 %v5014
        %v6031 = vunpack.c.3.s8 %v5015
        %v6032 = vunpack.c.3.s8 %v5016
        %v6033 = vunpack.c.3.s8 %v5017
        %v6034 = vunpack.c.3.s8 %v5018
        %v6035 = vunpack.c.3.s8 %v5019
        %v6036 = vunpack.c.3.s8 %v5020
        %v6037 = vunpack.c.3.s8 %v5021
        %v6038 = vunpack.c.0.s8 %v5022
        %v6039 = vunpack.c.0.s8 %v5023
        %v6040 = vunpack.c.0.s8 %v5024
        %v6041 = vunpack.c.0.s8 %v5025
        %v6042 = vunpack.c.0.s8 %v5026
        %v6043 = vunpack.c.0.s8 %v5027
        %v6044 = vunpack.c.0.s8 %v5028
        %v6045 = vunpack.c.0.s8 %v5029
        %v6046 = vunpack.c.1.s8 %v5022
        %v6047 = vunpack.c.1.s8 %v5023
        %v6048 = vunpack.c.1.s8 %v5024
        %v6049 = vunpack.c.1.s8 %v5025
        %v6050 = vunpack.c.1.s8 %v5026
        %v6051 = vunpack.c.1.s8 %v5027
        %v6052 = vunpack.c.1.s8 %v5028
        %v6053 = vunpack.c.1.s8 %v5029
        %v6054 = vunpack.c.2.s8 %v5022
        %v6055 = vunpack.c.2.s8 %v5023
        %v6056 = vunpack.c.2.s8 %v5024
        %v6057 = vunpack.c.2.s8 %v5025
        %v6058 = vunpack.c.2.s8 %v5026
        %v6059 = vunpack.c.2.s8 %v5027
        %v6060 = vunpack.c.2.s8 %v5028
        %v6061 = vunpack.c.2.s8 %v5029
        %v6062 = vunpack.c.3.s8 %v5022
        %v6063 = vunpack.c.3.s8 %v5023
        %v6064 = vunpack.c.3.s8 %v5024
        %v6065 = vunpack.c.3.s8 %v5025
        %v6066 = vunpack.c.3.s8 %v5026
        %v6067 = vunpack.c.3.s8 %v5027
        %v6068 = vunpack.c.3.s8 %v5028
        %v6069 = vunpack.c.3.s8 %v5029
        %v6070 = vunpack.c.0.s8 %v5030
        %v6071 = vunpack.c.0.s8 %v5031
        %v6072 = vunpack.c.0.s8 %v5032
        %v6073 = vunpack.c.0.s8 %v5033
        %v6074 = vunpack.c.0.s8 %v5034
        %v6075 = vunpack.c.0.s8 %v5035
        %v6076 = vunpack.c.0.s8 %v5036
        %v6077 = vunpack.c.0.s8 %v5037
        %v6078 = vunpack.c.1.s8 %v5030
        %v6079 = vunpack.c.1.s8 %v5031
        %v6080 = vunpack.c.1.s8 %v5032
        %v6081 = vunpack.c.1.s8 %v5033
        %v6082 = vunpack.c.1.s8 %v5034
        %v6083 = vunpack.c.1.s8 %v5035
        %v6084 = vunpack.c.1.s8 %v5036
        %v6085 = vunpack.c.1.s8 %v5037
        %v6086 = vunpack.c.2.s8 %v5030
        %v6087 = vunpack.c.2.s8 %v5031
        %v6088 = vunpack.c.2.s8 %v5032
        %v6089 = vunpack.c.2.s8 %v5033
        %v6090 = vunpack.c.2.s8 %v5034
        %v6091 = vunpack.c.2.s8 %v5035
        %v6092 = vunpack.c.2.s8 %v5036
        %v6093 = vunpack.c.2.s8 %v5037
        %v6094 = vunpack.c.3.s8 %v5030
        %v6095 = vunpack.c.3.s8 %v5031
        %v6096 = vunpack.c.3.s8 %v5032
        %v6097 = vunpack.c.3.s8 %v5033
        %v6098 = vunpack.c.3.s8 %v5034
        %v6099 = vunpack.c.3.s8 %v5035
        %v6100 = vunpack.c.3.s8 %v5036
        %v6101 = vunpack.c.3.s8 %v5037
        %v6102 = vunpack.c.0.s8 %v5038
        %v6103 = vunpack.c.0.s8 %v5039
        %v6104 = vunpack.c.0.s8 %v5040
        %v6105 = vunpack.c.0.s8 %v5041
        %v6106 = vunpack.c.0.s8 %v5042
        %v6107 = vunpack.c.0.s8 %v5043
        %v6108 = vunpack.c.0.s8 %v5044
        %v6109 = vunpack.c.0.s8 %v5045
        %v6110 = vunpack.c.1.s8 %v5038
        %v6111 = vunpack.c.1.s8 %v5039
        %v6112 = vunpack.c.1.s8 %v5040
        %v6113 = vunpack.c.1.s8 %v5041
        %v6114 = vunpack.c.1.s8 %v5042
        %v6115 = vunpack.c.1.s8 %v5043
        %v6116 = vunpack.c.1.s8 %v5044
        %v6117 = vunpack.c.1.s8 %v5045
        %v6118 = vunpack.c.2.s8 %v5038
        %v6119 = vunpack.c.2.s8 %v5039
        %v6120 = vunpack.c.2.s8 %v5040
        %v6121 = vunpack.c.2.s8 %v5041
        %v6122 = vunpack.c.2.s8 %v5042
        %v6123 = vunpack.c.2.s8 %v5043
        %v6124 = vunpack.c.2.s8 %v5044
        %v6125 = vunpack.c.2.s8 %v5045
        %v6126 = vunpack.c.3.s8 %v5038
        %v6127 = vunpack.c.3.s8 %v5039
        %v6128 = vunpack.c.3.s8 %v5040
        %v6129 = vunpack.c.3.s8 %v5041
        %v6130 = vunpack.c.3.s8 %v5042
        %v6131 = vunpack.c.3.s8 %v5043
        %v6132 = vunpack.c.3.s8 %v5044
        %v6133 = vunpack.c.3.s8 %v5045
        %v6134 = vunpack.c.0.s8 %v5046
        %v6135 = vunpack.c.0.s8 %v5047
        %v6136 = vunpack.c.0.s8 %v5048
        %v6137 = vunpack.c.0.s8 %v5049
        %v6138 = vunpack.c.0.s8 %v5050
        %v6139 = vunpack.c.0.s8 %v5051
        %v6140 = vunpack.c.0.s8 %v5052
        %v6141 = vunpack.c.0.s8 %v5053
        %v6142 = vunpack.c.1.s8 %v5046
        %v6143 = vunpack.c.1.s8 %v5047
        %v6144 = vunpack.c.1.s8 %v5048
        %v6145 = vunpack.c.1.s8 %v5049
        %v6146 = vunpack.c.1.s8 %v5050
        %v6147 = vunpack.c.1.s8 %v5051
        %v6148 = vunpack.c.1.s8 %v5052
        %v6149 = vunpack.c.1.s8 %v5053
        %v6150 = vunpack.c.2.s8 %v5046
        %v6151 = vunpack.c.2.s8 %v5047
        %v6152 = vunpack.c.2.s8 %v5048
        %v6153 = vunpack.c.2.s8 %v5049
        %v6154 = vunpack.c.2.s8 %v5050
        %v6155 = vunpack.c.2.s8 %v5051
        %v6156 = vunpack.c.2.s8 %v5052
        %v6157 = vunpack.c.2.s8 %v5053
        %v6158 = vunpack.c.3.s8 %v5046
        %v6159 = vunpack.c.3.s8 %v5047
        %v6160 = vunpack.c.3.s8 %v5048
        %v6161 = vunpack.c.3.s8 %v5049
        %v6162 = vunpack.c.3.s8 %v5050
        %v6163 = vunpack.c.3.s8 %v5051
        %v6164 = vunpack.c.3.s8 %v5052
        %v6165 = vunpack.c.3.s8 %v5053
        %v6166 = vunpack.c.0.s8 %v5054
        %v6167 = vunpack.c.0.s8 %v5055
        %v6168 = vunpack.c.0.s8 %v5056
        %v6169 = vunpack.c.0.s8 %v5057
        %v6170 = vunpack.c.0.s8 %v5058
        %v6171 = vunpack.c.0.s8 %v5059
        %v6172 = vunpack.c.0.s8 %v5060
        %v6173 = vunpack.c.0.s8 %v5061
        %v6174 = vunpack.c.1.s8 %v5054
        %v6175 = vunpack.c.1.s8 %v5055
        %v6176 = vunpack.c.1.s8 %v5056
        %v6177 = vunpack.c.1.s8 %v5057
        %v6178 = vunpack.c.1.s8 %v5058
        %v6179 = vunpack.c.1.s8 %v5059
        %v6180 = vunpack.c.1.s8 %v5060
        %v6181 = vunpack.c.1.s8 %v5061
        %v6182 = vunpack.c.2.s8 %v5054
        %v6183 = vunpack.c.2.s8 %v5055
        %v6184 = vunpack.c.2.s8 %v5056
        %v6185 = vunpack.c.2.s8 %v5057
        %v6186 = vunpack.c.2.s8 %v5058
        %v6187 = vunpack.c.2.s8 %v5059
        %v6188 = vunpack.c.2.s8 %v5060
        %v6189 = vunpack.c.2.s8 %v5061
        %v6190 = vunpack.c.3.s8 %v5054
        %v6191 = vunpack.c.3.s8 %v5055
        %v6192 = vunpack.c.3.s8 %v5056
        %v6193 = vunpack.c.3.s8 %v5057
        %v6194 = vunpack.c.3.s8 %v5058
        %v6195 = vunpack.c.3.s8 %v5059
        %v6196 = vunpack.c.3.s8 %v5060
        %v6197 = vunpack.c.3.s8 %v5061
        %v6198 = vunpack.c.0.s8 %v5062
        %v6199 = vunpack.c.0.s8 %v5063
        %v6200 = vunpack.c.0.s8 %v5064
        %v6201 = vunpack.c.0.s8 %v5065
        %v6202 = vunpack.c.0.s8 %v5066
        %v6203 = vunpack.c.0.s8 %v5067
        %v6204 = vunpack.c.0.s8 %v5068
        %v6205 = vunpack.c.0.s8 %v5069
        %v6206 = vunpack.c.1.s8 %v5062
        %v6207 = vunpack.c.1.s8 %v5063
        %v6208 = vunpack.c.1.s8 %v5064
        %v6209 = vunpack.c.1.s8 %v5065
        %v6210 = vunpack.c.1.s8 %v5066
        %v6211 = vunpack.c.1.s8 %v5067
        %v6212 = vunpack.c.1.s8 %v5068
        %v6213 = vunpack.c.1.s8 %v5069
        %v6214 = vunpack.c.2.s8 %v5062
        %v6215 = vunpack.c.2.s8 %v5063
        %v6216 = vunpack.c.2.s8 %v5064
        %v6217 = vunpack.c.2.s8 %v5065
        %v6218 = vunpack.c.2.s8 %v5066
        %v6219 = vunpack.c.2.s8 %v5067
        %v6220 = vunpack.c.2.s8 %v5068
        %v6221 = vunpack.c.2.s8 %v5069
        %v6222 = vunpack.c.3.s8 %v5062
        %v6223 = vunpack.c.3.s8 %v5063
        %v6224 = vunpack.c.3.s8 %v5064
        %v6225 = vunpack.c.3.s8 %v5065
        %v6226 = vunpack.c.3.s8 %v5066
        %v6227 = vunpack.c.3.s8 %v5067
        %v6228 = vunpack.c.3.s8 %v5068
        %v6229 = vunpack.c.3.s8 %v5069
        %v6230 = vunpack.c.0.s8 %v5070
        %v6231 = vunpack.c.0.s8 %v5071
        %v6232 = vunpack.c.0.s8 %v5072
        %v6233 = vunpack.c.0.s8 %v5073
        %v6234 = vunpack.c.0.s8 %v5074
        %v6235 = vunpack.c.0.s8 %v5075
        %v6236 = vunpack.c.0.s8 %v5076
        %v6237 = vunpack.c.0.s8 %v5077
        %v6238 = vunpack.c.1.s8 %v5070
        %v6239 = vunpack.c.1.s8 %v5071
        %v6240 = vunpack.c.1.s8 %v5072
        %v6241 = vunpack.c.1.s8 %v5073
        %v6242 = vunpack.c.1.s8 %v5074
        %v6243 = vunpack.c.1.s8 %v5075
        %v6244 = vunpack.c.1.s8 %v5076
        %v6245 = vunpack.c.1.s8 %v5077
        %v6246 = vunpack.c.2.s8 %v5070
        %v6247 = vunpack.c.2.s8 %v5071
        %v6248 = vunpack.c.2.s8 %v5072
        %v6249 = vunpack.c.2.s8 %v5073
        %v6250 = vunpack.c.2.s8 %v5074
        %v6251 = vunpack.c.2.s8 %v5075
        %v6252 = vunpack.c.2.s8 %v5076
        %v6253 = vunpack.c.2.s8 %v5077
        %v6254 = vunpack.c.3.s8 %v5070
        %v6255 = vunpack.c.3.s8 %v5071
        %v6256 = vunpack.c.3.s8 %v5072
        %v6257 = vunpack.c.3.s8 %v5073
        %v6258 = vunpack.c.3.s8 %v5074
        %v6259 = vunpack.c.3.s8 %v5075
        %v6260 = vunpack.c.3.s8 %v5076
        %v6261 = vunpack.c.3.s8 %v5077
        %v6262 = vunpack.c.0.s8 %v5078
        %v6263 = vunpack.c.0.s8 %v5079
        %v6264 = vunpack.c.0.s8 %v5080
        %v6265 = vunpack.c.0.s8 %v5081
        %v6266 = vunpack.c.0.s8 %v5082
        %v6267 = vunpack.c.0.s8 %v5083
        %v6268 = vunpack.c.0.s8 %v5084
        %v6269 = vunpack.c.0.s8 %v5085
        %v6270 = vunpack.c.1.s8 %v5078
        %v6271 = vunpack.c.1.s8 %v5079
        %v6272 = vunpack.c.1.s8 %v5080
        %v6273 = vunpack.c.1.s8 %v5081
        %v6274 = vunpack.c.1.s8 %v5082
        %v6275 = vunpack.c.1.s8 %v5083
        %v6276 = vunpack.c.1.s8 %v5084
        %v6277 = vunpack.c.1.s8 %v5085
        %v6278 = vunpack.c.2.s8 %v5078
        %v6279 = vunpack.c.2.s8 %v5079
        %v6280 = vunpack.c.2.s8 %v5080
        %v6281 = vunpack.c.2.s8 %v5081
        %v6282 = vunpack.c.2.s8 %v5082
        %v6283 = vunpack.c.2.s8 %v5083
        %v6284 = vunpack.c.2.s8 %v5084
        %v6285 = vunpack.c.2.s8 %v5085
        %v6286 = vunpack.c.3.s8 %v5078
        %v6287 = vunpack.c.3.s8 %v5079
        %v6288 = vunpack.c.3.s8 %v5080
        %v6289 = vunpack.c.3.s8 %v5081
        %v6290 = vunpack.c.3.s8 %v5082
        %v6291 = vunpack.c.3.s8 %v5083
        %v6292 = vunpack.c.3.s8 %v5084
        %v6293 = vunpack.c.3.s8 %v5085
        %v6294 = vunpack.c.0.s8 %v5086
        %v6295 = vunpack.c.0.s8 %v5087
        %v6296 = vunpack.c.0.s8 %v5088
        %v6297 = vunpack.c.0.s8 %v5089
        %v6298 = vunpack.c.0.s8 %v5090
        %v6299 = vunpack.c.0.s8 %v5091
        %v6300 = vunpack.c.0.s8 %v5092
        %v6301 = vunpack.c.0.s8 %v5093
        %v6302 = vunpack.c.1.s8 %v5086
        %v6303 = vunpack.c.1.s8 %v5087
        %v6304 = vunpack.c.1.s8 %v5088
        %v6305 = vunpack.c.1.s8 %v5089
        %v6306 = vunpack.c.1.s8 %v5090
        %v6307 = vunpack.c.1.s8 %v5091
        %v6308 = vunpack.c.1.s8 %v5092
        %v6309 = vunpack.c.1.s8 %v5093
        %v6310 = vunpack.c.2.s8 %v5086
        %v6311 = vunpack.c.2.s8 %v5087
        %v6312 = vunpack.c.2.s8 %v5088
        %v6313 = vunpack.c.2.s8 %v5089
        %v6314 = vunpack.c.2.s8 %v5090
        %v6315 = vunpack.c.2.s8 %v5091
        %v6316 = vunpack.c.2.s8 %v5092
        %v6317 = vunpack.c.2.s8 %v5093
        %v6318 = vunpack.c.3.s8 %v5086
        %v6319 = vunpack.c.3.s8 %v5087
        %v6320 = vunpack.c.3.s8 %v5088
        %v6321 = vunpack.c.3.s8 %v5089
        %v6322 = vunpack.c.3.s8 %v5090
        %v6323 = vunpack.c.3.s8 %v5091
        %v6324 = vunpack.c.3.s8 %v5092
        %v6325 = vunpack.c.3.s8 %v5093
        %v6326 = vunpack.c.0.s8 %v5094
        %v6327 = vunpack.c.0.s8 %v5095
        %v6328 = vunpack.c.0.s8 %v5096
        %v6329 = vunpack.c.0.s8 %v5097
        %v6330 = vunpack.c.0.s8 %v5098
        %v6331 = vunpack.c.0.s8 %v5099
        %v6332 = vunpack.c.0.s8 %v5100
        %v6333 = vunpack.c.0.s8 %v5101
        %v6334 = vunpack.c.1.s8 %v5094
        %v6335 = vunpack.c.1.s8 %v5095
        %v6336 = vunpack.c.1.s8 %v5096
        %v6337 = vunpack.c.1.s8 %v5097
        %v6338 = vunpack.c.1.s8 %v5098
        %v6339 = vunpack.c.1.s8 %v5099
        %v6340 = vunpack.c.1.s8 %v5100
        %v6341 = vunpack.c.1.s8 %v5101
        %v6342 = vunpack.c.2.s8 %v5094
        %v6343 = vunpack.c.2.s8 %v5095
        %v6344 = vunpack.c.2.s8 %v5096
        %v6345 = vunpack.c.2.s8 %v5097
        %v6346 = vunpack.c.2.s8 %v5098
        %v6347 = vunpack.c.2.s8 %v5099
        %v6348 = vunpack.c.2.s8 %v5100
        %v6349 = vunpack.c.2.s8 %v5101
        %v6350 = vunpack.c.3.s8 %v5094
        %v6351 = vunpack.c.3.s8 %v5095
        %v6352 = vunpack.c.3.s8 %v5096
        %v6353 = vunpack.c.3.s8 %v5097
        %v6354 = vunpack.c.3.s8 %v5098
        %v6355 = vunpack.c.3.s8 %v5099
        %v6356 = vunpack.c.3.s8 %v5100
        %v6357 = vunpack.c.3.s8 %v5101
        %v6358 = vunpack.c.0.s8 %v5102
        %v6359 = vunpack.c.0.s8 %v5103
        %v6360 = vunpack.c.0.s8 %v5104
        %v6361 = vunpack.c.0.s8 %v5105
        %v6362 = vunpack.c.0.s8 %v5106
        %v6363 = vunpack.c.0.s8 %v5107
        %v6364 = vunpack.c.0.s8 %v5108
        %v6365 = vunpack.c.0.s8 %v5109
        %v6366 = vunpack.c.1.s8 %v5102
        %v6367 = vunpack.c.1.s8 %v5103
        %v6368 = vunpack.c.1.s8 %v5104
        %v6369 = vunpack.c.1.s8 %v5105
        %v6370 = vunpack.c.1.s8 %v5106
        %v6371 = vunpack.c.1.s8 %v5107
        %v6372 = vunpack.c.1.s8 %v5108
        %v6373 = vunpack.c.1.s8 %v5109
        %v6374 = vunpack.c.2.s8 %v5102
        %v6375 = vunpack.c.2.s8 %v5103
        %v6376 = vunpack.c.2.s8 %v5104
        %v6377 = vunpack.c.2.s8 %v5105
        %v6378 = vunpack.c.2.s8 %v5106
        %v6379 = vunpack.c.2.s8 %v5107
        %v6380 = vunpack.c.2.s8 %v5108
        %v6381 = vunpack.c.2.s8 %v5109
        %v6382 = vunpack.c.3.s8 %v5102
        %v6383 = vunpack.c.3.s8 %v5103
        %v6384 = vunpack.c.3.s8 %v5104
        %v6385 = vunpack.c.3.s8 %v5105
        %v6386 = vunpack.c.3.s8 %v5106
        %v6387 = vunpack.c.3.s8 %v5107
        %v6388 = vunpack.c.3.s8 %v5108
        %v6389 = vunpack.c.3.s8 %v5109
        %v6390 = vcvt.s32.f32 %v5110
        %v6391 = vcvt.s32.f32 %v5111
        %v6392 = vcvt.s32.f32 %v5112
        %v6393 = vcvt.s32.f32 %v5113
        %v6394 = vcvt.s32.f32 %v5114
        %v6395 = vcvt.s32.f32 %v5115
        %v6396 = vcvt.s32.f32 %v5116
        %v6397 = vcvt.s32.f32 %v5117
        %v6398 = vcvt.s32.f32 %v5118
        %v6399 = vcvt.s32.f32 %v5119
        %v6400 = vcvt.s32.f32 %v5120
        %v6401 = vcvt.s32.f32 %v5121
        %v6402 = vcvt.s32.f32 %v5122
        %v6403 = vcvt.s32.f32 %v5123
        %v6404 = vcvt.s32.f32 %v5124
        %v6405 = vcvt.s32.f32 %v5125
        %v6406 = vcvt.s32.f32 %v5126
        %v6407 = vcvt.s32.f32 %v5127
        %v6408 = vcvt.s32.f32 %v5128
        %v6409 = vcvt.s32.f32 %v5129
        %v6410 = vcvt.s32.f32 %v5130
        %v6411 = vcvt.s32.f32 %v5131
        %v6412 = vcvt.s32.f32 %v5132
        %v6413 = vcvt.s32.f32 %v5133
        %v6414 = vcvt.s32.f32 %v5134
        %v6415 = vcvt.s32.f32 %v5135
        %v6416 = vcvt.s32.f32 %v5136
        %v6417 = vcvt.s32.f32 %v5137
        %v6418 = vcvt.s32.f32 %v5138
        %v6419 = vcvt.s32.f32 %v5139
        %v6420 = vcvt.s32.f32 %v5140
        %v6421 = vcvt.s32.f32 %v5141
        %v6422 = vcvt.s32.f32 %v5142
        %v6423 = vcvt.s32.f32 %v5143
        %v6424 = vcvt.s32.f32 %v5144
        %v6425 = vcvt.s32.f32 %v5145
        %v6426 = vcvt.s32.f32 %v5146
        %v6427 = vcvt.s32.f32 %v5147
        %v6428 = vcvt.s32.f32 %v5148
        %v6429 = vcvt.s32.f32 %v5149
        %v6430 = vcvt.s32.f32 %v5150
        %v6431 = vcvt.s32.f32 %v5151
        %v6432 = vcvt.s32.f32 %v5152
        %v6433 = vcvt.s32.f32 %v5153
        %v6434 = vcvt.s32.f32 %v5154
        %v6435 = vcvt.s32.f32 %v5155
        %v6436 = vcvt.s32.f32 %v5156
        %v6437 = vcvt.s32.f32 %v5157
        %v6438 = vcvt.s32.f32 %v5158
        %v6439 = vcvt.s32.f32 %v5159
        %v6440 = vcvt.s32.f32 %v5160
        %v6441 = vcvt.s32.f32 %v5161
        %v6442 = vcvt.s32.f32 %v5162
        %v6443 = vcvt.s32.f32 %v5163
        %v6444 = vcvt.s32.f32 %v5164
        %v6445 = vcvt.s32.f32 %v5165
        %v6446 = vcvt.s32.f32 %v5166
        %v6447 = vcvt.s32.f32 %v5167
        %v6448 = vcvt.s32.f32 %v5168
        %v6449 = vcvt.s32.f32 %v5169
        %v6450 = vcvt.s32.f32 %v5170
        %v6451 = vcvt.s32.f32 %v5171
        %v6452 = vcvt.s32.f32 %v5172
        %v6453 = vcvt.s32.f32 %v5173
        %v6454 = vcvt.s32.f32 %v5174
        %v6455 = vcvt.s32.f32 %v5175
        %v6456 = vcvt.s32.f32 %v5176
        %v6457 = vcvt.s32.f32 %v5177
        %v6458 = vcvt.s32.f32 %v5178
        %v6459 = vcvt.s32.f32 %v5179
        %v6460 = vcvt.s32.f32 %v5180
        %v6461 = vcvt.s32.f32 %v5181
        %v6462 = vcvt.s32.f32 %v5182
        %v6463 = vcvt.s32.f32 %v5183
        %v6464 = vcvt.s32.f32 %v5184
        %v6465 = vcvt.s32.f32 %v5185
        %v6466 = vcvt.s32.f32 %v5186
        %v6467 = vcvt.s32.f32 %v5187
        %v6468 = vcvt.s32.f32 %v5188
        %v6469 = vcvt.s32.f32 %v5189
        %v6470 = vcvt.s32.f32 %v5190
        %v6471 = vcvt.s32.f32 %v5191
        %v6472 = vcvt.s32.f32 %v5192
        %v6473 = vcvt.s32.f32 %v5193
        %v6474 = vcvt.s32.f32 %v5194
        %v6475 = vcvt.s32.f32 %v5195
        %v6476 = vcvt.s32.f32 %v5196
        %v6477 = vcvt.s32.f32 %v5197
        %v6478 = vcvt.s32.f32 %v5198
        %v6479 = vcvt.s32.f32 %v5199
        %v6480 = vcvt.s32.f32 %v5200
        %v6481 = vcvt.s32.f32 %v5201
        %v6482 = vcvt.s32.f32 %v5202
        %v6483 = vcvt.s32.f32 %v5203
        %v6484 = vcvt.s32.f32 %v5204
        %v6485 = vcvt.s32.f32 %v5205
        %v6486 = vcvt.s32.f32 %v5206
        %v6487 = vcvt.s32.f32 %v5207
        %v6488 = vcvt.s32.f32 %v5208
        %v6489 = vcvt.s32.f32 %v5209
        %v6490 = vcvt.s32.f32 %v5210
        %v6491 = vcvt.s32.f32 %v5211
        %v6492 = vcvt.s32.f32 %v5212
        %v6493 = vcvt.s32.f32 %v5213
        %v6494 = vcvt.s32.f32 %v5214
        %v6495 = vcvt.s32.f32 %v5215
        %v6496 = vcvt.s32.f32 %v5216
        %v6497 = vcvt.s32.f32 %v5217
        %v6498 = vcvt.s32.f32 %v5218
        %v6499 = vcvt.s32.f32 %v5219
        %v6500 = vcvt.s32.f32 %v5220
        %v6501 = vcvt.s32.f32 %v5221
        %v6502 = vcvt.s32.f32 %v5222
        %v6503 = vcvt.s32.f32 %v5223
        %v6504 = vcvt.s32.f32 %v5224
        %v6505 = vcvt.s32.f32 %v5225
        %v6506 = vcvt.s32.f32 %v5226
        %v6507 = vcvt.s32.f32 %v5227
        %v6508 = vcvt.s32.f32 %v5228
        %v6509 = vcvt.s32.f32 %v5229
        %v6510 = vcvt.s32.f32 %v5230
        %v6511 = vcvt.s32.f32 %v5231
        %v6512 = vcvt.s32.f32 %v5232
        %v6513 = vcvt.s32.f32 %v5233
        %v6514 = vcvt.s32.f32 %v5234
        %v6515 = vcvt.s32.f32 %v5235
        %v6516 = vcvt.s32.f32 %v5236
        %v6517 = vcvt.s32.f32 %v5237
        %v6518 = vcvt.s32.f32 %v5238
        %v6519 = vcvt.s32.f32 %v5239
        %v6520 = vcvt.s32.f32 %v5240
        %v6521 = vcvt.s32.f32 %v5241
        %v6522 = vcvt.s32.f32 %v5242
        %v6523 = vcvt.s32.f32 %v5243
        %v6524 = vcvt.s32.f32 %v5244
        %v6525 = vcvt.s32.f32 %v5245
        %v6526 = vcvt.s32.f32 %v5246
        %v6527 = vcvt.s32.f32 %v5247
        %v6528 = vcvt.s32.f32 %v5248
        %v6529 = vcvt.s32.f32 %v5249
        %v6530 = vcvt.s32.f32 %v5250
        %v6531 = vcvt.s32.f32 %v5251
        %v6532 = vcvt.s32.f32 %v5252
        %v6533 = vcvt.s32.f32 %v5253
        %v6534 = vcvt.s32.f32 %v5254
        %v6535 = vcvt.s32.f32 %v5255
        %v6536 = vcvt.s32.f32 %v5256
        %v6537 = vcvt.s32.f32 %v5257
        %v6538 = vcvt.s32.f32 %v5258
        %v6539 = vcvt.s32.f32 %v5259
        %v6540 = vcvt.s32.f32 %v5260
        %v6541 = vcvt.s32.f32 %v5261
        %v6542 = vcvt.s32.f32 %v5262
        %v6543 = vcvt.s32.f32 %v5263
        %v6544 = vcvt.s32.f32 %v5264
        %v6545 = vcvt.s32.f32 %v5265
        %v6546 = vcvt.s32.f32 %v5266
        %v6547 = vcvt.s32.f32 %v5267
        %v6548 = vcvt.s32.f32 %v5268
        %v6549 = vcvt.s32.f32 %v5269
        %v6550 = vcvt.s32.f32 %v5270
        %v6551 = vcvt.s32.f32 %v5271
        %v6552 = vcvt.s32.f32 %v5272
        %v6553 = vcvt.s32.f32 %v5273
        %v6554 = vcvt.s32.f32 %v5274
        %v6555 = vcvt.s32.f32 %v5275
        %v6556 = vcvt.s32.f32 %v5276
        %v6557 = vcvt.s32.f32 %v5277
        %v6558 = vcvt.s32.f32 %v5278
        %v6559 = vcvt.s32.f32 %v5279
        %v6560 = vcvt.s32.f32 %v5280
        %v6561 = vcvt.s32.f32 %v5281
        %v6562 = vcvt.s32.f32 %v5282
        %v6563 = vcvt.s32.f32 %v5283
        %v6564 = vcvt.s32.f32 %v5284
        %v6565 = vcvt.s32.f32 %v5285
        %v6566 = vcvt.s32.f32 %v5286
        %v6567 = vcvt.s32.f32 %v5287
        %v6568 = vcvt.s32.f32 %v5288
        %v6569 = vcvt.s32.f32 %v5289
        %v6570 = vcvt.s32.f32 %v5290
        %v6571 = vcvt.s32.f32 %v5291
        %v6572 = vcvt.s32.f32 %v5292
        %v6573 = vcvt.s32.f32 %v5293
        %v6574 = vcvt.s32.f32 %v5294
        %v6575 = vcvt.s32.f32 %v5295
        %v6576 = vcvt.s32.f32 %v5296
        %v6577 = vcvt.s32.f32 %v5297
        %v6578 = vcvt.s32.f32 %v5298
        %v6579 = vcvt.s32.f32 %v5299
        %v6580 = vcvt.s32.f32 %v5300
        %v6581 = vcvt.s32.f32 %v5301
        %v6582 = vcvt.s32.f32 %v5302
        %v6583 = vcvt.s32.f32 %v5303
        %v6584 = vcvt.s32.f32 %v5304
        %v6585 = vcvt.s32.f32 %v5305
        %v6586 = vcvt.s32.f32 %v5306
        %v6587 = vcvt.s32.f32 %v5307
        %v6588 = vcvt.s32.f32 %v5308
        %v6589 = vcvt.s32.f32 %v5309
        %v6590 = vcvt.s32.f32 %v5310
        %v6591 = vcvt.s32.f32 %v5311
        %v6592 = vcvt.s32.f32 %v5312
        %v6593 = vcvt.s32.f32 %v5313
        %v6594 = vcvt.s32.f32 %v5314
        %v6595 = vcvt.s32.f32 %v5315
        %v6596 = vcvt.s32.f32 %v5316
        %v6597 = vcvt.s32.f32 %v5317
        %v6598 = vcvt.s32.f32 %v5318
        %v6599 = vcvt.s32.f32 %v5319
        %v6600 = vcvt.s32.f32 %v5320
        %v6601 = vcvt.s32.f32 %v5321
        %v6602 = vcvt.s32.f32 %v5322
        %v6603 = vcvt.s32.f32 %v5323
        %v6604 = vcvt.s32.f32 %v5324
        %v6605 = vcvt.s32.f32 %v5325
        %v6606 = vcvt.s32.f32 %v5326
        %v6607 = vcvt.s32.f32 %v5327
        %v6608 = vcvt.s32.f32 %v5328
        %v6609 = vcvt.s32.f32 %v5329
        %v6610 = vcvt.s32.f32 %v5330
        %v6611 = vcvt.s32.f32 %v5331
        %v6612 = vcvt.s32.f32 %v5332
        %v6613 = vcvt.s32.f32 %v5333
        %v6614 = vcvt.s32.f32 %v5334
        %v6615 = vcvt.s32.f32 %v5335
        %v6616 = vcvt.s32.f32 %v5336
        %v6617 = vcvt.s32.f32 %v5337
        %v6618 = vcvt.s32.f32 %v5338
        %v6619 = vcvt.s32.f32 %v5339
        %v6620 = vcvt.s32.f32 %v5340
        %v6621 = vcvt.s32.f32 %v5341
        %v6622 = vcvt.s32.f32 %v5342
        %v6623 = vcvt.s32.f32 %v5343
        %v6624 = vcvt.s32.f32 %v5344
        %v6625 = vcvt.s32.f32 %v5345
        %v6626 = vcvt.s32.f32 %v5346
        %v6627 = vcvt.s32.f32 %v5347
        %v6628 = vcvt.s32.f32 %v5348
        %v6629 = vcvt.s32.f32 %v5349
        %v6630 = vcvt.s32.f32 %v5350
        %v6631 = vcvt.s32.f32 %v5351
        %v6632 = vcvt.s32.f32 %v5352
        %v6633 = vcvt.s32.f32 %v5353
        %v6634 = vcvt.s32.f32 %v5354
        %v6635 = vcvt.s32.f32 %v5355
        %v6636 = vcvt.s32.f32 %v5356
        %v6637 = vcvt.s32.f32 %v5357
        %v6638 = vcvt.s32.f32 %v5358
        %v6639 = vcvt.s32.f32 %v5359
        %v6640 = vcvt.s32.f32 %v5360
        %v6641 = vcvt.s32.f32 %v5361
        %v6642 = vcvt.s32.f32 %v5362
        %v6643 = vcvt.s32.f32 %v5363
        %v6644 = vcvt.s32.f32 %v5364
        %v6645 = vcvt.s32.f32 %v5365
        %v6646 = vcvt.s32.f32 %v5366
        %v6647 = vcvt.s32.f32 %v5367
        %v6648 = vcvt.s32.f32 %v5368
        %v6649 = vcvt.s32.f32 %v5369
        %v6650 = vcvt.s32.f32 %v5370
        %v6651 = vcvt.s32.f32 %v5371
        %v6652 = vcvt.s32.f32 %v5372
        %v6653 = vcvt.s32.f32 %v5373
        %v6654 = vcvt.s32.f32 %v5374
        %v6655 = vcvt.s32.f32 %v5375
        %v6656 = vcvt.s32.f32 %v5376
        %v6657 = vcvt.s32.f32 %v5377
        %v6658 = vcvt.s32.f32 %v5378
        %v6659 = vcvt.s32.f32 %v5379
        %v6660 = vcvt.s32.f32 %v5380
        %v6661 = vcvt.s32.f32 %v5381
        %v6662 = vcvt.s32.f32 %v5382
        %v6663 = vcvt.s32.f32 %v5383
        %v6664 = vcvt.s32.f32 %v5384
        %v6665 = vcvt.s32.f32 %v5385
        %v6666 = vcvt.s32.f32 %v5386
        %v6667 = vcvt.s32.f32 %v5387
        %v6668 = vcvt.s32.f32 %v5388
        %v6669 = vcvt.s32.f32 %v5389
        %v6670 = vcvt.s32.f32 %v5390
        %v6671 = vcvt.s32.f32 %v5391
        %v6672 = vcvt.s32.f32 %v5392
        %v6673 = vcvt.s32.f32 %v5393
        %v6674 = vcvt.s32.f32 %v5394
        %v6675 = vcvt.s32.f32 %v5395
        %v6676 = vcvt.s32.f32 %v5396
        %v6677 = vcvt.s32.f32 %v5397
        %v6678 = vcvt.s32.f32 %v5398
        %v6679 = vcvt.s32.f32 %v5399
        %v6680 = vcvt.s32.f32 %v5400
        %v6681 = vcvt.s32.f32 %v5401
        %v6682 = vcvt.s32.f32 %v5402
        %v6683 = vcvt.s32.f32 %v5403
        %v6684 = vcvt.s32.f32 %v5404
        %v6685 = vcvt.s32.f32 %v5405
        %v6686 = vcvt.s32.f32 %v5406
        %v6687 = vcvt.s32.f32 %v5407
        %v6688 = vcvt.s32.f32 %v5408
        %v6689 = vcvt.s32.f32 %v5409
        %v6690 = vcvt.s32.f32 %v5410
        %v6691 = vcvt.s32.f32 %v5411
        %v6692 = vcvt.s32.f32 %v5412
        %v6693 = vcvt.s32.f32 %v5413
        %v6694 = vcvt.s32.f32 %v5414
        %v6695 = vcvt.s32.f32 %v5415
        %v6696 = vcvt.s32.f32 %v5416
        %v6697 = vcvt.s32.f32 %v5417
        %v6698 = vcvt.s32.f32 %v5418
        %v6699 = vcvt.s32.f32 %v5419
        %v6700 = vcvt.s32.f32 %v5420
        %v6701 = vcvt.s32.f32 %v5421
        %v6702 = vcvt.s32.f32 %v5422
        %v6703 = vcvt.s32.f32 %v5423
        %v6704 = vcvt.s32.f32 %v5424
        %v6705 = vcvt.s32.f32 %v5425
        %v6706 = vcvt.s32.f32 %v5426
        %v6707 = vcvt.s32.f32 %v5427
        %v6708 = vcvt.s32.f32 %v5428
        %v6709 = vcvt.s32.f32 %v5429
        %v6710 = vcvt.s32.f32 %v5430
        %v6711 = vcvt.s32.f32 %v5431
        %v6712 = vcvt.s32.f32 %v5432
        %v6713 = vcvt.s32.f32 %v5433
        %v6714 = vcvt.s32.f32 %v5434
        %v6715 = vcvt.s32.f32 %v5435
        %v6716 = vcvt.s32.f32 %v5436
        %v6717 = vcvt.s32.f32 %v5437
        %v6718 = vcvt.s32.f32 %v5438
        %v6719 = vcvt.s32.f32 %v5439
        %v6720 = vcvt.s32.f32 %v5440
        %v6721 = vcvt.s32.f32 %v5441
        %v6722 = vcvt.s32.f32 %v5442
        %v6723 = vcvt.s32.f32 %v5443
        %v6724 = vcvt.s32.f32 %v5444
        %v6725 = vcvt.s32.f32 %v5445
        %v6726 = vcvt.s32.f32 %v5446
        %v6727 = vcvt.s32.f32 %v5447
        %v6728 = vcvt.s32.f32 %v5448
        %v6729 = vcvt.s32.f32 %v5449
        %v6730 = vcvt.s32.f32 %v5450
        %v6731 = vcvt.s32.f32 %v5451
        %v6732 = vcvt.s32.f32 %v5452
        %v6733 = vcvt.s32.f32 %v5453
        %v6734 = vcvt.s32.f32 %v5454
        %v6735 = vcvt.s32.f32 %v5455
        %v6736 = vcvt.s32.f32 %v5456
        %v6737 = vcvt.s32.f32 %v5457
        %v6738 = vcvt.s32.f32 %v5458
        %v6739 = vcvt.s32.f32 %v5459
        %v6740 = vcvt.s32.f32 %v5460
        %v6741 = vcvt.s32.f32 %v5461
        %v6742 = vcvt.s32.f32 %v5462
        %v6743 = vcvt.s32.f32 %v5463
        %v6744 = vcvt.s32.f32 %v5464
        %v6745 = vcvt.s32.f32 %v5465
        %v6746 = vcvt.s32.f32 %v5466
        %v6747 = vcvt.s32.f32 %v5467
        %v6748 = vcvt.s32.f32 %v5468
        %v6749 = vcvt.s32.f32 %v5469
        %v6750 = vcvt.s32.f32 %v5470
        %v6751 = vcvt.s32.f32 %v5471
        %v6752 = vcvt.s32.f32 %v5472
        %v6753 = vcvt.s32.f32 %v5473
        %v6754 = vcvt.s32.f32 %v5474
        %v6755 = vcvt.s32.f32 %v5475
        %v6756 = vcvt.s32.f32 %v5476
        %v6757 = vcvt.s32.f32 %v5477
        %v6758 = vcvt.s32.f32 %v5478
        %v6759 = vcvt.s32.f32 %v5479
        %v6760 = vcvt.s32.f32 %v5480
        %v6761 = vcvt.s32.f32 %v5481
        %v6762 = vcvt.s32.f32 %v5482
        %v6763 = vcvt.s32.f32 %v5483
        %v6764 = vcvt.s32.f32 %v5484
        %v6765 = vcvt.s32.f32 %v5485
        %v6766 = vcvt.s32.f32 %v5486
        %v6767 = vcvt.s32.f32 %v5487
        %v6768 = vcvt.s32.f32 %v5488
        %v6769 = vcvt.s32.f32 %v5489
        %v6770 = vcvt.s32.f32 %v5490
        %v6771 = vcvt.s32.f32 %v5491
        %v6772 = vcvt.s32.f32 %v5492
        %v6773 = vcvt.s32.f32 %v5493
        %v6774 = vcvt.s32.f32 %v5494
        %v6775 = vcvt.s32.f32 %v5495
        %v6776 = vcvt.s32.f32 %v5496
        %v6777 = vcvt.s32.f32 %v5497
        %v6778 = vcvt.s32.f32 %v5498
        %v6779 = vcvt.s32.f32 %v5499
        %v6780 = vcvt.s32.f32 %v5500
        %v6781 = vcvt.s32.f32 %v5501
        %v6782 = vcvt.s32.f32 %v5502
        %v6783 = vcvt.s32.f32 %v5503
        %v6784 = vcvt.s32.f32 %v5504
        %v6785 = vcvt.s32.f32 %v5505
        %v6786 = vcvt.s32.f32 %v5506
        %v6787 = vcvt.s32.f32 %v5507
        %v6788 = vcvt.s32.f32 %v5508
        %v6789 = vcvt.s32.f32 %v5509
        %v6790 = vcvt.s32.f32 %v5510
        %v6791 = vcvt.s32.f32 %v5511
        %v6792 = vcvt.s32.f32 %v5512
        %v6793 = vcvt.s32.f32 %v5513
        %v6794 = vcvt.s32.f32 %v5514
        %v6795 = vcvt.s32.f32 %v5515
        %v6796 = vcvt.s32.f32 %v5516
        %v6797 = vcvt.s32.f32 %v5517
        %v6798 = vcvt.s32.f32 %v5518
        %v6799 = vcvt.s32.f32 %v5519
        %v6800 = vcvt.s32.f32 %v5520
        %v6801 = vcvt.s32.f32 %v5521
        %v6802 = vcvt.s32.f32 %v5522
        %v6803 = vcvt.s32.f32 %v5523
        %v6804 = vcvt.s32.f32 %v5524
        %v6805 = vcvt.s32.f32 %v5525
        %v6806 = vcvt.s32.f32 %v5526
        %v6807 = vcvt.s32.f32 %v5527
        %v6808 = vcvt.s32.f32 %v5528
        %v6809 = vcvt.s32.f32 %v5529
        %v6810 = vcvt.s32.f32 %v5530
        %v6811 = vcvt.s32.f32 %v5531
        %v6812 = vcvt.s32.f32 %v5532
        %v6813 = vcvt.s32.f32 %v5533
        %v6814 = vcvt.s32.f32 %v5534
        %v6815 = vcvt.s32.f32 %v5535
        %v6816 = vcvt.s32.f32 %v5536
        %v6817 = vcvt.s32.f32 %v5537
        %v6818 = vcvt.s32.f32 %v5538
        %v6819 = vcvt.s32.f32 %v5539
        %v6820 = vcvt.s32.f32 %v5540
        %v6821 = vcvt.s32.f32 %v5541
        %v6822 = vcvt.s32.f32 %v5542
        %v6823 = vcvt.s32.f32 %v5543
        %v6824 = vcvt.s32.f32 %v5544
        %v6825 = vcvt.s32.f32 %v5545
        %v6826 = vcvt.s32.f32 %v5546
        %v6827 = vcvt.s32.f32 %v5547
        %v6828 = vcvt.s32.f32 %v5548
        %v6829 = vcvt.s32.f32 %v5549
        %v6830 = vcvt.s32.f32 %v5550
        %v6831 = vcvt.s32.f32 %v5551
        %v6832 = vcvt.s32.f32 %v5552
        %v6833 = vcvt.s32.f32 %v5553
        %v6834 = vcvt.s32.f32 %v5554
        %v6835 = vcvt.s32.f32 %v5555
        %v6836 = vcvt.s32.f32 %v5556
        %v6837 = vcvt.s32.f32 %v5557
        %v6838 = vcvt.s32.f32 %v5558
        %v6839 = vcvt.s32.f32 %v5559
        %v6840 = vcvt.s32.f32 %v5560
        %v6841 = vcvt.s32.f32 %v5561
        %v6842 = vcvt.s32.f32 %v5562
        %v6843 = vcvt.s32.f32 %v5563
        %v6844 = vcvt.s32.f32 %v5564
        %v6845 = vcvt.s32.f32 %v5565
        %v6846 = vcvt.s32.f32 %v5566
        %v6847 = vcvt.s32.f32 %v5567
        %v6848 = vcvt.s32.f32 %v5568
        %v6849 = vcvt.s32.f32 %v5569
        %v6850 = vcvt.s32.f32 %v5570
        %v6851 = vcvt.s32.f32 %v5571
        %v6852 = vcvt.s32.f32 %v5572
        %v6853 = vcvt.s32.f32 %v5573
        %v6854 = vcvt.s32.f32 %v5574
        %v6855 = vcvt.s32.f32 %v5575
        %v6856 = vcvt.s32.f32 %v5576
        %v6857 = vcvt.s32.f32 %v5577
        %v6858 = vcvt.s32.f32 %v5578
        %v6859 = vcvt.s32.f32 %v5579
        %v6860 = vcvt.s32.f32 %v5580
        %v6861 = vcvt.s32.f32 %v5581
        %v6862 = vcvt.s32.f32 %v5582
        %v6863 = vcvt.s32.f32 %v5583
        %v6864 = vcvt.s32.f32 %v5584
        %v6865 = vcvt.s32.f32 %v5585
        %v6866 = vcvt.s32.f32 %v5586
        %v6867 = vcvt.s32.f32 %v5587
        %v6868 = vcvt.s32.f32 %v5588
        %v6869 = vcvt.s32.f32 %v5589
        %v6870 = vcvt.s32.f32 %v5590
        %v6871 = vcvt.s32.f32 %v5591
        %v6872 = vcvt.s32.f32 %v5592
        %v6873 = vcvt.s32.f32 %v5593
        %v6874 = vcvt.s32.f32 %v5594
        %v6875 = vcvt.s32.f32 %v5595
        %v6876 = vcvt.s32.f32 %v5596
        %v6877 = vcvt.s32.f32 %v5597
        %v6878 = vcvt.s32.f32 %v5598
        %v6879 = vcvt.s32.f32 %v5599
        %v6880 = vcvt.s32.f32 %v5600
        %v6881 = vcvt.s32.f32 %v5601
        %v6882 = vcvt.s32.f32 %v5602
        %v6883 = vcvt.s32.f32 %v5603
        %v6884 = vcvt.s32.f32 %v5604
        %v6885 = vcvt.s32.f32 %v5605
        %v6886 = vcvt.s32.f32 %v5606
        %v6887 = vcvt.s32.f32 %v5607
        %v6888 = vcvt.s32.f32 %v5608
        %v6889 = vcvt.s32.f32 %v5609
        %v6890 = vcvt.s32.f32 %v5610
        %v6891 = vcvt.s32.f32 %v5611
        %v6892 = vcvt.s32.f32 %v5612
        %v6893 = vcvt.s32.f32 %v5613
        %v6894 = vcvt.s32.f32 %v5614
        %v6895 = vcvt.s32.f32 %v5615
        %v6896 = vcvt.s32.f32 %v5616
        %v6897 = vcvt.s32.f32 %v5617
        %v6898 = vcvt.s32.f32 %v5618
        %v6899 = vcvt.s32.f32 %v5619
        %v6900 = vcvt.s32.f32 %v5620
        %v6901 = vcvt.s32.f32 %v5621
        %v6902 = vcvt.s32.f32 %v5622
        %v6903 = vcvt.s32.f32 %v5623
        %v6904 = vcvt.s32.f32 %v5624
        %v6905 = vcvt.s32.f32 %v5625
        %v6906 = vcvt.s32.f32 %v5626
        %v6907 = vcvt.s32.f32 %v5627
        %v6908 = vcvt.s32.f32 %v5628
        %v6909 = vcvt.s32.f32 %v5629
        %v6910 = vcvt.s32.f32 %v5630
        %v6911 = vcvt.s32.f32 %v5631
        %v6912 = vcvt.s32.f32 %v5632
        %v6913 = vcvt.s32.f32 %v5633
        %v6914 = vcvt.s32.f32 %v5634
        %v6915 = vcvt.s32.f32 %v5635
        %v6916 = vcvt.s32.f32 %v5636
        %v6917 = vcvt.s32.f32 %v5637
        %v6918 = vcvt.s32.f32 %v5638
        %v6919 = vcvt.s32.f32 %v5639
        %v6920 = vcvt.s32.f32 %v5640
        %v6921 = vcvt.s32.f32 %v5641
        %v6922 = vcvt.s32.f32 %v5642
        %v6923 = vcvt.s32.f32 %v5643
        %v6924 = vcvt.s32.f32 %v5644
        %v6925 = vcvt.s32.f32 %v5645
        %v6926 = vcvt.s32.f32 %v5646
        %v6927 = vcvt.s32.f32 %v5647
        %v6928 = vcvt.s32.f32 %v5648
        %v6929 = vcvt.s32.f32 %v5649
        %v6930 = vcvt.s32.f32 %v5650
        %v6931 = vcvt.s32.f32 %v5651
        %v6932 = vcvt.s32.f32 %v5652
        %v6933 = vcvt.s32.f32 %v5653
        %v6934 = vcvt.s32.f32 %v5654
        %v6935 = vcvt.s32.f32 %v5655
        %v6936 = vcvt.s32.f32 %v5656
        %v6937 = vcvt.s32.f32 %v5657
        %v6938 = vcvt.s32.f32 %v5658
        %v6939 = vcvt.s32.f32 %v5659
        %v6940 = vcvt.s32.f32 %v5660
        %v6941 = vcvt.s32.f32 %v5661
        %v6942 = vcvt.s32.f32 %v5662
        %v6943 = vcvt.s32.f32 %v5663
        %v6944 = vcvt.s32.f32 %v5664
        %v6945 = vcvt.s32.f32 %v5665
        %v6946 = vcvt.s32.f32 %v5666
        %v6947 = vcvt.s32.f32 %v5667
        %v6948 = vcvt.s32.f32 %v5668
        %v6949 = vcvt.s32.f32 %v5669
        %v6950 = vcvt.s32.f32 %v5670
        %v6951 = vcvt.s32.f32 %v5671
        %v6952 = vcvt.s32.f32 %v5672
        %v6953 = vcvt.s32.f32 %v5673
        %v6954 = vcvt.s32.f32 %v5674
        %v6955 = vcvt.s32.f32 %v5675
        %v6956 = vcvt.s32.f32 %v5676
        %v6957 = vcvt.s32.f32 %v5677
        %v6958 = vcvt.s32.f32 %v5678
        %v6959 = vcvt.s32.f32 %v5679
        %v6960 = vcvt.s32.f32 %v5680
        %v6961 = vcvt.s32.f32 %v5681
        %v6962 = vcvt.s32.f32 %v5682
        %v6963 = vcvt.s32.f32 %v5683
        %v6964 = vcvt.s32.f32 %v5684
        %v6965 = vcvt.s32.f32 %v5685
        %v6966 = vcvt.s32.f32 %v5686
        %v6967 = vcvt.s32.f32 %v5687
        %v6968 = vcvt.s32.f32 %v5688
        %v6969 = vcvt.s32.f32 %v5689
        %v6970 = vcvt.s32.f32 %v5690
        %v6971 = vcvt.s32.f32 %v5691
        %v6972 = vcvt.s32.f32 %v5692
        %v6973 = vcvt.s32.f32 %v5693
        %v6974 = vcvt.s32.f32 %v5694
        %v6975 = vcvt.s32.f32 %v5695
        %v6976 = vcvt.s32.f32 %v5696
        %v6977 = vcvt.s32.f32 %v5697
        %v6978 = vcvt.s32.f32 %v5698
        %v6979 = vcvt.s32.f32 %v5699
        %v6980 = vcvt.s32.f32 %v5700
        %v6981 = vcvt.s32.f32 %v5701
        %v6982 = vcvt.s32.f32 %v5702
        %v6983 = vcvt.s32.f32 %v5703
        %v6984 = vcvt.s32.f32 %v5704
        %v6985 = vcvt.s32.f32 %v5705
        %v6986 = vcvt.s32.f32 %v5706
        %v6987 = vcvt.s32.f32 %v5707
        %v6988 = vcvt.s32.f32 %v5708
        %v6989 = vcvt.s32.f32 %v5709
        %v6990 = vcvt.s32.f32 %v5710
        %v6991 = vcvt.s32.f32 %v5711
        %v6992 = vcvt.s32.f32 %v5712
        %v6993 = vcvt.s32.f32 %v5713
        %v6994 = vcvt.s32.f32 %v5714
        %v6995 = vcvt.s32.f32 %v5715
        %v6996 = vcvt.s32.f32 %v5716
        %v6997 = vcvt.s32.f32 %v5717
        %v6998 = vcvt.s32.f32 %v5718
        %v6999 = vcvt.s32.f32 %v5719
        %v7000 = vcvt.s32.f32 %v5720
        %v7001 = vcvt.s32.f32 %v5721
        %v7002 = vcvt.s32.f32 %v5722
        %v7003 = vcvt.s32.f32 %v5723
        %v7004 = vcvt.s32.f32 %v5724
        %v7005 = vcvt.s32.f32 %v5725
        %v7006 = vcvt.s32.f32 %v5726
        %v7007 = vcvt.s32.f32 %v5727
        %v7008 = vcvt.s32.f32 %v5728
        %v7009 = vcvt.s32.f32 %v5729
        %v7010 = vcvt.s32.f32 %v5730
        %v7011 = vcvt.s32.f32 %v5731
        %v7012 = vcvt.s32.f32 %v5732
        %v7013 = vcvt.s32.f32 %v5733
        %v7014 = vcvt.s32.f32 %v5734
        %v7015 = vcvt.s32.f32 %v5735
        %v7016 = vcvt.s32.f32 %v5736
        %v7017 = vcvt.s32.f32 %v5737
        %v7018 = vcvt.s32.f32 %v5738
        %v7019 = vcvt.s32.f32 %v5739
        %v7020 = vcvt.s32.f32 %v5740
        %v7021 = vcvt.s32.f32 %v5741
        %v7022 = vcvt.s32.f32 %v5742
        %v7023 = vcvt.s32.f32 %v5743
        %v7024 = vcvt.s32.f32 %v5744
        %v7025 = vcvt.s32.f32 %v5745
        %v7026 = vcvt.s32.f32 %v5746
        %v7027 = vcvt.s32.f32 %v5747
        %v7028 = vcvt.s32.f32 %v5748
        %v7029 = vcvt.s32.f32 %v5749
        %v7030 = vcvt.s32.f32 %v5750
        %v7031 = vcvt.s32.f32 %v5751
        %v7032 = vcvt.s32.f32 %v5752
        %v7033 = vcvt.s32.f32 %v5753
        %v7034 = vcvt.s32.f32 %v5754
        %v7035 = vcvt.s32.f32 %v5755
        %v7036 = vcvt.s32.f32 %v5756
        %v7037 = vcvt.s32.f32 %v5757
        %v7038 = vcvt.s32.f32 %v5758
        %v7039 = vcvt.s32.f32 %v5759
        %v7040 = vcvt.s32.f32 %v5760
        %v7041 = vcvt.s32.f32 %v5761
        %v7042 = vcvt.s32.f32 %v5762
        %v7043 = vcvt.s32.f32 %v5763
        %v7044 = vcvt.s32.f32 %v5764
        %v7045 = vcvt.s32.f32 %v5765
        %v7046 = vcvt.s32.f32 %v5766
        %v7047 = vcvt.s32.f32 %v5767
        %v7048 = vcvt.s32.f32 %v5768
        %v7049 = vcvt.s32.f32 %v5769
        %v7050 = vcvt.s32.f32 %v5770
        %v7051 = vcvt.s32.f32 %v5771
        %v7052 = vcvt.s32.f32 %v5772
        %v7053 = vcvt.s32.f32 %v5773
        %v7054 = vcvt.s32.f32 %v5774
        %v7055 = vcvt.s32.f32 %v5775
        %v7056 = vcvt.s32.f32 %v5776
        %v7057 = vcvt.s32.f32 %v5777
        %v7058 = vcvt.s32.f32 %v5778
        %v7059 = vcvt.s32.f32 %v5779
        %v7060 = vcvt.s32.f32 %v5780
        %v7061 = vcvt.s32.f32 %v5781
        %v7062 = vcvt.s32.f32 %v5782
        %v7063 = vcvt.s32.f32 %v5783
        %v7064 = vcvt.s32.f32 %v5784
        %v7065 = vcvt.s32.f32 %v5785
        %v7066 = vcvt.s32.f32 %v5786
        %v7067 = vcvt.s32.f32 %v5787
        %v7068 = vcvt.s32.f32 %v5788
        %v7069 = vcvt.s32.f32 %v5789
        %v7070 = vcvt.s32.f32 %v5790
        %v7071 = vcvt.s32.f32 %v5791
        %v7072 = vcvt.s32.f32 %v5792
        %v7073 = vcvt.s32.f32 %v5793
        %v7074 = vcvt.s32.f32 %v5794
        %v7075 = vcvt.s32.f32 %v5795
        %v7076 = vcvt.s32.f32 %v5796
        %v7077 = vcvt.s32.f32 %v5797
        %v7078 = vcvt.s32.f32 %v5798
        %v7079 = vcvt.s32.f32 %v5799
        %v7080 = vcvt.s32.f32 %v5800
        %v7081 = vcvt.s32.f32 %v5801
        %v7082 = vcvt.s32.f32 %v5802
        %v7083 = vcvt.s32.f32 %v5803
        %v7084 = vcvt.s32.f32 %v5804
        %v7085 = vcvt.s32.f32 %v5805
        %v7086 = vcvt.s32.f32 %v5806
        %v7087 = vcvt.s32.f32 %v5807
        %v7088 = vcvt.s32.f32 %v5808
        %v7089 = vcvt.s32.f32 %v5809
        %v7090 = vcvt.s32.f32 %v5810
        %v7091 = vcvt.s32.f32 %v5811
        %v7092 = vcvt.s32.f32 %v5812
        %v7093 = vcvt.s32.f32 %v5813
        %v7094 = vcvt.s32.f32 %v5814
        %v7095 = vcvt.s32.f32 %v5815
        %v7096 = vcvt.s32.f32 %v5816
        %v7097 = vcvt.s32.f32 %v5817
        %v7098 = vcvt.s32.f32 %v5818
        %v7099 = vcvt.s32.f32 %v5819
        %v7100 = vcvt.s32.f32 %v5820
        %v7101 = vcvt.s32.f32 %v5821
        %v7102 = vcvt.s32.f32 %v5822
        %v7103 = vcvt.s32.f32 %v5823
        %v7104 = vcvt.s32.f32 %v5824
        %v7105 = vcvt.s32.f32 %v5825
        %v7106 = vcvt.s32.f32 %v5826
        %v7107 = vcvt.s32.f32 %v5827
        %v7108 = vcvt.s32.f32 %v5828
        %v7109 = vcvt.s32.f32 %v5829
        %v7110 = vcvt.s32.f32 %v5830
        %v7111 = vcvt.s32.f32 %v5831
        %v7112 = vcvt.s32.f32 %v5832
        %v7113 = vcvt.s32.f32 %v5833
        %v7114 = vcvt.s32.f32 %v5834
        %v7115 = vcvt.s32.f32 %v5835
        %v7116 = vcvt.s32.f32 %v5836
        %v7117 = vcvt.s32.f32 %v5837
        %v7118 = vcvt.s32.f32 %v5838
        %v7119 = vcvt.s32.f32 %v5839
        %v7120 = vcvt.s32.f32 %v5840
        %v7121 = vcvt.s32.f32 %v5841
        %v7122 = vcvt.s32.f32 %v5842
        %v7123 = vcvt.s32.f32 %v5843
        %v7124 = vcvt.s32.f32 %v5844
        %v7125 = vcvt.s32.f32 %v5845
        %v7126 = vcvt.s32.f32 %v5846
        %v7127 = vcvt.s32.f32 %v5847
        %v7128 = vcvt.s32.f32 %v5848
        %v7129 = vcvt.s32.f32 %v5849
        %v7130 = vcvt.s32.f32 %v5850
        %v7131 = vcvt.s32.f32 %v5851
        %v7132 = vcvt.s32.f32 %v5852
        %v7133 = vcvt.s32.f32 %v5853
        %v7134 = vcvt.s32.f32 %v5854
        %v7135 = vcvt.s32.f32 %v5855
        %v7136 = vcvt.s32.f32 %v5856
        %v7137 = vcvt.s32.f32 %v5857
        %v7138 = vcvt.s32.f32 %v5858
        %v7139 = vcvt.s32.f32 %v5859
        %v7140 = vcvt.s32.f32 %v5860
        %v7141 = vcvt.s32.f32 %v5861
        %v7142 = vcvt.s32.f32 %v5862
        %v7143 = vcvt.s32.f32 %v5863
        %v7144 = vcvt.s32.f32 %v5864
        %v7145 = vcvt.s32.f32 %v5865
        %v7146 = vcvt.s32.f32 %v5866
        %v7147 = vcvt.s32.f32 %v5867
        %v7148 = vcvt.s32.f32 %v5868
        %v7149 = vcvt.s32.f32 %v5869
        %v7150 = vcvt.s32.f32 %v5870
        %v7151 = vcvt.s32.f32 %v5871
        %v7152 = vcvt.s32.f32 %v5872
        %v7153 = vcvt.s32.f32 %v5873
        %v7154 = vcvt.s32.f32 %v5874
        %v7155 = vcvt.s32.f32 %v5875
        %v7156 = vcvt.s32.f32 %v5876
        %v7157 = vcvt.s32.f32 %v5877
        %v7158 = vcvt.s32.f32 %v5878
        %v7159 = vcvt.s32.f32 %v5879
        %v7160 = vcvt.s32.f32 %v5880
        %v7161 = vcvt.s32.f32 %v5881
        %v7162 = vcvt.s32.f32 %v5882
        %v7163 = vcvt.s32.f32 %v5883
        %v7164 = vcvt.s32.f32 %v5884
        %v7165 = vcvt.s32.f32 %v5885
        %v7166 = vcvt.s32.f32 %v5886
        %v7167 = vcvt.s32.f32 %v5887
        %v7168 = vcvt.s32.f32 %v5888
        %v7169 = vcvt.s32.f32 %v5889
        %v7170 = vcvt.s32.f32 %v5890
        %v7171 = vcvt.s32.f32 %v5891
        %v7172 = vcvt.s32.f32 %v5892
        %v7173 = vcvt.s32.f32 %v5893
        %v7174 = vcvt.s32.f32 %v5894
        %v7175 = vcvt.s32.f32 %v5895
        %v7176 = vcvt.s32.f32 %v5896
        %v7177 = vcvt.s32.f32 %v5897
        %v7178 = vcvt.s32.f32 %v5898
        %v7179 = vcvt.s32.f32 %v5899
        %v7180 = vcvt.s32.f32 %v5900
        %v7181 = vcvt.s32.f32 %v5901
        %v7182 = vcvt.s32.f32 %v5902
        %v7183 = vcvt.s32.f32 %v5903
        %v7184 = vcvt.s32.f32 %v5904
        %v7185 = vcvt.s32.f32 %v5905
        %v7186 = vcvt.s32.f32 %v5906
        %v7187 = vcvt.s32.f32 %v5907
        %v7188 = vcvt.s32.f32 %v5908
        %v7189 = vcvt.s32.f32 %v5909
        %v7190 = vcvt.s32.f32 %v5910
        %v7191 = vcvt.s32.f32 %v5911
        %v7192 = vcvt.s32.f32 %v5912
        %v7193 = vcvt.s32.f32 %v5913
        %v7194 = vcvt.s32.f32 %v5914
        %v7195 = vcvt.s32.f32 %v5915
        %v7196 = vcvt.s32.f32 %v5916
        %v7197 = vcvt.s32.f32 %v5917
        %v7198 = vcvt.s32.f32 %v5918
        %v7199 = vcvt.s32.f32 %v5919
        %v7200 = vcvt.s32.f32 %v5920
        %v7201 = vcvt.s32.f32 %v5921
        %v7202 = vcvt.s32.f32 %v5922
        %v7203 = vcvt.s32.f32 %v5923
        %v7204 = vcvt.s32.f32 %v5924
        %v7205 = vcvt.s32.f32 %v5925
        %v7206 = vcvt.s32.f32 %v5926
        %v7207 = vcvt.s32.f32 %v5927
        %v7208 = vcvt.s32.f32 %v5928
        %v7209 = vcvt.s32.f32 %v5929
        %v7210 = vcvt.s32.f32 %v5930
        %v7211 = vcvt.s32.f32 %v5931
        %v7212 = vcvt.s32.f32 %v5932
        %v7213 = vcvt.s32.f32 %v5933
        %v7214 = vcvt.s32.f32 %v5934
        %v7215 = vcvt.s32.f32 %v5935
        %v7216 = vcvt.s32.f32 %v5936
        %v7217 = vcvt.s32.f32 %v5937
        %v7218 = vcvt.s32.f32 %v5938
        %v7219 = vcvt.s32.f32 %v5939
        %v7220 = vcvt.s32.f32 %v5940
        %v7221 = vcvt.s32.f32 %v5941
        %v7222 = vcvt.s32.f32 %v5942
        %v7223 = vcvt.s32.f32 %v5943
        %v7224 = vcvt.s32.f32 %v5944
        %v7225 = vcvt.s32.f32 %v5945
        %v7226 = vcvt.s32.f32 %v5946
        %v7227 = vcvt.s32.f32 %v5947
        %v7228 = vcvt.s32.f32 %v5948
        %v7229 = vcvt.s32.f32 %v5949
        %v7230 = vcvt.s32.f32 %v5950
        %v7231 = vcvt.s32.f32 %v5951
        %v7232 = vcvt.s32.f32 %v5952
        %v7233 = vcvt.s32.f32 %v5953
        %v7234 = vcvt.s32.f32 %v5954
        %v7235 = vcvt.s32.f32 %v5955
        %v7236 = vcvt.s32.f32 %v5956
        %v7237 = vcvt.s32.f32 %v5957
        %v7238 = vcvt.s32.f32 %v5958
        %v7239 = vcvt.s32.f32 %v5959
        %v7240 = vcvt.s32.f32 %v5960
        %v7241 = vcvt.s32.f32 %v5961
        %v7242 = vcvt.s32.f32 %v5962
        %v7243 = vcvt.s32.f32 %v5963
        %v7244 = vcvt.s32.f32 %v5964
        %v7245 = vcvt.s32.f32 %v5965
        %v7246 = vcvt.s32.f32 %v5966
        %v7247 = vcvt.s32.f32 %v5967
        %v7248 = vcvt.s32.f32 %v5968
        %v7249 = vcvt.s32.f32 %v5969
        %v7250 = vcvt.s32.f32 %v5970
        %v7251 = vcvt.s32.f32 %v5971
        %v7252 = vcvt.s32.f32 %v5972
        %v7253 = vcvt.s32.f32 %v5973
        %v7254 = vcvt.s32.f32 %v5974
        %v7255 = vcvt.s32.f32 %v5975
        %v7256 = vcvt.s32.f32 %v5976
        %v7257 = vcvt.s32.f32 %v5977
        %v7258 = vcvt.s32.f32 %v5978
        %v7259 = vcvt.s32.f32 %v5979
        %v7260 = vcvt.s32.f32 %v5980
        %v7261 = vcvt.s32.f32 %v5981
        %v7262 = vcvt.s32.f32 %v5982
        %v7263 = vcvt.s32.f32 %v5983
        %v7264 = vcvt.s32.f32 %v5984
        %v7265 = vcvt.s32.f32 %v5985
        %v7266 = vcvt.s32.f32 %v5986
        %v7267 = vcvt.s32.f32 %v5987
        %v7268 = vcvt.s32.f32 %v5988
        %v7269 = vcvt.s32.f32 %v5989
        %v7270 = vcvt.s32.f32 %v5990
        %v7271 = vcvt.s32.f32 %v5991
        %v7272 = vcvt.s32.f32 %v5992
        %v7273 = vcvt.s32.f32 %v5993
        %v7274 = vcvt.s32.f32 %v5994
        %v7275 = vcvt.s32.f32 %v5995
        %v7276 = vcvt.s32.f32 %v5996
        %v7277 = vcvt.s32.f32 %v5997
        %v7278 = vcvt.s32.f32 %v5998
        %v7279 = vcvt.s32.f32 %v5999
        %v7280 = vcvt.s32.f32 %v6000
        %v7281 = vcvt.s32.f32 %v6001
        %v7282 = vcvt.s32.f32 %v6002
        %v7283 = vcvt.s32.f32 %v6003
        %v7284 = vcvt.s32.f32 %v6004
        %v7285 = vcvt.s32.f32 %v6005
        %v7286 = vcvt.s32.f32 %v6006
        %v7287 = vcvt.s32.f32 %v6007
        %v7288 = vcvt.s32.f32 %v6008
        %v7289 = vcvt.s32.f32 %v6009
        %v7290 = vcvt.s32.f32 %v6010
        %v7291 = vcvt.s32.f32 %v6011
        %v7292 = vcvt.s32.f32 %v6012
        %v7293 = vcvt.s32.f32 %v6013
        %v7294 = vcvt.s32.f32 %v6014
        %v7295 = vcvt.s32.f32 %v6015
        %v7296 = vcvt.s32.f32 %v6016
        %v7297 = vcvt.s32.f32 %v6017
        %v7298 = vcvt.s32.f32 %v6018
        %v7299 = vcvt.s32.f32 %v6019
        %v7300 = vcvt.s32.f32 %v6020
        %v7301 = vcvt.s32.f32 %v6021
        %v7302 = vcvt.s32.f32 %v6022
        %v7303 = vcvt.s32.f32 %v6023
        %v7304 = vcvt.s32.f32 %v6024
        %v7305 = vcvt.s32.f32 %v6025
        %v7306 = vcvt.s32.f32 %v6026
        %v7307 = vcvt.s32.f32 %v6027
        %v7308 = vcvt.s32.f32 %v6028
        %v7309 = vcvt.s32.f32 %v6029
        %v7310 = vcvt.s32.f32 %v6030
        %v7311 = vcvt.s32.f32 %v6031
        %v7312 = vcvt.s32.f32 %v6032
        %v7313 = vcvt.s32.f32 %v6033
        %v7314 = vcvt.s32.f32 %v6034
        %v7315 = vcvt.s32.f32 %v6035
        %v7316 = vcvt.s32.f32 %v6036
        %v7317 = vcvt.s32.f32 %v6037
        %v7318 = vcvt.s32.f32 %v6038
        %v7319 = vcvt.s32.f32 %v6039
        %v7320 = vcvt.s32.f32 %v6040
        %v7321 = vcvt.s32.f32 %v6041
        %v7322 = vcvt.s32.f32 %v6042
        %v7323 = vcvt.s32.f32 %v6043
        %v7324 = vcvt.s32.f32 %v6044
        %v7325 = vcvt.s32.f32 %v6045
        %v7326 = vcvt.s32.f32 %v6046
        %v7327 = vcvt.s32.f32 %v6047
        %v7328 = vcvt.s32.f32 %v6048
        %v7329 = vcvt.s32.f32 %v6049
        %v7330 = vcvt.s32.f32 %v6050
        %v7331 = vcvt.s32.f32 %v6051
        %v7332 = vcvt.s32.f32 %v6052
        %v7333 = vcvt.s32.f32 %v6053
        %v7334 = vcvt.s32.f32 %v6054
        %v7335 = vcvt.s32.f32 %v6055
        %v7336 = vcvt.s32.f32 %v6056
        %v7337 = vcvt.s32.f32 %v6057
        %v7338 = vcvt.s32.f32 %v6058
        %v7339 = vcvt.s32.f32 %v6059
        %v7340 = vcvt.s32.f32 %v6060
        %v7341 = vcvt.s32.f32 %v6061
        %v7342 = vcvt.s32.f32 %v6062
        %v7343 = vcvt.s32.f32 %v6063
        %v7344 = vcvt.s32.f32 %v6064
        %v7345 = vcvt.s32.f32 %v6065
        %v7346 = vcvt.s32.f32 %v6066
        %v7347 = vcvt.s32.f32 %v6067
        %v7348 = vcvt.s32.f32 %v6068
        %v7349 = vcvt.s32.f32 %v6069
        %v7350 = vcvt.s32.f32 %v6070
        %v7351 = vcvt.s32.f32 %v6071
        %v7352 = vcvt.s32.f32 %v6072
        %v7353 = vcvt.s32.f32 %v6073
        %v7354 = vcvt.s32.f32 %v6074
        %v7355 = vcvt.s32.f32 %v6075
        %v7356 = vcvt.s32.f32 %v6076
        %v7357 = vcvt.s32.f32 %v6077
        %v7358 = vcvt.s32.f32 %v6078
        %v7359 = vcvt.s32.f32 %v6079
        %v7360 = vcvt.s32.f32 %v6080
        %v7361 = vcvt.s32.f32 %v6081
        %v7362 = vcvt.s32.f32 %v6082
        %v7363 = vcvt.s32.f32 %v6083
        %v7364 = vcvt.s32.f32 %v6084
        %v7365 = vcvt.s32.f32 %v6085
        %v7366 = vcvt.s32.f32 %v6086
        %v7367 = vcvt.s32.f32 %v6087
        %v7368 = vcvt.s32.f32 %v6088
        %v7369 = vcvt.s32.f32 %v6089
        %v7370 = vcvt.s32.f32 %v6090
        %v7371 = vcvt.s32.f32 %v6091
        %v7372 = vcvt.s32.f32 %v6092
        %v7373 = vcvt.s32.f32 %v6093
        %v7374 = vcvt.s32.f32 %v6094
        %v7375 = vcvt.s32.f32 %v6095
        %v7376 = vcvt.s32.f32 %v6096
        %v7377 = vcvt.s32.f32 %v6097
        %v7378 = vcvt.s32.f32 %v6098
        %v7379 = vcvt.s32.f32 %v6099
        %v7380 = vcvt.s32.f32 %v6100
        %v7381 = vcvt.s32.f32 %v6101
        %v7382 = vcvt.s32.f32 %v6102
        %v7383 = vcvt.s32.f32 %v6103
        %v7384 = vcvt.s32.f32 %v6104
        %v7385 = vcvt.s32.f32 %v6105
        %v7386 = vcvt.s32.f32 %v6106
        %v7387 = vcvt.s32.f32 %v6107
        %v7388 = vcvt.s32.f32 %v6108
        %v7389 = vcvt.s32.f32 %v6109
        %v7390 = vcvt.s32.f32 %v6110
        %v7391 = vcvt.s32.f32 %v6111
        %v7392 = vcvt.s32.f32 %v6112
        %v7393 = vcvt.s32.f32 %v6113
        %v7394 = vcvt.s32.f32 %v6114
        %v7395 = vcvt.s32.f32 %v6115
        %v7396 = vcvt.s32.f32 %v6116
        %v7397 = vcvt.s32.f32 %v6117
        %v7398 = vcvt.s32.f32 %v6118
        %v7399 = vcvt.s32.f32 %v6119
        %v7400 = vcvt.s32.f32 %v6120
        %v7401 = vcvt.s32.f32 %v6121
        %v7402 = vcvt.s32.f32 %v6122
        %v7403 = vcvt.s32.f32 %v6123
        %v7404 = vcvt.s32.f32 %v6124
        %v7405 = vcvt.s32.f32 %v6125
        %v7406 = vcvt.s32.f32 %v6126
        %v7407 = vcvt.s32.f32 %v6127
        %v7408 = vcvt.s32.f32 %v6128
        %v7409 = vcvt.s32.f32 %v6129
        %v7410 = vcvt.s32.f32 %v6130
        %v7411 = vcvt.s32.f32 %v6131
        %v7412 = vcvt.s32.f32 %v6132
        %v7413 = vcvt.s32.f32 %v6133
        %v7414 = vcvt.s32.f32 %v6134
        %v7415 = vcvt.s32.f32 %v6135
        %v7416 = vcvt.s32.f32 %v6136
        %v7417 = vcvt.s32.f32 %v6137
        %v7418 = vcvt.s32.f32 %v6138
        %v7419 = vcvt.s32.f32 %v6139
        %v7420 = vcvt.s32.f32 %v6140
        %v7421 = vcvt.s32.f32 %v6141
        %v7422 = vcvt.s32.f32 %v6142
        %v7423 = vcvt.s32.f32 %v6143
        %v7424 = vcvt.s32.f32 %v6144
        %v7425 = vcvt.s32.f32 %v6145
        %v7426 = vcvt.s32.f32 %v6146
        %v7427 = vcvt.s32.f32 %v6147
        %v7428 = vcvt.s32.f32 %v6148
        %v7429 = vcvt.s32.f32 %v6149
        %v7430 = vcvt.s32.f32 %v6150
        %v7431 = vcvt.s32.f32 %v6151
        %v7432 = vcvt.s32.f32 %v6152
        %v7433 = vcvt.s32.f32 %v6153
        %v7434 = vcvt.s32.f32 %v6154
        %v7435 = vcvt.s32.f32 %v6155
        %v7436 = vcvt.s32.f32 %v6156
        %v7437 = vcvt.s32.f32 %v6157
        %v7438 = vcvt.s32.f32 %v6158
        %v7439 = vcvt.s32.f32 %v6159
        %v7440 = vcvt.s32.f32 %v6160
        %v7441 = vcvt.s32.f32 %v6161
        %v7442 = vcvt.s32.f32 %v6162
        %v7443 = vcvt.s32.f32 %v6163
        %v7444 = vcvt.s32.f32 %v6164
        %v7445 = vcvt.s32.f32 %v6165
        %v7446 = vcvt.s32.f32 %v6166
        %v7447 = vcvt.s32.f32 %v6167
        %v7448 = vcvt.s32.f32 %v6168
        %v7449 = vcvt.s32.f32 %v6169
        %v7450 = vcvt.s32.f32 %v6170
        %v7451 = vcvt.s32.f32 %v6171
        %v7452 = vcvt.s32.f32 %v6172
        %v7453 = vcvt.s32.f32 %v6173
        %v7454 = vcvt.s32.f32 %v6174
        %v7455 = vcvt.s32.f32 %v6175
        %v7456 = vcvt.s32.f32 %v6176
        %v7457 = vcvt.s32.f32 %v6177
        %v7458 = vcvt.s32.f32 %v6178
        %v7459 = vcvt.s32.f32 %v6179
        %v7460 = vcvt.s32.f32 %v6180
        %v7461 = vcvt.s32.f32 %v6181
        %v7462 = vcvt.s32.f32 %v6182
        %v7463 = vcvt.s32.f32 %v6183
        %v7464 = vcvt.s32.f32 %v6184
        %v7465 = vcvt.s32.f32 %v6185
        %v7466 = vcvt.s32.f32 %v6186
        %v7467 = vcvt.s32.f32 %v6187
        %v7468 = vcvt.s32.f32 %v6188
        %v7469 = vcvt.s32.f32 %v6189
        %v7470 = vcvt.s32.f32 %v6190
        %v7471 = vcvt.s32.f32 %v6191
        %v7472 = vcvt.s32.f32 %v6192
        %v7473 = vcvt.s32.f32 %v6193
        %v7474 = vcvt.s32.f32 %v6194
        %v7475 = vcvt.s32.f32 %v6195
        %v7476 = vcvt.s32.f32 %v6196
        %v7477 = vcvt.s32.f32 %v6197
        %v7478 = vcvt.s32.f32 %v6198
        %v7479 = vcvt.s32.f32 %v6199
        %v7480 = vcvt.s32.f32 %v6200
        %v7481 = vcvt.s32.f32 %v6201
        %v7482 = vcvt.s32.f32 %v6202
        %v7483 = vcvt.s32.f32 %v6203
        %v7484 = vcvt.s32.f32 %v6204
        %v7485 = vcvt.s32.f32 %v6205
        %v7486 = vcvt.s32.f32 %v6206
        %v7487 = vcvt.s32.f32 %v6207
        %v7488 = vcvt.s32.f32 %v6208
        %v7489 = vcvt.s32.f32 %v6209
        %v7490 = vcvt.s32.f32 %v6210
        %v7491 = vcvt.s32.f32 %v6211
        %v7492 = vcvt.s32.f32 %v6212
        %v7493 = vcvt.s32.f32 %v6213
        %v7494 = vcvt.s32.f32 %v6214
        %v7495 = vcvt.s32.f32 %v6215
        %v7496 = vcvt.s32.f32 %v6216
        %v7497 = vcvt.s32.f32 %v6217
        %v7498 = vcvt.s32.f32 %v6218
        %v7499 = vcvt.s32.f32 %v6219
        %v7500 = vcvt.s32.f32 %v6220
        %v7501 = vcvt.s32.f32 %v6221
        %v7502 = vcvt.s32.f32 %v6222
        %v7503 = vcvt.s32.f32 %v6223
        %v7504 = vcvt.s32.f32 %v6224
        %v7505 = vcvt.s32.f32 %v6225
        %v7506 = vcvt.s32.f32 %v6226
        %v7507 = vcvt.s32.f32 %v6227
        %v7508 = vcvt.s32.f32 %v6228
        %v7509 = vcvt.s32.f32 %v6229
        %v7510 = vcvt.s32.f32 %v6230
        %v7511 = vcvt.s32.f32 %v6231
        %v7512 = vcvt.s32.f32 %v6232
        %v7513 = vcvt.s32.f32 %v6233
        %v7514 = vcvt.s32.f32 %v6234
        %v7515 = vcvt.s32.f32 %v6235
        %v7516 = vcvt.s32.f32 %v6236
        %v7517 = vcvt.s32.f32 %v6237
        %v7518 = vcvt.s32.f32 %v6238
        %v7519 = vcvt.s32.f32 %v6239
        %v7520 = vcvt.s32.f32 %v6240
        %v7521 = vcvt.s32.f32 %v6241
        %v7522 = vcvt.s32.f32 %v6242
        %v7523 = vcvt.s32.f32 %v6243
        %v7524 = vcvt.s32.f32 %v6244
        %v7525 = vcvt.s32.f32 %v6245
        %v7526 = vcvt.s32.f32 %v6246
        %v7527 = vcvt.s32.f32 %v6247
        %v7528 = vcvt.s32.f32 %v6248
        %v7529 = vcvt.s32.f32 %v6249
        %v7530 = vcvt.s32.f32 %v6250
        %v7531 = vcvt.s32.f32 %v6251
        %v7532 = vcvt.s32.f32 %v6252
        %v7533 = vcvt.s32.f32 %v6253
        %v7534 = vcvt.s32.f32 %v6254
        %v7535 = vcvt.s32.f32 %v6255
        %v7536 = vcvt.s32.f32 %v6256
        %v7537 = vcvt.s32.f32 %v6257
        %v7538 = vcvt.s32.f32 %v6258
        %v7539 = vcvt.s32.f32 %v6259
        %v7540 = vcvt.s32.f32 %v6260
        %v7541 = vcvt.s32.f32 %v6261
        %v7542 = vcvt.s32.f32 %v6262
        %v7543 = vcvt.s32.f32 %v6263
        %v7544 = vcvt.s32.f32 %v6264
        %v7545 = vcvt.s32.f32 %v6265
        %v7546 = vcvt.s32.f32 %v6266
        %v7547 = vcvt.s32.f32 %v6267
        %v7548 = vcvt.s32.f32 %v6268
        %v7549 = vcvt.s32.f32 %v6269
        %v7550 = vcvt.s32.f32 %v6270
        %v7551 = vcvt.s32.f32 %v6271
        %v7552 = vcvt.s32.f32 %v6272
        %v7553 = vcvt.s32.f32 %v6273
        %v7554 = vcvt.s32.f32 %v6274
        %v7555 = vcvt.s32.f32 %v6275
        %v7556 = vcvt.s32.f32 %v6276
        %v7557 = vcvt.s32.f32 %v6277
        %v7558 = vcvt.s32.f32 %v6278
        %v7559 = vcvt.s32.f32 %v6279
        %v7560 = vcvt.s32.f32 %v6280
        %v7561 = vcvt.s32.f32 %v6281
        %v7562 = vcvt.s32.f32 %v6282
        %v7563 = vcvt.s32.f32 %v6283
        %v7564 = vcvt.s32.f32 %v6284
        %v7565 = vcvt.s32.f32 %v6285
        %v7566 = vcvt.s32.f32 %v6286
        %v7567 = vcvt.s32.f32 %v6287
        %v7568 = vcvt.s32.f32 %v6288
        %v7569 = vcvt.s32.f32 %v6289
        %v7570 = vcvt.s32.f32 %v6290
        %v7571 = vcvt.s32.f32 %v6291
        %v7572 = vcvt.s32.f32 %v6292
        %v7573 = vcvt.s32.f32 %v6293
        %v7574 = vcvt.s32.f32 %v6294
        %v7575 = vcvt.s32.f32 %v6295
        %v7576 = vcvt.s32.f32 %v6296
        %v7577 = vcvt.s32.f32 %v6297
        %v7578 = vcvt.s32.f32 %v6298
        %v7579 = vcvt.s32.f32 %v6299
        %v7580 = vcvt.s32.f32 %v6300
        %v7581 = vcvt.s32.f32 %v6301
        %v7582 = vcvt.s32.f32 %v6302
        %v7583 = vcvt.s32.f32 %v6303
        %v7584 = vcvt.s32.f32 %v6304
        %v7585 = vcvt.s32.f32 %v6305
        %v7586 = vcvt.s32.f32 %v6306
        %v7587 = vcvt.s32.f32 %v6307
        %v7588 = vcvt.s32.f32 %v6308
        %v7589 = vcvt.s32.f32 %v6309
        %v7590 = vcvt.s32.f32 %v6310
        %v7591 = vcvt.s32.f32 %v6311
        %v7592 = vcvt.s32.f32 %v6312
        %v7593 = vcvt.s32.f32 %v6313
        %v7594 = vcvt.s32.f32 %v6314
        %v7595 = vcvt.s32.f32 %v6315
        %v7596 = vcvt.s32.f32 %v6316
        %v7597 = vcvt.s32.f32 %v6317
        %v7598 = vcvt.s32.f32 %v6318
        %v7599 = vcvt.s32.f32 %v6319
        %v7600 = vcvt.s32.f32 %v6320
        %v7601 = vcvt.s32.f32 %v6321
        %v7602 = vcvt.s32.f32 %v6322
        %v7603 = vcvt.s32.f32 %v6323
        %v7604 = vcvt.s32.f32 %v6324
        %v7605 = vcvt.s32.f32 %v6325
        %v7606 = vcvt.s32.f32 %v6326
        %v7607 = vcvt.s32.f32 %v6327
        %v7608 = vcvt.s32.f32 %v6328
        %v7609 = vcvt.s32.f32 %v6329
        %v7610 = vcvt.s32.f32 %v6330
        %v7611 = vcvt.s32.f32 %v6331
        %v7612 = vcvt.s32.f32 %v6332
        %v7613 = vcvt.s32.f32 %v6333
        %v7614 = vcvt.s32.f32 %v6334
        %v7615 = vcvt.s32.f32 %v6335
        %v7616 = vcvt.s32.f32 %v6336
        %v7617 = vcvt.s32.f32 %v6337
        %v7618 = vcvt.s32.f32 %v6338
        %v7619 = vcvt.s32.f32 %v6339
        %v7620 = vcvt.s32.f32 %v6340
        %v7621 = vcvt.s32.f32 %v6341
        %v7622 = vcvt.s32.f32 %v6342
        %v7623 = vcvt.s32.f32 %v6343
        %v7624 = vcvt.s32.f32 %v6344
        %v7625 = vcvt.s32.f32 %v6345
        %v7626 = vcvt.s32.f32 %v6346
        %v7627 = vcvt.s32.f32 %v6347
        %v7628 = vcvt.s32.f32 %v6348
        %v7629 = vcvt.s32.f32 %v6349
        %v7630 = vcvt.s32.f32 %v6350
        %v7631 = vcvt.s32.f32 %v6351
        %v7632 = vcvt.s32.f32 %v6352
        %v7633 = vcvt.s32.f32 %v6353
        %v7634 = vcvt.s32.f32 %v6354
        %v7635 = vcvt.s32.f32 %v6355
        %v7636 = vcvt.s32.f32 %v6356
        %v7637 = vcvt.s32.f32 %v6357
        %v7638 = vcvt.s32.f32 %v6358
        %v7639 = vcvt.s32.f32 %v6359
        %v7640 = vcvt.s32.f32 %v6360
        %v7641 = vcvt.s32.f32 %v6361
        %v7642 = vcvt.s32.f32 %v6362
        %v7643 = vcvt.s32.f32 %v6363
        %v7644 = vcvt.s32.f32 %v6364
        %v7645 = vcvt.s32.f32 %v6365
        %v7646 = vcvt.s32.f32 %v6366
        %v7647 = vcvt.s32.f32 %v6367
        %v7648 = vcvt.s32.f32 %v6368
        %v7649 = vcvt.s32.f32 %v6369
        %v7650 = vcvt.s32.f32 %v6370
        %v7651 = vcvt.s32.f32 %v6371
        %v7652 = vcvt.s32.f32 %v6372
        %v7653 = vcvt.s32.f32 %v6373
        %v7654 = vcvt.s32.f32 %v6374
        %v7655 = vcvt.s32.f32 %v6375
        %v7656 = vcvt.s32.f32 %v6376
        %v7657 = vcvt.s32.f32 %v6377
        %v7658 = vcvt.s32.f32 %v6378
        %v7659 = vcvt.s32.f32 %v6379
        %v7660 = vcvt.s32.f32 %v6380
        %v7661 = vcvt.s32.f32 %v6381
        %v7662 = vcvt.s32.f32 %v6382
        %v7663 = vcvt.s32.f32 %v6383
        %v7664 = vcvt.s32.f32 %v6384
        %v7665 = vcvt.s32.f32 %v6385
        %v7666 = vcvt.s32.f32 %v6386
        %v7667 = vcvt.s32.f32 %v6387
        %v7668 = vcvt.s32.f32 %v6388
        %v7669 = vcvt.s32.f32 %v6389
        %v7670 = vpack.c.bf16 %v6398, %v6390
        %v7671 = vpack.c.bf16 %v6399, %v6391
        %v7672 = vpack.c.bf16 %v6400, %v6392
        %v7673 = vpack.c.bf16 %v6401, %v6393
        %v7674 = vpack.c.bf16 %v6402, %v6394
        %v7675 = vpack.c.bf16 %v6403, %v6395
        %v7676 = vpack.c.bf16 %v6404, %v6396
        %v7677 = vpack.c.bf16 %v6405, %v6397
        %v7678 = vpack.c.bf16 %v6414, %v6406
        %v7679 = vpack.c.bf16 %v6415, %v6407
        %v7680 = vpack.c.bf16 %v6416, %v6408
        %v7681 = vpack.c.bf16 %v6417, %v6409
        %v7682 = vpack.c.bf16 %v6418, %v6410
        %v7683 = vpack.c.bf16 %v6419, %v6411
        %v7684 = vpack.c.bf16 %v6420, %v6412
        %v7685 = vpack.c.bf16 %v6421, %v6413
        %v7686 = vpack.c.bf16 %v6430, %v6422
        %v7687 = vpack.c.bf16 %v6431, %v6423
        %v7688 = vpack.c.bf16 %v6432, %v6424
        %v7689 = vpack.c.bf16 %v6433, %v6425
        %v7690 = vpack.c.bf16 %v6434, %v6426
        %v7691 = vpack.c.bf16 %v6435, %v6427
        %v7692 = vpack.c.bf16 %v6436, %v6428
        %v7693 = vpack.c.bf16 %v6437, %v6429
        %v7694 = vpack.c.bf16 %v6446, %v6438
        %v7695 = vpack.c.bf16 %v6447, %v6439
        %v7696 = vpack.c.bf16 %v6448, %v6440
        %v7697 = vpack.c.bf16 %v6449, %v6441
        %v7698 = vpack.c.bf16 %v6450, %v6442
        %v7699 = vpack.c.bf16 %v6451, %v6443
        %v7700 = vpack.c.bf16 %v6452, %v6444
        %v7701 = vpack.c.bf16 %v6453, %v6445
        %v7702 = vpack.c.bf16 %v6462, %v6454
        %v7703 = vpack.c.bf16 %v6463, %v6455
        %v7704 = vpack.c.bf16 %v6464, %v6456
        %v7705 = vpack.c.bf16 %v6465, %v6457
        %v7706 = vpack.c.bf16 %v6466, %v6458
        %v7707 = vpack.c.bf16 %v6467, %v6459
        %v7708 = vpack.c.bf16 %v6468, %v6460
        %v7709 = vpack.c.bf16 %v6469, %v6461
        %v7710 = vpack.c.bf16 %v6478, %v6470
        %v7711 = vpack.c.bf16 %v6479, %v6471
        %v7712 = vpack.c.bf16 %v6480, %v6472
        %v7713 = vpack.c.bf16 %v6481, %v6473
        %v7714 = vpack.c.bf16 %v6482, %v6474
        %v7715 = vpack.c.bf16 %v6483, %v6475
        %v7716 = vpack.c.bf16 %v6484, %v6476
        %v7717 = vpack.c.bf16 %v6485, %v6477
        %v7718 = vpack.c.bf16 %v6494, %v6486
        %v7719 = vpack.c.bf16 %v6495, %v6487
        %v7720 = vpack.c.bf16 %v6496, %v6488
        %v7721 = vpack.c.bf16 %v6497, %v6489
        %v7722 = vpack.c.bf16 %v6498, %v6490
        %v7723 = vpack.c.bf16 %v6499, %v6491
        %v7724 = vpack.c.bf16 %v6500, %v6492
        %v7725 = vpack.c.bf16 %v6501, %v6493
        %v7726 = vpack.c.bf16 %v6510, %v6502
        %v7727 = vpack.c.bf16 %v6511, %v6503
        %v7728 = vpack.c.bf16 %v6512, %v6504
        %v7729 = vpack.c.bf16 %v6513, %v6505
        %v7730 = vpack.c.bf16 %v6514, %v6506
        %v7731 = vpack.c.bf16 %v6515, %v6507
        %v7732 = vpack.c.bf16 %v6516, %v6508
        %v7733 = vpack.c.bf16 %v6517, %v6509
        %v7734 = vpack.c.bf16 %v6526, %v6518
        %v7735 = vpack.c.bf16 %v6527, %v6519
        %v7736 = vpack.c.bf16 %v6528, %v6520
        %v7737 = vpack.c.bf16 %v6529, %v6521
        %v7738 = vpack.c.bf16 %v6530, %v6522
        %v7739 = vpack.c.bf16 %v6531, %v6523
        %v7740 = vpack.c.bf16 %v6532, %v6524
        %v7741 = vpack.c.bf16 %v6533, %v6525
        %v7742 = vpack.c.bf16 %v6542, %v6534
        %v7743 = vpack.c.bf16 %v6543, %v6535
        %v7744 = vpack.c.bf16 %v6544, %v6536
        %v7745 = vpack.c.bf16 %v6545, %v6537
        %v7746 = vpack.c.bf16 %v6546, %v6538
        %v7747 = vpack.c.bf16 %v6547, %v6539
        %v7748 = vpack.c.bf16 %v6548, %v6540
        %v7749 = vpack.c.bf16 %v6549, %v6541
        %v7750 = vpack.c.bf16 %v6558, %v6550
        %v7751 = vpack.c.bf16 %v6559, %v6551
        %v7752 = vpack.c.bf16 %v6560, %v6552
        %v7753 = vpack.c.bf16 %v6561, %v6553
        %v7754 = vpack.c.bf16 %v6562, %v6554
        %v7755 = vpack.c.bf16 %v6563, %v6555
        %v7756 = vpack.c.bf16 %v6564, %v6556
        %v7757 = vpack.c.bf16 %v6565, %v6557
        %v7758 = vpack.c.bf16 %v6574, %v6566
        %v7759 = vpack.c.bf16 %v6575, %v6567
        %v7760 = vpack.c.bf16 %v6576, %v6568
        %v7761 = vpack.c.bf16 %v6577, %v6569
        %v7762 = vpack.c.bf16 %v6578, %v6570
        %v7763 = vpack.c.bf16 %v6579, %v6571
        %v7764 = vpack.c.bf16 %v6580, %v6572
        %v7765 = vpack.c.bf16 %v6581, %v6573
        %v7766 = vpack.c.bf16 %v6590, %v6582
        %v7767 = vpack.c.bf16 %v6591, %v6583
        %v7768 = vpack.c.bf16 %v6592, %v6584
        %v7769 = vpack.c.bf16 %v6593, %v6585
        %v7770 = vpack.c.bf16 %v6594, %v6586
        %v7771 = vpack.c.bf16 %v6595, %v6587
        %v7772 = vpack.c.bf16 %v6596, %v6588
        %v7773 = vpack.c.bf16 %v6597, %v6589
        %v7774 = vpack.c.bf16 %v6606, %v6598
        %v7775 = vpack.c.bf16 %v6607, %v6599
        %v7776 = vpack.c.bf16 %v6608, %v6600
        %v7777 = vpack.c.bf16 %v6609, %v6601
        %v7778 = vpack.c.bf16 %v6610, %v6602
        %v7779 = vpack.c.bf16 %v6611, %v6603
        %v7780 = vpack.c.bf16 %v6612, %v6604
        %v7781 = vpack.c.bf16 %v6613, %v6605
        %v7782 = vpack.c.bf16 %v6622, %v6614
        %v7783 = vpack.c.bf16 %v6623, %v6615
        %v7784 = vpack.c.bf16 %v6624, %v6616
        %v7785 = vpack.c.bf16 %v6625, %v6617
        %v7786 = vpack.c.bf16 %v6626, %v6618
        %v7787 = vpack.c.bf16 %v6627, %v6619
        %v7788 = vpack.c.bf16 %v6628, %v6620
        %v7789 = vpack.c.bf16 %v6629, %v6621
        %v7790 = vpack.c.bf16 %v6638, %v6630
        %v7791 = vpack.c.bf16 %v6639, %v6631
        %v7792 = vpack.c.bf16 %v6640, %v6632
        %v7793 = vpack.c.bf16 %v6641, %v6633
        %v7794 = vpack.c.bf16 %v6642, %v6634
        %v7795 = vpack.c.bf16 %v6643, %v6635
        %v7796 = vpack.c.bf16 %v6644, %v6636
        %v7797 = vpack.c.bf16 %v6645, %v6637
        %v7798 = vpack.c.bf16 %v6654, %v6646
        %v7799 = vpack.c.bf16 %v6655, %v6647
        %v7800 = vpack.c.bf16 %v6656, %v6648
        %v7801 = vpack.c.bf16 %v6657, %v6649
        %v7802 = vpack.c.bf16 %v6658, %v6650
        %v7803 = vpack.c.bf16 %v6659, %v6651
        %v7804 = vpack.c.bf16 %v6660, %v6652
        %v7805 = vpack.c.bf16 %v6661, %v6653
        %v7806 = vpack.c.bf16 %v6670, %v6662
        %v7807 = vpack.c.bf16 %v6671, %v6663
        %v7808 = vpack.c.bf16 %v6672, %v6664
        %v7809 = vpack.c.bf16 %v6673, %v6665
        %v7810 = vpack.c.bf16 %v6674, %v6666
        %v7811 = vpack.c.bf16 %v6675, %v6667
        %v7812 = vpack.c.bf16 %v6676, %v6668
        %v7813 = vpack.c.bf16 %v6677, %v6669
        %v7814 = vpack.c.bf16 %v6686, %v6678
        %v7815 = vpack.c.bf16 %v6687, %v6679
        %v7816 = vpack.c.bf16 %v6688, %v6680
        %v7817 = vpack.c.bf16 %v6689, %v6681
        %v7818 = vpack.c.bf16 %v6690, %v6682
        %v7819 = vpack.c.bf16 %v6691, %v6683
        %v7820 = vpack.c.bf16 %v6692, %v6684
        %v7821 = vpack.c.bf16 %v6693, %v6685
        %v7822 = vpack.c.bf16 %v6702, %v6694
        %v7823 = vpack.c.bf16 %v6703, %v6695
        %v7824 = vpack.c.bf16 %v6704, %v6696
        %v7825 = vpack.c.bf16 %v6705, %v6697
        %v7826 = vpack.c.bf16 %v6706, %v6698
        %v7827 = vpack.c.bf16 %v6707, %v6699
        %v7828 = vpack.c.bf16 %v6708, %v6700
        %v7829 = vpack.c.bf16 %v6709, %v6701
        %v7830 = vpack.c.bf16 %v6718, %v6710
        %v7831 = vpack.c.bf16 %v6719, %v6711
        %v7832 = vpack.c.bf16 %v6720, %v6712
        %v7833 = vpack.c.bf16 %v6721, %v6713
        %v7834 = vpack.c.bf16 %v6722, %v6714
        %v7835 = vpack.c.bf16 %v6723, %v6715
        %v7836 = vpack.c.bf16 %v6724, %v6716
        %v7837 = vpack.c.bf16 %v6725, %v6717
        %v7838 = vpack.c.bf16 %v6734, %v6726
        %v7839 = vpack.c.bf16 %v6735, %v6727
        %v7840 = vpack.c.bf16 %v6736, %v6728
        %v7841 = vpack.c.bf16 %v6737, %v6729
        %v7842 = vpack.c.bf16 %v6738, %v6730
        %v7843 = vpack.c.bf16 %v6739, %v6731
        %v7844 = vpack.c.bf16 %v6740, %v6732
        %v7845 = vpack.c.bf16 %v6741, %v6733
        %v7846 = vpack.c.bf16 %v6750, %v6742
        %v7847 = vpack.c.bf16 %v6751, %v6743
        %v7848 = vpack.c.bf16 %v6752, %v6744
        %v7849 = vpack.c.bf16 %v6753, %v6745
        %v7850 = vpack.c.bf16 %v6754, %v6746
        %v7851 = vpack.c.bf16 %v6755, %v6747
        %v7852 = vpack.c.bf16 %v6756, %v6748
        %v7853 = vpack.c.bf16 %v6757, %v6749
        %v7854 = vpack.c.bf16 %v6766, %v6758
        %v7855 = vpack.c.bf16 %v6767, %v6759
        %v7856 = vpack.c.bf16 %v6768, %v6760
        %v7857 = vpack.c.bf16 %v6769, %v6761
        %v7858 = vpack.c.bf16 %v6770, %v6762
        %v7859 = vpack.c.bf16 %v6771, %v6763
        %v7860 = vpack.c.bf16 %v6772, %v6764
        %v7861 = vpack.c.bf16 %v6773, %v6765
        %v7862 = vpack.c.bf16 %v6782, %v6774
        %v7863 = vpack.c.bf16 %v6783, %v6775
        %v7864 = vpack.c.bf16 %v6784, %v6776
        %v7865 = vpack.c.bf16 %v6785, %v6777
        %v7866 = vpack.c.bf16 %v6786, %v6778
        %v7867 = vpack.c.bf16 %v6787, %v6779
        %v7868 = vpack.c.bf16 %v6788, %v6780
        %v7869 = vpack.c.bf16 %v6789, %v6781
        %v7870 = vpack.c.bf16 %v6798, %v6790
        %v7871 = vpack.c.bf16 %v6799, %v6791
        %v7872 = vpack.c.bf16 %v6800, %v6792
        %v7873 = vpack.c.bf16 %v6801, %v6793
        %v7874 = vpack.c.bf16 %v6802, %v6794
        %v7875 = vpack.c.bf16 %v6803, %v6795
        %v7876 = vpack.c.bf16 %v6804, %v6796
        %v7877 = vpack.c.bf16 %v6805, %v6797
        %v7878 = vpack.c.bf16 %v6814, %v6806
        %v7879 = vpack.c.bf16 %v6815, %v6807
        %v7880 = vpack.c.bf16 %v6816, %v6808
        %v7881 = vpack.c.bf16 %v6817, %v6809
        %v7882 = vpack.c.bf16 %v6818, %v6810
        %v7883 = vpack.c.bf16 %v6819, %v6811
        %v7884 = vpack.c.bf16 %v6820, %v6812
        %v7885 = vpack.c.bf16 %v6821, %v6813
        %v7886 = vpack.c.bf16 %v6830, %v6822
        %v7887 = vpack.c.bf16 %v6831, %v6823
        %v7888 = vpack.c.bf16 %v6832, %v6824
        %v7889 = vpack.c.bf16 %v6833, %v6825
        %v7890 = vpack.c.bf16 %v6834, %v6826
        %v7891 = vpack.c.bf16 %v6835, %v6827
        %v7892 = vpack.c.bf16 %v6836, %v6828
        %v7893 = vpack.c.bf16 %v6837, %v6829
        %v7894 = vpack.c.bf16 %v6846, %v6838
        %v7895 = vpack.c.bf16 %v6847, %v6839
        %v7896 = vpack.c.bf16 %v6848, %v6840
        %v7897 = vpack.c.bf16 %v6849, %v6841
        %v7898 = vpack.c.bf16 %v6850, %v6842
        %v7899 = vpack.c.bf16 %v6851, %v6843
        %v7900 = vpack.c.bf16 %v6852, %v6844
        %v7901 = vpack.c.bf16 %v6853, %v6845
        %v7902 = vpack.c.bf16 %v6862, %v6854
        %v7903 = vpack.c.bf16 %v6863, %v6855
        %v7904 = vpack.c.bf16 %v6864, %v6856
        %v7905 = vpack.c.bf16 %v6865, %v6857
        %v7906 = vpack.c.bf16 %v6866, %v6858
        %v7907 = vpack.c.bf16 %v6867, %v6859
        %v7908 = vpack.c.bf16 %v6868, %v6860
        %v7909 = vpack.c.bf16 %v6869, %v6861
        %v7910 = vpack.c.bf16 %v6878, %v6870
        %v7911 = vpack.c.bf16 %v6879, %v6871
        %v7912 = vpack.c.bf16 %v6880, %v6872
        %v7913 = vpack.c.bf16 %v6881, %v6873
        %v7914 = vpack.c.bf16 %v6882, %v6874
        %v7915 = vpack.c.bf16 %v6883, %v6875
        %v7916 = vpack.c.bf16 %v6884, %v6876
        %v7917 = vpack.c.bf16 %v6885, %v6877
        %v7918 = vpack.c.bf16 %v6894, %v6886
        %v7919 = vpack.c.bf16 %v6895, %v6887
        %v7920 = vpack.c.bf16 %v6896, %v6888
        %v7921 = vpack.c.bf16 %v6897, %v6889
        %v7922 = vpack.c.bf16 %v6898, %v6890
        %v7923 = vpack.c.bf16 %v6899, %v6891
        %v7924 = vpack.c.bf16 %v6900, %v6892
        %v7925 = vpack.c.bf16 %v6901, %v6893
        %v7926 = vpack.c.bf16 %v6910, %v6902
        %v7927 = vpack.c.bf16 %v6911, %v6903
        %v7928 = vpack.c.bf16 %v6912, %v6904
        %v7929 = vpack.c.bf16 %v6913, %v6905
        %v7930 = vpack.c.bf16 %v6914, %v6906
        %v7931 = vpack.c.bf16 %v6915, %v6907
        %v7932 = vpack.c.bf16 %v6916, %v6908
        %v7933 = vpack.c.bf16 %v6917, %v6909
        %v7934 = vpack.c.bf16 %v6926, %v6918
        %v7935 = vpack.c.bf16 %v6927, %v6919
        %v7936 = vpack.c.bf16 %v6928, %v6920
        %v7937 = vpack.c.bf16 %v6929, %v6921
        %v7938 = vpack.c.bf16 %v6930, %v6922
        %v7939 = vpack.c.bf16 %v6931, %v6923
        %v7940 = vpack.c.bf16 %v6932, %v6924
        %v7941 = vpack.c.bf16 %v6933, %v6925
        %v7942 = vpack.c.bf16 %v6942, %v6934
        %v7943 = vpack.c.bf16 %v6943, %v6935
        %v7944 = vpack.c.bf16 %v6944, %v6936
        %v7945 = vpack.c.bf16 %v6945, %v6937
        %v7946 = vpack.c.bf16 %v6946, %v6938
        %v7947 = vpack.c.bf16 %v6947, %v6939
        %v7948 = vpack.c.bf16 %v6948, %v6940
        %v7949 = vpack.c.bf16 %v6949, %v6941
        %v7950 = vpack.c.bf16 %v6958, %v6950
        %v7951 = vpack.c.bf16 %v6959, %v6951
        %v7952 = vpack.c.bf16 %v6960, %v6952
        %v7953 = vpack.c.bf16 %v6961, %v6953
        %v7954 = vpack.c.bf16 %v6962, %v6954
        %v7955 = vpack.c.bf16 %v6963, %v6955
        %v7956 = vpack.c.bf16 %v6964, %v6956
        %v7957 = vpack.c.bf16 %v6965, %v6957
        %v7958 = vpack.c.bf16 %v6974, %v6966
        %v7959 = vpack.c.bf16 %v6975, %v6967
        %v7960 = vpack.c.bf16 %v6976, %v6968
        %v7961 = vpack.c.bf16 %v6977, %v6969
        %v7962 = vpack.c.bf16 %v6978, %v6970
        %v7963 = vpack.c.bf16 %v6979, %v6971
        %v7964 = vpack.c.bf16 %v6980, %v6972
        %v7965 = vpack.c.bf16 %v6981, %v6973
        %v7966 = vpack.c.bf16 %v6990, %v6982
        %v7967 = vpack.c.bf16 %v6991, %v6983
        %v7968 = vpack.c.bf16 %v6992, %v6984
        %v7969 = vpack.c.bf16 %v6993, %v6985
        %v7970 = vpack.c.bf16 %v6994, %v6986
        %v7971 = vpack.c.bf16 %v6995, %v6987
        %v7972 = vpack.c.bf16 %v6996, %v6988
        %v7973 = vpack.c.bf16 %v6997, %v6989
        %v7974 = vpack.c.bf16 %v7006, %v6998
        %v7975 = vpack.c.bf16 %v7007, %v6999
        %v7976 = vpack.c.bf16 %v7008, %v7000
        %v7977 = vpack.c.bf16 %v7009, %v7001
        %v7978 = vpack.c.bf16 %v7010, %v7002
        %v7979 = vpack.c.bf16 %v7011, %v7003
        %v7980 = vpack.c.bf16 %v7012, %v7004
        %v7981 = vpack.c.bf16 %v7013, %v7005
        %v7982 = vpack.c.bf16 %v7022, %v7014
        %v7983 = vpack.c.bf16 %v7023, %v7015
        %v7984 = vpack.c.bf16 %v7024, %v7016
        %v7985 = vpack.c.bf16 %v7025, %v7017
        %v7986 = vpack.c.bf16 %v7026, %v7018
        %v7987 = vpack.c.bf16 %v7027, %v7019
        %v7988 = vpack.c.bf16 %v7028, %v7020
        %v7989 = vpack.c.bf16 %v7029, %v7021
        %v7990 = vpack.c.bf16 %v7038, %v7030
        %v7991 = vpack.c.bf16 %v7039, %v7031
        %v7992 = vpack.c.bf16 %v7040, %v7032
        %v7993 = vpack.c.bf16 %v7041, %v7033
        %v7994 = vpack.c.bf16 %v7042, %v7034
        %v7995 = vpack.c.bf16 %v7043, %v7035
        %v7996 = vpack.c.bf16 %v7044, %v7036
        %v7997 = vpack.c.bf16 %v7045, %v7037
        %v7998 = vpack.c.bf16 %v7054, %v7046
        %v7999 = vpack.c.bf16 %v7055, %v7047
        %v8000 = vpack.c.bf16 %v7056, %v7048
        %v8001 = vpack.c.bf16 %v7057, %v7049
        %v8002 = vpack.c.bf16 %v7058, %v7050
        %v8003 = vpack.c.bf16 %v7059, %v7051
        %v8004 = vpack.c.bf16 %v7060, %v7052
        %v8005 = vpack.c.bf16 %v7061, %v7053
        %v8006 = vpack.c.bf16 %v7070, %v7062
        %v8007 = vpack.c.bf16 %v7071, %v7063
        %v8008 = vpack.c.bf16 %v7072, %v7064
        %v8009 = vpack.c.bf16 %v7073, %v7065
        %v8010 = vpack.c.bf16 %v7074, %v7066
        %v8011 = vpack.c.bf16 %v7075, %v7067
        %v8012 = vpack.c.bf16 %v7076, %v7068
        %v8013 = vpack.c.bf16 %v7077, %v7069
        %v8014 = vpack.c.bf16 %v7086, %v7078
        %v8015 = vpack.c.bf16 %v7087, %v7079
        %v8016 = vpack.c.bf16 %v7088, %v7080
        %v8017 = vpack.c.bf16 %v7089, %v7081
        %v8018 = vpack.c.bf16 %v7090, %v7082
        %v8019 = vpack.c.bf16 %v7091, %v7083
        %v8020 = vpack.c.bf16 %v7092, %v7084
        %v8021 = vpack.c.bf16 %v7093, %v7085
        %v8022 = vpack.c.bf16 %v7102, %v7094
        %v8023 = vpack.c.bf16 %v7103, %v7095
        %v8024 = vpack.c.bf16 %v7104, %v7096
        %v8025 = vpack.c.bf16 %v7105, %v7097
        %v8026 = vpack.c.bf16 %v7106, %v7098
        %v8027 = vpack.c.bf16 %v7107, %v7099
        %v8028 = vpack.c.bf16 %v7108, %v7100
        %v8029 = vpack.c.bf16 %v7109, %v7101
        %v8030 = vpack.c.bf16 %v7118, %v7110
        %v8031 = vpack.c.bf16 %v7119, %v7111
        %v8032 = vpack.c.bf16 %v7120, %v7112
        %v8033 = vpack.c.bf16 %v7121, %v7113
        %v8034 = vpack.c.bf16 %v7122, %v7114
        %v8035 = vpack.c.bf16 %v7123, %v7115
        %v8036 = vpack.c.bf16 %v7124, %v7116
        %v8037 = vpack.c.bf16 %v7125, %v7117
        %v8038 = vpack.c.bf16 %v7134, %v7126
        %v8039 = vpack.c.bf16 %v7135, %v7127
        %v8040 = vpack.c.bf16 %v7136, %v7128
        %v8041 = vpack.c.bf16 %v7137, %v7129
        %v8042 = vpack.c.bf16 %v7138, %v7130
        %v8043 = vpack.c.bf16 %v7139, %v7131
        %v8044 = vpack.c.bf16 %v7140, %v7132
        %v8045 = vpack.c.bf16 %v7141, %v7133
        %v8046 = vpack.c.bf16 %v7150, %v7142
        %v8047 = vpack.c.bf16 %v7151, %v7143
        %v8048 = vpack.c.bf16 %v7152, %v7144
        %v8049 = vpack.c.bf16 %v7153, %v7145
        %v8050 = vpack.c.bf16 %v7154, %v7146
        %v8051 = vpack.c.bf16 %v7155, %v7147
        %v8052 = vpack.c.bf16 %v7156, %v7148
        %v8053 = vpack.c.bf16 %v7157, %v7149
        %v8054 = vpack.c.bf16 %v7166, %v7158
        %v8055 = vpack.c.bf16 %v7167, %v7159
        %v8056 = vpack.c.bf16 %v7168, %v7160
        %v8057 = vpack.c.bf16 %v7169, %v7161
        %v8058 = vpack.c.bf16 %v7170, %v7162
        %v8059 = vpack.c.bf16 %v7171, %v7163
        %v8060 = vpack.c.bf16 %v7172, %v7164
        %v8061 = vpack.c.bf16 %v7173, %v7165
        %v8062 = vpack.c.bf16 %v7182, %v7174
        %v8063 = vpack.c.bf16 %v7183, %v7175
        %v8064 = vpack.c.bf16 %v7184, %v7176
        %v8065 = vpack.c.bf16 %v7185, %v7177
        %v8066 = vpack.c.bf16 %v7186, %v7178
        %v8067 = vpack.c.bf16 %v7187, %v7179
        %v8068 = vpack.c.bf16 %v7188, %v7180
        %v8069 = vpack.c.bf16 %v7189, %v7181
        %v8070 = vpack.c.bf16 %v7198, %v7190
        %v8071 = vpack.c.bf16 %v7199, %v7191
        %v8072 = vpack.c.bf16 %v7200, %v7192
        %v8073 = vpack.c.bf16 %v7201, %v7193
        %v8074 = vpack.c.bf16 %v7202, %v7194
        %v8075 = vpack.c.bf16 %v7203, %v7195
        %v8076 = vpack.c.bf16 %v7204, %v7196
        %v8077 = vpack.c.bf16 %v7205, %v7197
        %v8078 = vpack.c.bf16 %v7214, %v7206
        %v8079 = vpack.c.bf16 %v7215, %v7207
        %v8080 = vpack.c.bf16 %v7216, %v7208
        %v8081 = vpack.c.bf16 %v7217, %v7209
        %v8082 = vpack.c.bf16 %v7218, %v7210
        %v8083 = vpack.c.bf16 %v7219, %v7211
        %v8084 = vpack.c.bf16 %v7220, %v7212
        %v8085 = vpack.c.bf16 %v7221, %v7213
        %v8086 = vpack.c.bf16 %v7230, %v7222
        %v8087 = vpack.c.bf16 %v7231, %v7223
        %v8088 = vpack.c.bf16 %v7232, %v7224
        %v8089 = vpack.c.bf16 %v7233, %v7225
        %v8090 = vpack.c.bf16 %v7234, %v7226
        %v8091 = vpack.c.bf16 %v7235, %v7227
        %v8092 = vpack.c.bf16 %v7236, %v7228
        %v8093 = vpack.c.bf16 %v7237, %v7229
        %v8094 = vpack.c.bf16 %v7246, %v7238
        %v8095 = vpack.c.bf16 %v7247, %v7239
        %v8096 = vpack.c.bf16 %v7248, %v7240
        %v8097 = vpack.c.bf16 %v7249, %v7241
        %v8098 = vpack.c.bf16 %v7250, %v7242
        %v8099 = vpack.c.bf16 %v7251, %v7243
        %v8100 = vpack.c.bf16 %v7252, %v7244
        %v8101 = vpack.c.bf16 %v7253, %v7245
        %v8102 = vpack.c.bf16 %v7262, %v7254
        %v8103 = vpack.c.bf16 %v7263, %v7255
        %v8104 = vpack.c.bf16 %v7264, %v7256
        %v8105 = vpack.c.bf16 %v7265, %v7257
        %v8106 = vpack.c.bf16 %v7266, %v7258
        %v8107 = vpack.c.bf16 %v7267, %v7259
        %v8108 = vpack.c.bf16 %v7268, %v7260
        %v8109 = vpack.c.bf16 %v7269, %v7261
        %v8110 = vpack.c.bf16 %v7278, %v7270
        %v8111 = vpack.c.bf16 %v7279, %v7271
        %v8112 = vpack.c.bf16 %v7280, %v7272
        %v8113 = vpack.c.bf16 %v7281, %v7273
        %v8114 = vpack.c.bf16 %v7282, %v7274
        %v8115 = vpack.c.bf16 %v7283, %v7275
        %v8116 = vpack.c.bf16 %v7284, %v7276
        %v8117 = vpack.c.bf16 %v7285, %v7277
        %v8118 = vpack.c.bf16 %v7294, %v7286
        %v8119 = vpack.c.bf16 %v7295, %v7287
        %v8120 = vpack.c.bf16 %v7296, %v7288
        %v8121 = vpack.c.bf16 %v7297, %v7289
        %v8122 = vpack.c.bf16 %v7298, %v7290
        %v8123 = vpack.c.bf16 %v7299, %v7291
        %v8124 = vpack.c.bf16 %v7300, %v7292
        %v8125 = vpack.c.bf16 %v7301, %v7293
        %v8126 = vpack.c.bf16 %v7310, %v7302
        %v8127 = vpack.c.bf16 %v7311, %v7303
        %v8128 = vpack.c.bf16 %v7312, %v7304
        %v8129 = vpack.c.bf16 %v7313, %v7305
        %v8130 = vpack.c.bf16 %v7314, %v7306
        %v8131 = vpack.c.bf16 %v7315, %v7307
        %v8132 = vpack.c.bf16 %v7316, %v7308
        %v8133 = vpack.c.bf16 %v7317, %v7309
        %v8134 = vpack.c.bf16 %v7326, %v7318
        %v8135 = vpack.c.bf16 %v7327, %v7319
        %v8136 = vpack.c.bf16 %v7328, %v7320
        %v8137 = vpack.c.bf16 %v7329, %v7321
        %v8138 = vpack.c.bf16 %v7330, %v7322
        %v8139 = vpack.c.bf16 %v7331, %v7323
        %v8140 = vpack.c.bf16 %v7332, %v7324
        %v8141 = vpack.c.bf16 %v7333, %v7325
        %v8142 = vpack.c.bf16 %v7342, %v7334
        %v8143 = vpack.c.bf16 %v7343, %v7335
        %v8144 = vpack.c.bf16 %v7344, %v7336
        %v8145 = vpack.c.bf16 %v7345, %v7337
        %v8146 = vpack.c.bf16 %v7346, %v7338
        %v8147 = vpack.c.bf16 %v7347, %v7339
        %v8148 = vpack.c.bf16 %v7348, %v7340
        %v8149 = vpack.c.bf16 %v7349, %v7341
        %v8150 = vpack.c.bf16 %v7358, %v7350
        %v8151 = vpack.c.bf16 %v7359, %v7351
        %v8152 = vpack.c.bf16 %v7360, %v7352
        %v8153 = vpack.c.bf16 %v7361, %v7353
        %v8154 = vpack.c.bf16 %v7362, %v7354
        %v8155 = vpack.c.bf16 %v7363, %v7355
        %v8156 = vpack.c.bf16 %v7364, %v7356
        %v8157 = vpack.c.bf16 %v7365, %v7357
        %v8158 = vpack.c.bf16 %v7374, %v7366
        %v8159 = vpack.c.bf16 %v7375, %v7367
        %v8160 = vpack.c.bf16 %v7376, %v7368
        %v8161 = vpack.c.bf16 %v7377, %v7369
        %v8162 = vpack.c.bf16 %v7378, %v7370
        %v8163 = vpack.c.bf16 %v7379, %v7371
        %v8164 = vpack.c.bf16 %v7380, %v7372
        %v8165 = vpack.c.bf16 %v7381, %v7373
        %v8166 = vpack.c.bf16 %v7390, %v7382
        %v8167 = vpack.c.bf16 %v7391, %v7383
        %v8168 = vpack.c.bf16 %v7392, %v7384
        %v8169 = vpack.c.bf16 %v7393, %v7385
        %v8170 = vpack.c.bf16 %v7394, %v7386
        %v8171 = vpack.c.bf16 %v7395, %v7387
        %v8172 = vpack.c.bf16 %v7396, %v7388
        %v8173 = vpack.c.bf16 %v7397, %v7389
        %v8174 = vpack.c.bf16 %v7406, %v7398
        %v8175 = vpack.c.bf16 %v7407, %v7399
        %v8176 = vpack.c.bf16 %v7408, %v7400
        %v8177 = vpack.c.bf16 %v7409, %v7401
        %v8178 = vpack.c.bf16 %v7410, %v7402
        %v8179 = vpack.c.bf16 %v7411, %v7403
        %v8180 = vpack.c.bf16 %v7412, %v7404
        %v8181 = vpack.c.bf16 %v7413, %v7405
        %v8182 = vpack.c.bf16 %v7422, %v7414
        %v8183 = vpack.c.bf16 %v7423, %v7415
        %v8184 = vpack.c.bf16 %v7424, %v7416
        %v8185 = vpack.c.bf16 %v7425, %v7417
        %v8186 = vpack.c.bf16 %v7426, %v7418
        %v8187 = vpack.c.bf16 %v7427, %v7419
        %v8188 = vpack.c.bf16 %v7428, %v7420
        %v8189 = vpack.c.bf16 %v7429, %v7421
        %v8190 = vpack.c.bf16 %v7438, %v7430
        %v8191 = vpack.c.bf16 %v7439, %v7431
        %v8192 = vpack.c.bf16 %v7440, %v7432
        %v8193 = vpack.c.bf16 %v7441, %v7433
        %v8194 = vpack.c.bf16 %v7442, %v7434
        %v8195 = vpack.c.bf16 %v7443, %v7435
        %v8196 = vpack.c.bf16 %v7444, %v7436
        %v8197 = vpack.c.bf16 %v7445, %v7437
        %v8198 = vpack.c.bf16 %v7454, %v7446
        %v8199 = vpack.c.bf16 %v7455, %v7447
        %v8200 = vpack.c.bf16 %v7456, %v7448
        %v8201 = vpack.c.bf16 %v7457, %v7449
        %v8202 = vpack.c.bf16 %v7458, %v7450
        %v8203 = vpack.c.bf16 %v7459, %v7451
        %v8204 = vpack.c.bf16 %v7460, %v7452
        %v8205 = vpack.c.bf16 %v7461, %v7453
        %v8206 = vpack.c.bf16 %v7470, %v7462
        %v8207 = vpack.c.bf16 %v7471, %v7463
        %v8208 = vpack.c.bf16 %v7472, %v7464
        %v8209 = vpack.c.bf16 %v7473, %v7465
        %v8210 = vpack.c.bf16 %v7474, %v7466
        %v8211 = vpack.c.bf16 %v7475, %v7467
        %v8212 = vpack.c.bf16 %v7476, %v7468
        %v8213 = vpack.c.bf16 %v7477, %v7469
        %v8214 = vpack.c.bf16 %v7486, %v7478
        %v8215 = vpack.c.bf16 %v7487, %v7479
        %v8216 = vpack.c.bf16 %v7488, %v7480
        %v8217 = vpack.c.bf16 %v7489, %v7481
        %v8218 = vpack.c.bf16 %v7490, %v7482
        %v8219 = vpack.c.bf16 %v7491, %v7483
        %v8220 = vpack.c.bf16 %v7492, %v7484
        %v8221 = vpack.c.bf16 %v7493, %v7485
        %v8222 = vpack.c.bf16 %v7502, %v7494
        %v8223 = vpack.c.bf16 %v7503, %v7495
        %v8224 = vpack.c.bf16 %v7504, %v7496
        %v8225 = vpack.c.bf16 %v7505, %v7497
        %v8226 = vpack.c.bf16 %v7506, %v7498
        %v8227 = vpack.c.bf16 %v7507, %v7499
        %v8228 = vpack.c.bf16 %v7508, %v7500
        %v8229 = vpack.c.bf16 %v7509, %v7501
        %v8230 = vpack.c.bf16 %v7518, %v7510
        %v8231 = vpack.c.bf16 %v7519, %v7511
        %v8232 = vpack.c.bf16 %v7520, %v7512
        %v8233 = vpack.c.bf16 %v7521, %v7513
        %v8234 = vpack.c.bf16 %v7522, %v7514
        %v8235 = vpack.c.bf16 %v7523, %v7515
        %v8236 = vpack.c.bf16 %v7524, %v7516
        %v8237 = vpack.c.bf16 %v7525, %v7517
        %v8238 = vpack.c.bf16 %v7534, %v7526
        %v8239 = vpack.c.bf16 %v7535, %v7527
        %v8240 = vpack.c.bf16 %v7536, %v7528
        %v8241 = vpack.c.bf16 %v7537, %v7529
        %v8242 = vpack.c.bf16 %v7538, %v7530
        %v8243 = vpack.c.bf16 %v7539, %v7531
        %v8244 = vpack.c.bf16 %v7540, %v7532
        %v8245 = vpack.c.bf16 %v7541, %v7533
        %v8246 = vpack.c.bf16 %v7550, %v7542
        %v8247 = vpack.c.bf16 %v7551, %v7543
        %v8248 = vpack.c.bf16 %v7552, %v7544
        %v8249 = vpack.c.bf16 %v7553, %v7545
        %v8250 = vpack.c.bf16 %v7554, %v7546
        %v8251 = vpack.c.bf16 %v7555, %v7547
        %v8252 = vpack.c.bf16 %v7556, %v7548
        %v8253 = vpack.c.bf16 %v7557, %v7549
        %v8254 = vpack.c.bf16 %v7566, %v7558
        %v8255 = vpack.c.bf16 %v7567, %v7559
        %v8256 = vpack.c.bf16 %v7568, %v7560
        %v8257 = vpack.c.bf16 %v7569, %v7561
        %v8258 = vpack.c.bf16 %v7570, %v7562
        %v8259 = vpack.c.bf16 %v7571, %v7563
        %v8260 = vpack.c.bf16 %v7572, %v7564
        %v8261 = vpack.c.bf16 %v7573, %v7565
        %v8262 = vpack.c.bf16 %v7582, %v7574
        %v8263 = vpack.c.bf16 %v7583, %v7575
        %v8264 = vpack.c.bf16 %v7584, %v7576
        %v8265 = vpack.c.bf16 %v7585, %v7577
        %v8266 = vpack.c.bf16 %v7586, %v7578
        %v8267 = vpack.c.bf16 %v7587, %v7579
        %v8268 = vpack.c.bf16 %v7588, %v7580
        %v8269 = vpack.c.bf16 %v7589, %v7581
        %v8270 = vpack.c.bf16 %v7598, %v7590
        %v8271 = vpack.c.bf16 %v7599, %v7591
        %v8272 = vpack.c.bf16 %v7600, %v7592
        %v8273 = vpack.c.bf16 %v7601, %v7593
        %v8274 = vpack.c.bf16 %v7602, %v7594
        %v8275 = vpack.c.bf16 %v7603, %v7595
        %v8276 = vpack.c.bf16 %v7604, %v7596
        %v8277 = vpack.c.bf16 %v7605, %v7597
        %v8278 = vpack.c.bf16 %v7614, %v7606
        %v8279 = vpack.c.bf16 %v7615, %v7607
        %v8280 = vpack.c.bf16 %v7616, %v7608
        %v8281 = vpack.c.bf16 %v7617, %v7609
        %v8282 = vpack.c.bf16 %v7618, %v7610
        %v8283 = vpack.c.bf16 %v7619, %v7611
        %v8284 = vpack.c.bf16 %v7620, %v7612
        %v8285 = vpack.c.bf16 %v7621, %v7613
        %v8286 = vpack.c.bf16 %v7630, %v7622
        %v8287 = vpack.c.bf16 %v7631, %v7623
        %v8288 = vpack.c.bf16 %v7632, %v7624
        %v8289 = vpack.c.bf16 %v7633, %v7625
        %v8290 = vpack.c.bf16 %v7634, %v7626
        %v8291 = vpack.c.bf16 %v7635, %v7627
        %v8292 = vpack.c.bf16 %v7636, %v7628
        %v8293 = vpack.c.bf16 %v7637, %v7629
        %v8294 = vpack.c.bf16 %v7646, %v7638
        %v8295 = vpack.c.bf16 %v7647, %v7639
        %v8296 = vpack.c.bf16 %v7648, %v7640
        %v8297 = vpack.c.bf16 %v7649, %v7641
        %v8298 = vpack.c.bf16 %v7650, %v7642
        %v8299 = vpack.c.bf16 %v7651, %v7643
        %v8300 = vpack.c.bf16 %v7652, %v7644
        %v8301 = vpack.c.bf16 %v7653, %v7645
        %v8302 = vpack.c.bf16 %v7662, %v7654
        %v8303 = vpack.c.bf16 %v7663, %v7655
        %v8304 = vpack.c.bf16 %v7664, %v7656
        %v8305 = vpack.c.bf16 %v7665, %v7657
        %v8306 = vpack.c.bf16 %v7666, %v7658
        %v8307 = vpack.c.bf16 %v7667, %v7659
        %v8308 = vpack.c.bf16 %v7668, %v7660
        %v8309 = vpack.c.bf16 %v7669, %v7661
        %v8310 = vpack.c.bf16 %v4770, %v4770
        %v8311 = vpack.c.bf16 %v4771, %v4771
        %v8312 = vpack.c.bf16 %v4772, %v4772
        %v8313 = vpack.c.bf16 %v4773, %v4773
        %v8314 = vpack.c.bf16 %v4774, %v4774
        %v8315 = vpack.c.bf16 %v4775, %v4775
        %v8316 = vpack.c.bf16 %v4776, %v4776
        %v8317 = vpack.c.bf16 %v4777, %v4777
        %v8318 = vpack.c.bf16 %v4778, %v4778
        %v8319 = vpack.c.bf16 %v4779, %v4779
        %v8320 = vpack.c.bf16 %v4780, %v4780
        %v8321 = vpack.c.bf16 %v4781, %v4781
        %v8322 = vpack.c.bf16 %v4782, %v4782
        %v8323 = vpack.c.bf16 %v4783, %v4783
        %v8324 = vpack.c.bf16 %v4784, %v4784
        %v8325 = vpack.c.bf16 %v4785, %v4785
        %v8326 = vpack.c.bf16 %v4786, %v4786
        %v8327 = vpack.c.bf16 %v4787, %v4787
        %v8328 = vpack.c.bf16 %v4788, %v4788
        %v8329 = vpack.c.bf16 %v4789, %v4789
        %v8350 = vunpack.c.l.b16 %v8310
        %v8351 = vunpack.c.l.b16 %v8311
        %v8352 = vunpack.c.l.b16 %v8312
        %v8353 = vunpack.c.l.b16 %v8313
        %v8354 = vunpack.c.l.b16 %v8314
        %v8355 = vunpack.c.l.b16 %v8315
        %v8356 = vunpack.c.l.b16 %v8316
        %v8357 = vunpack.c.l.b16 %v8317
        %v8358 = vunpack.c.l.b16 %v8318
        %v8359 = vunpack.c.l.b16 %v8319
        %v8360 = vunpack.c.l.b16 %v8320
        %v8361 = vunpack.c.l.b16 %v8321
        %v8362 = vunpack.c.l.b16 %v8322
        %v8363 = vunpack.c.l.b16 %v8323
        %v8364 = vunpack.c.l.b16 %v8324
        %v8365 = vunpack.c.l.b16 %v8325
        %v8366 = vunpack.c.l.b16 %v8326
        %v8367 = vunpack.c.l.b16 %v8327
        %v8368 = vunpack.c.l.b16 %v8328
        %v8369 = vunpack.c.l.b16 %v8329
        %vm8370 = vcmask 1041409
        %v8371 = vsel %vm8370, %v8360, %v8350
        %v8372 = vsel %vm8370, %v8361, %v8351
        %v8373 = vsel %vm8370, %v8362, %v8352
        %v8374 = vsel %vm8370, %v8363, %v8353
        %v8375 = vsel %vm8370, %v8364, %v8354
        %v8376 = vsel %vm8370, %v8365, %v8355
        %v8377 = vsel %vm8370, %v8366, %v8356
        %v8378 = vsel %vm8370, %v8367, %v8357
        %v8379 = vsel %vm8370, %v8368, %v8358
        %v8380 = vsel %vm8370, %v8369, %v8359
        %v8381 = vpack.c.b16 %v8371, %v8371
        %v8382 = vpack.c.b16 %v8372, %v8372
        %v8383 = vpack.c.b16 %v8373, %v8373
        %v8384 = vpack.c.b16 %v8374, %v8374
        %v8385 = vpack.c.b16 %v8375, %v8375
        %v8386 = vpack.c.b16 %v8376, %v8376
        %v8387 = vpack.c.b16 %v8377, %v8377
        %v8388 = vpack.c.b16 %v8378, %v8378
        %v8389 = vpack.c.b16 %v8379, %v8379
        %v8390 = vpack.c.b16 %v8380, %v8380
        %8401 = vmatpush.bf16.msra.mxu0 %v7726
        %8402 = vmatpush.bf16.msra.mxu0 %v7718
        %8403 = vmatpush.bf16.msra.mxu0 %v7710
        %8404 = vmatpush.bf16.msra.mxu0 %v7702
        %8405 = vmatpush.bf16.msra.mxu0 %v7694
        %8406 = vmatpush.bf16.msra.mxu0 %v7686
        %8407 = vmatpush.bf16.msra.mxu0 %v7678
        %8408 = vmatpush.bf16.msra.mxu0 %v7670
        %8409 = vmatmul.bf16.gmra.mxu0 %v8381
        %v8410 = vpop.f32.mrf.mxu0
        %v8411 = vadd.f32 0.0, %v8410
        %v8412 = vpop.f32.mrf.mxu0
        %8413 = vdwg.mxu0
        %8414 = vmatpush.bf16.msra.mxu0 %v7790
        %8415 = vmatpush.bf16.msra.mxu0 %v7782
        %8416 = vmatpush.bf16.msra.mxu0 %v7774
        %8417 = vmatpush.bf16.msra.mxu0 %v7766
        %8418 = vmatpush.bf16.msra.mxu0 %v7758
        %8419 = vmatpush.bf16.msra.mxu0 %v7750
        %8420 = vmatpush.bf16.msra.mxu0 %v7742
        %8421 = vmatpush.bf16.msra.mxu0 %v7734
        %8422 = vmatmul.bf16.gmra.mxu0 %v8382
        %v8423 = vpop.f32.mrf.mxu0
        %v8424 = vadd.f32 %v8411, %v8423
        %v8425 = vpop.f32.mrf.mxu0
        %8426 = vdwg.mxu0
        %8427 = vmatpush.bf16.msra.mxu0 %v7854
        %8428 = vmatpush.bf16.msra.mxu0 %v7846
        %8429 = vmatpush.bf16.msra.mxu0 %v7838
        %8430 = vmatpush.bf16.msra.mxu0 %v7830
        %8431 = vmatpush.bf16.msra.mxu0 %v7822
        %8432 = vmatpush.bf16.msra.mxu0 %v7814
        %8433 = vmatpush.bf16.msra.mxu0 %v7806
        %8434 = vmatpush.bf16.msra.mxu0 %v7798
        %8435 = vmatmul.bf16.gmra.mxu0 %v8383
        %v8436 = vpop.f32.mrf.mxu0
        %v8437 = vadd.f32 %v8424, %v8436
        %v8438 = vpop.f32.mrf.mxu0
        %8439 = vdwg.mxu0
        %8440 = vmatpush.bf16.msra.mxu0 %v7918
        %8441 = vmatpush.bf16.msra.mxu0 %v7910
        %8442 = vmatpush.bf16.msra.mxu0 %v7902
        %8443 = vmatpush.bf16.msra.mxu0 %v7894
        %8444 = vmatpush.bf16.msra.mxu0 %v7886
        %8445 = vmatpush.bf16.msra.mxu0 %v7878
        %8446 = vmatpush.bf16.msra.mxu0 %v7870
        %8447 = vmatpush.bf16.msra.mxu0 %v7862
        %8448 = vmatmul.bf16.gmra.mxu0 %v8384
        %v8449 = vpop.f32.mrf.mxu0
        %v8450 = vadd.f32 %v8437, %v8449
        %v8451 = vpop.f32.mrf.mxu0
        %8452 = vdwg.mxu0
        %8453 = vmatpush.bf16.msra.mxu0 %v7982
        %8454 = vmatpush.bf16.msra.mxu0 %v7974
        %8455 = vmatpush.bf16.msra.mxu0 %v7966
        %8456 = vmatpush.bf16.msra.mxu0 %v7958
        %8457 = vmatpush.bf16.msra.mxu0 %v7950
        %8458 = vmatpush.bf16.msra.mxu0 %v7942
        %8459 = vmatpush.bf16.msra.mxu0 %v7934
        %8460 = vmatpush.bf16.msra.mxu0 %v7926
        %8461 = vmatmul.bf16.gmra.mxu0 %v8385
        %v8462 = vpop.f32.mrf.mxu0
        %v8463 = vadd.f32 %v8450, %v8462
        %v8464 = vpop.f32.mrf.mxu0
        %8465 = vdwg.mxu0
        %8466 = vmatpush.bf16.msra.mxu0 %v8046
        %8467 = vmatpush.bf16.msra.mxu0 %v8038
        %8468 = vmatpush.bf16.msra.mxu0 %v8030
        %8469 = vmatpush.bf16.msra.mxu0 %v8022
        %8470 = vmatpush.bf16.msra.mxu0 %v8014
        %8471 = vmatpush.bf16.msra.mxu0 %v8006
        %8472 = vmatpush.bf16.msra.mxu0 %v7998
        %8473 = vmatpush.bf16.msra.mxu0 %v7990
        %8474 = vmatmul.bf16.gmra.mxu0 %v8386
        %v8475 = vpop.f32.mrf.mxu0
        %v8476 = vadd.f32 %v8463, %v8475
        %v8477 = vpop.f32.mrf.mxu0
        %8478 = vdwg.mxu0
        %8479 = vmatpush.bf16.msra.mxu0 %v8110
        %8480 = vmatpush.bf16.msra.mxu0 %v8102
        %8481 = vmatpush.bf16.msra.mxu0 %v8094
        %8482 = vmatpush.bf16.msra.mxu0 %v8086
        %8483 = vmatpush.bf16.msra.mxu0 %v8078
        %8484 = vmatpush.bf16.msra.mxu0 %v8070
        %8485 = vmatpush.bf16.msra.mxu0 %v8062
        %8486 = vmatpush.bf16.msra.mxu0 %v8054
        %8487 = vmatmul.bf16.gmra.mxu0 %v8387
        %v8488 = vpop.f32.mrf.mxu0
        %v8489 = vadd.f32 %v8476, %v8488
        %v8490 = vpop.f32.mrf.mxu0
        %8491 = vdwg.mxu0
        %8492 = vmatpush.bf16.msra.mxu0 %v8174
        %8493 = vmatpush.bf16.msra.mxu0 %v8166
        %8494 = vmatpush.bf16.msra.mxu0 %v8158
        %8495 = vmatpush.bf16.msra.mxu0 %v8150
        %8496 = vmatpush.bf16.msra.mxu0 %v8142
        %8497 = vmatpush.bf16.msra.mxu0 %v8134
        %8498 = vmatpush.bf16.msra.mxu0 %v8126
        %8499 = vmatpush.bf16.msra.mxu0 %v8118
        %8500 = vmatmul.bf16.gmra.mxu0 %v8388
        %v8501 = vpop.f32.mrf.mxu0
        %v8502 = vadd.f32 %v8489, %v8501
        %v8503 = vpop.f32.mrf.mxu0
        %8504 = vdwg.mxu0
        %8505 = vmatpush.bf16.msra.mxu0 %v8238
        %8506 = vmatpush.bf16.msra.mxu0 %v8230
        %8507 = vmatpush.bf16.msra.mxu0 %v8222
        %8508 = vmatpush.bf16.msra.mxu0 %v8214
        %8509 = vmatpush.bf16.msra.mxu0 %v8206
        %8510 = vmatpush.bf16.msra.mxu0 %v8198
        %8511 = vmatpush.bf16.msra.mxu0 %v8190
        %8512 = vmatpush.bf16.msra.mxu0 %v8182
        %8513 = vmatmul.bf16.gmra.mxu0 %v8389
        %v8514 = vpop.f32.mrf.mxu0
        %v8515 = vadd.f32 %v8502, %v8514
        %v8516 = vpop.f32.mrf.mxu0
        %8517 = vdwg.mxu0
        %8518 = vmatpush.bf16.msra.mxu0 %v8302
        %8519 = vmatpush.bf16.msra.mxu0 %v8294
        %8520 = vmatpush.bf16.msra.mxu0 %v8286
        %8521 = vmatpush.bf16.msra.mxu0 %v8278
        %8522 = vmatpush.bf16.msra.mxu0 %v8270
        %8523 = vmatpush.bf16.msra.mxu0 %v8262
        %8524 = vmatpush.bf16.msra.mxu0 %v8254
        %8525 = vmatpush.bf16.msra.mxu0 %v8246
        %8526 = vmatmul.bf16.gmra.mxu0 %v8390
        %v8527 = vpop.f32.mrf.mxu0
        %v8528 = vadd.f32 %v8515, %v8527
        %v8529 = vpop.f32.mrf.mxu0
        %8530 = vdwg.mxu0
        %8531 = vmatpush.bf16.msra.mxu0 %v7727
        %8532 = vmatpush.bf16.msra.mxu0 %v7719
        %8533 = vmatpush.bf16.msra.mxu0 %v7711
        %8534 = vmatpush.bf16.msra.mxu0 %v7703
        %8535 = vmatpush.bf16.msra.mxu0 %v7695
        %8536 = vmatpush.bf16.msra.mxu0 %v7687
        %8537 = vmatpush.bf16.msra.mxu0 %v7679
        %8538 = vmatpush.bf16.msra.mxu0 %v7671
        %8539 = vmatmul.bf16.gmra.mxu0 %v8381
        %v8540 = vpop.f32.mrf.mxu0
        %v8541 = vadd.f32 0.0, %v8540
        %v8542 = vpop.f32.mrf.mxu0
        %8543 = vdwg.mxu0
        %8544 = vmatpush.bf16.msra.mxu0 %v7791
        %8545 = vmatpush.bf16.msra.mxu0 %v7783
        %8546 = vmatpush.bf16.msra.mxu0 %v7775
        %8547 = vmatpush.bf16.msra.mxu0 %v7767
        %8548 = vmatpush.bf16.msra.mxu0 %v7759
        %8549 = vmatpush.bf16.msra.mxu0 %v7751
        %8550 = vmatpush.bf16.msra.mxu0 %v7743
        %8551 = vmatpush.bf16.msra.mxu0 %v7735
        %8552 = vmatmul.bf16.gmra.mxu0 %v8382
        %v8553 = vpop.f32.mrf.mxu0
        %v8554 = vadd.f32 %v8541, %v8553
        %v8555 = vpop.f32.mrf.mxu0
        %8556 = vdwg.mxu0
        %8557 = vmatpush.bf16.msra.mxu0 %v7855
        %8558 = vmatpush.bf16.msra.mxu0 %v7847
        %8559 = vmatpush.bf16.msra.mxu0 %v7839
        %8560 = vmatpush.bf16.msra.mxu0 %v7831
        %8561 = vmatpush.bf16.msra.mxu0 %v7823
        %8562 = vmatpush.bf16.msra.mxu0 %v7815
        %8563 = vmatpush.bf16.msra.mxu0 %v7807
        %8564 = vmatpush.bf16.msra.mxu0 %v7799
        %8565 = vmatmul.bf16.gmra.mxu0 %v8383
        %v8566 = vpop.f32.mrf.mxu0
        %v8567 = vadd.f32 %v8554, %v8566
        %v8568 = vpop.f32.mrf.mxu0
        %8569 = vdwg.mxu0
        %8570 = vmatpush.bf16.msra.mxu0 %v7919
        %8571 = vmatpush.bf16.msra.mxu0 %v7911
        %8572 = vmatpush.bf16.msra.mxu0 %v7903
        %8573 = vmatpush.bf16.msra.mxu0 %v7895
        %8574 = vmatpush.bf16.msra.mxu0 %v7887
        %8575 = vmatpush.bf16.msra.mxu0 %v7879
        %8576 = vmatpush.bf16.msra.mxu0 %v7871
        %8577 = vmatpush.bf16.msra.mxu0 %v7863
        %8578 = vmatmul.bf16.gmra.mxu0 %v8384
        %v8579 = vpop.f32.mrf.mxu0
        %v8580 = vadd.f32 %v8567, %v8579
        %v8581 = vpop.f32.mrf.mxu0
        %8582 = vdwg.mxu0
        %8583 = vmatpush.bf16.msra.mxu0 %v7983
        %8584 = vmatpush.bf16.msra.mxu0 %v7975
        %8585 = vmatpush.bf16.msra.mxu0 %v7967
        %8586 = vmatpush.bf16.msra.mxu0 %v7959
        %8587 = vmatpush.bf16.msra.mxu0 %v7951
        %8588 = vmatpush.bf16.msra.mxu0 %v7943
        %8589 = vmatpush.bf16.msra.mxu0 %v7935
        %8590 = vmatpush.bf16.msra.mxu0 %v7927
        %8591 = vmatmul.bf16.gmra.mxu0 %v8385
        %v8592 = vpop.f32.mrf.mxu0
        %v8593 = vadd.f32 %v8580, %v8592
        %v8594 = vpop.f32.mrf.mxu0
        %8595 = vdwg.mxu0
        %8596 = vmatpush.bf16.msra.mxu0 %v8047
        %8597 = vmatpush.bf16.msra.mxu0 %v8039
        %8598 = vmatpush.bf16.msra.mxu0 %v8031
        %8599 = vmatpush.bf16.msra.mxu0 %v8023
        %8600 = vmatpush.bf16.msra.mxu0 %v8015
        %8601 = vmatpush.bf16.msra.mxu0 %v8007
        %8602 = vmatpush.bf16.msra.mxu0 %v7999
        %8603 = vmatpush.bf16.msra.mxu0 %v7991
        %8604 = vmatmul.bf16.gmra.mxu0 %v8386
        %v8605 = vpop.f32.mrf.mxu0
        %v8606 = vadd.f32 %v8593, %v8605
        %v8607 = vpop.f32.mrf.mxu0
        %8608 = vdwg.mxu0
        %8609 = vmatpush.bf16.msra.mxu0 %v8111
        %8610 = vmatpush.bf16.msra.mxu0 %v8103
        %8611 = vmatpush.bf16.msra.mxu0 %v8095
        %8612 = vmatpush.bf16.msra.mxu0 %v8087
        %8613 = vmatpush.bf16.msra.mxu0 %v8079
        %8614 = vmatpush.bf16.msra.mxu0 %v8071
        %8615 = vmatpush.bf16.msra.mxu0 %v8063
        %8616 = vmatpush.bf16.msra.mxu0 %v8055
        %8617 = vmatmul.bf16.gmra.mxu0 %v8387
        %v8618 = vpop.f32.mrf.mxu0
        %v8619 = vadd.f32 %v8606, %v8618
        %v8620 = vpop.f32.mrf.mxu0
        %8621 = vdwg.mxu0
        %8622 = vmatpush.bf16.msra.mxu0 %v8175
        %8623 = vmatpush.bf16.msra.mxu0 %v8167
        %8624 = vmatpush.bf16.msra.mxu0 %v8159
        %8625 = vmatpush.bf16.msra.mxu0 %v8151
        %8626 = vmatpush.bf16.msra.mxu0 %v8143
        %8627 = vmatpush.bf16.msra.mxu0 %v8135
        %8628 = vmatpush.bf16.msra.mxu0 %v8127
        %8629 = vmatpush.bf16.msra.mxu0 %v8119
        %8630 = vmatmul.bf16.gmra.mxu0 %v8388
        %v8631 = vpop.f32.mrf.mxu0
        %v8632 = vadd.f32 %v8619, %v8631
        %v8633 = vpop.f32.mrf.mxu0
        %8634 = vdwg.mxu0
        %8635 = vmatpush.bf16.msra.mxu0 %v8239
        %8636 = vmatpush.bf16.msra.mxu0 %v8231
        %8637 = vmatpush.bf16.msra.mxu0 %v8223
        %8638 = vmatpush.bf16.msra.mxu0 %v8215
        %8639 = vmatpush.bf16.msra.mxu0 %v8207
        %8640 = vmatpush.bf16.msra.mxu0 %v8199
        %8641 = vmatpush.bf16.msra.mxu0 %v8191
        %8642 = vmatpush.bf16.msra.mxu0 %v8183
        %8643 = vmatmul.bf16.gmra.mxu0 %v8389
        %v8644 = vpop.f32.mrf.mxu0
        %v8645 = vadd.f32 %v8632, %v8644
        %v8646 = vpop.f32.mrf.mxu0
        %8647 = vdwg.mxu0
        %8648 = vmatpush.bf16.msra.mxu0 %v8303
        %8649 = vmatpush.bf16.msra.mxu0 %v8295
        %8650 = vmatpush.bf16.msra.mxu0 %v8287
        %8651 = vmatpush.bf16.msra.mxu0 %v8279
        %8652 = vmatpush.bf16.msra.mxu0 %v8271
        %8653 = vmatpush.bf16.msra.mxu0 %v8263
        %8654 = vmatpush.bf16.msra.mxu0 %v8255
        %8655 = vmatpush.bf16.msra.mxu0 %v8247
        %8656 = vmatmul.bf16.gmra.mxu0 %v8390
        %v8657 = vpop.f32.mrf.mxu0
        %v8658 = vadd.f32 %v8645, %v8657
        %v8659 = vpop.f32.mrf.mxu0
        %8660 = vdwg.mxu0
        %8661 = vmatpush.bf16.msra.mxu0 %v7728
        %8662 = vmatpush.bf16.msra.mxu0 %v7720
        %8663 = vmatpush.bf16.msra.mxu0 %v7712
        %8664 = vmatpush.bf16.msra.mxu0 %v7704
        %8665 = vmatpush.bf16.msra.mxu0 %v7696
        %8666 = vmatpush.bf16.msra.mxu0 %v7688
        %8667 = vmatpush.bf16.msra.mxu0 %v7680
        %8668 = vmatpush.bf16.msra.mxu0 %v7672
        %8669 = vmatmul.bf16.gmra.mxu0 %v8381
        %v8670 = vpop.f32.mrf.mxu0
        %v8671 = vadd.f32 0.0, %v8670
        %v8672 = vpop.f32.mrf.mxu0
        %8673 = vdwg.mxu0
        %8674 = vmatpush.bf16.msra.mxu0 %v7792
        %8675 = vmatpush.bf16.msra.mxu0 %v7784
        %8676 = vmatpush.bf16.msra.mxu0 %v7776
        %8677 = vmatpush.bf16.msra.mxu0 %v7768
        %8678 = vmatpush.bf16.msra.mxu0 %v7760
        %8679 = vmatpush.bf16.msra.mxu0 %v7752
        %8680 = vmatpush.bf16.msra.mxu0 %v7744
        %8681 = vmatpush.bf16.msra.mxu0 %v7736
        %8682 = vmatmul.bf16.gmra.mxu0 %v8382
        %v8683 = vpop.f32.mrf.mxu0
        %v8684 = vadd.f32 %v8671, %v8683
        %v8685 = vpop.f32.mrf.mxu0
        %8686 = vdwg.mxu0
        %8687 = vmatpush.bf16.msra.mxu0 %v7856
        %8688 = vmatpush.bf16.msra.mxu0 %v7848
        %8689 = vmatpush.bf16.msra.mxu0 %v7840
        %8690 = vmatpush.bf16.msra.mxu0 %v7832
        %8691 = vmatpush.bf16.msra.mxu0 %v7824
        %8692 = vmatpush.bf16.msra.mxu0 %v7816
        %8693 = vmatpush.bf16.msra.mxu0 %v7808
        %8694 = vmatpush.bf16.msra.mxu0 %v7800
        %8695 = vmatmul.bf16.gmra.mxu0 %v8383
        %v8696 = vpop.f32.mrf.mxu0
        %v8697 = vadd.f32 %v8684, %v8696
        %v8698 = vpop.f32.mrf.mxu0
        %8699 = vdwg.mxu0
        %8700 = vmatpush.bf16.msra.mxu0 %v7920
        %8701 = vmatpush.bf16.msra.mxu0 %v7912
        %8702 = vmatpush.bf16.msra.mxu0 %v7904
        %8703 = vmatpush.bf16.msra.mxu0 %v7896
        %8704 = vmatpush.bf16.msra.mxu0 %v7888
        %8705 = vmatpush.bf16.msra.mxu0 %v7880
        %8706 = vmatpush.bf16.msra.mxu0 %v7872
        %8707 = vmatpush.bf16.msra.mxu0 %v7864
        %8708 = vmatmul.bf16.gmra.mxu0 %v8384
        %v8709 = vpop.f32.mrf.mxu0
        %v8710 = vadd.f32 %v8697, %v8709
        %v8711 = vpop.f32.mrf.mxu0
        %8712 = vdwg.mxu0
        %8713 = vmatpush.bf16.msra.mxu0 %v7984
        %8714 = vmatpush.bf16.msra.mxu0 %v7976
        %8715 = vmatpush.bf16.msra.mxu0 %v7968
        %8716 = vmatpush.bf16.msra.mxu0 %v7960
        %8717 = vmatpush.bf16.msra.mxu0 %v7952
        %8718 = vmatpush.bf16.msra.mxu0 %v7944
        %8719 = vmatpush.bf16.msra.mxu0 %v7936
        %8720 = vmatpush.bf16.msra.mxu0 %v7928
        %8721 = vmatmul.bf16.gmra.mxu0 %v8385
        %v8722 = vpop.f32.mrf.mxu0
        %v8723 = vadd.f32 %v8710, %v8722
        %v8724 = vpop.f32.mrf.mxu0
        %8725 = vdwg.mxu0
        %8726 = vmatpush.bf16.msra.mxu0 %v8048
        %8727 = vmatpush.bf16.msra.mxu0 %v8040
        %8728 = vmatpush.bf16.msra.mxu0 %v8032
        %8729 = vmatpush.bf16.msra.mxu0 %v8024
        %8730 = vmatpush.bf16.msra.mxu0 %v8016
        %8731 = vmatpush.bf16.msra.mxu0 %v8008
        %8732 = vmatpush.bf16.msra.mxu0 %v8000
        %8733 = vmatpush.bf16.msra.mxu0 %v7992
        %8734 = vmatmul.bf16.gmra.mxu0 %v8386
        %v8735 = vpop.f32.mrf.mxu0
        %v8736 = vadd.f32 %v8723, %v8735
        %v8737 = vpop.f32.mrf.mxu0
        %8738 = vdwg.mxu0
        %8739 = vmatpush.bf16.msra.mxu0 %v8112
        %8740 = vmatpush.bf16.msra.mxu0 %v8104
        %8741 = vmatpush.bf16.msra.mxu0 %v8096
        %8742 = vmatpush.bf16.msra.mxu0 %v8088
        %8743 = vmatpush.bf16.msra.mxu0 %v8080
        %8744 = vmatpush.bf16.msra.mxu0 %v8072
        %8745 = vmatpush.bf16.msra.mxu0 %v8064
        %8746 = vmatpush.bf16.msra.mxu0 %v8056
        %8747 = vmatmul.bf16.gmra.mxu0 %v8387
        %v8748 = vpop.f32.mrf.mxu0
        %v8749 = vadd.f32 %v8736, %v8748
        %v8750 = vpop.f32.mrf.mxu0
        %8751 = vdwg.mxu0
        %8752 = vmatpush.bf16.msra.mxu0 %v8176
        %8753 = vmatpush.bf16.msra.mxu0 %v8168
        %8754 = vmatpush.bf16.msra.mxu0 %v8160
        %8755 = vmatpush.bf16.msra.mxu0 %v8152
        %8756 = vmatpush.bf16.msra.mxu0 %v8144
        %8757 = vmatpush.bf16.msra.mxu0 %v8136
        %8758 = vmatpush.bf16.msra.mxu0 %v8128
        %8759 = vmatpush.bf16.msra.mxu0 %v8120
        %8760 = vmatmul.bf16.gmra.mxu0 %v8388
        %v8761 = vpop.f32.mrf.mxu0
        %v8762 = vadd.f32 %v8749, %v8761
        %v8763 = vpop.f32.mrf.mxu0
        %8764 = vdwg.mxu0
        %8765 = vmatpush.bf16.msra.mxu0 %v8240
        %8766 = vmatpush.bf16.msra.mxu0 %v8232
        %8767 = vmatpush.bf16.msra.mxu0 %v8224
        %8768 = vmatpush.bf16.msra.mxu0 %v8216
        %8769 = vmatpush.bf16.msra.mxu0 %v8208
        %8770 = vmatpush.bf16.msra.mxu0 %v8200
        %8771 = vmatpush.bf16.msra.mxu0 %v8192
        %8772 = vmatpush.bf16.msra.mxu0 %v8184
        %8773 = vmatmul.bf16.gmra.mxu0 %v8389
        %v8774 = vpop.f32.mrf.mxu0
        %v8775 = vadd.f32 %v8762, %v8774
        %v8776 = vpop.f32.mrf.mxu0
        %8777 = vdwg.mxu0
        %8778 = vmatpush.bf16.msra.mxu0 %v8304
        %8779 = vmatpush.bf16.msra.mxu0 %v8296
        %8780 = vmatpush.bf16.msra.mxu0 %v8288
        %8781 = vmatpush.bf16.msra.mxu0 %v8280
        %8782 = vmatpush.bf16.msra.mxu0 %v8272
        %8783 = vmatpush.bf16.msra.mxu0 %v8264
        %8784 = vmatpush.bf16.msra.mxu0 %v8256
        %8785 = vmatpush.bf16.msra.mxu0 %v8248
        %8786 = vmatmul.bf16.gmra.mxu0 %v8390
        %v8787 = vpop.f32.mrf.mxu0
        %v8788 = vadd.f32 %v8775, %v8787
        %v8789 = vpop.f32.mrf.mxu0
        %8790 = vdwg.mxu0
        %8791 = vmatpush.bf16.msra.mxu0 %v7729
        %8792 = vmatpush.bf16.msra.mxu0 %v7721
        %8793 = vmatpush.bf16.msra.mxu0 %v7713
        %8794 = vmatpush.bf16.msra.mxu0 %v7705
        %8795 = vmatpush.bf16.msra.mxu0 %v7697
        %8796 = vmatpush.bf16.msra.mxu0 %v7689
        %8797 = vmatpush.bf16.msra.mxu0 %v7681
        %8798 = vmatpush.bf16.msra.mxu0 %v7673
        %8799 = vmatmul.bf16.gmra.mxu0 %v8381
        %v8800 = vpop.f32.mrf.mxu0
        %v8801 = vadd.f32 0.0, %v8800
        %v8802 = vpop.f32.mrf.mxu0
        %8803 = vdwg.mxu0
        %8804 = vmatpush.bf16.msra.mxu0 %v7793
        %8805 = vmatpush.bf16.msra.mxu0 %v7785
        %8806 = vmatpush.bf16.msra.mxu0 %v7777
        %8807 = vmatpush.bf16.msra.mxu0 %v7769
        %8808 = vmatpush.bf16.msra.mxu0 %v7761
        %8809 = vmatpush.bf16.msra.mxu0 %v7753
        %8810 = vmatpush.bf16.msra.mxu0 %v7745
        %8811 = vmatpush.bf16.msra.mxu0 %v7737
        %8812 = vmatmul.bf16.gmra.mxu0 %v8382
        %v8813 = vpop.f32.mrf.mxu0
        %v8814 = vadd.f32 %v8801, %v8813
        %v8815 = vpop.f32.mrf.mxu0
        %8816 = vdwg.mxu0
        %8817 = vmatpush.bf16.msra.mxu0 %v7857
        %8818 = vmatpush.bf16.msra.mxu0 %v7849
        %8819 = vmatpush.bf16.msra.mxu0 %v7841
        %8820 = vmatpush.bf16.msra.mxu0 %v7833
        %8821 = vmatpush.bf16.msra.mxu0 %v7825
        %8822 = vmatpush.bf16.msra.mxu0 %v7817
        %8823 = vmatpush.bf16.msra.mxu0 %v7809
        %8824 = vmatpush.bf16.msra.mxu0 %v7801
        %8825 = vmatmul.bf16.gmra.mxu0 %v8383
        %v8826 = vpop.f32.mrf.mxu0
        %v8827 = vadd.f32 %v8814, %v8826
        %v8828 = vpop.f32.mrf.mxu0
        %8829 = vdwg.mxu0
        %8830 = vmatpush.bf16.msra.mxu0 %v7921
        %8831 = vmatpush.bf16.msra.mxu0 %v7913
        %8832 = vmatpush.bf16.msra.mxu0 %v7905
        %8833 = vmatpush.bf16.msra.mxu0 %v7897
        %8834 = vmatpush.bf16.msra.mxu0 %v7889
        %8835 = vmatpush.bf16.msra.mxu0 %v7881
        %8836 = vmatpush.bf16.msra.mxu0 %v7873
        %8837 = vmatpush.bf16.msra.mxu0 %v7865
        %8838 = vmatmul.bf16.gmra.mxu0 %v8384
        %v8839 = vpop.f32.mrf.mxu0
        %v8840 = vadd.f32 %v8827, %v8839
        %v8841 = vpop.f32.mrf.mxu0
        %8842 = vdwg.mxu0
        %8843 = vmatpush.bf16.msra.mxu0 %v7985
        %8844 = vmatpush.bf16.msra.mxu0 %v7977
        %8845 = vmatpush.bf16.msra.mxu0 %v7969
        %8846 = vmatpush.bf16.msra.mxu0 %v7961
        %8847 = vmatpush.bf16.msra.mxu0 %v7953
        %8848 = vmatpush.bf16.msra.mxu0 %v7945
        %8849 = vmatpush.bf16.msra.mxu0 %v7937
        %8850 = vmatpush.bf16.msra.mxu0 %v7929
        %8851 = vmatmul.bf16.gmra.mxu0 %v8385
        %v8852 = vpop.f32.mrf.mxu0
        %v8853 = vadd.f32 %v8840, %v8852
        %v8854 = vpop.f32.mrf.mxu0
        %8855 = vdwg.mxu0
        %8856 = vmatpush.bf16.msra.mxu0 %v8049
        %8857 = vmatpush.bf16.msra.mxu0 %v8041
        %8858 = vmatpush.bf16.msra.mxu0 %v8033
        %8859 = vmatpush.bf16.msra.mxu0 %v8025
        %8860 = vmatpush.bf16.msra.mxu0 %v8017
        %8861 = vmatpush.bf16.msra.mxu0 %v8009
        %8862 = vmatpush.bf16.msra.mxu0 %v8001
        %8863 = vmatpush.bf16.msra.mxu0 %v7993
        %8864 = vmatmul.bf16.gmra.mxu0 %v8386
        %v8865 = vpop.f32.mrf.mxu0
        %v8866 = vadd.f32 %v8853, %v8865
        %v8867 = vpop.f32.mrf.mxu0
        %8868 = vdwg.mxu0
        %8869 = vmatpush.bf16.msra.mxu0 %v8113
        %8870 = vmatpush.bf16.msra.mxu0 %v8105
        %8871 = vmatpush.bf16.msra.mxu0 %v8097
        %8872 = vmatpush.bf16.msra.mxu0 %v8089
        %8873 = vmatpush.bf16.msra.mxu0 %v8081
        %8874 = vmatpush.bf16.msra.mxu0 %v8073
        %8875 = vmatpush.bf16.msra.mxu0 %v8065
        %8876 = vmatpush.bf16.msra.mxu0 %v8057
        %8877 = vmatmul.bf16.gmra.mxu0 %v8387
        %v8878 = vpop.f32.mrf.mxu0
        %v8879 = vadd.f32 %v8866, %v8878
        %v8880 = vpop.f32.mrf.mxu0
        %8881 = vdwg.mxu0
        %8882 = vmatpush.bf16.msra.mxu0 %v8177
        %8883 = vmatpush.bf16.msra.mxu0 %v8169
        %8884 = vmatpush.bf16.msra.mxu0 %v8161
        %8885 = vmatpush.bf16.msra.mxu0 %v8153
        %8886 = vmatpush.bf16.msra.mxu0 %v8145
        %8887 = vmatpush.bf16.msra.mxu0 %v8137
        %8888 = vmatpush.bf16.msra.mxu0 %v8129
        %8889 = vmatpush.bf16.msra.mxu0 %v8121
        %8890 = vmatmul.bf16.gmra.mxu0 %v8388
        %v8891 = vpop.f32.mrf.mxu0
        %v8892 = vadd.f32 %v8879, %v8891
        %v8893 = vpop.f32.mrf.mxu0
        %8894 = vdwg.mxu0
        %8895 = vmatpush.bf16.msra.mxu0 %v8241
        %8896 = vmatpush.bf16.msra.mxu0 %v8233
        %8897 = vmatpush.bf16.msra.mxu0 %v8225
        %8898 = vmatpush.bf16.msra.mxu0 %v8217
        %8899 = vmatpush.bf16.msra.mxu0 %v8209
        %8900 = vmatpush.bf16.msra.mxu0 %v8201
        %8901 = vmatpush.bf16.msra.mxu0 %v8193
        %8902 = vmatpush.bf16.msra.mxu0 %v8185
        %8903 = vmatmul.bf16.gmra.mxu0 %v8389
        %v8904 = vpop.f32.mrf.mxu0
        %v8905 = vadd.f32 %v8892, %v8904
        %v8906 = vpop.f32.mrf.mxu0
        %8907 = vdwg.mxu0
        %8908 = vmatpush.bf16.msra.mxu0 %v8305
        %8909 = vmatpush.bf16.msra.mxu0 %v8297
        %8910 = vmatpush.bf16.msra.mxu0 %v8289
        %8911 = vmatpush.bf16.msra.mxu0 %v8281
        %8912 = vmatpush.bf16.msra.mxu0 %v8273
        %8913 = vmatpush.bf16.msra.mxu0 %v8265
        %8914 = vmatpush.bf16.msra.mxu0 %v8257
        %8915 = vmatpush.bf16.msra.mxu0 %v8249
        %8916 = vmatmul.bf16.gmra.mxu0 %v8390
        %v8917 = vpop.f32.mrf.mxu0
        %v8918 = vadd.f32 %v8905, %v8917
        %v8919 = vpop.f32.mrf.mxu0
        %8920 = vdwg.mxu0
        %8921 = vmatpush.bf16.msra.mxu0 %v7730
        %8922 = vmatpush.bf16.msra.mxu0 %v7722
        %8923 = vmatpush.bf16.msra.mxu0 %v7714
        %8924 = vmatpush.bf16.msra.mxu0 %v7706
        %8925 = vmatpush.bf16.msra.mxu0 %v7698
        %8926 = vmatpush.bf16.msra.mxu0 %v7690
        %8927 = vmatpush.bf16.msra.mxu0 %v7682
        %8928 = vmatpush.bf16.msra.mxu0 %v7674
        %8929 = vmatmul.bf16.gmra.mxu0 %v8381
        %v8930 = vpop.f32.mrf.mxu0
        %v8931 = vadd.f32 0.0, %v8930
        %v8932 = vpop.f32.mrf.mxu0
        %8933 = vdwg.mxu0
        %8934 = vmatpush.bf16.msra.mxu0 %v7794
        %8935 = vmatpush.bf16.msra.mxu0 %v7786
        %8936 = vmatpush.bf16.msra.mxu0 %v7778
        %8937 = vmatpush.bf16.msra.mxu0 %v7770
        %8938 = vmatpush.bf16.msra.mxu0 %v7762
        %8939 = vmatpush.bf16.msra.mxu0 %v7754
        %8940 = vmatpush.bf16.msra.mxu0 %v7746
        %8941 = vmatpush.bf16.msra.mxu0 %v7738
        %8942 = vmatmul.bf16.gmra.mxu0 %v8382
        %v8943 = vpop.f32.mrf.mxu0
        %v8944 = vadd.f32 %v8931, %v8943
        %v8945 = vpop.f32.mrf.mxu0
        %8946 = vdwg.mxu0
        %8947 = vmatpush.bf16.msra.mxu0 %v7858
        %8948 = vmatpush.bf16.msra.mxu0 %v7850
        %8949 = vmatpush.bf16.msra.mxu0 %v7842
        %8950 = vmatpush.bf16.msra.mxu0 %v7834
        %8951 = vmatpush.bf16.msra.mxu0 %v7826
        %8952 = vmatpush.bf16.msra.mxu0 %v7818
        %8953 = vmatpush.bf16.msra.mxu0 %v7810
        %8954 = vmatpush.bf16.msra.mxu0 %v7802
        %8955 = vmatmul.bf16.gmra.mxu0 %v8383
        %v8956 = vpop.f32.mrf.mxu0
        %v8957 = vadd.f32 %v8944, %v8956
        %v8958 = vpop.f32.mrf.mxu0
        %8959 = vdwg.mxu0
        %8960 = vmatpush.bf16.msra.mxu0 %v7922
        %8961 = vmatpush.bf16.msra.mxu0 %v7914
        %8962 = vmatpush.bf16.msra.mxu0 %v7906
        %8963 = vmatpush.bf16.msra.mxu0 %v7898
        %8964 = vmatpush.bf16.msra.mxu0 %v7890
        %8965 = vmatpush.bf16.msra.mxu0 %v7882
        %8966 = vmatpush.bf16.msra.mxu0 %v7874
        %8967 = vmatpush.bf16.msra.mxu0 %v7866
        %8968 = vmatmul.bf16.gmra.mxu0 %v8384
        %v8969 = vpop.f32.mrf.mxu0
        %v8970 = vadd.f32 %v8957, %v8969
        %v8971 = vpop.f32.mrf.mxu0
        %8972 = vdwg.mxu0
        %8973 = vmatpush.bf16.msra.mxu0 %v7986
        %8974 = vmatpush.bf16.msra.mxu0 %v7978
        %8975 = vmatpush.bf16.msra.mxu0 %v7970
        %8976 = vmatpush.bf16.msra.mxu0 %v7962
        %8977 = vmatpush.bf16.msra.mxu0 %v7954
        %8978 = vmatpush.bf16.msra.mxu0 %v7946
        %8979 = vmatpush.bf16.msra.mxu0 %v7938
        %8980 = vmatpush.bf16.msra.mxu0 %v7930
        %8981 = vmatmul.bf16.gmra.mxu0 %v8385
        %v8982 = vpop.f32.mrf.mxu0
        %v8983 = vadd.f32 %v8970, %v8982
        %v8984 = vpop.f32.mrf.mxu0
        %8985 = vdwg.mxu0
        %8986 = vmatpush.bf16.msra.mxu0 %v8050
        %8987 = vmatpush.bf16.msra.mxu0 %v8042
        %8988 = vmatpush.bf16.msra.mxu0 %v8034
        %8989 = vmatpush.bf16.msra.mxu0 %v8026
        %8990 = vmatpush.bf16.msra.mxu0 %v8018
        %8991 = vmatpush.bf16.msra.mxu0 %v8010
        %8992 = vmatpush.bf16.msra.mxu0 %v8002
        %8993 = vmatpush.bf16.msra.mxu0 %v7994
        %8994 = vmatmul.bf16.gmra.mxu0 %v8386
        %v8995 = vpop.f32.mrf.mxu0
        %v8996 = vadd.f32 %v8983, %v8995
        %v8997 = vpop.f32.mrf.mxu0
        %8998 = vdwg.mxu0
        %8999 = vmatpush.bf16.msra.mxu0 %v8114
        %9000 = vmatpush.bf16.msra.mxu0 %v8106
        %9001 = vmatpush.bf16.msra.mxu0 %v8098
        %9002 = vmatpush.bf16.msra.mxu0 %v8090
        %9003 = vmatpush.bf16.msra.mxu0 %v8082
        %9004 = vmatpush.bf16.msra.mxu0 %v8074
        %9005 = vmatpush.bf16.msra.mxu0 %v8066
        %9006 = vmatpush.bf16.msra.mxu0 %v8058
        %9007 = vmatmul.bf16.gmra.mxu0 %v8387
        %v9008 = vpop.f32.mrf.mxu0
        %v9009 = vadd.f32 %v8996, %v9008
        %v9010 = vpop.f32.mrf.mxu0
        %9011 = vdwg.mxu0
        %9012 = vmatpush.bf16.msra.mxu0 %v8178
        %9013 = vmatpush.bf16.msra.mxu0 %v8170
        %9014 = vmatpush.bf16.msra.mxu0 %v8162
        %9015 = vmatpush.bf16.msra.mxu0 %v8154
        %9016 = vmatpush.bf16.msra.mxu0 %v8146
        %9017 = vmatpush.bf16.msra.mxu0 %v8138
        %9018 = vmatpush.bf16.msra.mxu0 %v8130
        %9019 = vmatpush.bf16.msra.mxu0 %v8122
        %9020 = vmatmul.bf16.gmra.mxu0 %v8388
        %v9021 = vpop.f32.mrf.mxu0
        %v9022 = vadd.f32 %v9009, %v9021
        %v9023 = vpop.f32.mrf.mxu0
        %9024 = vdwg.mxu0
        %9025 = vmatpush.bf16.msra.mxu0 %v8242
        %9026 = vmatpush.bf16.msra.mxu0 %v8234
        %9027 = vmatpush.bf16.msra.mxu0 %v8226
        %9028 = vmatpush.bf16.msra.mxu0 %v8218
        %9029 = vmatpush.bf16.msra.mxu0 %v8210
        %9030 = vmatpush.bf16.msra.mxu0 %v8202
        %9031 = vmatpush.bf16.msra.mxu0 %v8194
        %9032 = vmatpush.bf16.msra.mxu0 %v8186
        %9033 = vmatmul.bf16.gmra.mxu0 %v8389
        %v9034 = vpop.f32.mrf.mxu0
        %v9035 = vadd.f32 %v9022, %v9034
        %v9036 = vpop.f32.mrf.mxu0
        %9037 = vdwg.mxu0
        %9038 = vmatpush.bf16.msra.mxu0 %v8306
        %9039 = vmatpush.bf16.msra.mxu0 %v8298
        %9040 = vmatpush.bf16.msra.mxu0 %v8290
        %9041 = vmatpush.bf16.msra.mxu0 %v8282
        %9042 = vmatpush.bf16.msra.mxu0 %v8274
        %9043 = vmatpush.bf16.msra.mxu0 %v8266
        %9044 = vmatpush.bf16.msra.mxu0 %v8258
        %9045 = vmatpush.bf16.msra.mxu0 %v8250
        %9046 = vmatmul.bf16.gmra.mxu0 %v8390
        %v9047 = vpop.f32.mrf.mxu0
        %v9048 = vadd.f32 %v9035, %v9047
        %v9049 = vpop.f32.mrf.mxu0
        %9050 = vdwg.mxu0
        %9051 = vmatpush.bf16.msra.mxu0 %v7731
        %9052 = vmatpush.bf16.msra.mxu0 %v7723
        %9053 = vmatpush.bf16.msra.mxu0 %v7715
        %9054 = vmatpush.bf16.msra.mxu0 %v7707
        %9055 = vmatpush.bf16.msra.mxu0 %v7699
        %9056 = vmatpush.bf16.msra.mxu0 %v7691
        %9057 = vmatpush.bf16.msra.mxu0 %v7683
        %9058 = vmatpush.bf16.msra.mxu0 %v7675
        %9059 = vmatmul.bf16.gmra.mxu0 %v8381
        %v9060 = vpop.f32.mrf.mxu0
        %v9061 = vadd.f32 0.0, %v9060
        %v9062 = vpop.f32.mrf.mxu0
        %9063 = vdwg.mxu0
        %9064 = vmatpush.bf16.msra.mxu0 %v7795
        %9065 = vmatpush.bf16.msra.mxu0 %v7787
        %9066 = vmatpush.bf16.msra.mxu0 %v7779
        %9067 = vmatpush.bf16.msra.mxu0 %v7771
        %9068 = vmatpush.bf16.msra.mxu0 %v7763
        %9069 = vmatpush.bf16.msra.mxu0 %v7755
        %9070 = vmatpush.bf16.msra.mxu0 %v7747
        %9071 = vmatpush.bf16.msra.mxu0 %v7739
        %9072 = vmatmul.bf16.gmra.mxu0 %v8382
        %v9073 = vpop.f32.mrf.mxu0
        %v9074 = vadd.f32 %v9061, %v9073
        %v9075 = vpop.f32.mrf.mxu0
        %9076 = vdwg.mxu0
        %9077 = vmatpush.bf16.msra.mxu0 %v7859
        %9078 = vmatpush.bf16.msra.mxu0 %v7851
        %9079 = vmatpush.bf16.msra.mxu0 %v7843
        %9080 = vmatpush.bf16.msra.mxu0 %v7835
        %9081 = vmatpush.bf16.msra.mxu0 %v7827
        %9082 = vmatpush.bf16.msra.mxu0 %v7819
        %9083 = vmatpush.bf16.msra.mxu0 %v7811
        %9084 = vmatpush.bf16.msra.mxu0 %v7803
        %9085 = vmatmul.bf16.gmra.mxu0 %v8383
        %v9086 = vpop.f32.mrf.mxu0
        %v9087 = vadd.f32 %v9074, %v9086
        %v9088 = vpop.f32.mrf.mxu0
        %9089 = vdwg.mxu0
        %9090 = vmatpush.bf16.msra.mxu0 %v7923
        %9091 = vmatpush.bf16.msra.mxu0 %v7915
        %9092 = vmatpush.bf16.msra.mxu0 %v7907
        %9093 = vmatpush.bf16.msra.mxu0 %v7899
        %9094 = vmatpush.bf16.msra.mxu0 %v7891
        %9095 = vmatpush.bf16.msra.mxu0 %v7883
        %9096 = vmatpush.bf16.msra.mxu0 %v7875
        %9097 = vmatpush.bf16.msra.mxu0 %v7867
        %9098 = vmatmul.bf16.gmra.mxu0 %v8384
        %v9099 = vpop.f32.mrf.mxu0
        %v9100 = vadd.f32 %v9087, %v9099
        %v9101 = vpop.f32.mrf.mxu0
        %9102 = vdwg.mxu0
        %9103 = vmatpush.bf16.msra.mxu0 %v7987
        %9104 = vmatpush.bf16.msra.mxu0 %v7979
        %9105 = vmatpush.bf16.msra.mxu0 %v7971
        %9106 = vmatpush.bf16.msra.mxu0 %v7963
        %9107 = vmatpush.bf16.msra.mxu0 %v7955
        %9108 = vmatpush.bf16.msra.mxu0 %v7947
        %9109 = vmatpush.bf16.msra.mxu0 %v7939
        %9110 = vmatpush.bf16.msra.mxu0 %v7931
        %9111 = vmatmul.bf16.gmra.mxu0 %v8385
        %v9112 = vpop.f32.mrf.mxu0
        %v9113 = vadd.f32 %v9100, %v9112
        %v9114 = vpop.f32.mrf.mxu0
        %9115 = vdwg.mxu0
        %9116 = vmatpush.bf16.msra.mxu0 %v8051
        %9117 = vmatpush.bf16.msra.mxu0 %v8043
        %9118 = vmatpush.bf16.msra.mxu0 %v8035
        %9119 = vmatpush.bf16.msra.mxu0 %v8027
        %9120 = vmatpush.bf16.msra.mxu0 %v8019
        %9121 = vmatpush.bf16.msra.mxu0 %v8011
        %9122 = vmatpush.bf16.msra.mxu0 %v8003
        %9123 = vmatpush.bf16.msra.mxu0 %v7995
        %9124 = vmatmul.bf16.gmra.mxu0 %v8386
        %v9125 = vpop.f32.mrf.mxu0
        %v9126 = vadd.f32 %v9113, %v9125
        %v9127 = vpop.f32.mrf.mxu0
        %9128 = vdwg.mxu0
        %9129 = vmatpush.bf16.msra.mxu0 %v8115
        %9130 = vmatpush.bf16.msra.mxu0 %v8107
        %9131 = vmatpush.bf16.msra.mxu0 %v8099
        %9132 = vmatpush.bf16.msra.mxu0 %v8091
        %9133 = vmatpush.bf16.msra.mxu0 %v8083
        %9134 = vmatpush.bf16.msra.mxu0 %v8075
        %9135 = vmatpush.bf16.msra.mxu0 %v8067
        %9136 = vmatpush.bf16.msra.mxu0 %v8059
        %9137 = vmatmul.bf16.gmra.mxu0 %v8387
        %v9138 = vpop.f32.mrf.mxu0
        %v9139 = vadd.f32 %v9126, %v9138
        %v9140 = vpop.f32.mrf.mxu0
        %9141 = vdwg.mxu0
        %9142 = vmatpush.bf16.msra.mxu0 %v8179
        %9143 = vmatpush.bf16.msra.mxu0 %v8171
        %9144 = vmatpush.bf16.msra.mxu0 %v8163
        %9145 = vmatpush.bf16.msra.mxu0 %v8155
        %9146 = vmatpush.bf16.msra.mxu0 %v8147
        %9147 = vmatpush.bf16.msra.mxu0 %v8139
        %9148 = vmatpush.bf16.msra.mxu0 %v8131
        %9149 = vmatpush.bf16.msra.mxu0 %v8123
        %9150 = vmatmul.bf16.gmra.mxu0 %v8388
        %v9151 = vpop.f32.mrf.mxu0
        %v9152 = vadd.f32 %v9139, %v9151
        %v9153 = vpop.f32.mrf.mxu0
        %9154 = vdwg.mxu0
        %9155 = vmatpush.bf16.msra.mxu0 %v8243
        %9156 = vmatpush.bf16.msra.mxu0 %v8235
        %9157 = vmatpush.bf16.msra.mxu0 %v8227
        %9158 = vmatpush.bf16.msra.mxu0 %v8219
        %9159 = vmatpush.bf16.msra.mxu0 %v8211
        %9160 = vmatpush.bf16.msra.mxu0 %v8203
        %9161 = vmatpush.bf16.msra.mxu0 %v8195
        %9162 = vmatpush.bf16.msra.mxu0 %v8187
        %9163 = vmatmul.bf16.gmra.mxu0 %v8389
        %v9164 = vpop.f32.mrf.mxu0
        %v9165 = vadd.f32 %v9152, %v9164
        %v9166 = vpop.f32.mrf.mxu0
        %9167 = vdwg.mxu0
        %9168 = vmatpush.bf16.msra.mxu0 %v8307
        %9169 = vmatpush.bf16.msra.mxu0 %v8299
        %9170 = vmatpush.bf16.msra.mxu0 %v8291
        %9171 = vmatpush.bf16.msra.mxu0 %v8283
        %9172 = vmatpush.bf16.msra.mxu0 %v8275
        %9173 = vmatpush.bf16.msra.mxu0 %v8267
        %9174 = vmatpush.bf16.msra.mxu0 %v8259
        %9175 = vmatpush.bf16.msra.mxu0 %v8251
        %9176 = vmatmul.bf16.gmra.mxu0 %v8390
        %v9177 = vpop.f32.mrf.mxu0
        %v9178 = vadd.f32 %v9165, %v9177
        %v9179 = vpop.f32.mrf.mxu0
        %9180 = vdwg.mxu0
        %9181 = vmatpush.bf16.msra.mxu0 %v7732
        %9182 = vmatpush.bf16.msra.mxu0 %v7724
        %9183 = vmatpush.bf16.msra.mxu0 %v7716
        %9184 = vmatpush.bf16.msra.mxu0 %v7708
        %9185 = vmatpush.bf16.msra.mxu0 %v7700
        %9186 = vmatpush.bf16.msra.mxu0 %v7692
        %9187 = vmatpush.bf16.msra.mxu0 %v7684
        %9188 = vmatpush.bf16.msra.mxu0 %v7676
        %9189 = vmatmul.bf16.gmra.mxu0 %v8381
        %v9190 = vpop.f32.mrf.mxu0
        %v9191 = vadd.f32 0.0, %v9190
        %v9192 = vpop.f32.mrf.mxu0
        %9193 = vdwg.mxu0
        %9194 = vmatpush.bf16.msra.mxu0 %v7796
        %9195 = vmatpush.bf16.msra.mxu0 %v7788
        %9196 = vmatpush.bf16.msra.mxu0 %v7780
        %9197 = vmatpush.bf16.msra.mxu0 %v7772
        %9198 = vmatpush.bf16.msra.mxu0 %v7764
        %9199 = vmatpush.bf16.msra.mxu0 %v7756
        %9200 = vmatpush.bf16.msra.mxu0 %v7748
        %9201 = vmatpush.bf16.msra.mxu0 %v7740
        %9202 = vmatmul.bf16.gmra.mxu0 %v8382
        %v9203 = vpop.f32.mrf.mxu0
        %v9204 = vadd.f32 %v9191, %v9203
        %v9205 = vpop.f32.mrf.mxu0
        %9206 = vdwg.mxu0
        %9207 = vmatpush.bf16.msra.mxu0 %v7860
        %9208 = vmatpush.bf16.msra.mxu0 %v7852
        %9209 = vmatpush.bf16.msra.mxu0 %v7844
        %9210 = vmatpush.bf16.msra.mxu0 %v7836
        %9211 = vmatpush.bf16.msra.mxu0 %v7828
        %9212 = vmatpush.bf16.msra.mxu0 %v7820
        %9213 = vmatpush.bf16.msra.mxu0 %v7812
        %9214 = vmatpush.bf16.msra.mxu0 %v7804
        %9215 = vmatmul.bf16.gmra.mxu0 %v8383
        %v9216 = vpop.f32.mrf.mxu0
        %v9217 = vadd.f32 %v9204, %v9216
        %v9218 = vpop.f32.mrf.mxu0
        %9219 = vdwg.mxu0
        %9220 = vmatpush.bf16.msra.mxu0 %v7924
        %9221 = vmatpush.bf16.msra.mxu0 %v7916
        %9222 = vmatpush.bf16.msra.mxu0 %v7908
        %9223 = vmatpush.bf16.msra.mxu0 %v7900
        %9224 = vmatpush.bf16.msra.mxu0 %v7892
        %9225 = vmatpush.bf16.msra.mxu0 %v7884
        %9226 = vmatpush.bf16.msra.mxu0 %v7876
        %9227 = vmatpush.bf16.msra.mxu0 %v7868
        %9228 = vmatmul.bf16.gmra.mxu0 %v8384
        %v9229 = vpop.f32.mrf.mxu0
        %v9230 = vadd.f32 %v9217, %v9229
        %v9231 = vpop.f32.mrf.mxu0
        %9232 = vdwg.mxu0
        %9233 = vmatpush.bf16.msra.mxu0 %v7988
        %9234 = vmatpush.bf16.msra.mxu0 %v7980
        %9235 = vmatpush.bf16.msra.mxu0 %v7972
        %9236 = vmatpush.bf16.msra.mxu0 %v7964
        %9237 = vmatpush.bf16.msra.mxu0 %v7956
        %9238 = vmatpush.bf16.msra.mxu0 %v7948
        %9239 = vmatpush.bf16.msra.mxu0 %v7940
        %9240 = vmatpush.bf16.msra.mxu0 %v7932
        %9241 = vmatmul.bf16.gmra.mxu0 %v8385
        %v9242 = vpop.f32.mrf.mxu0
        %v9243 = vadd.f32 %v9230, %v9242
        %v9244 = vpop.f32.mrf.mxu0
        %9245 = vdwg.mxu0
        %9246 = vmatpush.bf16.msra.mxu0 %v8052
        %9247 = vmatpush.bf16.msra.mxu0 %v8044
        %9248 = vmatpush.bf16.msra.mxu0 %v8036
        %9249 = vmatpush.bf16.msra.mxu0 %v8028
        %9250 = vmatpush.bf16.msra.mxu0 %v8020
        %9251 = vmatpush.bf16.msra.mxu0 %v8012
        %9252 = vmatpush.bf16.msra.mxu0 %v8004
        %9253 = vmatpush.bf16.msra.mxu0 %v7996
        %9254 = vmatmul.bf16.gmra.mxu0 %v8386
        %v9255 = vpop.f32.mrf.mxu0
        %v9256 = vadd.f32 %v9243, %v9255
        %v9257 = vpop.f32.mrf.mxu0
        %9258 = vdwg.mxu0
        %9259 = vmatpush.bf16.msra.mxu0 %v8116
        %9260 = vmatpush.bf16.msra.mxu0 %v8108
        %9261 = vmatpush.bf16.msra.mxu0 %v8100
        %9262 = vmatpush.bf16.msra.mxu0 %v8092
        %9263 = vmatpush.bf16.msra.mxu0 %v8084
        %9264 = vmatpush.bf16.msra.mxu0 %v8076
        %9265 = vmatpush.bf16.msra.mxu0 %v8068
        %9266 = vmatpush.bf16.msra.mxu0 %v8060
        %9267 = vmatmul.bf16.gmra.mxu0 %v8387
        %v9268 = vpop.f32.mrf.mxu0
        %v9269 = vadd.f32 %v9256, %v9268
        %v9270 = vpop.f32.mrf.mxu0
        %9271 = vdwg.mxu0
        %9272 = vmatpush.bf16.msra.mxu0 %v8180
        %9273 = vmatpush.bf16.msra.mxu0 %v8172
        %9274 = vmatpush.bf16.msra.mxu0 %v8164
        %9275 = vmatpush.bf16.msra.mxu0 %v8156
        %9276 = vmatpush.bf16.msra.mxu0 %v8148
        %9277 = vmatpush.bf16.msra.mxu0 %v8140
        %9278 = vmatpush.bf16.msra.mxu0 %v8132
        %9279 = vmatpush.bf16.msra.mxu0 %v8124
        %9280 = vmatmul.bf16.gmra.mxu0 %v8388
        %v9281 = vpop.f32.mrf.mxu0
        %v9282 = vadd.f32 %v9269, %v9281
        %v9283 = vpop.f32.mrf.mxu0
        %9284 = vdwg.mxu0
        %9285 = vmatpush.bf16.msra.mxu0 %v8244
        %9286 = vmatpush.bf16.msra.mxu0 %v8236
        %9287 = vmatpush.bf16.msra.mxu0 %v8228
        %9288 = vmatpush.bf16.msra.mxu0 %v8220
        %9289 = vmatpush.bf16.msra.mxu0 %v8212
        %9290 = vmatpush.bf16.msra.mxu0 %v8204
        %9291 = vmatpush.bf16.msra.mxu0 %v8196
        %9292 = vmatpush.bf16.msra.mxu0 %v8188
        %9293 = vmatmul.bf16.gmra.mxu0 %v8389
        %v9294 = vpop.f32.mrf.mxu0
        %v9295 = vadd.f32 %v9282, %v9294
        %v9296 = vpop.f32.mrf.mxu0
        %9297 = vdwg.mxu0
        %9298 = vmatpush.bf16.msra.mxu0 %v8308
        %9299 = vmatpush.bf16.msra.mxu0 %v8300
        %9300 = vmatpush.bf16.msra.mxu0 %v8292
        %9301 = vmatpush.bf16.msra.mxu0 %v8284
        %9302 = vmatpush.bf16.msra.mxu0 %v8276
        %9303 = vmatpush.bf16.msra.mxu0 %v8268
        %9304 = vmatpush.bf16.msra.mxu0 %v8260
        %9305 = vmatpush.bf16.msra.mxu0 %v8252
        %9306 = vmatmul.bf16.gmra.mxu0 %v8390
        %v9307 = vpop.f32.mrf.mxu0
        %v9308 = vadd.f32 %v9295, %v9307
        %v9309 = vpop.f32.mrf.mxu0
        %9310 = vdwg.mxu0
        %9311 = vmatpush.bf16.msra.mxu0 %v7733
        %9312 = vmatpush.bf16.msra.mxu0 %v7725
        %9313 = vmatpush.bf16.msra.mxu0 %v7717
        %9314 = vmatpush.bf16.msra.mxu0 %v7709
        %9315 = vmatpush.bf16.msra.mxu0 %v7701
        %9316 = vmatpush.bf16.msra.mxu0 %v7693
        %9317 = vmatpush.bf16.msra.mxu0 %v7685
        %9318 = vmatpush.bf16.msra.mxu0 %v7677
        %9319 = vmatmul.bf16.gmra.mxu0 %v8381
        %v9320 = vpop.f32.mrf.mxu0
        %v9321 = vadd.f32 0.0, %v9320
        %v9322 = vpop.f32.mrf.mxu0
        %9323 = vdwg.mxu0
        %9324 = vmatpush.bf16.msra.mxu0 %v7797
        %9325 = vmatpush.bf16.msra.mxu0 %v7789
        %9326 = vmatpush.bf16.msra.mxu0 %v7781
        %9327 = vmatpush.bf16.msra.mxu0 %v7773
        %9328 = vmatpush.bf16.msra.mxu0 %v7765
        %9329 = vmatpush.bf16.msra.mxu0 %v7757
        %9330 = vmatpush.bf16.msra.mxu0 %v7749
        %9331 = vmatpush.bf16.msra.mxu0 %v7741
        %9332 = vmatmul.bf16.gmra.mxu0 %v8382
        %v9333 = vpop.f32.mrf.mxu0
        %v9334 = vadd.f32 %v9321, %v9333
        %v9335 = vpop.f32.mrf.mxu0
        %9336 = vdwg.mxu0
        %9337 = vmatpush.bf16.msra.mxu0 %v7861
        %9338 = vmatpush.bf16.msra.mxu0 %v7853
        %9339 = vmatpush.bf16.msra.mxu0 %v7845
        %9340 = vmatpush.bf16.msra.mxu0 %v7837
        %9341 = vmatpush.bf16.msra.mxu0 %v7829
        %9342 = vmatpush.bf16.msra.mxu0 %v7821
        %9343 = vmatpush.bf16.msra.mxu0 %v7813
        %9344 = vmatpush.bf16.msra.mxu0 %v7805
        %9345 = vmatmul.bf16.gmra.mxu0 %v8383
        %v9346 = vpop.f32.mrf.mxu0
        %v9347 = vadd.f32 %v9334, %v9346
        %v9348 = vpop.f32.mrf.mxu0
        %9349 = vdwg.mxu0
        %9350 = vmatpush.bf16.msra.mxu0 %v7925
        %9351 = vmatpush.bf16.msra.mxu0 %v7917
        %9352 = vmatpush.bf16.msra.mxu0 %v7909
        %9353 = vmatpush.bf16.msra.mxu0 %v7901
        %9354 = vmatpush.bf16.msra.mxu0 %v7893
        %9355 = vmatpush.bf16.msra.mxu0 %v7885
        %9356 = vmatpush.bf16.msra.mxu0 %v7877
        %9357 = vmatpush.bf16.msra.mxu0 %v7869
        %9358 = vmatmul.bf16.gmra.mxu0 %v8384
        %v9359 = vpop.f32.mrf.mxu0
        %v9360 = vadd.f32 %v9347, %v9359
        %v9361 = vpop.f32.mrf.mxu0
        %9362 = vdwg.mxu0
        %9363 = vmatpush.bf16.msra.mxu0 %v7989
        %9364 = vmatpush.bf16.msra.mxu0 %v7981
        %9365 = vmatpush.bf16.msra.mxu0 %v7973
        %9366 = vmatpush.bf16.msra.mxu0 %v7965
        %9367 = vmatpush.bf16.msra.mxu0 %v7957
        %9368 = vmatpush.bf16.msra.mxu0 %v7949
        %9369 = vmatpush.bf16.msra.mxu0 %v7941
        %9370 = vmatpush.bf16.msra.mxu0 %v7933
        %9371 = vmatmul.bf16.gmra.mxu0 %v8385
        %v9372 = vpop.f32.mrf.mxu0
        %v9373 = vadd.f32 %v9360, %v9372
        %v9374 = vpop.f32.mrf.mxu0
        %9375 = vdwg.mxu0
        %9376 = vmatpush.bf16.msra.mxu0 %v8053
        %9377 = vmatpush.bf16.msra.mxu0 %v8045
        %9378 = vmatpush.bf16.msra.mxu0 %v8037
        %9379 = vmatpush.bf16.msra.mxu0 %v8029
        %9380 = vmatpush.bf16.msra.mxu0 %v8021
        %9381 = vmatpush.bf16.msra.mxu0 %v8013
        %9382 = vmatpush.bf16.msra.mxu0 %v8005
        %9383 = vmatpush.bf16.msra.mxu0 %v7997
        %9384 = vmatmul.bf16.gmra.mxu0 %v8386
        %v9385 = vpop.f32.mrf.mxu0
        %v9386 = vadd.f32 %v9373, %v9385
        %v9387 = vpop.f32.mrf.mxu0
        %9388 = vdwg.mxu0
        %9389 = vmatpush.bf16.msra.mxu0 %v8117
        %9390 = vmatpush.bf16.msra.mxu0 %v8109
        %9391 = vmatpush.bf16.msra.mxu0 %v8101
        %9392 = vmatpush.bf16.msra.mxu0 %v8093
        %9393 = vmatpush.bf16.msra.mxu0 %v8085
        %9394 = vmatpush.bf16.msra.mxu0 %v8077
        %9395 = vmatpush.bf16.msra.mxu0 %v8069
        %9396 = vmatpush.bf16.msra.mxu0 %v8061
        %9397 = vmatmul.bf16.gmra.mxu0 %v8387
        %v9398 = vpop.f32.mrf.mxu0
        %v9399 = vadd.f32 %v9386, %v9398
        %v9400 = vpop.f32.mrf.mxu0
        %9401 = vdwg.mxu0
        %9402 = vmatpush.bf16.msra.mxu0 %v8181
        %9403 = vmatpush.bf16.msra.mxu0 %v8173
        %9404 = vmatpush.bf16.msra.mxu0 %v8165
        %9405 = vmatpush.bf16.msra.mxu0 %v8157
        %9406 = vmatpush.bf16.msra.mxu0 %v8149
        %9407 = vmatpush.bf16.msra.mxu0 %v8141
        %9408 = vmatpush.bf16.msra.mxu0 %v8133
        %9409 = vmatpush.bf16.msra.mxu0 %v8125
        %9410 = vmatmul.bf16.gmra.mxu0 %v8388
        %v9411 = vpop.f32.mrf.mxu0
        %v9412 = vadd.f32 %v9399, %v9411
        %v9413 = vpop.f32.mrf.mxu0
        %9414 = vdwg.mxu0
        %9415 = vmatpush.bf16.msra.mxu0 %v8245
        %9416 = vmatpush.bf16.msra.mxu0 %v8237
        %9417 = vmatpush.bf16.msra.mxu0 %v8229
        %9418 = vmatpush.bf16.msra.mxu0 %v8221
        %9419 = vmatpush.bf16.msra.mxu0 %v8213
        %9420 = vmatpush.bf16.msra.mxu0 %v8205
        %9421 = vmatpush.bf16.msra.mxu0 %v8197
        %9422 = vmatpush.bf16.msra.mxu0 %v8189
        %9423 = vmatmul.bf16.gmra.mxu0 %v8389
        %v9424 = vpop.f32.mrf.mxu0
        %v9425 = vadd.f32 %v9412, %v9424
        %v9426 = vpop.f32.mrf.mxu0
        %9427 = vdwg.mxu0
        %9428 = vmatpush.bf16.msra.mxu0 %v8309
        %9429 = vmatpush.bf16.msra.mxu0 %v8301
        %9430 = vmatpush.bf16.msra.mxu0 %v8293
        %9431 = vmatpush.bf16.msra.mxu0 %v8285
        %9432 = vmatpush.bf16.msra.mxu0 %v8277
        %9433 = vmatpush.bf16.msra.mxu0 %v8269
        %9434 = vmatpush.bf16.msra.mxu0 %v8261
        %9435 = vmatpush.bf16.msra.mxu0 %v8253
        %9436 = vmatmul.bf16.gmra.mxu0 %v8390
        %v9437 = vpop.f32.mrf.mxu0
        %v9438 = vadd.f32 %v9425, %v9437
        %v9439 = vpop.f32.mrf.mxu0
        %9440 = vdwg.mxu0
        %v9441 = vld [vmem:[%s515] sm:$0xff]
        %v9443 = vperm.slane %v9441, 0
        %v9444 = vperm.slane %v9441, 1
        %v9445 = vperm.slane %v9441, 2
        %v9446 = vperm.slane %v9441, 3
        %v9447 = vperm.slane %v9441, 4
        %v9448 = vperm.slane %v9441, 5
        %v9449 = vperm.slane %v9441, 6
        %v9450 = vperm.slane %v9441, 7
        %v9459 = vmul.f32 %v8528, %v9443
        %v9460 = vmul.f32 %v8658, %v9444
        %v9461 = vmul.f32 %v8788, %v9445
        %v9462 = vmul.f32 %v8918, %v9446
        %v9463 = vmul.f32 %v9048, %v9447
        %v9464 = vmul.f32 %v9178, %v9448
        %v9465 = vmul.f32 %v9308, %v9449
        %v9466 = vmul.f32 %v9438, %v9450
        %v9467 = vld [vmem:[%s525] sm:$0xff]
        %v9469 = vperm.slane %v9467, 0
        %v9470 = vperm.slane %v9467, 1
        %v9471 = vperm.slane %v9467, 2
        %v9472 = vperm.slane %v9467, 3
        %v9473 = vperm.slane %v9467, 4
        %v9474 = vperm.slane %v9467, 5
        %v9475 = vperm.slane %v9467, 6
        %v9476 = vperm.slane %v9467, 7
        %v9485 = vadd.f32 %v9459, %v9469
        %v9486 = vadd.f32 %v9460, %v9470
        %v9487 = vadd.f32 %v9461, %v9471
        %v9488 = vadd.f32 %v9462, %v9472
        %v9489 = vadd.f32 %v9463, %v9473
        %v9490 = vadd.f32 %v9464, %v9474
        %v9491 = vadd.f32 %v9465, %v9475
        %v9492 = vadd.f32 %v9466, %v9476
        %v9493 = vmax.f32 %v9485, 0.0
        %v9494 = vmax.f32 %v9486, 0.0
        %v9495 = vmax.f32 %v9487, 0.0
        %v9496 = vmax.f32 %v9488, 0.0
        %v9497 = vmax.f32 %v9489, 0.0
        %v9498 = vmax.f32 %v9490, 0.0
        %v9499 = vmax.f32 %v9491, 0.0
        %v9500 = vmax.f32 %v9492, 0.0
        %v9501 = vld [vmem:[%s535] sm:$0xff]
        %v9502 = vld [vmem:[%s535 + $0x8] sm:$0xff]
        %v9503 = vld [vmem:[%s535 + $0x10] sm:$0xff]
        %v9504 = vld [vmem:[%s535 + $0x18] sm:$0xff]
        %v9505 = vld [vmem:[%s535 + $0x20] sm:$0xff]
        %v9506 = vld [vmem:[%s535 + $0x28] sm:$0xff]
        %v9507 = vld [vmem:[%s535 + $0x30] sm:$0xff]
        %v9508 = vld [vmem:[%s535 + $0x38] sm:$0xff]
        %v9509 = vld [vmem:[%s535 + $0x40] sm:$0xff]
        %v9510 = vld [vmem:[%s535 + $0x48] sm:$0xff]
        %v9511 = vld [vmem:[%s535 + $0x50] sm:$0xff]
        %v9512 = vld [vmem:[%s535 + $0x58] sm:$0xff]
        %v9513 = vld [vmem:[%s535 + $0x60] sm:$0xff]
        %v9514 = vld [vmem:[%s535 + $0x68] sm:$0xff]
        %v9515 = vld [vmem:[%s535 + $0x70] sm:$0xff]
        %v9516 = vld [vmem:[%s535 + $0x78] sm:$0xff]
        %v9517 = vld [vmem:[%s535 + $0x80] sm:$0xff]
        %v9518 = vld [vmem:[%s535 + $0x88] sm:$0xff]
        %v9519 = vld [vmem:[%s535 + $0x90] sm:$0xff]
        %v9520 = vld [vmem:[%s535 + $0x98] sm:$0xff]
        %v9521 = vld [vmem:[%s535 + $0xa0] sm:$0xff]
        %v9522 = vld [vmem:[%s535 + $0xa8] sm:$0xff]
        %v9523 = vld [vmem:[%s535 + $0xb0] sm:$0xff]
        %v9524 = vld [vmem:[%s535 + $0xb8] sm:$0xff]
        %v9525 = vld [vmem:[%s535 + $0xc0] sm:$0xff]
        %v9526 = vld [vmem:[%s535 + $0xc8] sm:$0xff]
        %v9527 = vld [vmem:[%s535 + $0xd0] sm:$0xff]
        %v9528 = vld [vmem:[%s535 + $0xd8] sm:$0xff]
        %v9529 = vld [vmem:[%s535 + $0xe0] sm:$0xff]
        %v9530 = vld [vmem:[%s535 + $0xe8] sm:$0xff]
        %v9531 = vld [vmem:[%s535 + $0xf0] sm:$0xff]
        %v9532 = vld [vmem:[%s535 + $0xf8] sm:$0xff]
        %v9533 = vld [vmem:[%s535 + $0x100] sm:$0xff]
        %v9534 = vld [vmem:[%s535 + $0x108] sm:$0xff]
        %v9535 = vld [vmem:[%s535 + $0x110] sm:$0xff]
        %v9536 = vld [vmem:[%s535 + $0x118] sm:$0xff]
        %v9537 = vld [vmem:[%s535 + $0x120] sm:$0xff]
        %v9538 = vld [vmem:[%s535 + $0x128] sm:$0xff]
        %v9539 = vld [vmem:[%s535 + $0x130] sm:$0xff]
        %v9540 = vld [vmem:[%s535 + $0x138] sm:$0xff]
        %v9541 = vld [vmem:[%s535 + $0x140] sm:$0xff]
        %v9542 = vld [vmem:[%s535 + $0x148] sm:$0xff]
        %v9543 = vld [vmem:[%s535 + $0x150] sm:$0xff]
        %v9544 = vld [vmem:[%s535 + $0x158] sm:$0xff]
        %v9545 = vld [vmem:[%s535 + $0x160] sm:$0xff]
        %v9546 = vld [vmem:[%s535 + $0x168] sm:$0xff]
        %v9547 = vld [vmem:[%s535 + $0x170] sm:$0xff]
        %v9548 = vld [vmem:[%s535 + $0x178] sm:$0xff]
        %v9549 = vld [vmem:[%s535 + $0x180] sm:$0xff]
        %v9550 = vld [vmem:[%s535 + $0x188] sm:$0xff]
        %v9551 = vld [vmem:[%s535 + $0x190] sm:$0xff]
        %v9552 = vld [vmem:[%s535 + $0x198] sm:$0xff]
        %v9553 = vld [vmem:[%s535 + $0x1a0] sm:$0xff]
        %v9554 = vld [vmem:[%s535 + $0x1a8] sm:$0xff]
        %v9555 = vld [vmem:[%s535 + $0x1b0] sm:$0xff]
        %v9556 = vld [vmem:[%s535 + $0x1b8] sm:$0xff]
        %v9557 = vld [vmem:[%s535 + $0x1c0] sm:$0xff]
        %v9558 = vld [vmem:[%s535 + $0x1c8] sm:$0xff]
        %v9559 = vld [vmem:[%s535 + $0x1d0] sm:$0xff]
        %v9560 = vld [vmem:[%s535 + $0x1d8] sm:$0xff]
        %v9561 = vld [vmem:[%s535 + $0x1e0] sm:$0xff]
        %v9562 = vld [vmem:[%s535 + $0x1e8] sm:$0xff]
        %v9563 = vld [vmem:[%s535 + $0x1f0] sm:$0xff]
        %v9564 = vld [vmem:[%s535 + $0x1f8] sm:$0xff]
        %v9565 = vld [vmem:[%s535 + $0x200] sm:$0xff]
        %v9566 = vld [vmem:[%s535 + $0x208] sm:$0xff]
        %v9567 = vld [vmem:[%s535 + $0x210] sm:$0xff]
        %v9568 = vld [vmem:[%s535 + $0x218] sm:$0xff]
        %v9569 = vld [vmem:[%s535 + $0x220] sm:$0xff]
        %v9570 = vld [vmem:[%s535 + $0x228] sm:$0xff]
        %v9571 = vld [vmem:[%s535 + $0x230] sm:$0xff]
        %v9572 = vld [vmem:[%s535 + $0x238] sm:$0xff]
        %v9573 = vld [vmem:[%s535 + $0x240] sm:$0xff]
        %v9574 = vld [vmem:[%s535 + $0x248] sm:$0xff]
        %v9575 = vld [vmem:[%s535 + $0x250] sm:$0xff]
        %v9576 = vld [vmem:[%s535 + $0x258] sm:$0xff]
        %v9577 = vld [vmem:[%s535 + $0x260] sm:$0xff]
        %v9578 = vld [vmem:[%s535 + $0x268] sm:$0xff]
        %v9579 = vld [vmem:[%s535 + $0x270] sm:$0xff]
        %v9580 = vld [vmem:[%s535 + $0x278] sm:$0xff]
        %v9581 = vld [vmem:[%s535 + $0x280] sm:$0xff]
        %v9582 = vld [vmem:[%s535 + $0x288] sm:$0xff]
        %v9583 = vld [vmem:[%s535 + $0x290] sm:$0xff]
        %v9584 = vld [vmem:[%s535 + $0x298] sm:$0xff]
        %v9585 = vld [vmem:[%s535 + $0x2a0] sm:$0xff]
        %v9586 = vld [vmem:[%s535 + $0x2a8] sm:$0xff]
        %v9587 = vld [vmem:[%s535 + $0x2b0] sm:$0xff]
        %v9588 = vld [vmem:[%s535 + $0x2b8] sm:$0xff]
        %v9589 = vld [vmem:[%s535 + $0x2c0] sm:$0xff]
        %v9590 = vld [vmem:[%s535 + $0x2c8] sm:$0xff]
        %v9591 = vld [vmem:[%s535 + $0x2d0] sm:$0xff]
        %v9592 = vld [vmem:[%s535 + $0x2d8] sm:$0xff]
        %v9593 = vld [vmem:[%s535 + $0x2e0] sm:$0xff]
        %v9594 = vld [vmem:[%s535 + $0x2e8] sm:$0xff]
        %v9595 = vld [vmem:[%s535 + $0x2f0] sm:$0xff]
        %v9596 = vld [vmem:[%s535 + $0x2f8] sm:$0xff]
        %v9597 = vld [vmem:[%s535 + $0x300] sm:$0xff]
        %v9598 = vld [vmem:[%s535 + $0x308] sm:$0xff]
        %v9599 = vld [vmem:[%s535 + $0x310] sm:$0xff]
        %v9600 = vld [vmem:[%s535 + $0x318] sm:$0xff]
        %v9601 = vld [vmem:[%s535 + $0x320] sm:$0xff]
        %v9602 = vld [vmem:[%s535 + $0x328] sm:$0xff]
        %v9603 = vld [vmem:[%s535 + $0x330] sm:$0xff]
        %v9604 = vld [vmem:[%s535 + $0x338] sm:$0xff]
        %v9605 = vld [vmem:[%s535 + $0x340] sm:$0xff]
        %v9606 = vld [vmem:[%s535 + $0x348] sm:$0xff]
        %v9607 = vld [vmem:[%s535 + $0x350] sm:$0xff]
        %v9608 = vld [vmem:[%s535 + $0x358] sm:$0xff]
        %v9609 = vld [vmem:[%s535 + $0x360] sm:$0xff]
        %v9610 = vld [vmem:[%s535 + $0x368] sm:$0xff]
        %v9611 = vld [vmem:[%s535 + $0x370] sm:$0xff]
        %v9612 = vld [vmem:[%s535 + $0x378] sm:$0xff]
        %v9613 = vld [vmem:[%s535 + $0x380] sm:$0xff]
        %v9614 = vld [vmem:[%s535 + $0x388] sm:$0xff]
        %v9615 = vld [vmem:[%s535 + $0x390] sm:$0xff]
        %v9616 = vld [vmem:[%s535 + $0x398] sm:$0xff]
        %v9617 = vld [vmem:[%s535 + $0x3a0] sm:$0xff]
        %v9618 = vld [vmem:[%s535 + $0x3a8] sm:$0xff]
        %v9619 = vld [vmem:[%s535 + $0x3b0] sm:$0xff]
        %v9620 = vld [vmem:[%s535 + $0x3b8] sm:$0xff]
        %v9621 = vld [vmem:[%s535 + $0x3c0] sm:$0xff]
        %v9622 = vld [vmem:[%s535 + $0x3c8] sm:$0xff]
        %v9623 = vld [vmem:[%s535 + $0x3d0] sm:$0xff]
        %v9624 = vld [vmem:[%s535 + $0x3d8] sm:$0xff]
        %v9625 = vld [vmem:[%s535 + $0x3e0] sm:$0xff]
        %v9626 = vld [vmem:[%s535 + $0x3e8] sm:$0xff]
        %v9627 = vld [vmem:[%s535 + $0x3f0] sm:$0xff]
        %v9628 = vld [vmem:[%s535 + $0x3f8] sm:$0xff]
        %v9629 = vunpack.c.0.s8 %v9501
        %v9630 = vunpack.c.0.s8 %v9502
        %v9631 = vunpack.c.0.s8 %v9503
        %v9632 = vunpack.c.0.s8 %v9504
        %v9633 = vunpack.c.1.s8 %v9501
        %v9634 = vunpack.c.1.s8 %v9502
        %v9635 = vunpack.c.1.s8 %v9503
        %v9636 = vunpack.c.1.s8 %v9504
        %v9637 = vunpack.c.2.s8 %v9501
        %v9638 = vunpack.c.2.s8 %v9502
        %v9639 = vunpack.c.2.s8 %v9503
        %v9640 = vunpack.c.2.s8 %v9504
        %v9641 = vunpack.c.3.s8 %v9501
        %v9642 = vunpack.c.3.s8 %v9502
        %v9643 = vunpack.c.3.s8 %v9503
        %v9644 = vunpack.c.3.s8 %v9504
        %v9645 = vunpack.c.0.s8 %v9505
        %v9646 = vunpack.c.0.s8 %v9506
        %v9647 = vunpack.c.0.s8 %v9507
        %v9648 = vunpack.c.0.s8 %v9508
        %v9649 = vunpack.c.1.s8 %v9505
        %v9650 = vunpack.c.1.s8 %v9506
        %v9651 = vunpack.c.1.s8 %v9507
        %v9652 = vunpack.c.1.s8 %v9508
        %v9653 = vunpack.c.2.s8 %v9505
        %v9654 = vunpack.c.2.s8 %v9506
        %v9655 = vunpack.c.2.s8 %v9507
        %v9656 = vunpack.c.2.s8 %v9508
        %v9657 = vunpack.c.3.s8 %v9505
        %v9658 = vunpack.c.3.s8 %v9506
        %v9659 = vunpack.c.3.s8 %v9507
        %v9660 = vunpack.c.3.s8 %v9508
        %v9661 = vunpack.c.0.s8 %v9509
        %v9662 = vunpack.c.0.s8 %v9510
        %v9663 = vunpack.c.0.s8 %v9511
        %v9664 = vunpack.c.0.s8 %v9512
        %v9665 = vunpack.c.1.s8 %v9509
        %v9666 = vunpack.c.1.s8 %v9510
        %v9667 = vunpack.c.1.s8 %v9511
        %v9668 = vunpack.c.1.s8 %v9512
        %v9669 = vunpack.c.2.s8 %v9509
        %v9670 = vunpack.c.2.s8 %v9510
        %v9671 = vunpack.c.2.s8 %v9511
        %v9672 = vunpack.c.2.s8 %v9512
        %v9673 = vunpack.c.3.s8 %v9509
        %v9674 = vunpack.c.3.s8 %v9510
        %v9675 = vunpack.c.3.s8 %v9511
        %v9676 = vunpack.c.3.s8 %v9512
        %v9677 = vunpack.c.0.s8 %v9513
        %v9678 = vunpack.c.0.s8 %v9514
        %v9679 = vunpack.c.0.s8 %v9515
        %v9680 = vunpack.c.0.s8 %v9516
        %v9681 = vunpack.c.1.s8 %v9513
        %v9682 = vunpack.c.1.s8 %v9514
        %v9683 = vunpack.c.1.s8 %v9515
        %v9684 = vunpack.c.1.s8 %v9516
        %v9685 = vunpack.c.2.s8 %v9513
        %v9686 = vunpack.c.2.s8 %v9514
        %v9687 = vunpack.c.2.s8 %v9515
        %v9688 = vunpack.c.2.s8 %v9516
        %v9689 = vunpack.c.3.s8 %v9513
        %v9690 = vunpack.c.3.s8 %v9514
        %v9691 = vunpack.c.3.s8 %v9515
        %v9692 = vunpack.c.3.s8 %v9516
        %v9693 = vunpack.c.0.s8 %v9517
        %v9694 = vunpack.c.0.s8 %v9518
        %v9695 = vunpack.c.0.s8 %v9519
        %v9696 = vunpack.c.0.s8 %v9520
        %v9697 = vunpack.c.1.s8 %v9517
        %v9698 = vunpack.c.1.s8 %v9518
        %v9699 = vunpack.c.1.s8 %v9519
        %v9700 = vunpack.c.1.s8 %v9520
        %v9701 = vunpack.c.2.s8 %v9517
        %v9702 = vunpack.c.2.s8 %v9518
        %v9703 = vunpack.c.2.s8 %v9519
        %v9704 = vunpack.c.2.s8 %v9520
        %v9705 = vunpack.c.3.s8 %v9517
        %v9706 = vunpack.c.3.s8 %v9518
        %v9707 = vunpack.c.3.s8 %v9519
        %v9708 = vunpack.c.3.s8 %v9520
        %v9709 = vunpack.c.0.s8 %v9521
        %v9710 = vunpack.c.0.s8 %v9522
        %v9711 = vunpack.c.0.s8 %v9523
        %v9712 = vunpack.c.0.s8 %v9524
        %v9713 = vunpack.c.1.s8 %v9521
        %v9714 = vunpack.c.1.s8 %v9522
        %v9715 = vunpack.c.1.s8 %v9523
        %v9716 = vunpack.c.1.s8 %v9524
        %v9717 = vunpack.c.2.s8 %v9521
        %v9718 = vunpack.c.2.s8 %v9522
        %v9719 = vunpack.c.2.s8 %v9523
        %v9720 = vunpack.c.2.s8 %v9524
        %v9721 = vunpack.c.3.s8 %v9521
        %v9722 = vunpack.c.3.s8 %v9522
        %v9723 = vunpack.c.3.s8 %v9523
        %v9724 = vunpack.c.3.s8 %v9524
        %v9725 = vunpack.c.0.s8 %v9525
        %v9726 = vunpack.c.0.s8 %v9526
        %v9727 = vunpack.c.0.s8 %v9527
        %v9728 = vunpack.c.0.s8 %v9528
        %v9729 = vunpack.c.1.s8 %v9525
        %v9730 = vunpack.c.1.s8 %v9526
        %v9731 = vunpack.c.1.s8 %v9527
        %v9732 = vunpack.c.1.s8 %v9528
        %v9733 = vunpack.c.2.s8 %v9525
        %v9734 = vunpack.c.2.s8 %v9526
        %v9735 = vunpack.c.2.s8 %v9527
        %v9736 = vunpack.c.2.s8 %v9528
        %v9737 = vunpack.c.3.s8 %v9525
        %v9738 = vunpack.c.3.s8 %v9526
        %v9739 = vunpack.c.3.s8 %v9527
        %v9740 = vunpack.c.3.s8 %v9528
        %v9741 = vunpack.c.0.s8 %v9529
        %v9742 = vunpack.c.0.s8 %v9530
        %v9743 = vunpack.c.0.s8 %v9531
        %v9744 = vunpack.c.0.s8 %v9532
        %v9745 = vunpack.c.1.s8 %v9529
        %v9746 = vunpack.c.1.s8 %v9530
        %v9747 = vunpack.c.1.s8 %v9531
        %v9748 = vunpack.c.1.s8 %v9532
        %v9749 = vunpack.c.2.s8 %v9529
        %v9750 = vunpack.c.2.s8 %v9530
        %v9751 = vunpack.c.2.s8 %v9531
        %v9752 = vunpack.c.2.s8 %v9532
        %v9753 = vunpack.c.3.s8 %v9529
        %v9754 = vunpack.c.3.s8 %v9530
        %v9755 = vunpack.c.3.s8 %v9531
        %v9756 = vunpack.c.3.s8 %v9532
        %v9757 = vunpack.c.0.s8 %v9533
        %v9758 = vunpack.c.0.s8 %v9534
        %v9759 = vunpack.c.0.s8 %v9535
        %v9760 = vunpack.c.0.s8 %v9536
        %v9761 = vunpack.c.1.s8 %v9533
        %v9762 = vunpack.c.1.s8 %v9534
        %v9763 = vunpack.c.1.s8 %v9535
        %v9764 = vunpack.c.1.s8 %v9536
        %v9765 = vunpack.c.2.s8 %v9533
        %v9766 = vunpack.c.2.s8 %v9534
        %v9767 = vunpack.c.2.s8 %v9535
        %v9768 = vunpack.c.2.s8 %v9536
        %v9769 = vunpack.c.3.s8 %v9533
        %v9770 = vunpack.c.3.s8 %v9534
        %v9771 = vunpack.c.3.s8 %v9535
        %v9772 = vunpack.c.3.s8 %v9536
        %v9773 = vunpack.c.0.s8 %v9537
        %v9774 = vunpack.c.0.s8 %v9538
        %v9775 = vunpack.c.0.s8 %v9539
        %v9776 = vunpack.c.0.s8 %v9540
        %v9777 = vunpack.c.1.s8 %v9537
        %v9778 = vunpack.c.1.s8 %v9538
        %v9779 = vunpack.c.1.s8 %v9539
        %v9780 = vunpack.c.1.s8 %v9540
        %v9781 = vunpack.c.2.s8 %v9537
        %v9782 = vunpack.c.2.s8 %v9538
        %v9783 = vunpack.c.2.s8 %v9539
        %v9784 = vunpack.c.2.s8 %v9540
        %v9785 = vunpack.c.3.s8 %v9537
        %v9786 = vunpack.c.3.s8 %v9538
        %v9787 = vunpack.c.3.s8 %v9539
        %v9788 = vunpack.c.3.s8 %v9540
        %v9789 = vunpack.c.0.s8 %v9541
        %v9790 = vunpack.c.0.s8 %v9542
        %v9791 = vunpack.c.0.s8 %v9543
        %v9792 = vunpack.c.0.s8 %v9544
        %v9793 = vunpack.c.1.s8 %v9541
        %v9794 = vunpack.c.1.s8 %v9542
        %v9795 = vunpack.c.1.s8 %v9543
        %v9796 = vunpack.c.1.s8 %v9544
        %v9797 = vunpack.c.2.s8 %v9541
        %v9798 = vunpack.c.2.s8 %v9542
        %v9799 = vunpack.c.2.s8 %v9543
        %v9800 = vunpack.c.2.s8 %v9544
        %v9801 = vunpack.c.3.s8 %v9541
        %v9802 = vunpack.c.3.s8 %v9542
        %v9803 = vunpack.c.3.s8 %v9543
        %v9804 = vunpack.c.3.s8 %v9544
        %v9805 = vunpack.c.0.s8 %v9545
        %v9806 = vunpack.c.0.s8 %v9546
        %v9807 = vunpack.c.0.s8 %v9547
        %v9808 = vunpack.c.0.s8 %v9548
        %v9809 = vunpack.c.1.s8 %v9545
        %v9810 = vunpack.c.1.s8 %v9546
        %v9811 = vunpack.c.1.s8 %v9547
        %v9812 = vunpack.c.1.s8 %v9548
        %v9813 = vunpack.c.2.s8 %v9545
        %v9814 = vunpack.c.2.s8 %v9546
        %v9815 = vunpack.c.2.s8 %v9547
        %v9816 = vunpack.c.2.s8 %v9548
        %v9817 = vunpack.c.3.s8 %v9545
        %v9818 = vunpack.c.3.s8 %v9546
        %v9819 = vunpack.c.3.s8 %v9547
        %v9820 = vunpack.c.3.s8 %v9548
        %v9821 = vunpack.c.0.s8 %v9549
        %v9822 = vunpack.c.0.s8 %v9550
        %v9823 = vunpack.c.0.s8 %v9551
        %v9824 = vunpack.c.0.s8 %v9552
        %v9825 = vunpack.c.1.s8 %v9549
        %v9826 = vunpack.c.1.s8 %v9550
        %v9827 = vunpack.c.1.s8 %v9551
        %v9828 = vunpack.c.1.s8 %v9552
        %v9829 = vunpack.c.2.s8 %v9549
        %v9830 = vunpack.c.2.s8 %v9550
        %v9831 = vunpack.c.2.s8 %v9551
        %v9832 = vunpack.c.2.s8 %v9552
        %v9833 = vunpack.c.3.s8 %v9549
        %v9834 = vunpack.c.3.s8 %v9550
        %v9835 = vunpack.c.3.s8 %v9551
        %v9836 = vunpack.c.3.s8 %v9552
        %v9837 = vunpack.c.0.s8 %v9553
        %v9838 = vunpack.c.0.s8 %v9554
        %v9839 = vunpack.c.0.s8 %v9555
        %v9840 = vunpack.c.0.s8 %v9556
        %v9841 = vunpack.c.1.s8 %v9553
        %v9842 = vunpack.c.1.s8 %v9554
        %v9843 = vunpack.c.1.s8 %v9555
        %v9844 = vunpack.c.1.s8 %v9556
        %v9845 = vunpack.c.2.s8 %v9553
        %v9846 = vunpack.c.2.s8 %v9554
        %v9847 = vunpack.c.2.s8 %v9555
        %v9848 = vunpack.c.2.s8 %v9556
        %v9849 = vunpack.c.3.s8 %v9553
        %v9850 = vunpack.c.3.s8 %v9554
        %v9851 = vunpack.c.3.s8 %v9555
        %v9852 = vunpack.c.3.s8 %v9556
        %v9853 = vunpack.c.0.s8 %v9557
        %v9854 = vunpack.c.0.s8 %v9558
        %v9855 = vunpack.c.0.s8 %v9559
        %v9856 = vunpack.c.0.s8 %v9560
        %v9857 = vunpack.c.1.s8 %v9557
        %v9858 = vunpack.c.1.s8 %v9558
        %v9859 = vunpack.c.1.s8 %v9559
        %v9860 = vunpack.c.1.s8 %v9560
        %v9861 = vunpack.c.2.s8 %v9557
        %v9862 = vunpack.c.2.s8 %v9558
        %v9863 = vunpack.c.2.s8 %v9559
        %v9864 = vunpack.c.2.s8 %v9560
        %v9865 = vunpack.c.3.s8 %v9557
        %v9866 = vunpack.c.3.s8 %v9558
        %v9867 = vunpack.c.3.s8 %v9559
        %v9868 = vunpack.c.3.s8 %v9560
        %v9869 = vunpack.c.0.s8 %v9561
        %v9870 = vunpack.c.0.s8 %v9562
        %v9871 = vunpack.c.0.s8 %v9563
        %v9872 = vunpack.c.0.s8 %v9564
        %v9873 = vunpack.c.1.s8 %v9561
        %v9874 = vunpack.c.1.s8 %v9562
        %v9875 = vunpack.c.1.s8 %v9563
        %v9876 = vunpack.c.1.s8 %v9564
        %v9877 = vunpack.c.2.s8 %v9561
        %v9878 = vunpack.c.2.s8 %v9562
        %v9879 = vunpack.c.2.s8 %v9563
        %v9880 = vunpack.c.2.s8 %v9564
        %v9881 = vunpack.c.3.s8 %v9561
        %v9882 = vunpack.c.3.s8 %v9562
        %v9883 = vunpack.c.3.s8 %v9563
        %v9884 = vunpack.c.3.s8 %v9564
        %v9885 = vunpack.c.0.s8 %v9565
        %v9886 = vunpack.c.0.s8 %v9566
        %v9887 = vunpack.c.0.s8 %v9567
        %v9888 = vunpack.c.0.s8 %v9568
        %v9889 = vunpack.c.1.s8 %v9565
        %v9890 = vunpack.c.1.s8 %v9566
        %v9891 = vunpack.c.1.s8 %v9567
        %v9892 = vunpack.c.1.s8 %v9568
        %v9893 = vunpack.c.2.s8 %v9565
        %v9894 = vunpack.c.2.s8 %v9566
        %v9895 = vunpack.c.2.s8 %v9567
        %v9896 = vunpack.c.2.s8 %v9568
        %v9897 = vunpack.c.3.s8 %v9565
        %v9898 = vunpack.c.3.s8 %v9566
        %v9899 = vunpack.c.3.s8 %v9567
        %v9900 = vunpack.c.3.s8 %v9568
        %v9901 = vunpack.c.0.s8 %v9569
        %v9902 = vunpack.c.0.s8 %v9570
        %v9903 = vunpack.c.0.s8 %v9571
        %v9904 = vunpack.c.0.s8 %v9572
        %v9905 = vunpack.c.1.s8 %v9569
        %v9906 = vunpack.c.1.s8 %v9570
        %v9907 = vunpack.c.1.s8 %v9571
        %v9908 = vunpack.c.1.s8 %v9572
        %v9909 = vunpack.c.2.s8 %v9569
        %v9910 = vunpack.c.2.s8 %v9570
        %v9911 = vunpack.c.2.s8 %v9571
        %v9912 = vunpack.c.2.s8 %v9572
        %v9913 = vunpack.c.3.s8 %v9569
        %v9914 = vunpack.c.3.s8 %v9570
        %v9915 = vunpack.c.3.s8 %v9571
        %v9916 = vunpack.c.3.s8 %v9572
        %v9917 = vunpack.c.0.s8 %v9573
        %v9918 = vunpack.c.0.s8 %v9574
        %v9919 = vunpack.c.0.s8 %v9575
        %v9920 = vunpack.c.0.s8 %v9576
        %v9921 = vunpack.c.1.s8 %v9573
        %v9922 = vunpack.c.1.s8 %v9574
        %v9923 = vunpack.c.1.s8 %v9575
        %v9924 = vunpack.c.1.s8 %v9576
        %v9925 = vunpack.c.2.s8 %v9573
        %v9926 = vunpack.c.2.s8 %v9574
        %v9927 = vunpack.c.2.s8 %v9575
        %v9928 = vunpack.c.2.s8 %v9576
        %v9929 = vunpack.c.3.s8 %v9573
        %v9930 = vunpack.c.3.s8 %v9574
        %v9931 = vunpack.c.3.s8 %v9575
        %v9932 = vunpack.c.3.s8 %v9576
        %v9933 = vunpack.c.0.s8 %v9577
        %v9934 = vunpack.c.0.s8 %v9578
        %v9935 = vunpack.c.0.s8 %v9579
        %v9936 = vunpack.c.0.s8 %v9580
        %v9937 = vunpack.c.1.s8 %v9577
        %v9938 = vunpack.c.1.s8 %v9578
        %v9939 = vunpack.c.1.s8 %v9579
        %v9940 = vunpack.c.1.s8 %v9580
        %v9941 = vunpack.c.2.s8 %v9577
        %v9942 = vunpack.c.2.s8 %v9578
        %v9943 = vunpack.c.2.s8 %v9579
        %v9944 = vunpack.c.2.s8 %v9580
        %v9945 = vunpack.c.3.s8 %v9577
        %v9946 = vunpack.c.3.s8 %v9578
        %v9947 = vunpack.c.3.s8 %v9579
        %v9948 = vunpack.c.3.s8 %v9580
        %v9949 = vunpack.c.0.s8 %v9581
        %v9950 = vunpack.c.0.s8 %v9582
        %v9951 = vunpack.c.0.s8 %v9583
        %v9952 = vunpack.c.0.s8 %v9584
        %v9953 = vunpack.c.1.s8 %v9581
        %v9954 = vunpack.c.1.s8 %v9582
        %v9955 = vunpack.c.1.s8 %v9583
        %v9956 = vunpack.c.1.s8 %v9584
        %v9957 = vunpack.c.2.s8 %v9581
        %v9958 = vunpack.c.2.s8 %v9582
        %v9959 = vunpack.c.2.s8 %v9583
        %v9960 = vunpack.c.2.s8 %v9584
        %v9961 = vunpack.c.3.s8 %v9581
        %v9962 = vunpack.c.3.s8 %v9582
        %v9963 = vunpack.c.3.s8 %v9583
        %v9964 = vunpack.c.3.s8 %v9584
        %v9965 = vunpack.c.0.s8 %v9585
        %v9966 = vunpack.c.0.s8 %v9586
        %v9967 = vunpack.c.0.s8 %v9587
        %v9968 = vunpack.c.0.s8 %v9588
        %v9969 = vunpack.c.1.s8 %v9585
        %v9970 = vunpack.c.1.s8 %v9586
        %v9971 = vunpack.c.1.s8 %v9587
        %v9972 = vunpack.c.1.s8 %v9588
        %v9973 = vunpack.c.2.s8 %v9585
        %v9974 = vunpack.c.2.s8 %v9586
        %v9975 = vunpack.c.2.s8 %v9587
        %v9976 = vunpack.c.2.s8 %v9588
        %v9977 = vunpack.c.3.s8 %v9585
        %v9978 = vunpack.c.3.s8 %v9586
        %v9979 = vunpack.c.3.s8 %v9587
        %v9980 = vunpack.c.3.s8 %v9588
        %v9981 = vunpack.c.0.s8 %v9589
        %v9982 = vunpack.c.0.s8 %v9590
        %v9983 = vunpack.c.0.s8 %v9591
        %v9984 = vunpack.c.0.s8 %v9592
        %v9985 = vunpack.c.1.s8 %v9589
        %v9986 = vunpack.c.1.s8 %v9590
        %v9987 = vunpack.c.1.s8 %v9591
        %v9988 = vunpack.c.1.s8 %v9592
        %v9989 = vunpack.c.2.s8 %v9589
        %v9990 = vunpack.c.2.s8 %v9590
        %v9991 = vunpack.c.2.s8 %v9591
        %v9992 = vunpack.c.2.s8 %v9592
        %v9993 = vunpack.c.3.s8 %v9589
        %v9994 = vunpack.c.3.s8 %v9590
        %v9995 = vunpack.c.3.s8 %v9591
        %v9996 = vunpack.c.3.s8 %v9592
        %v9997 = vunpack.c.0.s8 %v9593
        %v9998 = vunpack.c.0.s8 %v9594
        %v9999 = vunpack.c.0.s8 %v9595
        %v10000 = vunpack.c.0.s8 %v9596
        %v10001 = vunpack.c.1.s8 %v9593
        %v10002 = vunpack.c.1.s8 %v9594
        %v10003 = vunpack.c.1.s8 %v9595
        %v10004 = vunpack.c.1.s8 %v9596
        %v10005 = vunpack.c.2.s8 %v9593
        %v10006 = vunpack.c.2.s8 %v9594
        %v10007 = vunpack.c.2.s8 %v9595
        %v10008 = vunpack.c.2.s8 %v9596
        %v10009 = vunpack.c.3.s8 %v9593
        %v10010 = vunpack.c.3.s8 %v9594
        %v10011 = vunpack.c.3.s8 %v9595
        %v10012 = vunpack.c.3.s8 %v9596
        %v10013 = vunpack.c.0.s8 %v9597
        %v10014 = vunpack.c.0.s8 %v9598
        %v10015 = vunpack.c.0.s8 %v9599
        %v10016 = vunpack.c.0.s8 %v9600
        %v10017 = vunpack.c.1.s8 %v9597
        %v10018 = vunpack.c.1.s8 %v9598
        %v10019 = vunpack.c.1.s8 %v9599
        %v10020 = vunpack.c.1.s8 %v9600
        %v10021 = vunpack.c.2.s8 %v9597
        %v10022 = vunpack.c.2.s8 %v9598
        %v10023 = vunpack.c.2.s8 %v9599
        %v10024 = vunpack.c.2.s8 %v9600
        %v10025 = vunpack.c.3.s8 %v9597
        %v10026 = vunpack.c.3.s8 %v9598
        %v10027 = vunpack.c.3.s8 %v9599
        %v10028 = vunpack.c.3.s8 %v9600
        %v10029 = vunpack.c.0.s8 %v9601
        %v10030 = vunpack.c.0.s8 %v9602
        %v10031 = vunpack.c.0.s8 %v9603
        %v10032 = vunpack.c.0.s8 %v9604
        %v10033 = vunpack.c.1.s8 %v9601
        %v10034 = vunpack.c.1.s8 %v9602
        %v10035 = vunpack.c.1.s8 %v9603
        %v10036 = vunpack.c.1.s8 %v9604
        %v10037 = vunpack.c.2.s8 %v9601
        %v10038 = vunpack.c.2.s8 %v9602
        %v10039 = vunpack.c.2.s8 %v9603
        %v10040 = vunpack.c.2.s8 %v9604
        %v10041 = vunpack.c.3.s8 %v9601
        %v10042 = vunpack.c.3.s8 %v9602
        %v10043 = vunpack.c.3.s8 %v9603
        %v10044 = vunpack.c.3.s8 %v9604
        %v10045 = vunpack.c.0.s8 %v9605
        %v10046 = vunpack.c.0.s8 %v9606
        %v10047 = vunpack.c.0.s8 %v9607
        %v10048 = vunpack.c.0.s8 %v9608
        %v10049 = vunpack.c.1.s8 %v9605
        %v10050 = vunpack.c.1.s8 %v9606
        %v10051 = vunpack.c.1.s8 %v9607
        %v10052 = vunpack.c.1.s8 %v9608
        %v10053 = vunpack.c.2.s8 %v9605
        %v10054 = vunpack.c.2.s8 %v9606
        %v10055 = vunpack.c.2.s8 %v9607
        %v10056 = vunpack.c.2.s8 %v9608
        %v10057 = vunpack.c.3.s8 %v9605
        %v10058 = vunpack.c.3.s8 %v9606
        %v10059 = vunpack.c.3.s8 %v9607
        %v10060 = vunpack.c.3.s8 %v9608
        %v10061 = vunpack.c.0.s8 %v9609
        %v10062 = vunpack.c.0.s8 %v9610
        %v10063 = vunpack.c.0.s8 %v9611
        %v10064 = vunpack.c.0.s8 %v9612
        %v10065 = vunpack.c.1.s8 %v9609
        %v10066 = vunpack.c.1.s8 %v9610
        %v10067 = vunpack.c.1.s8 %v9611
        %v10068 = vunpack.c.1.s8 %v9612
        %v10069 = vunpack.c.2.s8 %v9609
        %v10070 = vunpack.c.2.s8 %v9610
        %v10071 = vunpack.c.2.s8 %v9611
        %v10072 = vunpack.c.2.s8 %v9612
        %v10073 = vunpack.c.3.s8 %v9609
        %v10074 = vunpack.c.3.s8 %v9610
        %v10075 = vunpack.c.3.s8 %v9611
        %v10076 = vunpack.c.3.s8 %v9612
        %v10077 = vunpack.c.0.s8 %v9613
        %v10078 = vunpack.c.0.s8 %v9614
        %v10079 = vunpack.c.0.s8 %v9615
        %v10080 = vunpack.c.0.s8 %v9616
        %v10081 = vunpack.c.1.s8 %v9613
        %v10082 = vunpack.c.1.s8 %v9614
        %v10083 = vunpack.c.1.s8 %v9615
        %v10084 = vunpack.c.1.s8 %v9616
        %v10085 = vunpack.c.2.s8 %v9613
        %v10086 = vunpack.c.2.s8 %v9614
        %v10087 = vunpack.c.2.s8 %v9615
        %v10088 = vunpack.c.2.s8 %v9616
        %v10089 = vunpack.c.3.s8 %v9613
        %v10090 = vunpack.c.3.s8 %v9614
        %v10091 = vunpack.c.3.s8 %v9615
        %v10092 = vunpack.c.3.s8 %v9616
        %v10093 = vunpack.c.0.s8 %v9617
        %v10094 = vunpack.c.0.s8 %v9618
        %v10095 = vunpack.c.0.s8 %v9619
        %v10096 = vunpack.c.0.s8 %v9620
        %v10097 = vunpack.c.1.s8 %v9617
        %v10098 = vunpack.c.1.s8 %v9618
        %v10099 = vunpack.c.1.s8 %v9619
        %v10100 = vunpack.c.1.s8 %v9620
        %v10101 = vunpack.c.2.s8 %v9617
        %v10102 = vunpack.c.2.s8 %v9618
        %v10103 = vunpack.c.2.s8 %v9619
        %v10104 = vunpack.c.2.s8 %v9620
        %v10105 = vunpack.c.3.s8 %v9617
        %v10106 = vunpack.c.3.s8 %v9618
        %v10107 = vunpack.c.3.s8 %v9619
        %v10108 = vunpack.c.3.s8 %v9620
        %v10109 = vunpack.c.0.s8 %v9621
        %v10110 = vunpack.c.0.s8 %v9622
        %v10111 = vunpack.c.0.s8 %v9623
        %v10112 = vunpack.c.0.s8 %v9624
        %v10113 = vunpack.c.1.s8 %v9621
        %v10114 = vunpack.c.1.s8 %v9622
        %v10115 = vunpack.c.1.s8 %v9623
        %v10116 = vunpack.c.1.s8 %v9624
        %v10117 = vunpack.c.2.s8 %v9621
        %v10118 = vunpack.c.2.s8 %v9622
        %v10119 = vunpack.c.2.s8 %v9623
        %v10120 = vunpack.c.2.s8 %v9624
        %v10121 = vunpack.c.3.s8 %v9621
        %v10122 = vunpack.c.3.s8 %v9622
        %v10123 = vunpack.c.3.s8 %v9623
        %v10124 = vunpack.c.3.s8 %v9624
        %v10125 = vunpack.c.0.s8 %v9625
        %v10126 = vunpack.c.0.s8 %v9626
        %v10127 = vunpack.c.0.s8 %v9627
        %v10128 = vunpack.c.0.s8 %v9628
        %v10129 = vunpack.c.1.s8 %v9625
        %v10130 = vunpack.c.1.s8 %v9626
        %v10131 = vunpack.c.1.s8 %v9627
        %v10132 = vunpack.c.1.s8 %v9628
        %v10133 = vunpack.c.2.s8 %v9625
        %v10134 = vunpack.c.2.s8 %v9626
        %v10135 = vunpack.c.2.s8 %v9627
        %v10136 = vunpack.c.2.s8 %v9628
        %v10137 = vunpack.c.3.s8 %v9625
        %v10138 = vunpack.c.3.s8 %v9626
        %v10139 = vunpack.c.3.s8 %v9627
        %v10140 = vunpack.c.3.s8 %v9628
        %v10141 = vcvt.s32.f32 %v9629
        %v10142 = vcvt.s32.f32 %v9630
        %v10143 = vcvt.s32.f32 %v9631
        %v10144 = vcvt.s32.f32 %v9632
        %v10145 = vcvt.s32.f32 %v9633
        %v10146 = vcvt.s32.f32 %v9634
        %v10147 = vcvt.s32.f32 %v9635
        %v10148 = vcvt.s32.f32 %v9636
        %v10149 = vcvt.s32.f32 %v9637
        %v10150 = vcvt.s32.f32 %v9638
        %v10151 = vcvt.s32.f32 %v9639
        %v10152 = vcvt.s32.f32 %v9640
        %v10153 = vcvt.s32.f32 %v9641
        %v10154 = vcvt.s32.f32 %v9642
        %v10155 = vcvt.s32.f32 %v9643
        %v10156 = vcvt.s32.f32 %v9644
        %v10157 = vcvt.s32.f32 %v9645
        %v10158 = vcvt.s32.f32 %v9646
        %v10159 = vcvt.s32.f32 %v9647
        %v10160 = vcvt.s32.f32 %v9648
        %v10161 = vcvt.s32.f32 %v9649
        %v10162 = vcvt.s32.f32 %v9650
        %v10163 = vcvt.s32.f32 %v9651
        %v10164 = vcvt.s32.f32 %v9652
        %v10165 = vcvt.s32.f32 %v9653
        %v10166 = vcvt.s32.f32 %v9654
        %v10167 = vcvt.s32.f32 %v9655
        %v10168 = vcvt.s32.f32 %v9656
        %v10169 = vcvt.s32.f32 %v9657
        %v10170 = vcvt.s32.f32 %v9658
        %v10171 = vcvt.s32.f32 %v9659
        %v10172 = vcvt.s32.f32 %v9660
        %v10173 = vcvt.s32.f32 %v9661
        %v10174 = vcvt.s32.f32 %v9662
        %v10175 = vcvt.s32.f32 %v9663
        %v10176 = vcvt.s32.f32 %v9664
        %v10177 = vcvt.s32.f32 %v9665
        %v10178 = vcvt.s32.f32 %v9666
        %v10179 = vcvt.s32.f32 %v9667
        %v10180 = vcvt.s32.f32 %v9668
        %v10181 = vcvt.s32.f32 %v9669
        %v10182 = vcvt.s32.f32 %v9670
        %v10183 = vcvt.s32.f32 %v9671
        %v10184 = vcvt.s32.f32 %v9672
        %v10185 = vcvt.s32.f32 %v9673
        %v10186 = vcvt.s32.f32 %v9674
        %v10187 = vcvt.s32.f32 %v9675
        %v10188 = vcvt.s32.f32 %v9676
        %v10189 = vcvt.s32.f32 %v9677
        %v10190 = vcvt.s32.f32 %v9678
        %v10191 = vcvt.s32.f32 %v9679
        %v10192 = vcvt.s32.f32 %v9680
        %v10193 = vcvt.s32.f32 %v9681
        %v10194 = vcvt.s32.f32 %v9682
        %v10195 = vcvt.s32.f32 %v9683
        %v10196 = vcvt.s32.f32 %v9684
        %v10197 = vcvt.s32.f32 %v9685
        %v10198 = vcvt.s32.f32 %v9686
        %v10199 = vcvt.s32.f32 %v9687
        %v10200 = vcvt.s32.f32 %v9688
        %v10201 = vcvt.s32.f32 %v9689
        %v10202 = vcvt.s32.f32 %v9690
        %v10203 = vcvt.s32.f32 %v9691
        %v10204 = vcvt.s32.f32 %v9692
        %v10205 = vcvt.s32.f32 %v9693
        %v10206 = vcvt.s32.f32 %v9694
        %v10207 = vcvt.s32.f32 %v9695
        %v10208 = vcvt.s32.f32 %v9696
        %v10209 = vcvt.s32.f32 %v9697
        %v10210 = vcvt.s32.f32 %v9698
        %v10211 = vcvt.s32.f32 %v9699
        %v10212 = vcvt.s32.f32 %v9700
        %v10213 = vcvt.s32.f32 %v9701
        %v10214 = vcvt.s32.f32 %v9702
        %v10215 = vcvt.s32.f32 %v9703
        %v10216 = vcvt.s32.f32 %v9704
        %v10217 = vcvt.s32.f32 %v9705
        %v10218 = vcvt.s32.f32 %v9706
        %v10219 = vcvt.s32.f32 %v9707
        %v10220 = vcvt.s32.f32 %v9708
        %v10221 = vcvt.s32.f32 %v9709
        %v10222 = vcvt.s32.f32 %v9710
        %v10223 = vcvt.s32.f32 %v9711
        %v10224 = vcvt.s32.f32 %v9712
        %v10225 = vcvt.s32.f32 %v9713
        %v10226 = vcvt.s32.f32 %v9714
        %v10227 = vcvt.s32.f32 %v9715
        %v10228 = vcvt.s32.f32 %v9716
        %v10229 = vcvt.s32.f32 %v9717
        %v10230 = vcvt.s32.f32 %v9718
        %v10231 = vcvt.s32.f32 %v9719
        %v10232 = vcvt.s32.f32 %v9720
        %v10233 = vcvt.s32.f32 %v9721
        %v10234 = vcvt.s32.f32 %v9722
        %v10235 = vcvt.s32.f32 %v9723
        %v10236 = vcvt.s32.f32 %v9724
        %v10237 = vcvt.s32.f32 %v9725
        %v10238 = vcvt.s32.f32 %v9726
        %v10239 = vcvt.s32.f32 %v9727
        %v10240 = vcvt.s32.f32 %v9728
        %v10241 = vcvt.s32.f32 %v9729
        %v10242 = vcvt.s32.f32 %v9730
        %v10243 = vcvt.s32.f32 %v9731
        %v10244 = vcvt.s32.f32 %v9732
        %v10245 = vcvt.s32.f32 %v9733
        %v10246 = vcvt.s32.f32 %v9734
        %v10247 = vcvt.s32.f32 %v9735
        %v10248 = vcvt.s32.f32 %v9736
        %v10249 = vcvt.s32.f32 %v9737
        %v10250 = vcvt.s32.f32 %v9738
        %v10251 = vcvt.s32.f32 %v9739
        %v10252 = vcvt.s32.f32 %v9740
        %v10253 = vcvt.s32.f32 %v9741
        %v10254 = vcvt.s32.f32 %v9742
        %v10255 = vcvt.s32.f32 %v9743
        %v10256 = vcvt.s32.f32 %v9744
        %v10257 = vcvt.s32.f32 %v9745
        %v10258 = vcvt.s32.f32 %v9746
        %v10259 = vcvt.s32.f32 %v9747
        %v10260 = vcvt.s32.f32 %v9748
        %v10261 = vcvt.s32.f32 %v9749
        %v10262 = vcvt.s32.f32 %v9750
        %v10263 = vcvt.s32.f32 %v9751
        %v10264 = vcvt.s32.f32 %v9752
        %v10265 = vcvt.s32.f32 %v9753
        %v10266 = vcvt.s32.f32 %v9754
        %v10267 = vcvt.s32.f32 %v9755
        %v10268 = vcvt.s32.f32 %v9756
        %v10269 = vcvt.s32.f32 %v9757
        %v10270 = vcvt.s32.f32 %v9758
        %v10271 = vcvt.s32.f32 %v9759
        %v10272 = vcvt.s32.f32 %v9760
        %v10273 = vcvt.s32.f32 %v9761
        %v10274 = vcvt.s32.f32 %v9762
        %v10275 = vcvt.s32.f32 %v9763
        %v10276 = vcvt.s32.f32 %v9764
        %v10277 = vcvt.s32.f32 %v9765
        %v10278 = vcvt.s32.f32 %v9766
        %v10279 = vcvt.s32.f32 %v9767
        %v10280 = vcvt.s32.f32 %v9768
        %v10281 = vcvt.s32.f32 %v9769
        %v10282 = vcvt.s32.f32 %v9770
        %v10283 = vcvt.s32.f32 %v9771
        %v10284 = vcvt.s32.f32 %v9772
        %v10285 = vcvt.s32.f32 %v9773
        %v10286 = vcvt.s32.f32 %v9774
        %v10287 = vcvt.s32.f32 %v9775
        %v10288 = vcvt.s32.f32 %v9776
        %v10289 = vcvt.s32.f32 %v9777
        %v10290 = vcvt.s32.f32 %v9778
        %v10291 = vcvt.s32.f32 %v9779
        %v10292 = vcvt.s32.f32 %v9780
        %v10293 = vcvt.s32.f32 %v9781
        %v10294 = vcvt.s32.f32 %v9782
        %v10295 = vcvt.s32.f32 %v9783
        %v10296 = vcvt.s32.f32 %v9784
        %v10297 = vcvt.s32.f32 %v9785
        %v10298 = vcvt.s32.f32 %v9786
        %v10299 = vcvt.s32.f32 %v9787
        %v10300 = vcvt.s32.f32 %v9788
        %v10301 = vcvt.s32.f32 %v9789
        %v10302 = vcvt.s32.f32 %v9790
        %v10303 = vcvt.s32.f32 %v9791
        %v10304 = vcvt.s32.f32 %v9792
        %v10305 = vcvt.s32.f32 %v9793
        %v10306 = vcvt.s32.f32 %v9794
        %v10307 = vcvt.s32.f32 %v9795
        %v10308 = vcvt.s32.f32 %v9796
        %v10309 = vcvt.s32.f32 %v9797
        %v10310 = vcvt.s32.f32 %v9798
        %v10311 = vcvt.s32.f32 %v9799
        %v10312 = vcvt.s32.f32 %v9800
        %v10313 = vcvt.s32.f32 %v9801
        %v10314 = vcvt.s32.f32 %v9802
        %v10315 = vcvt.s32.f32 %v9803
        %v10316 = vcvt.s32.f32 %v9804
        %v10317 = vcvt.s32.f32 %v9805
        %v10318 = vcvt.s32.f32 %v9806
        %v10319 = vcvt.s32.f32 %v9807
        %v10320 = vcvt.s32.f32 %v9808
        %v10321 = vcvt.s32.f32 %v9809
        %v10322 = vcvt.s32.f32 %v9810
        %v10323 = vcvt.s32.f32 %v9811
        %v10324 = vcvt.s32.f32 %v9812
        %v10325 = vcvt.s32.f32 %v9813
        %v10326 = vcvt.s32.f32 %v9814
        %v10327 = vcvt.s32.f32 %v9815
        %v10328 = vcvt.s32.f32 %v9816
        %v10329 = vcvt.s32.f32 %v9817
        %v10330 = vcvt.s32.f32 %v9818
        %v10331 = vcvt.s32.f32 %v9819
        %v10332 = vcvt.s32.f32 %v9820
        %v10333 = vcvt.s32.f32 %v9821
        %v10334 = vcvt.s32.f32 %v9822
        %v10335 = vcvt.s32.f32 %v9823
        %v10336 = vcvt.s32.f32 %v9824
        %v10337 = vcvt.s32.f32 %v9825
        %v10338 = vcvt.s32.f32 %v9826
        %v10339 = vcvt.s32.f32 %v9827
        %v10340 = vcvt.s32.f32 %v9828
        %v10341 = vcvt.s32.f32 %v9829
        %v10342 = vcvt.s32.f32 %v9830
        %v10343 = vcvt.s32.f32 %v9831
        %v10344 = vcvt.s32.f32 %v9832
        %v10345 = vcvt.s32.f32 %v9833
        %v10346 = vcvt.s32.f32 %v9834
        %v10347 = vcvt.s32.f32 %v9835
        %v10348 = vcvt.s32.f32 %v9836
        %v10349 = vcvt.s32.f32 %v9837
        %v10350 = vcvt.s32.f32 %v9838
        %v10351 = vcvt.s32.f32 %v9839
        %v10352 = vcvt.s32.f32 %v9840
        %v10353 = vcvt.s32.f32 %v9841
        %v10354 = vcvt.s32.f32 %v9842
        %v10355 = vcvt.s32.f32 %v9843
        %v10356 = vcvt.s32.f32 %v9844
        %v10357 = vcvt.s32.f32 %v9845
        %v10358 = vcvt.s32.f32 %v9846
        %v10359 = vcvt.s32.f32 %v9847
        %v10360 = vcvt.s32.f32 %v9848
        %v10361 = vcvt.s32.f32 %v9849
        %v10362 = vcvt.s32.f32 %v9850
        %v10363 = vcvt.s32.f32 %v9851
        %v10364 = vcvt.s32.f32 %v9852
        %v10365 = vcvt.s32.f32 %v9853
        %v10366 = vcvt.s32.f32 %v9854
        %v10367 = vcvt.s32.f32 %v9855
        %v10368 = vcvt.s32.f32 %v9856
        %v10369 = vcvt.s32.f32 %v9857
        %v10370 = vcvt.s32.f32 %v9858
        %v10371 = vcvt.s32.f32 %v9859
        %v10372 = vcvt.s32.f32 %v9860
        %v10373 = vcvt.s32.f32 %v9861
        %v10374 = vcvt.s32.f32 %v9862
        %v10375 = vcvt.s32.f32 %v9863
        %v10376 = vcvt.s32.f32 %v9864
        %v10377 = vcvt.s32.f32 %v9865
        %v10378 = vcvt.s32.f32 %v9866
        %v10379 = vcvt.s32.f32 %v9867
        %v10380 = vcvt.s32.f32 %v9868
        %v10381 = vcvt.s32.f32 %v9869
        %v10382 = vcvt.s32.f32 %v9870
        %v10383 = vcvt.s32.f32 %v9871
        %v10384 = vcvt.s32.f32 %v9872
        %v10385 = vcvt.s32.f32 %v9873
        %v10386 = vcvt.s32.f32 %v9874
        %v10387 = vcvt.s32.f32 %v9875
        %v10388 = vcvt.s32.f32 %v9876
        %v10389 = vcvt.s32.f32 %v9877
        %v10390 = vcvt.s32.f32 %v9878
        %v10391 = vcvt.s32.f32 %v9879
        %v10392 = vcvt.s32.f32 %v9880
        %v10393 = vcvt.s32.f32 %v9881
        %v10394 = vcvt.s32.f32 %v9882
        %v10395 = vcvt.s32.f32 %v9883
        %v10396 = vcvt.s32.f32 %v9884
        %v10397 = vcvt.s32.f32 %v9885
        %v10398 = vcvt.s32.f32 %v9886
        %v10399 = vcvt.s32.f32 %v9887
        %v10400 = vcvt.s32.f32 %v9888
        %v10401 = vcvt.s32.f32 %v9889
        %v10402 = vcvt.s32.f32 %v9890
        %v10403 = vcvt.s32.f32 %v9891
        %v10404 = vcvt.s32.f32 %v9892
        %v10405 = vcvt.s32.f32 %v9893
        %v10406 = vcvt.s32.f32 %v9894
        %v10407 = vcvt.s32.f32 %v9895
        %v10408 = vcvt.s32.f32 %v9896
        %v10409 = vcvt.s32.f32 %v9897
        %v10410 = vcvt.s32.f32 %v9898
        %v10411 = vcvt.s32.f32 %v9899
        %v10412 = vcvt.s32.f32 %v9900
        %v10413 = vcvt.s32.f32 %v9901
        %v10414 = vcvt.s32.f32 %v9902
        %v10415 = vcvt.s32.f32 %v9903
        %v10416 = vcvt.s32.f32 %v9904
        %v10417 = vcvt.s32.f32 %v9905
        %v10418 = vcvt.s32.f32 %v9906
        %v10419 = vcvt.s32.f32 %v9907
        %v10420 = vcvt.s32.f32 %v9908
        %v10421 = vcvt.s32.f32 %v9909
        %v10422 = vcvt.s32.f32 %v9910
        %v10423 = vcvt.s32.f32 %v9911
        %v10424 = vcvt.s32.f32 %v9912
        %v10425 = vcvt.s32.f32 %v9913
        %v10426 = vcvt.s32.f32 %v9914
        %v10427 = vcvt.s32.f32 %v9915
        %v10428 = vcvt.s32.f32 %v9916
        %v10429 = vcvt.s32.f32 %v9917
        %v10430 = vcvt.s32.f32 %v9918
        %v10431 = vcvt.s32.f32 %v9919
        %v10432 = vcvt.s32.f32 %v9920
        %v10433 = vcvt.s32.f32 %v9921
        %v10434 = vcvt.s32.f32 %v9922
        %v10435 = vcvt.s32.f32 %v9923
        %v10436 = vcvt.s32.f32 %v9924
        %v10437 = vcvt.s32.f32 %v9925
        %v10438 = vcvt.s32.f32 %v9926
        %v10439 = vcvt.s32.f32 %v9927
        %v10440 = vcvt.s32.f32 %v9928
        %v10441 = vcvt.s32.f32 %v9929
        %v10442 = vcvt.s32.f32 %v9930
        %v10443 = vcvt.s32.f32 %v9931
        %v10444 = vcvt.s32.f32 %v9932
        %v10445 = vcvt.s32.f32 %v9933
        %v10446 = vcvt.s32.f32 %v9934
        %v10447 = vcvt.s32.f32 %v9935
        %v10448 = vcvt.s32.f32 %v9936
        %v10449 = vcvt.s32.f32 %v9937
        %v10450 = vcvt.s32.f32 %v9938
        %v10451 = vcvt.s32.f32 %v9939
        %v10452 = vcvt.s32.f32 %v9940
        %v10453 = vcvt.s32.f32 %v9941
        %v10454 = vcvt.s32.f32 %v9942
        %v10455 = vcvt.s32.f32 %v9943
        %v10456 = vcvt.s32.f32 %v9944
        %v10457 = vcvt.s32.f32 %v9945
        %v10458 = vcvt.s32.f32 %v9946
        %v10459 = vcvt.s32.f32 %v9947
        %v10460 = vcvt.s32.f32 %v9948
        %v10461 = vcvt.s32.f32 %v9949
        %v10462 = vcvt.s32.f32 %v9950
        %v10463 = vcvt.s32.f32 %v9951
        %v10464 = vcvt.s32.f32 %v9952
        %v10465 = vcvt.s32.f32 %v9953
        %v10466 = vcvt.s32.f32 %v9954
        %v10467 = vcvt.s32.f32 %v9955
        %v10468 = vcvt.s32.f32 %v9956
        %v10469 = vcvt.s32.f32 %v9957
        %v10470 = vcvt.s32.f32 %v9958
        %v10471 = vcvt.s32.f32 %v9959
        %v10472 = vcvt.s32.f32 %v9960
        %v10473 = vcvt.s32.f32 %v9961
        %v10474 = vcvt.s32.f32 %v9962
        %v10475 = vcvt.s32.f32 %v9963
        %v10476 = vcvt.s32.f32 %v9964
        %v10477 = vcvt.s32.f32 %v9965
        %v10478 = vcvt.s32.f32 %v9966
        %v10479 = vcvt.s32.f32 %v9967
        %v10480 = vcvt.s32.f32 %v9968
        %v10481 = vcvt.s32.f32 %v9969
        %v10482 = vcvt.s32.f32 %v9970
        %v10483 = vcvt.s32.f32 %v9971
        %v10484 = vcvt.s32.f32 %v9972
        %v10485 = vcvt.s32.f32 %v9973
        %v10486 = vcvt.s32.f32 %v9974
        %v10487 = vcvt.s32.f32 %v9975
        %v10488 = vcvt.s32.f32 %v9976
        %v10489 = vcvt.s32.f32 %v9977
        %v10490 = vcvt.s32.f32 %v9978
        %v10491 = vcvt.s32.f32 %v9979
        %v10492 = vcvt.s32.f32 %v9980
        %v10493 = vcvt.s32.f32 %v9981
        %v10494 = vcvt.s32.f32 %v9982
        %v10495 = vcvt.s32.f32 %v9983
        %v10496 = vcvt.s32.f32 %v9984
        %v10497 = vcvt.s32.f32 %v9985
        %v10498 = vcvt.s32.f32 %v9986
        %v10499 = vcvt.s32.f32 %v9987
        %v10500 = vcvt.s32.f32 %v9988
        %v10501 = vcvt.s32.f32 %v9989
        %v10502 = vcvt.s32.f32 %v9990
        %v10503 = vcvt.s32.f32 %v9991
        %v10504 = vcvt.s32.f32 %v9992
        %v10505 = vcvt.s32.f32 %v9993
        %v10506 = vcvt.s32.f32 %v9994
        %v10507 = vcvt.s32.f32 %v9995
        %v10508 = vcvt.s32.f32 %v9996
        %v10509 = vcvt.s32.f32 %v9997
        %v10510 = vcvt.s32.f32 %v9998
        %v10511 = vcvt.s32.f32 %v9999
        %v10512 = vcvt.s32.f32 %v10000
        %v10513 = vcvt.s32.f32 %v10001
        %v10514 = vcvt.s32.f32 %v10002
        %v10515 = vcvt.s32.f32 %v10003
        %v10516 = vcvt.s32.f32 %v10004
        %v10517 = vcvt.s32.f32 %v10005
        %v10518 = vcvt.s32.f32 %v10006
        %v10519 = vcvt.s32.f32 %v10007
        %v10520 = vcvt.s32.f32 %v10008
        %v10521 = vcvt.s32.f32 %v10009
        %v10522 = vcvt.s32.f32 %v10010
        %v10523 = vcvt.s32.f32 %v10011
        %v10524 = vcvt.s32.f32 %v10012
        %v10525 = vcvt.s32.f32 %v10013
        %v10526 = vcvt.s32.f32 %v10014
        %v10527 = vcvt.s32.f32 %v10015
        %v10528 = vcvt.s32.f32 %v10016
        %v10529 = vcvt.s32.f32 %v10017
        %v10530 = vcvt.s32.f32 %v10018
        %v10531 = vcvt.s32.f32 %v10019
        %v10532 = vcvt.s32.f32 %v10020
        %v10533 = vcvt.s32.f32 %v10021
        %v10534 = vcvt.s32.f32 %v10022
        %v10535 = vcvt.s32.f32 %v10023
        %v10536 = vcvt.s32.f32 %v10024
        %v10537 = vcvt.s32.f32 %v10025
        %v10538 = vcvt.s32.f32 %v10026
        %v10539 = vcvt.s32.f32 %v10027
        %v10540 = vcvt.s32.f32 %v10028
        %v10541 = vcvt.s32.f32 %v10029
        %v10542 = vcvt.s32.f32 %v10030
        %v10543 = vcvt.s32.f32 %v10031
        %v10544 = vcvt.s32.f32 %v10032
        %v10545 = vcvt.s32.f32 %v10033
        %v10546 = vcvt.s32.f32 %v10034
        %v10547 = vcvt.s32.f32 %v10035
        %v10548 = vcvt.s32.f32 %v10036
        %v10549 = vcvt.s32.f32 %v10037
        %v10550 = vcvt.s32.f32 %v10038
        %v10551 = vcvt.s32.f32 %v10039
        %v10552 = vcvt.s32.f32 %v10040
        %v10553 = vcvt.s32.f32 %v10041
        %v10554 = vcvt.s32.f32 %v10042
        %v10555 = vcvt.s32.f32 %v10043
        %v10556 = vcvt.s32.f32 %v10044
        %v10557 = vcvt.s32.f32 %v10045
        %v10558 = vcvt.s32.f32 %v10046
        %v10559 = vcvt.s32.f32 %v10047
        %v10560 = vcvt.s32.f32 %v10048
        %v10561 = vcvt.s32.f32 %v10049
        %v10562 = vcvt.s32.f32 %v10050
        %v10563 = vcvt.s32.f32 %v10051
        %v10564 = vcvt.s32.f32 %v10052
        %v10565 = vcvt.s32.f32 %v10053
        %v10566 = vcvt.s32.f32 %v10054
        %v10567 = vcvt.s32.f32 %v10055
        %v10568 = vcvt.s32.f32 %v10056
        %v10569 = vcvt.s32.f32 %v10057
        %v10570 = vcvt.s32.f32 %v10058
        %v10571 = vcvt.s32.f32 %v10059
        %v10572 = vcvt.s32.f32 %v10060
        %v10573 = vcvt.s32.f32 %v10061
        %v10574 = vcvt.s32.f32 %v10062
        %v10575 = vcvt.s32.f32 %v10063
        %v10576 = vcvt.s32.f32 %v10064
        %v10577 = vcvt.s32.f32 %v10065
        %v10578 = vcvt.s32.f32 %v10066
        %v10579 = vcvt.s32.f32 %v10067
        %v10580 = vcvt.s32.f32 %v10068
        %v10581 = vcvt.s32.f32 %v10069
        %v10582 = vcvt.s32.f32 %v10070
        %v10583 = vcvt.s32.f32 %v10071
        %v10584 = vcvt.s32.f32 %v10072
        %v10585 = vcvt.s32.f32 %v10073
        %v10586 = vcvt.s32.f32 %v10074
        %v10587 = vcvt.s32.f32 %v10075
        %v10588 = vcvt.s32.f32 %v10076
        %v10589 = vcvt.s32.f32 %v10077
        %v10590 = vcvt.s32.f32 %v10078
        %v10591 = vcvt.s32.f32 %v10079
        %v10592 = vcvt.s32.f32 %v10080
        %v10593 = vcvt.s32.f32 %v10081
        %v10594 = vcvt.s32.f32 %v10082
        %v10595 = vcvt.s32.f32 %v10083
        %v10596 = vcvt.s32.f32 %v10084
        %v10597 = vcvt.s32.f32 %v10085
        %v10598 = vcvt.s32.f32 %v10086
        %v10599 = vcvt.s32.f32 %v10087
        %v10600 = vcvt.s32.f32 %v10088
        %v10601 = vcvt.s32.f32 %v10089
        %v10602 = vcvt.s32.f32 %v10090
        %v10603 = vcvt.s32.f32 %v10091
        %v10604 = vcvt.s32.f32 %v10092
        %v10605 = vcvt.s32.f32 %v10093
        %v10606 = vcvt.s32.f32 %v10094
        %v10607 = vcvt.s32.f32 %v10095
        %v10608 = vcvt.s32.f32 %v10096
        %v10609 = vcvt.s32.f32 %v10097
        %v10610 = vcvt.s32.f32 %v10098
        %v10611 = vcvt.s32.f32 %v10099
        %v10612 = vcvt.s32.f32 %v10100
        %v10613 = vcvt.s32.f32 %v10101
        %v10614 = vcvt.s32.f32 %v10102
        %v10615 = vcvt.s32.f32 %v10103
        %v10616 = vcvt.s32.f32 %v10104
        %v10617 = vcvt.s32.f32 %v10105
        %v10618 = vcvt.s32.f32 %v10106
        %v10619 = vcvt.s32.f32 %v10107
        %v10620 = vcvt.s32.f32 %v10108
        %v10621 = vcvt.s32.f32 %v10109
        %v10622 = vcvt.s32.f32 %v10110
        %v10623 = vcvt.s32.f32 %v10111
        %v10624 = vcvt.s32.f32 %v10112
        %v10625 = vcvt.s32.f32 %v10113
        %v10626 = vcvt.s32.f32 %v10114
        %v10627 = vcvt.s32.f32 %v10115
        %v10628 = vcvt.s32.f32 %v10116
        %v10629 = vcvt.s32.f32 %v10117
        %v10630 = vcvt.s32.f32 %v10118
        %v10631 = vcvt.s32.f32 %v10119
        %v10632 = vcvt.s32.f32 %v10120
        %v10633 = vcvt.s32.f32 %v10121
        %v10634 = vcvt.s32.f32 %v10122
        %v10635 = vcvt.s32.f32 %v10123
        %v10636 = vcvt.s32.f32 %v10124
        %v10637 = vcvt.s32.f32 %v10125
        %v10638 = vcvt.s32.f32 %v10126
        %v10639 = vcvt.s32.f32 %v10127
        %v10640 = vcvt.s32.f32 %v10128
        %v10641 = vcvt.s32.f32 %v10129
        %v10642 = vcvt.s32.f32 %v10130
        %v10643 = vcvt.s32.f32 %v10131
        %v10644 = vcvt.s32.f32 %v10132
        %v10645 = vcvt.s32.f32 %v10133
        %v10646 = vcvt.s32.f32 %v10134
        %v10647 = vcvt.s32.f32 %v10135
        %v10648 = vcvt.s32.f32 %v10136
        %v10649 = vcvt.s32.f32 %v10137
        %v10650 = vcvt.s32.f32 %v10138
        %v10651 = vcvt.s32.f32 %v10139
        %v10652 = vcvt.s32.f32 %v10140
        %v10653 = vpack.c.bf16 %v10145, %v10141
        %v10654 = vpack.c.bf16 %v10146, %v10142
        %v10655 = vpack.c.bf16 %v10147, %v10143
        %v10656 = vpack.c.bf16 %v10148, %v10144
        %v10657 = vpack.c.bf16 %v10153, %v10149
        %v10658 = vpack.c.bf16 %v10154, %v10150
        %v10659 = vpack.c.bf16 %v10155, %v10151
        %v10660 = vpack.c.bf16 %v10156, %v10152
        %v10661 = vpack.c.bf16 %v10161, %v10157
        %v10662 = vpack.c.bf16 %v10162, %v10158
        %v10663 = vpack.c.bf16 %v10163, %v10159
        %v10664 = vpack.c.bf16 %v10164, %v10160
        %v10665 = vpack.c.bf16 %v10169, %v10165
        %v10666 = vpack.c.bf16 %v10170, %v10166
        %v10667 = vpack.c.bf16 %v10171, %v10167
        %v10668 = vpack.c.bf16 %v10172, %v10168
        %v10669 = vpack.c.bf16 %v10177, %v10173
        %v10670 = vpack.c.bf16 %v10178, %v10174
        %v10671 = vpack.c.bf16 %v10179, %v10175
        %v10672 = vpack.c.bf16 %v10180, %v10176
        %v10673 = vpack.c.bf16 %v10185, %v10181
        %v10674 = vpack.c.bf16 %v10186, %v10182
        %v10675 = vpack.c.bf16 %v10187, %v10183
        %v10676 = vpack.c.bf16 %v10188, %v10184
        %v10677 = vpack.c.bf16 %v10193, %v10189
        %v10678 = vpack.c.bf16 %v10194, %v10190
        %v10679 = vpack.c.bf16 %v10195, %v10191
        %v10680 = vpack.c.bf16 %v10196, %v10192
        %v10681 = vpack.c.bf16 %v10201, %v10197
        %v10682 = vpack.c.bf16 %v10202, %v10198
        %v10683 = vpack.c.bf16 %v10203, %v10199
        %v10684 = vpack.c.bf16 %v10204, %v10200
        %v10685 = vpack.c.bf16 %v10209, %v10205
        %v10686 = vpack.c.bf16 %v10210, %v10206
        %v10687 = vpack.c.bf16 %v10211, %v10207
        %v10688 = vpack.c.bf16 %v10212, %v10208
        %v10689 = vpack.c.bf16 %v10217, %v10213
        %v10690 = vpack.c.bf16 %v10218, %v10214
        %v10691 = vpack.c.bf16 %v10219, %v10215
        %v10692 = vpack.c.bf16 %v10220, %v10216
        %v10693 = vpack.c.bf16 %v10225, %v10221
        %v10694 = vpack.c.bf16 %v10226, %v10222
        %v10695 = vpack.c.bf16 %v10227, %v10223
        %v10696 = vpack.c.bf16 %v10228, %v10224
        %v10697 = vpack.c.bf16 %v10233, %v10229
        %v10698 = vpack.c.bf16 %v10234, %v10230
        %v10699 = vpack.c.bf16 %v10235, %v10231
        %v10700 = vpack.c.bf16 %v10236, %v10232
        %v10701 = vpack.c.bf16 %v10241, %v10237
        %v10702 = vpack.c.bf16 %v10242, %v10238
        %v10703 = vpack.c.bf16 %v10243, %v10239
        %v10704 = vpack.c.bf16 %v10244, %v10240
        %v10705 = vpack.c.bf16 %v10249, %v10245
        %v10706 = vpack.c.bf16 %v10250, %v10246
        %v10707 = vpack.c.bf16 %v10251, %v10247
        %v10708 = vpack.c.bf16 %v10252, %v10248
        %v10709 = vpack.c.bf16 %v10257, %v10253
        %v10710 = vpack.c.bf16 %v10258, %v10254
        %v10711 = vpack.c.bf16 %v10259, %v10255
        %v10712 = vpack.c.bf16 %v10260, %v10256
        %v10713 = vpack.c.bf16 %v10265, %v10261
        %v10714 = vpack.c.bf16 %v10266, %v10262
        %v10715 = vpack.c.bf16 %v10267, %v10263
        %v10716 = vpack.c.bf16 %v10268, %v10264
        %v10717 = vpack.c.bf16 %v10273, %v10269
        %v10718 = vpack.c.bf16 %v10274, %v10270
        %v10719 = vpack.c.bf16 %v10275, %v10271
        %v10720 = vpack.c.bf16 %v10276, %v10272
        %v10721 = vpack.c.bf16 %v10281, %v10277
        %v10722 = vpack.c.bf16 %v10282, %v10278
        %v10723 = vpack.c.bf16 %v10283, %v10279
        %v10724 = vpack.c.bf16 %v10284, %v10280
        %v10725 = vpack.c.bf16 %v10289, %v10285
        %v10726 = vpack.c.bf16 %v10290, %v10286
        %v10727 = vpack.c.bf16 %v10291, %v10287
        %v10728 = vpack.c.bf16 %v10292, %v10288
        %v10729 = vpack.c.bf16 %v10297, %v10293
        %v10730 = vpack.c.bf16 %v10298, %v10294
        %v10731 = vpack.c.bf16 %v10299, %v10295
        %v10732 = vpack.c.bf16 %v10300, %v10296
        %v10733 = vpack.c.bf16 %v10305, %v10301
        %v10734 = vpack.c.bf16 %v10306, %v10302
        %v10735 = vpack.c.bf16 %v10307, %v10303
        %v10736 = vpack.c.bf16 %v10308, %v10304
        %v10737 = vpack.c.bf16 %v10313, %v10309
        %v10738 = vpack.c.bf16 %v10314, %v10310
        %v10739 = vpack.c.bf16 %v10315, %v10311
        %v10740 = vpack.c.bf16 %v10316, %v10312
        %v10741 = vpack.c.bf16 %v10321, %v10317
        %v10742 = vpack.c.bf16 %v10322, %v10318
        %v10743 = vpack.c.bf16 %v10323, %v10319
        %v10744 = vpack.c.bf16 %v10324, %v10320
        %v10745 = vpack.c.bf16 %v10329, %v10325
        %v10746 = vpack.c.bf16 %v10330, %v10326
        %v10747 = vpack.c.bf16 %v10331, %v10327
        %v10748 = vpack.c.bf16 %v10332, %v10328
        %v10749 = vpack.c.bf16 %v10337, %v10333
        %v10750 = vpack.c.bf16 %v10338, %v10334
        %v10751 = vpack.c.bf16 %v10339, %v10335
        %v10752 = vpack.c.bf16 %v10340, %v10336
        %v10753 = vpack.c.bf16 %v10345, %v10341
        %v10754 = vpack.c.bf16 %v10346, %v10342
        %v10755 = vpack.c.bf16 %v10347, %v10343
        %v10756 = vpack.c.bf16 %v10348, %v10344
        %v10757 = vpack.c.bf16 %v10353, %v10349
        %v10758 = vpack.c.bf16 %v10354, %v10350
        %v10759 = vpack.c.bf16 %v10355, %v10351
        %v10760 = vpack.c.bf16 %v10356, %v10352
        %v10761 = vpack.c.bf16 %v10361, %v10357
        %v10762 = vpack.c.bf16 %v10362, %v10358
        %v10763 = vpack.c.bf16 %v10363, %v10359
        %v10764 = vpack.c.bf16 %v10364, %v10360
        %v10765 = vpack.c.bf16 %v10369, %v10365
        %v10766 = vpack.c.bf16 %v10370, %v10366
        %v10767 = vpack.c.bf16 %v10371, %v10367
        %v10768 = vpack.c.bf16 %v10372, %v10368
        %v10769 = vpack.c.bf16 %v10377, %v10373
        %v10770 = vpack.c.bf16 %v10378, %v10374
        %v10771 = vpack.c.bf16 %v10379, %v10375
        %v10772 = vpack.c.bf16 %v10380, %v10376
        %v10773 = vpack.c.bf16 %v10385, %v10381
        %v10774 = vpack.c.bf16 %v10386, %v10382
        %v10775 = vpack.c.bf16 %v10387, %v10383
        %v10776 = vpack.c.bf16 %v10388, %v10384
        %v10777 = vpack.c.bf16 %v10393, %v10389
        %v10778 = vpack.c.bf16 %v10394, %v10390
        %v10779 = vpack.c.bf16 %v10395, %v10391
        %v10780 = vpack.c.bf16 %v10396, %v10392
        %v10781 = vpack.c.bf16 %v10401, %v10397
        %v10782 = vpack.c.bf16 %v10402, %v10398
        %v10783 = vpack.c.bf16 %v10403, %v10399
        %v10784 = vpack.c.bf16 %v10404, %v10400
        %v10785 = vpack.c.bf16 %v10409, %v10405
        %v10786 = vpack.c.bf16 %v10410, %v10406
        %v10787 = vpack.c.bf16 %v10411, %v10407
        %v10788 = vpack.c.bf16 %v10412, %v10408
        %v10789 = vpack.c.bf16 %v10417, %v10413
        %v10790 = vpack.c.bf16 %v10418, %v10414
        %v10791 = vpack.c.bf16 %v10419, %v10415
        %v10792 = vpack.c.bf16 %v10420, %v10416
        %v10793 = vpack.c.bf16 %v10425, %v10421
        %v10794 = vpack.c.bf16 %v10426, %v10422
        %v10795 = vpack.c.bf16 %v10427, %v10423
        %v10796 = vpack.c.bf16 %v10428, %v10424
        %v10797 = vpack.c.bf16 %v10433, %v10429
        %v10798 = vpack.c.bf16 %v10434, %v10430
        %v10799 = vpack.c.bf16 %v10435, %v10431
        %v10800 = vpack.c.bf16 %v10436, %v10432
        %v10801 = vpack.c.bf16 %v10441, %v10437
        %v10802 = vpack.c.bf16 %v10442, %v10438
        %v10803 = vpack.c.bf16 %v10443, %v10439
        %v10804 = vpack.c.bf16 %v10444, %v10440
        %v10805 = vpack.c.bf16 %v10449, %v10445
        %v10806 = vpack.c.bf16 %v10450, %v10446
        %v10807 = vpack.c.bf16 %v10451, %v10447
        %v10808 = vpack.c.bf16 %v10452, %v10448
        %v10809 = vpack.c.bf16 %v10457, %v10453
        %v10810 = vpack.c.bf16 %v10458, %v10454
        %v10811 = vpack.c.bf16 %v10459, %v10455
        %v10812 = vpack.c.bf16 %v10460, %v10456
        %v10813 = vpack.c.bf16 %v10465, %v10461
        %v10814 = vpack.c.bf16 %v10466, %v10462
        %v10815 = vpack.c.bf16 %v10467, %v10463
        %v10816 = vpack.c.bf16 %v10468, %v10464
        %v10817 = vpack.c.bf16 %v10473, %v10469
        %v10818 = vpack.c.bf16 %v10474, %v10470
        %v10819 = vpack.c.bf16 %v10475, %v10471
        %v10820 = vpack.c.bf16 %v10476, %v10472
        %v10821 = vpack.c.bf16 %v10481, %v10477
        %v10822 = vpack.c.bf16 %v10482, %v10478
        %v10823 = vpack.c.bf16 %v10483, %v10479
        %v10824 = vpack.c.bf16 %v10484, %v10480
        %v10825 = vpack.c.bf16 %v10489, %v10485
        %v10826 = vpack.c.bf16 %v10490, %v10486
        %v10827 = vpack.c.bf16 %v10491, %v10487
        %v10828 = vpack.c.bf16 %v10492, %v10488
        %v10829 = vpack.c.bf16 %v10497, %v10493
        %v10830 = vpack.c.bf16 %v10498, %v10494
        %v10831 = vpack.c.bf16 %v10499, %v10495
        %v10832 = vpack.c.bf16 %v10500, %v10496
        %v10833 = vpack.c.bf16 %v10505, %v10501
        %v10834 = vpack.c.bf16 %v10506, %v10502
        %v10835 = vpack.c.bf16 %v10507, %v10503
        %v10836 = vpack.c.bf16 %v10508, %v10504
        %v10837 = vpack.c.bf16 %v10513, %v10509
        %v10838 = vpack.c.bf16 %v10514, %v10510
        %v10839 = vpack.c.bf16 %v10515, %v10511
        %v10840 = vpack.c.bf16 %v10516, %v10512
        %v10841 = vpack.c.bf16 %v10521, %v10517
        %v10842 = vpack.c.bf16 %v10522, %v10518
        %v10843 = vpack.c.bf16 %v10523, %v10519
        %v10844 = vpack.c.bf16 %v10524, %v10520
        %v10845 = vpack.c.bf16 %v10529, %v10525
        %v10846 = vpack.c.bf16 %v10530, %v10526
        %v10847 = vpack.c.bf16 %v10531, %v10527
        %v10848 = vpack.c.bf16 %v10532, %v10528
        %v10849 = vpack.c.bf16 %v10537, %v10533
        %v10850 = vpack.c.bf16 %v10538, %v10534
        %v10851 = vpack.c.bf16 %v10539, %v10535
        %v10852 = vpack.c.bf16 %v10540, %v10536
        %v10853 = vpack.c.bf16 %v10545, %v10541
        %v10854 = vpack.c.bf16 %v10546, %v10542
        %v10855 = vpack.c.bf16 %v10547, %v10543
        %v10856 = vpack.c.bf16 %v10548, %v10544
        %v10857 = vpack.c.bf16 %v10553, %v10549
        %v10858 = vpack.c.bf16 %v10554, %v10550
        %v10859 = vpack.c.bf16 %v10555, %v10551
        %v10860 = vpack.c.bf16 %v10556, %v10552
        %v10861 = vpack.c.bf16 %v10561, %v10557
        %v10862 = vpack.c.bf16 %v10562, %v10558
        %v10863 = vpack.c.bf16 %v10563, %v10559
        %v10864 = vpack.c.bf16 %v10564, %v10560
        %v10865 = vpack.c.bf16 %v10569, %v10565
        %v10866 = vpack.c.bf16 %v10570, %v10566
        %v10867 = vpack.c.bf16 %v10571, %v10567
        %v10868 = vpack.c.bf16 %v10572, %v10568
        %v10869 = vpack.c.bf16 %v10577, %v10573
        %v10870 = vpack.c.bf16 %v10578, %v10574
        %v10871 = vpack.c.bf16 %v10579, %v10575
        %v10872 = vpack.c.bf16 %v10580, %v10576
        %v10873 = vpack.c.bf16 %v10585, %v10581
        %v10874 = vpack.c.bf16 %v10586, %v10582
        %v10875 = vpack.c.bf16 %v10587, %v10583
        %v10876 = vpack.c.bf16 %v10588, %v10584
        %v10877 = vpack.c.bf16 %v10593, %v10589
        %v10878 = vpack.c.bf16 %v10594, %v10590
        %v10879 = vpack.c.bf16 %v10595, %v10591
        %v10880 = vpack.c.bf16 %v10596, %v10592
        %v10881 = vpack.c.bf16 %v10601, %v10597
        %v10882 = vpack.c.bf16 %v10602, %v10598
        %v10883 = vpack.c.bf16 %v10603, %v10599
        %v10884 = vpack.c.bf16 %v10604, %v10600
        %v10885 = vpack.c.bf16 %v10609, %v10605
        %v10886 = vpack.c.bf16 %v10610, %v10606
        %v10887 = vpack.c.bf16 %v10611, %v10607
        %v10888 = vpack.c.bf16 %v10612, %v10608
        %v10889 = vpack.c.bf16 %v10617, %v10613
        %v10890 = vpack.c.bf16 %v10618, %v10614
        %v10891 = vpack.c.bf16 %v10619, %v10615
        %v10892 = vpack.c.bf16 %v10620, %v10616
        %v10893 = vpack.c.bf16 %v10625, %v10621
        %v10894 = vpack.c.bf16 %v10626, %v10622
        %v10895 = vpack.c.bf16 %v10627, %v10623
        %v10896 = vpack.c.bf16 %v10628, %v10624
        %v10897 = vpack.c.bf16 %v10633, %v10629
        %v10898 = vpack.c.bf16 %v10634, %v10630
        %v10899 = vpack.c.bf16 %v10635, %v10631
        %v10900 = vpack.c.bf16 %v10636, %v10632
        %v10901 = vpack.c.bf16 %v10641, %v10637
        %v10902 = vpack.c.bf16 %v10642, %v10638
        %v10903 = vpack.c.bf16 %v10643, %v10639
        %v10904 = vpack.c.bf16 %v10644, %v10640
        %v10905 = vpack.c.bf16 %v10649, %v10645
        %v10906 = vpack.c.bf16 %v10650, %v10646
        %v10907 = vpack.c.bf16 %v10651, %v10647
        %v10908 = vpack.c.bf16 %v10652, %v10648
        %v10909 = vpack.c.bf16 %v9493, %v9493
        %v10910 = vpack.c.bf16 %v9494, %v9494
        %v10911 = vpack.c.bf16 %v9495, %v9495
        %v10912 = vpack.c.bf16 %v9496, %v9496
        %v10913 = vpack.c.bf16 %v9497, %v9497
        %v10914 = vpack.c.bf16 %v9498, %v9498
        %v10915 = vpack.c.bf16 %v9499, %v9499
        %v10916 = vpack.c.bf16 %v9500, %v9500
        %10917 = vmatpush.bf16.msra.mxu0 %v10681
        %10918 = vmatpush.bf16.msra.mxu0 %v10677
        %10919 = vmatpush.bf16.msra.mxu0 %v10673
        %10920 = vmatpush.bf16.msra.mxu0 %v10669
        %10921 = vmatpush.bf16.msra.mxu0 %v10665
        %10922 = vmatpush.bf16.msra.mxu0 %v10661
        %10923 = vmatpush.bf16.msra.mxu0 %v10657
        %10924 = vmatpush.bf16.msra.mxu0 %v10653
        %10925 = vmatmul.bf16.gmra.mxu0 %v10909
        %v10926 = vpop.f32.mrf.mxu0
        %v10927 = vadd.f32 0.0, %v10926
        %v10928 = vpop.f32.mrf.mxu0
        %10929 = vdwg.mxu0
        %10930 = vmatpush.bf16.msra.mxu0 %v10713
        %10931 = vmatpush.bf16.msra.mxu0 %v10709
        %10932 = vmatpush.bf16.msra.mxu0 %v10705
        %10933 = vmatpush.bf16.msra.mxu0 %v10701
        %10934 = vmatpush.bf16.msra.mxu0 %v10697
        %10935 = vmatpush.bf16.msra.mxu0 %v10693
        %10936 = vmatpush.bf16.msra.mxu0 %v10689
        %10937 = vmatpush.bf16.msra.mxu0 %v10685
        %10938 = vmatmul.bf16.gmra.mxu0 %v10910
        %v10939 = vpop.f32.mrf.mxu0
        %v10940 = vadd.f32 %v10927, %v10939
        %v10941 = vpop.f32.mrf.mxu0
        %10942 = vdwg.mxu0
        %10943 = vmatpush.bf16.msra.mxu0 %v10745
        %10944 = vmatpush.bf16.msra.mxu0 %v10741
        %10945 = vmatpush.bf16.msra.mxu0 %v10737
        %10946 = vmatpush.bf16.msra.mxu0 %v10733
        %10947 = vmatpush.bf16.msra.mxu0 %v10729
        %10948 = vmatpush.bf16.msra.mxu0 %v10725
        %10949 = vmatpush.bf16.msra.mxu0 %v10721
        %10950 = vmatpush.bf16.msra.mxu0 %v10717
        %10951 = vmatmul.bf16.gmra.mxu0 %v10911
        %v10952 = vpop.f32.mrf.mxu0
        %v10953 = vadd.f32 %v10940, %v10952
        %v10954 = vpop.f32.mrf.mxu0
        %10955 = vdwg.mxu0
        %10956 = vmatpush.bf16.msra.mxu0 %v10777
        %10957 = vmatpush.bf16.msra.mxu0 %v10773
        %10958 = vmatpush.bf16.msra.mxu0 %v10769
        %10959 = vmatpush.bf16.msra.mxu0 %v10765
        %10960 = vmatpush.bf16.msra.mxu0 %v10761
        %10961 = vmatpush.bf16.msra.mxu0 %v10757
        %10962 = vmatpush.bf16.msra.mxu0 %v10753
        %10963 = vmatpush.bf16.msra.mxu0 %v10749
        %10964 = vmatmul.bf16.gmra.mxu0 %v10912
        %v10965 = vpop.f32.mrf.mxu0
        %v10966 = vadd.f32 %v10953, %v10965
        %v10967 = vpop.f32.mrf.mxu0
        %10968 = vdwg.mxu0
        %10969 = vmatpush.bf16.msra.mxu0 %v10809
        %10970 = vmatpush.bf16.msra.mxu0 %v10805
        %10971 = vmatpush.bf16.msra.mxu0 %v10801
        %10972 = vmatpush.bf16.msra.mxu0 %v10797
        %10973 = vmatpush.bf16.msra.mxu0 %v10793
        %10974 = vmatpush.bf16.msra.mxu0 %v10789
        %10975 = vmatpush.bf16.msra.mxu0 %v10785
        %10976 = vmatpush.bf16.msra.mxu0 %v10781
        %10977 = vmatmul.bf16.gmra.mxu0 %v10913
        %v10978 = vpop.f32.mrf.mxu0
        %v10979 = vadd.f32 %v10966, %v10978
        %v10980 = vpop.f32.mrf.mxu0
        %10981 = vdwg.mxu0
        %10982 = vmatpush.bf16.msra.mxu0 %v10841
        %10983 = vmatpush.bf16.msra.mxu0 %v10837
        %10984 = vmatpush.bf16.msra.mxu0 %v10833
        %10985 = vmatpush.bf16.msra.mxu0 %v10829
        %10986 = vmatpush.bf16.msra.mxu0 %v10825
        %10987 = vmatpush.bf16.msra.mxu0 %v10821
        %10988 = vmatpush.bf16.msra.mxu0 %v10817
        %10989 = vmatpush.bf16.msra.mxu0 %v10813
        %10990 = vmatmul.bf16.gmra.mxu0 %v10914
        %v10991 = vpop.f32.mrf.mxu0
        %v10992 = vadd.f32 %v10979, %v10991
        %v10993 = vpop.f32.mrf.mxu0
        %10994 = vdwg.mxu0
        %10995 = vmatpush.bf16.msra.mxu0 %v10873
        %10996 = vmatpush.bf16.msra.mxu0 %v10869
        %10997 = vmatpush.bf16.msra.mxu0 %v10865
        %10998 = vmatpush.bf16.msra.mxu0 %v10861
        %10999 = vmatpush.bf16.msra.mxu0 %v10857
        %11000 = vmatpush.bf16.msra.mxu0 %v10853
        %11001 = vmatpush.bf16.msra.mxu0 %v10849
        %11002 = vmatpush.bf16.msra.mxu0 %v10845
        %11003 = vmatmul.bf16.gmra.mxu0 %v10915
        %v11004 = vpop.f32.mrf.mxu0
        %v11005 = vadd.f32 %v10992, %v11004
        %v11006 = vpop.f32.mrf.mxu0
        %11007 = vdwg.mxu0
        %11008 = vmatpush.bf16.msra.mxu0 %v10905
        %11009 = vmatpush.bf16.msra.mxu0 %v10901
        %11010 = vmatpush.bf16.msra.mxu0 %v10897
        %11011 = vmatpush.bf16.msra.mxu0 %v10893
        %11012 = vmatpush.bf16.msra.mxu0 %v10889
        %11013 = vmatpush.bf16.msra.mxu0 %v10885
        %11014 = vmatpush.bf16.msra.mxu0 %v10881
        %11015 = vmatpush.bf16.msra.mxu0 %v10877
        %11016 = vmatmul.bf16.gmra.mxu0 %v10916
        %v11017 = vpop.f32.mrf.mxu0
        %v11018 = vadd.f32 %v11005, %v11017
        %v11019 = vpop.f32.mrf.mxu0
        %11020 = vdwg.mxu0
        %11021 = vmatpush.bf16.msra.mxu0 %v10682
        %11022 = vmatpush.bf16.msra.mxu0 %v10678
        %11023 = vmatpush.bf16.msra.mxu0 %v10674
        %11024 = vmatpush.bf16.msra.mxu0 %v10670
        %11025 = vmatpush.bf16.msra.mxu0 %v10666
        %11026 = vmatpush.bf16.msra.mxu0 %v10662
        %11027 = vmatpush.bf16.msra.mxu0 %v10658
        %11028 = vmatpush.bf16.msra.mxu0 %v10654
        %11029 = vmatmul.bf16.gmra.mxu0 %v10909
        %v11030 = vpop.f32.mrf.mxu0
        %v11031 = vadd.f32 0.0, %v11030
        %v11032 = vpop.f32.mrf.mxu0
        %11033 = vdwg.mxu0
        %11034 = vmatpush.bf16.msra.mxu0 %v10714
        %11035 = vmatpush.bf16.msra.mxu0 %v10710
        %11036 = vmatpush.bf16.msra.mxu0 %v10706
        %11037 = vmatpush.bf16.msra.mxu0 %v10702
        %11038 = vmatpush.bf16.msra.mxu0 %v10698
        %11039 = vmatpush.bf16.msra.mxu0 %v10694
        %11040 = vmatpush.bf16.msra.mxu0 %v10690
        %11041 = vmatpush.bf16.msra.mxu0 %v10686
        %11042 = vmatmul.bf16.gmra.mxu0 %v10910
        %v11043 = vpop.f32.mrf.mxu0
        %v11044 = vadd.f32 %v11031, %v11043
        %v11045 = vpop.f32.mrf.mxu0
        %11046 = vdwg.mxu0
        %11047 = vmatpush.bf16.msra.mxu0 %v10746
        %11048 = vmatpush.bf16.msra.mxu0 %v10742
        %11049 = vmatpush.bf16.msra.mxu0 %v10738
        %11050 = vmatpush.bf16.msra.mxu0 %v10734
        %11051 = vmatpush.bf16.msra.mxu0 %v10730
        %11052 = vmatpush.bf16.msra.mxu0 %v10726
        %11053 = vmatpush.bf16.msra.mxu0 %v10722
        %11054 = vmatpush.bf16.msra.mxu0 %v10718
        %11055 = vmatmul.bf16.gmra.mxu0 %v10911
        %v11056 = vpop.f32.mrf.mxu0
        %v11057 = vadd.f32 %v11044, %v11056
        %v11058 = vpop.f32.mrf.mxu0
        %11059 = vdwg.mxu0
        %11060 = vmatpush.bf16.msra.mxu0 %v10778
        %11061 = vmatpush.bf16.msra.mxu0 %v10774
        %11062 = vmatpush.bf16.msra.mxu0 %v10770
        %11063 = vmatpush.bf16.msra.mxu0 %v10766
        %11064 = vmatpush.bf16.msra.mxu0 %v10762
        %11065 = vmatpush.bf16.msra.mxu0 %v10758
        %11066 = vmatpush.bf16.msra.mxu0 %v10754
        %11067 = vmatpush.bf16.msra.mxu0 %v10750
        %11068 = vmatmul.bf16.gmra.mxu0 %v10912
        %v11069 = vpop.f32.mrf.mxu0
        %v11070 = vadd.f32 %v11057, %v11069
        %v11071 = vpop.f32.mrf.mxu0
        %11072 = vdwg.mxu0
        %11073 = vmatpush.bf16.msra.mxu0 %v10810
        %11074 = vmatpush.bf16.msra.mxu0 %v10806
        %11075 = vmatpush.bf16.msra.mxu0 %v10802
        %11076 = vmatpush.bf16.msra.mxu0 %v10798
        %11077 = vmatpush.bf16.msra.mxu0 %v10794
        %11078 = vmatpush.bf16.msra.mxu0 %v10790
        %11079 = vmatpush.bf16.msra.mxu0 %v10786
        %11080 = vmatpush.bf16.msra.mxu0 %v10782
        %11081 = vmatmul.bf16.gmra.mxu0 %v10913
        %v11082 = vpop.f32.mrf.mxu0
        %v11083 = vadd.f32 %v11070, %v11082
        %v11084 = vpop.f32.mrf.mxu0
        %11085 = vdwg.mxu0
        %11086 = vmatpush.bf16.msra.mxu0 %v10842
        %11087 = vmatpush.bf16.msra.mxu0 %v10838
        %11088 = vmatpush.bf16.msra.mxu0 %v10834
        %11089 = vmatpush.bf16.msra.mxu0 %v10830
        %11090 = vmatpush.bf16.msra.mxu0 %v10826
        %11091 = vmatpush.bf16.msra.mxu0 %v10822
        %11092 = vmatpush.bf16.msra.mxu0 %v10818
        %11093 = vmatpush.bf16.msra.mxu0 %v10814
        %11094 = vmatmul.bf16.gmra.mxu0 %v10914
        %v11095 = vpop.f32.mrf.mxu0
        %v11096 = vadd.f32 %v11083, %v11095
        %v11097 = vpop.f32.mrf.mxu0
        %11098 = vdwg.mxu0
        %11099 = vmatpush.bf16.msra.mxu0 %v10874
        %11100 = vmatpush.bf16.msra.mxu0 %v10870
        %11101 = vmatpush.bf16.msra.mxu0 %v10866
        %11102 = vmatpush.bf16.msra.mxu0 %v10862
        %11103 = vmatpush.bf16.msra.mxu0 %v10858
        %11104 = vmatpush.bf16.msra.mxu0 %v10854
        %11105 = vmatpush.bf16.msra.mxu0 %v10850
        %11106 = vmatpush.bf16.msra.mxu0 %v10846
        %11107 = vmatmul.bf16.gmra.mxu0 %v10915
        %v11108 = vpop.f32.mrf.mxu0
        %v11109 = vadd.f32 %v11096, %v11108
        %v11110 = vpop.f32.mrf.mxu0
        %11111 = vdwg.mxu0
        %11112 = vmatpush.bf16.msra.mxu0 %v10906
        %11113 = vmatpush.bf16.msra.mxu0 %v10902
        %11114 = vmatpush.bf16.msra.mxu0 %v10898
        %11115 = vmatpush.bf16.msra.mxu0 %v10894
        %11116 = vmatpush.bf16.msra.mxu0 %v10890
        %11117 = vmatpush.bf16.msra.mxu0 %v10886
        %11118 = vmatpush.bf16.msra.mxu0 %v10882
        %11119 = vmatpush.bf16.msra.mxu0 %v10878
        %11120 = vmatmul.bf16.gmra.mxu0 %v10916
        %v11121 = vpop.f32.mrf.mxu0
        %v11122 = vadd.f32 %v11109, %v11121
        %v11123 = vpop.f32.mrf.mxu0
        %11124 = vdwg.mxu0
        %11125 = vmatpush.bf16.msra.mxu0 %v10683
        %11126 = vmatpush.bf16.msra.mxu0 %v10679
        %11127 = vmatpush.bf16.msra.mxu0 %v10675
        %11128 = vmatpush.bf16.msra.mxu0 %v10671
        %11129 = vmatpush.bf16.msra.mxu0 %v10667
        %11130 = vmatpush.bf16.msra.mxu0 %v10663
        %11131 = vmatpush.bf16.msra.mxu0 %v10659
        %11132 = vmatpush.bf16.msra.mxu0 %v10655
        %11133 = vmatmul.bf16.gmra.mxu0 %v10909
        %v11134 = vpop.f32.mrf.mxu0
        %v11135 = vadd.f32 0.0, %v11134
        %v11136 = vpop.f32.mrf.mxu0
        %11137 = vdwg.mxu0
        %11138 = vmatpush.bf16.msra.mxu0 %v10715
        %11139 = vmatpush.bf16.msra.mxu0 %v10711
        %11140 = vmatpush.bf16.msra.mxu0 %v10707
        %11141 = vmatpush.bf16.msra.mxu0 %v10703
        %11142 = vmatpush.bf16.msra.mxu0 %v10699
        %11143 = vmatpush.bf16.msra.mxu0 %v10695
        %11144 = vmatpush.bf16.msra.mxu0 %v10691
        %11145 = vmatpush.bf16.msra.mxu0 %v10687
        %11146 = vmatmul.bf16.gmra.mxu0 %v10910
        %v11147 = vpop.f32.mrf.mxu0
        %v11148 = vadd.f32 %v11135, %v11147
        %v11149 = vpop.f32.mrf.mxu0
        %11150 = vdwg.mxu0
        %11151 = vmatpush.bf16.msra.mxu0 %v10747
        %11152 = vmatpush.bf16.msra.mxu0 %v10743
        %11153 = vmatpush.bf16.msra.mxu0 %v10739
        %11154 = vmatpush.bf16.msra.mxu0 %v10735
        %11155 = vmatpush.bf16.msra.mxu0 %v10731
        %11156 = vmatpush.bf16.msra.mxu0 %v10727
        %11157 = vmatpush.bf16.msra.mxu0 %v10723
        %11158 = vmatpush.bf16.msra.mxu0 %v10719
        %11159 = vmatmul.bf16.gmra.mxu0 %v10911
        %v11160 = vpop.f32.mrf.mxu0
        %v11161 = vadd.f32 %v11148, %v11160
        %v11162 = vpop.f32.mrf.mxu0
        %11163 = vdwg.mxu0
        %11164 = vmatpush.bf16.msra.mxu0 %v10779
        %11165 = vmatpush.bf16.msra.mxu0 %v10775
        %11166 = vmatpush.bf16.msra.mxu0 %v10771
        %11167 = vmatpush.bf16.msra.mxu0 %v10767
        %11168 = vmatpush.bf16.msra.mxu0 %v10763
        %11169 = vmatpush.bf16.msra.mxu0 %v10759
        %11170 = vmatpush.bf16.msra.mxu0 %v10755
        %11171 = vmatpush.bf16.msra.mxu0 %v10751
        %11172 = vmatmul.bf16.gmra.mxu0 %v10912
        %v11173 = vpop.f32.mrf.mxu0
        %v11174 = vadd.f32 %v11161, %v11173
        %v11175 = vpop.f32.mrf.mxu0
        %11176 = vdwg.mxu0
        %11177 = vmatpush.bf16.msra.mxu0 %v10811
        %11178 = vmatpush.bf16.msra.mxu0 %v10807
        %11179 = vmatpush.bf16.msra.mxu0 %v10803
        %11180 = vmatpush.bf16.msra.mxu0 %v10799
        %11181 = vmatpush.bf16.msra.mxu0 %v10795
        %11182 = vmatpush.bf16.msra.mxu0 %v10791
        %11183 = vmatpush.bf16.msra.mxu0 %v10787
        %11184 = vmatpush.bf16.msra.mxu0 %v10783
        %11185 = vmatmul.bf16.gmra.mxu0 %v10913
        %v11186 = vpop.f32.mrf.mxu0
        %v11187 = vadd.f32 %v11174, %v11186
        %v11188 = vpop.f32.mrf.mxu0
        %11189 = vdwg.mxu0
        %11190 = vmatpush.bf16.msra.mxu0 %v10843
        %11191 = vmatpush.bf16.msra.mxu0 %v10839
        %11192 = vmatpush.bf16.msra.mxu0 %v10835
        %11193 = vmatpush.bf16.msra.mxu0 %v10831
        %11194 = vmatpush.bf16.msra.mxu0 %v10827
        %11195 = vmatpush.bf16.msra.mxu0 %v10823
        %11196 = vmatpush.bf16.msra.mxu0 %v10819
        %11197 = vmatpush.bf16.msra.mxu0 %v10815
        %11198 = vmatmul.bf16.gmra.mxu0 %v10914
        %v11199 = vpop.f32.mrf.mxu0
        %v11200 = vadd.f32 %v11187, %v11199
        %v11201 = vpop.f32.mrf.mxu0
        %11202 = vdwg.mxu0
        %11203 = vmatpush.bf16.msra.mxu0 %v10875
        %11204 = vmatpush.bf16.msra.mxu0 %v10871
        %11205 = vmatpush.bf16.msra.mxu0 %v10867
        %11206 = vmatpush.bf16.msra.mxu0 %v10863
        %11207 = vmatpush.bf16.msra.mxu0 %v10859
        %11208 = vmatpush.bf16.msra.mxu0 %v10855
        %11209 = vmatpush.bf16.msra.mxu0 %v10851
        %11210 = vmatpush.bf16.msra.mxu0 %v10847
        %11211 = vmatmul.bf16.gmra.mxu0 %v10915
        %v11212 = vpop.f32.mrf.mxu0
        %v11213 = vadd.f32 %v11200, %v11212
        %v11214 = vpop.f32.mrf.mxu0
        %11215 = vdwg.mxu0
        %11216 = vmatpush.bf16.msra.mxu0 %v10907
        %11217 = vmatpush.bf16.msra.mxu0 %v10903
        %11218 = vmatpush.bf16.msra.mxu0 %v10899
        %11219 = vmatpush.bf16.msra.mxu0 %v10895
        %11220 = vmatpush.bf16.msra.mxu0 %v10891
        %11221 = vmatpush.bf16.msra.mxu0 %v10887
        %11222 = vmatpush.bf16.msra.mxu0 %v10883
        %11223 = vmatpush.bf16.msra.mxu0 %v10879
        %11224 = vmatmul.bf16.gmra.mxu0 %v10916
        %v11225 = vpop.f32.mrf.mxu0
        %v11226 = vadd.f32 %v11213, %v11225
        %v11227 = vpop.f32.mrf.mxu0
        %11228 = vdwg.mxu0
        %11229 = vmatpush.bf16.msra.mxu0 %v10684
        %11230 = vmatpush.bf16.msra.mxu0 %v10680
        %11231 = vmatpush.bf16.msra.mxu0 %v10676
        %11232 = vmatpush.bf16.msra.mxu0 %v10672
        %11233 = vmatpush.bf16.msra.mxu0 %v10668
        %11234 = vmatpush.bf16.msra.mxu0 %v10664
        %11235 = vmatpush.bf16.msra.mxu0 %v10660
        %11236 = vmatpush.bf16.msra.mxu0 %v10656
        %11237 = vmatmul.bf16.gmra.mxu0 %v10909
        %v11238 = vpop.f32.mrf.mxu0
        %v11239 = vadd.f32 0.0, %v11238
        %v11240 = vpop.f32.mrf.mxu0
        %11241 = vdwg.mxu0
        %11242 = vmatpush.bf16.msra.mxu0 %v10716
        %11243 = vmatpush.bf16.msra.mxu0 %v10712
        %11244 = vmatpush.bf16.msra.mxu0 %v10708
        %11245 = vmatpush.bf16.msra.mxu0 %v10704
        %11246 = vmatpush.bf16.msra.mxu0 %v10700
        %11247 = vmatpush.bf16.msra.mxu0 %v10696
        %11248 = vmatpush.bf16.msra.mxu0 %v10692
        %11249 = vmatpush.bf16.msra.mxu0 %v10688
        %11250 = vmatmul.bf16.gmra.mxu0 %v10910
        %v11251 = vpop.f32.mrf.mxu0
        %v11252 = vadd.f32 %v11239, %v11251
        %v11253 = vpop.f32.mrf.mxu0
        %11254 = vdwg.mxu0
        %11255 = vmatpush.bf16.msra.mxu0 %v10748
        %11256 = vmatpush.bf16.msra.mxu0 %v10744
        %11257 = vmatpush.bf16.msra.mxu0 %v10740
        %11258 = vmatpush.bf16.msra.mxu0 %v10736
        %11259 = vmatpush.bf16.msra.mxu0 %v10732
        %11260 = vmatpush.bf16.msra.mxu0 %v10728
        %11261 = vmatpush.bf16.msra.mxu0 %v10724
        %11262 = vmatpush.bf16.msra.mxu0 %v10720
        %11263 = vmatmul.bf16.gmra.mxu0 %v10911
        %v11264 = vpop.f32.mrf.mxu0
        %v11265 = vadd.f32 %v11252, %v11264
        %v11266 = vpop.f32.mrf.mxu0
        %11267 = vdwg.mxu0
        %11268 = vmatpush.bf16.msra.mxu0 %v10780
        %11269 = vmatpush.bf16.msra.mxu0 %v10776
        %11270 = vmatpush.bf16.msra.mxu0 %v10772
        %11271 = vmatpush.bf16.msra.mxu0 %v10768
        %11272 = vmatpush.bf16.msra.mxu0 %v10764
        %11273 = vmatpush.bf16.msra.mxu0 %v10760
        %11274 = vmatpush.bf16.msra.mxu0 %v10756
        %11275 = vmatpush.bf16.msra.mxu0 %v10752
        %11276 = vmatmul.bf16.gmra.mxu0 %v10912
        %v11277 = vpop.f32.mrf.mxu0
        %v11278 = vadd.f32 %v11265, %v11277
        %v11279 = vpop.f32.mrf.mxu0
        %11280 = vdwg.mxu0
        %11281 = vmatpush.bf16.msra.mxu0 %v10812
        %11282 = vmatpush.bf16.msra.mxu0 %v10808
        %11283 = vmatpush.bf16.msra.mxu0 %v10804
        %11284 = vmatpush.bf16.msra.mxu0 %v10800
        %11285 = vmatpush.bf16.msra.mxu0 %v10796
        %11286 = vmatpush.bf16.msra.mxu0 %v10792
        %11287 = vmatpush.bf16.msra.mxu0 %v10788
        %11288 = vmatpush.bf16.msra.mxu0 %v10784
        %11289 = vmatmul.bf16.gmra.mxu0 %v10913
        %v11290 = vpop.f32.mrf.mxu0
        %v11291 = vadd.f32 %v11278, %v11290
        %v11292 = vpop.f32.mrf.mxu0
        %11293 = vdwg.mxu0
        %11294 = vmatpush.bf16.msra.mxu0 %v10844
        %11295 = vmatpush.bf16.msra.mxu0 %v10840
        %11296 = vmatpush.bf16.msra.mxu0 %v10836
        %11297 = vmatpush.bf16.msra.mxu0 %v10832
        %11298 = vmatpush.bf16.msra.mxu0 %v10828
        %11299 = vmatpush.bf16.msra.mxu0 %v10824
        %11300 = vmatpush.bf16.msra.mxu0 %v10820
        %11301 = vmatpush.bf16.msra.mxu0 %v10816
        %11302 = vmatmul.bf16.gmra.mxu0 %v10914
        %v11303 = vpop.f32.mrf.mxu0
        %v11304 = vadd.f32 %v11291, %v11303
        %v11305 = vpop.f32.mrf.mxu0
        %11306 = vdwg.mxu0
        %11307 = vmatpush.bf16.msra.mxu0 %v10876
        %11308 = vmatpush.bf16.msra.mxu0 %v10872
        %11309 = vmatpush.bf16.msra.mxu0 %v10868
        %11310 = vmatpush.bf16.msra.mxu0 %v10864
        %11311 = vmatpush.bf16.msra.mxu0 %v10860
        %11312 = vmatpush.bf16.msra.mxu0 %v10856
        %11313 = vmatpush.bf16.msra.mxu0 %v10852
        %11314 = vmatpush.bf16.msra.mxu0 %v10848
        %11315 = vmatmul.bf16.gmra.mxu0 %v10915
        %v11316 = vpop.f32.mrf.mxu0
        %v11317 = vadd.f32 %v11304, %v11316
        %v11318 = vpop.f32.mrf.mxu0
        %11319 = vdwg.mxu0
        %11320 = vmatpush.bf16.msra.mxu0 %v10908
        %11321 = vmatpush.bf16.msra.mxu0 %v10904
        %11322 = vmatpush.bf16.msra.mxu0 %v10900
        %11323 = vmatpush.bf16.msra.mxu0 %v10896
        %11324 = vmatpush.bf16.msra.mxu0 %v10892
        %11325 = vmatpush.bf16.msra.mxu0 %v10888
        %11326 = vmatpush.bf16.msra.mxu0 %v10884
        %11327 = vmatpush.bf16.msra.mxu0 %v10880
        %11328 = vmatmul.bf16.gmra.mxu0 %v10916
        %v11329 = vpop.f32.mrf.mxu0
        %v11330 = vadd.f32 %v11317, %v11329
        %v11331 = vpop.f32.mrf.mxu0
        %11332 = vdwg.mxu0
        %v11333 = vld [vmem:[%s545] sm:$0xf]
        %v11335 = vperm.slane %v11333, 0
        %v11336 = vperm.slane %v11333, 1
        %v11337 = vperm.slane %v11333, 2
        %v11338 = vperm.slane %v11333, 3
        %v11343 = vmul.f32 %v11018, %v11335
        %v11344 = vmul.f32 %v11122, %v11336
        %v11345 = vmul.f32 %v11226, %v11337
        %v11346 = vmul.f32 %v11330, %v11338
        %v11347 = vld [vmem:[%s555] sm:$0xf]
        %v11349 = vperm.slane %v11347, 0
        %v11350 = vperm.slane %v11347, 1
        %v11351 = vperm.slane %v11347, 2
        %v11352 = vperm.slane %v11347, 3
        %v11357 = vadd.f32 %v11343, %v11349
        %v11358 = vadd.f32 %v11344, %v11350
        %v11359 = vadd.f32 %v11345, %v11351
        %v11360 = vadd.f32 %v11346, %v11352
        %v11361 = vmax.f32 %v11357, 0.0
        %v11362 = vmax.f32 %v11358, 0.0
        %v11363 = vmax.f32 %v11359, 0.0
        %v11364 = vmax.f32 %v11360, 0.0
        %v11365 = vld [vmem:[%s565] sm:$0xf]
        %v11367 = vperm.slane %v11365, 0
        %v11368 = vperm.slane %v11365, 1
        %v11369 = vperm.slane %v11365, 2
        %v11370 = vperm.slane %v11365, 3
        %v11375 = vmul.f32 %v11361, %v11367
        %v11376 = vmul.f32 %v11362, %v11368
        %v11377 = vmul.f32 %v11363, %v11369
        %v11378 = vmul.f32 %v11364, %v11370
        %vm11379 = vcmask 1041408
        %v11380 = vsel %vm11379, %v11375, 0.0
        %v11381 = vsel %vm11379, %v11376, 0.0
        %v11382 = vadd.f32 %v11380, %v11381
        %v11383 = vsel %vm11379, %v11377, 0.0
        %v11384 = vadd.f32 %v11382, %v11383
        %v11385 = vsel %vm11379, %v11378, 0.0
        %v11386 = vadd.f32 %v11384, %v11385
        %11387 = vadd.xlane.f32.xlu0 %v11386
        %v11388 = vpop.xlane.xlu0 %11387
        %vm11389 = vcmask 1024
        %11390 = vst.msk [vmem:[%s645] sm:$0x3] %vm11389, %v11388
        %p11391 = scmp.lt.s32.totalorder %s23, 1
        %s11392 = scalar_select %p11391, %s23, 1
        %s11393 = smul.addr %s11392, 2
        %s11394 = scalar_lea.vmem %s10, %s11393
        // Predicated region
        $region97: #{e_net_forward.1} parent=59 // pred_check
          %p11395 = pneg %p291
        $region98: #{e_net_forward.1} parent=59 // pred_check_branch
          %11397 = sbr.rel (%p11395) target = $region100
        $region99: #{e_net_forward.1} parent=59 // pred_region
          _
        $region100: #{e_net_forward.1} parent=59 // pred_fallthru
          _
      $region60: #{e_net_forward.1} parent=5 // pred_fallthru
        _
      %p11398 = scmp.le.s32.totalorder 2, %s18
      // Predicated region
      $region101: #{e_net_forward.1} parent=5 // pred_check
        %p11399 = pneg %p11398
      $region102: #{e_net_forward.1} parent=5 // pred_check_branch
        %11401 = sbr.rel (%p11399) target = $region104
      $region103: #{e_net_forward.1} parent=5 // pred_region
        %s11402 = ssub.s32 %s18, 2
        // Predicated region
        $region105: #{e_net_forward.1} parent=103 // pred_check
          %p11403 = pneg %p297
        $region106: #{e_net_forward.1} parent=103 // pred_check_branch
          %11405 = sbr.rel (%p11403) target = $region108
        $region107: #{e_net_forward.1} parent=103 // pred_region
          %p11406 = scmp.lt.s32.totalorder %s24, 1
          %s11407 = scalar_select %p11406, %s24, 1
          %s11408 = smul.addr %s11407, 2
          %s11409 = scalar_lea.vmem %s10, %s11408
        $region108: #{e_net_forward.1} parent=103 // pred_fallthru
          _
      $region104: #{e_net_forward.1} parent=5 // pred_fallthru
        _
    $region6: #{e_net_forward.1} parent=1 // loop_footer
      %s22 = sadd.s32 1, %s18
    $region7: #{e_net_forward.1} parent=1 // loop_footer_branch
      %17 = sbr.rel target = $region3
    $region8: #{e_net_forward.1} parent=1 // loop_exit
      _
    %11410 = vsyncpa [#allocation3], 1
    %s11411 = scalar_lea.sflag [#allocation3], 1
    %11412 = vsyncpa %s11411, 1
    %11413 = vsyncpa [#allocation5], 1

</llo_original>
